<compile_context>
chip_gen: v6e
topology: v6e:2x2x1
jax: 0.10.0
libtpu: 0.0.40
codegen_flags: <defaults>
</compile_context>

<pallas_src>
import jax
import jax.numpy as jnp
from jax import lax
from jax.experimental import pallas as pl
from jax.experimental.pallas import tpu as pltpu


MATMUL_DTYPE = jnp.bfloat16   # matmul operand dtype (f32 accumulation everywhere)


def _round_up(x, m):
    return (x + m - 1) // m * m


# ----------------------------------------------------------------------------
# Fused Conv2d(3x3, pad=1) + bias + ReLU + MaxPool2d(2) as one MXU matmul.
# ----------------------------------------------------------------------------
def _conv_pool_kernel(p_ref, w_ref, b_ref, o_ref):
    # p_ref: (TM, 16*Cin)    pooled-im2col patches (bf16)
    # w_ref: (16*Cin, 4*Cout) packed conv weights (bf16); 4 col blocks = 2x2 pool cands
    # b_ref: (1, Cout)       bias (f32)
    # o_ref: (TM, Cout)      pooled + ReLU output
    cout = o_ref.shape[-1]
    y = jnp.dot(p_ref[...], w_ref[...], preferred_element_type=jnp.float32)
    m = jnp.maximum(
        jnp.maximum(y[:, 0 * cout:1 * cout], y[:, 1 * cout:2 * cout]),
        jnp.maximum(y[:, 2 * cout:3 * cout], y[:, 3 * cout:4 * cout]))
    # relu(max(z_pq) + b) == max(relu(z_pq + b)) since bias is shared & relu monotone.
    o_ref[...] = jnp.maximum(m + b_ref[...], 0.0).astype(o_ref.dtype)


def _pack_conv_pool_weight(w_hwio):
    """(3,3,Cin,Cout) -> (16*Cin, 4*Cout): column block (2p+q) computes the
    pre-pool conv value at pool offset (p, q) from the 4x4 input patch."""
    cin, cout = w_hwio.shape[2], w_hwio.shape[3]
    wb = jnp.zeros((16 * cin, 4 * cout), jnp.float32)
    for p in range(2):
        for q in range(2):
            for t in range(4):
                for u in range(4):
                    dh, dw = t - p, u - q
                    if 0 <= dh <= 2 and 0 <= dw <= 2:
                        wb = wb.at[(t * 4 + u) * cin:(t * 4 + u + 1) * cin,
                                   (2 * p + q) * cout:(2 * p + q + 1) * cout
                                   ].set(w_hwio[dh, dw].astype(jnp.float32))
    return wb.astype(MATMUL_DTYPE)


def _pool_patches(x_nhwc):
    """(B,H,W,Cin) -> ((B*Ho*Wo, 16*Cin) patches, (B,Ho,Wo)).
    Row (b,i,j), column (t*4+u)*Cin+ci == padded_x[b, 2i+t, 2j+u, ci]."""
    b, h, w, cin = x_nhwc.shape
    ho, wo = h // 2, w // 2
    xp = jnp.pad(x_nhwc, ((0, 0), (1, 1), (1, 1), (0, 0)))
    taps = [xp[:, t:t + 2 * ho:2, u:u + 2 * wo:2, :]          # (B, Ho, Wo, Cin)
            for t in range(4) for u in range(4)]
    patch = jnp.stack(taps, axis=3)                           # (B, Ho, Wo, 16, Cin)
    return patch.reshape(b * ho * wo, 16 * cin).astype(MATMUL_DTYPE), (b, ho, wo)


def conv_relu_pool(x_nhwc, w_hwio, b):
    """Fused conv3x3(pad=1)+ReLU+maxpool2x2 via a single tiled Pallas matmul."""
    cout = w_hwio.shape[3]
    patches, (bsz, ho, wo) = _pool_patches(x_nhwc)
    w_big = _pack_conv_pool_weight(w_hwio)
    bias = b.reshape(1, cout).astype(jnp.float32)

    m, k = patches.shape
    tm = min(512, _round_up(m, 16))          # batch*Ho*Wo folded into M, tiled
    mp = _round_up(m, tm)
    if mp != m:
        patches = jnp.pad(patches, ((0, mp - m), (0, 0)))

    out = pl.pallas_call(
        _conv_pool_kernel,
        out_shape=jax.ShapeDtypeStruct((mp, cout), MATMUL_DTYPE),
        grid=(mp // tm,),
        in_specs=[
            pl.BlockSpec((tm, k), lambda i: (i, 0)),
            pl.BlockSpec((k, 4 * cout), lambda i: (0, 0)),   # weights stay resident
            pl.BlockSpec((1, cout), lambda i: (0, 0)),
        ],
        out_specs=pl.BlockSpec((tm, cout), lambda i: (i, 0)),
        compiler_params=pltpu.CompilerParams(
            dimension_semantics=("parallel",)),
    )(patches, w_big, bias)
    return out[:m].reshape(bsz, ho, wo, cout)


# ----------------------------------------------------------------------------
# Fused 3-layer MLP (Linear+ReLU, Linear+ReLU, Linear), batch-tiled.
# ----------------------------------------------------------------------------
def _mlp_kernel(x_ref, w1_ref, b1_ref, w2_ref, b2_ref, w3_ref, b3_ref, o_ref):
    h1 = jnp.maximum(
        jnp.dot(x_ref[...], w1_ref[...], preferred_element_type=jnp.float32)
        + b1_ref[...], 0.0)
    h2 = jnp.maximum(
        jnp.dot(h1.astype(w2_ref.dtype), w2_ref[...],
                preferred_element_type=jnp.float32) + b2_ref[...], 0.0)
    o_ref[...] = (jnp.dot(h2.astype(w3_ref.dtype), w3_ref[...],
                          preferred_element_type=jnp.float32)
                  + b3_ref[...]).astype(o_ref.dtype)


def mlp(feat, w1, b1, w2, b2, w3, b3):
    bsz, din = feat.shape
    tb = 128
    bp = _round_up(bsz, 16)
    if bp <= tb:
        tb = bp
    else:
        bp = _round_up(bsz, tb)
    if bp != bsz:
        feat = jnp.pad(feat, ((0, bp - bsz), (0, 0)))

    w1b = w1.astype(MATMUL_DTYPE)
    w2b = w2.astype(MATMUL_DTYPE)
    w3b = w3.astype(MATMUL_DTYPE)
    b1r = b1.reshape(1, -1).astype(jnp.float32)
    b2r = b2.reshape(1, -1).astype(jnp.float32)
    b3r = b3.reshape(1, -1).astype(jnp.float32)
    d1, d2, dout = w1b.shape[1], w2b.shape[1], w3b.shape[1]

    out = pl.pallas_call(
        _mlp_kernel,
        out_shape=jax.ShapeDtypeStruct((bp, dout), jnp.float32),
        grid=(bp // tb,),
        in_specs=[
            pl.BlockSpec((tb, din), lambda i: (i, 0)),
            pl.BlockSpec((din, d1), lambda i: (0, 0)),   # weights resident in VMEM
            pl.BlockSpec((1, d1), lambda i: (0, 0)),
            pl.BlockSpec((d1, d2), lambda i: (0, 0)),
            pl.BlockSpec((1, d2), lambda i: (0, 0)),
            pl.BlockSpec((d2, dout), lambda i: (0, 0)),
            pl.BlockSpec((1, dout), lambda i: (0, 0)),
        ],
        out_specs=pl.BlockSpec((tb, dout), lambda i: (i, 0)),
        compiler_params=pltpu.CompilerParams(
            dimension_semantics=("parallel",)),
    )(feat.astype(MATMUL_DTYPE), w1b, b1r, w2b, b2r, w3b, b3r)
    return out[:bsz]


# ----------------------------------------------------------------------------
# Full forward pass.
# ----------------------------------------------------------------------------
def cnn_forward(params, x):
    bsz = x.shape[0]
    h = x[:, :, :, None]                                              # (B,48,60,1) NHWC
    h = conv_relu_pool(h, params["w_conv1"], params["b_conv1"])       # (B,24,30,32)
    h = conv_relu_pool(h, params["w_conv2"], params["b_conv2"])       # (B,12,15,64)
    # NHWC flatten; the PyTorch NCHW x.view(B,-1) order is folded into fc1's rows.
    feat = h.reshape(bsz, -1)                                         # (B, 11520)
    cout, ho, wo = 64, 12, 15
    w1_perm = (params["w_fc1"].reshape(cout, ho, wo, -1)
               .transpose(1, 2, 0, 3).reshape(cout * ho * wo, -1))
    out = mlp(feat, w1_perm, params["b_fc1"],
              params["w_fc2"], params["b_fc2"],
              params["w_fc3"], params["b_fc3"])                       # (B, 1)
    return out[:, 0]


def init_params(key):
    ks = jax.random.split(key, 10)
    # TODO(synk): the original fc_layers contain nn.Linear(2048, 128) which is
    # shape-incompatible with the 128-dim output of the preceding Linear; it is
    # implemented here as Linear(128, 128) so the forward pass is runnable.
    return {
        "w_conv1": jax.random.normal(ks[0], (3, 3, 1, 32), jnp.float32) * 0.1,
        "b_conv1": jax.random.normal(ks[1], (32,), jnp.float32) * 0.1,
        "w_conv2": jax.random.normal(ks[2], (3, 3, 32, 64), jnp.float32) * 0.05,
        "b_conv2": jax.random.normal(ks[3], (64,), jnp.float32) * 0.05,
        # w_fc1 rows are in PyTorch NCHW flatten order (c*180 + h*15 + w).
        "w_fc1": jax.random.normal(ks[4], (64 * 12 * 15, 128), jnp.float32) * 0.01,
        "b_fc1": jax.random.normal(ks[5], (128,), jnp.float32) * 0.01,
        "w_fc2": jax.random.normal(ks[6], (128, 128), jnp.float32) * 0.05,
        "b_fc2": jax.random.normal(ks[7], (128,), jnp.float32) * 0.05,
        "w_fc3": jax.random.normal(ks[8], (128, 1), jnp.float32) * 0.05,
        "b_fc3": jax.random.normal(ks[9], (1,), jnp.float32) * 0.05,
    }


# ----------------------------------------------------------------------------
# Pure-JAX f32 reference (sanity check only).
# ----------------------------------------------------------------------------
def _ref_conv_block(x, w, b):
    y = lax.conv_general_dilated(x, w, window_strides=(1, 1), padding="SAME",
                                 dimension_numbers=("NHWC", "HWIO", "NHWC"))
    y = jnp.maximum(y + b, 0.0)
    return lax.reduce_window(y, -jnp.inf, lax.max,
                             window_dimensions=(1, 2, 2, 1),
                             window_strides=(1, 2, 2, 1), padding="VALID")


def reference_forward(params, x):
    bsz = x.shape[0]
    h = x[:, :, :, None]
    h = _ref_conv_block(h, params["w_conv1"], params["b_conv1"])
    h = _ref_conv_block(h, params["w_conv2"], params["b_conv2"])
    feat = jnp.transpose(h, (0, 3, 1, 2)).reshape(bsz, -1)   # NCHW flatten like torch
    h1 = jnp.maximum(feat @ params["w_fc1"] + params["b_fc1"], 0.0)
    h2 = jnp.maximum(h1 @ params["w_fc2"] + params["b_fc2"], 0.0)
    return (h2 @ params["w_fc3"] + params["b_fc3"])[:, 0]


if __name__ == "__main__":
    key = jax.random.PRNGKey(0)
    k_x, k_p = jax.random.split(key)

    # Raw input (B, H, W); forward unsqueezes the channel dimension.
    x = jax.random.normal(k_x, (2, 48, 60), jnp.float32)
    params = init_params(k_p)

    out = jax.jit(cnn_forward)(params, x)
    out = jax.block_until_ready(out)
    assert out.shape == (2,), out.shape

    ref = jax.block_until_ready(reference_forward(params, x))
    # bf16 matmul operands (f32 accumulation) => slightly looser tolerance.
    if not jnp.allclose(out, ref, atol=3e-2, rtol=3e-2):
        raise AssertionError(f"kernel/reference mismatch: {out} vs {ref}")

    print("KERNEL_OK")
</pallas_src>

<mosaic_0001>
module attributes {stable_mosaic.version = 11 : i64} {
  func.func @_conv_pool_kernel(%arg0: i32, %arg1: memref<512x16xbf16, #tpu.memory_space<vmem>>, %arg2: memref<16x128xbf16, #tpu.memory_space<vmem>>, %arg3: memref<1x32xf32, #tpu.memory_space<vmem>>, %arg4: memref<512x32xbf16, #tpu.memory_space<vmem>>) attributes {dimension_semantics = [#tpu.dimension_semantics<parallel>], iteration_bounds = array<i64: 3>, scalar_prefetch = 0 : i64, scratch_operands = 0 : i64, tpu.core_type = #tpu.core_type<tc>, window_params = [{transform_indices = @transform_0, window_bounds = array<i64: 512, 16>}, {pipeline_mode = #tpu.pipeline_mode<synchronous>, transform_indices = @transform_1, window_bounds = array<i64: 16, 128>}, {pipeline_mode = #tpu.pipeline_mode<synchronous>, transform_indices = @transform_2, window_bounds = array<i64: 1, 32>}, {transform_indices = @transform_3, window_bounds = array<i64: 512, 32>}]} {
    %c0 = arith.constant 0 : index
    %c0_0 = arith.constant 0 : index
    %0 = vector.load %arg1[%c0, %c0_0] : memref<512x16xbf16, #tpu.memory_space<vmem>>, vector<512x16xbf16>
    %c0_1 = arith.constant 0 : index
    %c0_2 = arith.constant 0 : index
    %1 = vector.load %arg2[%c0_1, %c0_2] : memref<16x128xbf16, #tpu.memory_space<vmem>>, vector<16x128xbf16>
    %cst = arith.constant dense<0.000000e+00> : vector<512x128xf32>
    %2 = tpu.matmul %0, %1, %cst {dimension_numbers = #tpu.dot_dimension_numbers<[1], [0], [0], [1], [0, 0, 1, 1], [], []>} : vector<512x16xbf16>, vector<16x128xbf16>, vector<512x128xf32> -> vector<512x128xf32>
    %3 = vector.extract_strided_slice %2 {offsets = [0, 0], sizes = [512, 32], strides = [1, 1]} : vector<512x128xf32> to vector<512x32xf32>
    %4 = vector.extract_strided_slice %2 {offsets = [0, 32], sizes = [512, 32], strides = [1, 1]} : vector<512x128xf32> to vector<512x32xf32>
    %5 = arith.maximumf %3, %4 : vector<512x32xf32>
    %6 = vector.extract_strided_slice %2 {offsets = [0, 64], sizes = [512, 32], strides = [1, 1]} : vector<512x128xf32> to vector<512x32xf32>
    %7 = vector.extract_strided_slice %2 {offsets = [0, 96], sizes = [512, 32], strides = [1, 1]} : vector<512x128xf32> to vector<512x32xf32>
    %8 = arith.maximumf %6, %7 : vector<512x32xf32>
    %9 = arith.maximumf %5, %8 : vector<512x32xf32>
    %c0_3 = arith.constant 0 : index
    %c0_4 = arith.constant 0 : index
    %10 = vector.load %arg3[%c0_3, %c0_4] : memref<1x32xf32, #tpu.memory_space<vmem>>, vector<1x32xf32>
    %11 = vector.broadcast %10 : vector<1x32xf32> to vector<512x32xf32>
    %12 = arith.addf %9, %11 : vector<512x32xf32>
    %cst_5 = arith.constant 0.000000e+00 : f32
    %13 = vector.broadcast %cst_5 : f32 to vector<512x32xf32>
    %14 = arith.maximumf %12, %13 : vector<512x32xf32>
    %15 = arith.truncf %14 : vector<512x32xf32> to vector<512x32xbf16>
    %c0_6 = arith.constant 0 : index
    %c0_7 = arith.constant 0 : index
    %16 = vector.load %arg4[%c0_6, %c0_7] : memref<512x32xbf16, #tpu.memory_space<vmem>>, vector<512x32xbf16>
    tpu.vector_store %arg4[%c0_6, %c0_7], %15 {strides = array<i32>} : memref<512x32xbf16, #tpu.memory_space<vmem>>, vector<512x32xbf16>,
    return
  }
  func.func @transform_0(%arg0: i32) -> (i32, i32) {
    %c0_i32 = arith.constant 0 : i32
    %c0_i32_0 = arith.constant 0 : i32
    return %arg0, %c0_i32 : i32, i32
  }
  func.func @transform_1(%arg0: i32) -> (i32, i32) {
    %c0_i32 = arith.constant 0 : i32
    %c0_i32_0 = arith.constant 0 : i32
    %c0_i32_1 = arith.constant 0 : i32
    return %c0_i32, %c0_i32_0 : i32, i32
  }
  func.func @transform_2(%arg0: i32) -> (i32, i32) {
    %c0_i32 = arith.constant 0 : i32
    %c0_i32_0 = arith.constant 0 : i32
    %c0_i32_1 = arith.constant 0 : i32
    return %c0_i32, %c0_i32_0 : i32, i32
  }
  func.func @transform_3(%arg0: i32) -> (i32, i32) {
    %c0_i32 = arith.constant 0 : i32
    %c0_i32_0 = arith.constant 0 : i32
    return %arg0, %c0_i32 : i32, i32
  }
}

module attributes {stable_mosaic.version = 11 : i64} {
  func.func @_conv_pool_kernel(%arg0: i32, %arg1: memref<368x512xbf16, #tpu.memory_space<vmem>>, %arg2: memref<512x256xbf16, #tpu.memory_space<vmem>>, %arg3: memref<1x64xf32, #tpu.memory_space<vmem>>, %arg4: memref<368x64xbf16, #tpu.memory_space<vmem>>) attributes {dimension_semantics = [#tpu.dimension_semantics<parallel>], iteration_bounds = array<i64: 1>, scalar_prefetch = 0 : i64, scratch_operands = 0 : i64, tpu.core_type = #tpu.core_type<tc>, window_params = [{transform_indices = @transform_0, window_bounds = array<i64: 368, 512>}, {pipeline_mode = #tpu.pipeline_mode<synchronous>, transform_indices = @transform_1, window_bounds = array<i64: 512, 256>}, {pipeline_mode = #tpu.pipeline_mode<synchronous>, transform_indices = @transform_2, window_bounds = array<i64: 1, 64>}, {transform_indices = @transform_3, window_bounds = array<i64: 368, 64>}]} {
    %c0 = arith.constant 0 : index
    %c0_0 = arith.constant 0 : index
    %0 = vector.load %arg1[%c0, %c0_0] : memref<368x512xbf16, #tpu.memory_space<vmem>>, vector<368x512xbf16>
    %c0_1 = arith.constant 0 : index
    %c0_2 = arith.constant 0 : index
    %1 = vector.load %arg2[%c0_1, %c0_2] : memref<512x256xbf16, #tpu.memory_space<vmem>>, vector<512x256xbf16>
    %cst = arith.constant dense<0.000000e+00> : vector<368x256xf32>
    %2 = tpu.matmul %0, %1, %cst {dimension_numbers = #tpu.dot_dimension_numbers<[1], [0], [0], [1], [0, 0, 1, 1], [], []>} : vector<368x512xbf16>, vector<512x256xbf16>, vector<368x256xf32> -> vector<368x256xf32>
    %3 = vector.extract_strided_slice %2 {offsets = [0, 0], sizes = [368, 64], strides = [1, 1]} : vector<368x256xf32> to vector<368x64xf32>
    %4 = vector.extract_strided_slice %2 {offsets = [0, 64], sizes = [368, 64], strides = [1, 1]} : vector<368x256xf32> to vector<368x64xf32>
    %5 = arith.maximumf %3, %4 : vector<368x64xf32>
    %6 = vector.extract_strided_slice %2 {offsets = [0, 128], sizes = [368, 64], strides = [1, 1]} : vector<368x256xf32> to vector<368x64xf32>
    %7 = vector.extract_strided_slice %2 {offsets = [0, 192], sizes = [368, 64], strides = [1, 1]} : vector<368x256xf32> to vector<368x64xf32>
    %8 = arith.maximumf %6, %7 : vector<368x64xf32>
    %9 = arith.maximumf %5, %8 : vector<368x64xf32>
    %c0_3 = arith.constant 0 : index
    %c0_4 = arith.constant 0 : index
    %10 = vector.load %arg3[%c0_3, %c0_4] : memref<1x64xf32, #tpu.memory_space<vmem>>, vector<1x64xf32>
    %11 = vector.broadcast %10 : vector<1x64xf32> to vector<368x64xf32>
    %12 = arith.addf %9, %11 : vector<368x64xf32>
    %cst_5 = arith.constant 0.000000e+00 : f32
    %13 = vector.broadcast %cst_5 : f32 to vector<368x64xf32>
    %14 = arith.maximumf %12, %13 : vector<368x64xf32>
    %15 = arith.truncf %14 : vector<368x64xf32> to vector<368x64xbf16>
    %c0_6 = arith.constant 0 : index
    %c0_7 = arith.constant 0 : index
    %16 = vector.load %arg4[%c0_6, %c0_7] : memref<368x64xbf16, #tpu.memory_space<vmem>>, vector<368x64xbf16>
    tpu.vector_store %arg4[%c0_6, %c0_7], %15 {strides = array<i32>} : memref<368x64xbf16, #tpu.memory_space<vmem>>, vector<368x64xbf16>,
    return
  }
  func.func @transform_0(%arg0: i32) -> (i32, i32) {
    %c0_i32 = arith.constant 0 : i32
    %c0_i32_0 = arith.constant 0 : i32
    return %arg0, %c0_i32 : i32, i32
  }
  func.func @transform_1(%arg0: i32) -> (i32, i32) {
    %c0_i32 = arith.constant 0 : i32
    %c0_i32_0 = arith.constant 0 : i32
    %c0_i32_1 = arith.constant 0 : i32
    return %c0_i32, %c0_i32_0 : i32, i32
  }
  func.func @transform_2(%arg0: i32) -> (i32, i32) {
    %c0_i32 = arith.constant 0 : i32
    %c0_i32_0 = arith.constant 0 : i32
    %c0_i32_1 = arith.constant 0 : i32
    return %c0_i32, %c0_i32_0 : i32, i32
  }
  func.func @transform_3(%arg0: i32) -> (i32, i32) {
    %c0_i32 = arith.constant 0 : i32
    %c0_i32_0 = arith.constant 0 : i32
    return %arg0, %c0_i32 : i32, i32
  }
}

module attributes {stable_mosaic.version = 11 : i64} {
  func.func @_mlp_kernel(%arg0: i32, %arg1: memref<16x11520xbf16, #tpu.memory_space<vmem>>, %arg2: memref<11520x128xbf16, #tpu.memory_space<vmem>>, %arg3: memref<1x128xf32, #tpu.memory_space<vmem>>, %arg4: memref<128x128xbf16, #tpu.memory_space<vmem>>, %arg5: memref<1x128xf32, #tpu.memory_space<vmem>>, %arg6: memref<128x1xbf16, #tpu.memory_space<vmem>>, %arg7: memref<1x1xf32, #tpu.memory_space<vmem>>, %arg8: memref<16x1xf32, #tpu.memory_space<vmem>>) attributes {dimension_semantics = [#tpu.dimension_semantics<parallel>], iteration_bounds = array<i64: 1>, scalar_prefetch = 0 : i64, scratch_operands = 0 : i64, tpu.core_type = #tpu.core_type<tc>, window_params = [{transform_indices = @transform_0, window_bounds = array<i64: 16, 11520>}, {pipeline_mode = #tpu.pipeline_mode<synchronous>, transform_indices = @transform_1, window_bounds = array<i64: 11520, 128>}, {pipeline_mode = #tpu.pipeline_mode<synchronous>, transform_indices = @transform_2, window_bounds = array<i64: 1, 128>}, {pipeline_mode = #tpu.pipeline_mode<synchronous>, transform_indices = @transform_3, window_bounds = array<i64: 128, 128>}, {pipeline_mode = #tpu.pipeline_mode<synchronous>, transform_indices = @transform_4, window_bounds = array<i64: 1, 128>}, {pipeline_mode = #tpu.pipeline_mode<synchronous>, transform_indices = @transform_5, window_bounds = array<i64: 128, 1>}, {pipeline_mode = #tpu.pipeline_mode<synchronous>, transform_indices = @transform_6, window_bounds = array<i64: 1, 1>}, {transform_indices = @transform_7, window_bounds = array<i64: 16, 1>}]} {
    %c0 = arith.constant 0 : index
    %c0_0 = arith.constant 0 : index
    %0 = vector.load %arg1[%c0, %c0_0] : memref<16x11520xbf16, #tpu.memory_space<vmem>>, vector<16x11520xbf16>
    %c0_1 = arith.constant 0 : index
    %c0_2 = arith.constant 0 : index
    %1 = vector.load %arg2[%c0_1, %c0_2] : memref<11520x128xbf16, #tpu.memory_space<vmem>>, vector<11520x128xbf16>
    %cst = arith.constant dense<0.000000e+00> : vector<16x128xf32>
    %2 = tpu.matmul %0, %1, %cst {dimension_numbers = #tpu.dot_dimension_numbers<[1], [0], [0], [1], [0, 0, 1, 1], [], []>} : vector<16x11520xbf16>, vector<11520x128xbf16>, vector<16x128xf32> -> vector<16x128xf32>
    %c0_3 = arith.constant 0 : index
    %c0_4 = arith.constant 0 : index
    %3 = vector.load %arg3[%c0_3, %c0_4] : memref<1x128xf32, #tpu.memory_space<vmem>>, vector<1x128xf32>
    %4 = vector.broadcast %3 : vector<1x128xf32> to vector<16x128xf32>
    %5 = arith.addf %2, %4 : vector<16x128xf32>
    %cst_5 = arith.constant 0.000000e+00 : f32
    %6 = vector.broadcast %cst_5 : f32 to vector<16x128xf32>
    %7 = arith.maximumf %5, %6 : vector<16x128xf32>
    %8 = arith.truncf %7 : vector<16x128xf32> to vector<16x128xbf16>
    %c0_6 = arith.constant 0 : index
    %c0_7 = arith.constant 0 : index
    %9 = vector.load %arg4[%c0_6, %c0_7] : memref<128x128xbf16, #tpu.memory_space<vmem>>, vector<128x128xbf16>
    %cst_8 = arith.constant dense<0.000000e+00> : vector<16x128xf32>
    %10 = tpu.matmul %8, %9, %cst_8 {dimension_numbers = #tpu.dot_dimension_numbers<[1], [0], [0], [1], [0, 0, 1, 1], [], []>} : vector<16x128xbf16>, vector<128x128xbf16>, vector<16x128xf32> -> vector<16x128xf32>
    %c0_9 = arith.constant 0 : index
    %c0_10 = arith.constant 0 : index
    %11 = vector.load %arg5[%c0_9, %c0_10] : memref<1x128xf32, #tpu.memory_space<vmem>>, vector<1x128xf32>
    %12 = vector.broadcast %11 : vector<1x128xf32> to vector<16x128xf32>
    %13 = arith.addf %10, %12 : vector<16x128xf32>
    %cst_11 = arith.constant 0.000000e+00 : f32
    %14 = vector.broadcast %cst_11 : f32 to vector<16x128xf32>
    %15 = arith.maximumf %13, %14 : vector<16x128xf32>
    %16 = arith.truncf %15 : vector<16x128xf32> to vector<16x128xbf16>
    %c0_12 = arith.constant 0 : index
    %c0_13 = arith.constant 0 : index
    %17 = vector.load %arg6[%c0_12, %c0_13] : memref<128x1xbf16, #tpu.memory_space<vmem>>, vector<128x1xbf16>
    %cst_14 = arith.constant dense<0.000000e+00> : vector<16x1xf32>
    %18 = tpu.matmul %16, %17, %cst_14 {dimension_numbers = #tpu.dot_dimension_numbers<[1], [0], [0], [1], [0, 0, 1, 1], [], []>} : vector<16x128xbf16>, vector<128x1xbf16>, vector<16x1xf32> -> vector<16x1xf32>
    %c0_15 = arith.constant 0 : index
    %c0_16 = arith.constant 0 : index
    %19 = vector.load %arg7[%c0_15, %c0_16] : memref<1x1xf32, #tpu.memory_space<vmem>>, vector<1x1xf32>
    %20 = vector.broadcast %19 : vector<1x1xf32> to vector<16x1xf32>
    %21 = arith.addf %18, %20 : vector<16x1xf32>
    %c0_17 = arith.constant 0 : index
    %c0_18 = arith.constant 0 : index
    %22 = vector.load %arg8[%c0_17, %c0_18] : memref<16x1xf32, #tpu.memory_space<vmem>>, vector<16x1xf32>
    tpu.vector_store %arg8[%c0_17, %c0_18], %21 {strides = array<i32>} : memref<16x1xf32, #tpu.memory_space<vmem>>, vector<16x1xf32>,
    return
  }
  func.func @transform_0(%arg0: i32) -> (i32, i32) {
    %c0_i32 = arith.constant 0 : i32
    %c0_i32_0 = arith.constant 0 : i32
    return %arg0, %c0_i32 : i32, i32
  }
  func.func @transform_1(%arg0: i32) -> (i32, i32) {
    %c0_i32 = arith.constant 0 : i32
    %c0_i32_0 = arith.constant 0 : i32
    %c0_i32_1 = arith.constant 0 : i32
    return %c0_i32, %c0_i32_0 : i32, i32
  }
  func.func @transform_2(%arg0: i32) -> (i32, i32) {
    %c0_i32 = arith.constant 0 : i32
    %c0_i32_0 = arith.constant 0 : i32
    %c0_i32_1 = arith.constant 0 : i32
    return %c0_i32, %c0_i32_0 : i32, i32
  }
  func.func @transform_3(%arg0: i32) -> (i32, i32) {
    %c0_i32 = arith.constant 0 : i32
    %c0_i32_0 = arith.constant 0 : i32
    %c0_i32_1 = arith.constant 0 : i32
    return %c0_i32, %c0_i32_0 : i32, i32
  }
  func.func @transform_4(%arg0: i32) -> (i32, i32) {
    %c0_i32 = arith.constant 0 : i32
    %c0_i32_0 = arith.constant 0 : i32
    %c0_i32_1 = arith.constant 0 : i32
    return %c0_i32, %c0_i32_0 : i32, i32
  }
  func.func @transform_5(%arg0: i32) -> (i32, i32) {
    %c0_i32 = arith.constant 0 : i32
    %c0_i32_0 = arith.constant 0 : i32
    %c0_i32_1 = arith.constant 0 : i32
    return %c0_i32, %c0_i32_0 : i32, i32
  }
  func.func @transform_6(%arg0: i32) -> (i32, i32) {
    %c0_i32 = arith.constant 0 : i32
    %c0_i32_0 = arith.constant 0 : i32
    %c0_i32_1 = arith.constant 0 : i32
    return %c0_i32, %c0_i32_0 : i32, i32
  }
  func.func @transform_7(%arg0: i32) -> (i32, i32) {
    %c0_i32 = arith.constant 0 : i32
    %c0_i32_0 = arith.constant 0 : i32
    return %arg0, %c0_i32 : i32, i32
  }
}

</mosaic_0001>

<llo_original>
// kernel: cnn_forward.3
$region0: #{cnn_forward.3}
  #allocation0 [shape = 'u32[]', space=smem, size = 0x4, offset = 0x4, fixed_abs, tag = 'smem constant byte address 0x4 - core index']
  #allocation1 [shape = 'u32[144,128]{1,0:T(1,128)}', space=vmem, size = 0x12000, scoped, tag = 'internal scratch']
  %s0 = inlined_call_operand.vmem [shape: bf16[1536,16], index: 0, kind: input, shape index: {}]
  %s1 = inlined_call_operand.vmem [shape: bf16[16,128], index: 1, kind: input, shape index: {}]
  %s2 = inlined_call_operand.hbm [shape: f32[1,32], index: 2, kind: input, shape index: {}]
  %s3 = inlined_call_operand.vmem [shape: bf16[1536,32], index: 3, kind: output, shape index: {}]
  %s4 = sld [smem:[#allocation0]]
  $region49: #{cnn_forward.3} parent=0
    _
  %s6 = ssub.s32 1, %s4
  %s7 = scalar_select 0, %s6, %s4
  $region1: #{cnn_forward.3} parent=0
    #allocation2 [shape = 'u8[512]{0}', space=vmem, size = 0x400, scoped, tag = 'input window, operand 2, single buffered']
    #allocation3 [shape = 's32[2]{0}', space=sflag, size = 0x8, scoped, tag = 'scoped memory for cnn_forward.3']
    %8 = vsyncpa [#allocation3], 0
    loop: start=0, step=1, limit=5
    $region2: #{cnn_forward.3} parent=1 // loop_pre_header
      _
    $region3: #{cnn_forward.3} parent=1 // loop_header
      %s10 = sphi 0, %s14
      %p11 = scmp.ge.s32.totalorder %s10, 5
      %s20 = sphi 0, %s22
      %s23 = sphi 0, %s20
      %s24 = sphi 0, %s23
      %s40 = sphi 0, %s24
      %s44 = sphi 0, %s44
      %s46 = sphi 0, %s44
      %s47 = sphi 0, %s46
      %s61 = sphi 0, %s47
      %s65 = sphi 0, %s65
      %s67 = sphi 0, %s65
      %s68 = sphi 0, %s67
      %s82 = sphi 0, %s68
      %s88 = sphi 0, %s90
      %s91 = sphi 0, %s88
      %s92 = sphi 0, %s91
      %s108 = sphi 0, %s92
    $region4: #{cnn_forward.3} parent=1 // loop_header_branch
      %13 = sbr.rel (%p11) target = $region8
    $region5: #{cnn_forward.3} parent=1 // loop_body
      %s15 = ssub.s32 %s10, 1
      %s16 = ssub.s32 %s10, 2
      %s17 = sadd.s32 %s10, 1
      %s18 = ssub.s32 %s10, %s17
      %p19 = scmp.eq.s32.totalorder %s18, 0
      %s21 = sadd.s32 %s20, 1
      %s22 = scalar_select %p19, %s20, %s21
      %p25 = pneg %p19
      %p26 = scmp.eq.s32.totalorder %s10, 2
      %p27 = por %p25, %p26
      %p28 = scmp.ne.s32.totalorder %s20, %s23
      %p29 = scmp.eq.s32.totalorder %s10, 0
      %p30 = por %p28, %p29
      %p31 = scmp.ne.s32.totalorder %s20, %s23
      %p32 = scmp.eq.s32.totalorder %s15, 2
      %p33 = por %p31, %p32
      %p34 = scmp.ne.s32.totalorder %s23, %s24
      %p35 = scmp.eq.s32.totalorder %s15, 0
      %p36 = por %p34, %p35
      %p37 = scmp.ne.s32.totalorder %s23, %s24
      %p38 = scmp.eq.s32.totalorder %s16, 2
      %p39 = por %p37, %p38
      %p41 = scmp.ne.s32.totalorder %s24, %s40
      %p42 = scmp.eq.s32.totalorder %s16, 0
      %p43 = por %p41, %p42
      %s45 = sadd.s32 %s44, 1
      %p48 = scmp.eq.s32.totalorder %s10, 2
      %p49 = scmp.ne.s32.totalorder %s44, %s46
      %p50 = scmp.eq.s32.totalorder %s10, 0
      %p51 = por %p49, %p50
      %p52 = scmp.ne.s32.totalorder %s44, %s46
      %p53 = scmp.eq.s32.totalorder %s15, 2
      %p54 = por %p52, %p53
      %p55 = scmp.ne.s32.totalorder %s46, %s47
      %p56 = scmp.eq.s32.totalorder %s15, 0
      %p57 = por %p55, %p56
      %p58 = scmp.ne.s32.totalorder %s46, %s47
      %p59 = scmp.eq.s32.totalorder %s16, 2
      %p60 = por %p58, %p59
      %p62 = scmp.ne.s32.totalorder %s47, %s61
      %p63 = scmp.eq.s32.totalorder %s16, 0
      %p64 = por %p62, %p63
      %s66 = sadd.s32 %s65, 1
      %p69 = scmp.eq.s32.totalorder %s10, 2
      %p70 = scmp.ne.s32.totalorder %s65, %s67
      %p71 = scmp.eq.s32.totalorder %s10, 0
      %p72 = por %p70, %p71
      %p73 = scmp.ne.s32.totalorder %s65, %s67
      %p74 = scmp.eq.s32.totalorder %s15, 2
      %p75 = por %p73, %p74
      %p76 = scmp.ne.s32.totalorder %s67, %s68
      %p77 = scmp.eq.s32.totalorder %s15, 0
      %p78 = por %p76, %p77
      %p79 = scmp.ne.s32.totalorder %s67, %s68
      %p80 = scmp.eq.s32.totalorder %s16, 2
      %p81 = por %p79, %p80
      %p83 = scmp.ne.s32.totalorder %s68, %s82
      %p84 = scmp.eq.s32.totalorder %s16, 0
      %p85 = por %p83, %p84
      %s86 = ssub.s32 %s10, %s17
      %p87 = scmp.eq.s32.totalorder %s86, 0
      %s89 = sadd.s32 %s88, 1
      %s90 = scalar_select %p87, %s88, %s89
      %p93 = pneg %p87
      %p94 = scmp.eq.s32.totalorder %s10, 2
      %p95 = por %p93, %p94
      %p96 = scmp.ne.s32.totalorder %s88, %s91
      %p97 = scmp.eq.s32.totalorder %s10, 0
      %p98 = por %p96, %p97
      %p99 = scmp.ne.s32.totalorder %s88, %s91
      %p100 = scmp.eq.s32.totalorder %s15, 2
      %p101 = por %p99, %p100
      %p102 = scmp.ne.s32.totalorder %s91, %s92
      %p103 = scmp.eq.s32.totalorder %s15, 0
      %p104 = por %p102, %p103
      %p105 = scmp.ne.s32.totalorder %s91, %s92
      %p106 = scmp.eq.s32.totalorder %s16, 2
      %p107 = por %p105, %p106
      %p109 = scmp.ne.s32.totalorder %s92, %s108
      %p110 = scmp.eq.s32.totalorder %s16, 0
      %p111 = por %p109, %p110
      %p112 = scmp.le.s32.totalorder 1, %s10
      %p113 = scmp.lt.s32.totalorder %s10, 4
      %p114 = pnand %p112, %p113
      %p115 = pneg %p114
      // Predicated region
      $region9: #{cnn_forward.3} parent=5 // pred_check
        _
      $region10: #{cnn_forward.3} parent=5 // pred_check_branch
        %117 = sbr.rel (%p114) target = $region12
      $region11: #{cnn_forward.3} parent=5 // pred_region
        %s118 = ssub.s32 %s10, 1
        // Predicated region
        $region13: #{cnn_forward.3} parent=11 // pred_check
          %p119 = pneg %p57
        $region14: #{cnn_forward.3} parent=11 // pred_check_branch
          %121 = sbr.rel (%p119) target = $region16
        $region15: #{cnn_forward.3} parent=11 // pred_region
          _
        $region16: #{cnn_forward.3} parent=11 // pred_fallthru
          _
        // Predicated region
        $region17: #{cnn_forward.3} parent=11 // pred_check
          %p122 = pneg %p78
        $region18: #{cnn_forward.3} parent=11 // pred_check_branch
          %124 = sbr.rel (%p122) target = $region20
        $region19: #{cnn_forward.3} parent=11 // pred_region
          %s126 = ssub.s32 16, 16
          %127 = vsyncadd [#allocation3], %s126
          %s129 = sshll.u32 [#allocation2], 4
          %s130 = int_to_ptr.vmem [resolvable:$true] %s129
          %132 = dma.hbm_to_vmem [thread:$0]  %s2, 16, %s130, [#allocation3]
        $region20: #{cnn_forward.3} parent=11 // pred_fallthru
          _
      $region12: #{cnn_forward.3} parent=5 // pred_fallthru
        _
      %p133 = scmp.lt.s32.totalorder %s10, 3
      // Predicated region
      $region21: #{cnn_forward.3} parent=5 // pred_check
        %p134 = pneg %p133
      $region22: #{cnn_forward.3} parent=5 // pred_check_branch
        %136 = sbr.rel (%p134) target = $region24
      $region23: #{cnn_forward.3} parent=5 // pred_region
        // Predicated region
        $region25: #{cnn_forward.3} parent=23 // pred_check
          %p137 = pneg %p30
        $region26: #{cnn_forward.3} parent=23 // pred_check_branch
          %139 = sbr.rel (%p137) target = $region28
        $region27: #{cnn_forward.3} parent=23 // pred_region
          %s140 = smul.u32 64, %s10
          %p141 = scmp.lt.s32.totalorder %s140, 191
          %s142 = scalar_select %p141, %s140, 191
          %s143 = smul.addr %s142, 4
          %s144 = scalar_lea.vmem %s0, %s143
          %s145 = smul.u32 64, %s10
        $region28: #{cnn_forward.3} parent=23 // pred_fallthru
          _
      $region24: #{cnn_forward.3} parent=5 // pred_fallthru
        _
      %p146 = scmp.le.s32.totalorder 1, %s10
      %p147 = scmp.lt.s32.totalorder %s10, 4
      %p148 = pnand %p146, %p147
      %p149 = pneg %p148
      // Predicated region
      $region29: #{cnn_forward.3} parent=5 // pred_check
        _
      $region30: #{cnn_forward.3} parent=5 // pred_check_branch
        %151 = sbr.rel (%p148) target = $region32
      $region31: #{cnn_forward.3} parent=5 // pred_region
        %s152 = ssub.s32 %s10, 1
        // Predicated region
        $region33: #{cnn_forward.3} parent=31 // pred_check
          %p153 = pneg %p78
        $region34: #{cnn_forward.3} parent=31 // pred_check_branch
          %155 = sbr.rel (%p153) target = $region36
        $region35: #{cnn_forward.3} parent=31 // pred_region
          %156 = dma.done [#allocation3], 16
        $region36: #{cnn_forward.3} parent=31 // pred_fallthru
          _
        %s157 = smul.u32 64, %s15
        %p158 = scmp.lt.s32.totalorder %s157, 191
        %s159 = scalar_select %p158, %s157, 191
        %s160 = smul.addr %s159, 4
        %s161 = scalar_lea.vmem %s0, %s160
        %p162 = pneg %p36
        %p163 = pneg %p33
        %p164 = pneg %p57
        %p165 = pneg %p54
        %p166 = pneg %p78
        %p167 = pneg %p75
        %p168 = pneg %p104
        %p169 = pneg %p101
        %s170 = smul.u32 64, %s15
        %p171 = scmp.lt.s32.totalorder %s170, 191
        %s172 = scalar_select %p171, %s170, 191
        %s173 = smul.addr %s172, 4
        %s174 = scalar_lea.vmem %s3, %s173
        %s175 = smul.u32 64, %s15
        %p176 = scmp.lt.s32.totalorder %s175, 191
        %s177 = scalar_select %p176, %s175, 191
        %s178 = smul.addr %s177, 4
        %s179 = scalar_lea.vmem %s0, %s178
        %s180 = smul.u32 64, %s15
        %s181 = smul.u32 64, %s15
        %p182 = scmp.lt.s32.totalorder %s181, 191
        %s183 = scalar_select %p182, %s181, 191
        %s184 = smul.addr %s183, 4
        %s185 = scalar_lea.vmem %s3, %s184
        %s186 = smul.u32 64, %s15
        %v188 = vld [vmem:[%s179] sm:$0xf]
        %v189 = vld [vmem:[%s179 + $0x4] sm:$0xf]
        %v190 = vld [vmem:[%s179 + $0x8] sm:$0xf]
        %v191 = vld [vmem:[%s179 + $0xc] sm:$0xf]
        %v192 = vld [vmem:[%s179 + $0x10] sm:$0xf]
        %v193 = vld [vmem:[%s179 + $0x14] sm:$0xf]
        %v194 = vld [vmem:[%s179 + $0x18] sm:$0xf]
        %v195 = vld [vmem:[%s179 + $0x1c] sm:$0xf]
        %v196 = vld [vmem:[%s179 + $0x20] sm:$0xf]
        %v197 = vld [vmem:[%s179 + $0x24] sm:$0xf]
        %v198 = vld [vmem:[%s179 + $0x28] sm:$0xf]
        %v199 = vld [vmem:[%s179 + $0x2c] sm:$0xf]
        %v200 = vld [vmem:[%s179 + $0x30] sm:$0xf]
        %v201 = vld [vmem:[%s179 + $0x34] sm:$0xf]
        %v202 = vld [vmem:[%s179 + $0x38] sm:$0xf]
        %v203 = vld [vmem:[%s179 + $0x3c] sm:$0xf]
        %v204 = vld [vmem:[%s179 + $0x40] sm:$0xf]
        %v205 = vld [vmem:[%s179 + $0x44] sm:$0xf]
        %v206 = vld [vmem:[%s179 + $0x48] sm:$0xf]
        %v207 = vld [vmem:[%s179 + $0x4c] sm:$0xf]
        %v208 = vld [vmem:[%s179 + $0x50] sm:$0xf]
        %v209 = vld [vmem:[%s179 + $0x54] sm:$0xf]
        %v210 = vld [vmem:[%s179 + $0x58] sm:$0xf]
        %v211 = vld [vmem:[%s179 + $0x5c] sm:$0xf]
        %v212 = vld [vmem:[%s179 + $0x60] sm:$0xf]
        %v213 = vld [vmem:[%s179 + $0x64] sm:$0xf]
        %v214 = vld [vmem:[%s179 + $0x68] sm:$0xf]
        %v215 = vld [vmem:[%s179 + $0x6c] sm:$0xf]
        %v216 = vld [vmem:[%s179 + $0x70] sm:$0xf]
        %v217 = vld [vmem:[%s179 + $0x74] sm:$0xf]
        %v218 = vld [vmem:[%s179 + $0x78] sm:$0xf]
        %v219 = vld [vmem:[%s179 + $0x7c] sm:$0xf]
        %v220 = vld [vmem:[%s179 + $0x80] sm:$0xf]
        %v221 = vld [vmem:[%s179 + $0x84] sm:$0xf]
        %v222 = vld [vmem:[%s179 + $0x88] sm:$0xf]
        %v223 = vld [vmem:[%s179 + $0x8c] sm:$0xf]
        %v224 = vld [vmem:[%s179 + $0x90] sm:$0xf]
        %v225 = vld [vmem:[%s179 + $0x94] sm:$0xf]
        %v226 = vld [vmem:[%s179 + $0x98] sm:$0xf]
        %v227 = vld [vmem:[%s179 + $0x9c] sm:$0xf]
        %v228 = vld [vmem:[%s179 + $0xa0] sm:$0xf]
        %v229 = vld [vmem:[%s179 + $0xa4] sm:$0xf]
        %v230 = vld [vmem:[%s179 + $0xa8] sm:$0xf]
        %v231 = vld [vmem:[%s179 + $0xac] sm:$0xf]
        %v232 = vld [vmem:[%s179 + $0xb0] sm:$0xf]
        %v233 = vld [vmem:[%s179 + $0xb4] sm:$0xf]
        %v234 = vld [vmem:[%s179 + $0xb8] sm:$0xf]
        %v235 = vld [vmem:[%s179 + $0xbc] sm:$0xf]
        %v236 = vld [vmem:[%s179 + $0xc0] sm:$0xf]
        %v237 = vld [vmem:[%s179 + $0xc4] sm:$0xf]
        %v238 = vld [vmem:[%s179 + $0xc8] sm:$0xf]
        %v239 = vld [vmem:[%s179 + $0xcc] sm:$0xf]
        %v240 = vld [vmem:[%s179 + $0xd0] sm:$0xf]
        %v241 = vld [vmem:[%s179 + $0xd4] sm:$0xf]
        %v242 = vld [vmem:[%s179 + $0xd8] sm:$0xf]
        %v243 = vld [vmem:[%s179 + $0xdc] sm:$0xf]
        %v244 = vld [vmem:[%s179 + $0xe0] sm:$0xf]
        %v245 = vld [vmem:[%s179 + $0xe4] sm:$0xf]
        %v246 = vld [vmem:[%s179 + $0xe8] sm:$0xf]
        %v247 = vld [vmem:[%s179 + $0xec] sm:$0xf]
        %v248 = vld [vmem:[%s179 + $0xf0] sm:$0xf]
        %v249 = vld [vmem:[%s179 + $0xf4] sm:$0xf]
        %v250 = vld [vmem:[%s179 + $0xf8] sm:$0xf]
        %v251 = vld [vmem:[%s179 + $0xfc] sm:$0xf]
        %v252 = vld [vmem:[%s1] sm:$0xf]
        %v253 = vld [vmem:[%s1 + $0x4] sm:$0xf]
        %v318 = vunpack.c.l.b16 %v188
        %v319 = vunpack.c.l.b16 %v189
        %v320 = vunpack.c.l.b16 %v190
        %v321 = vunpack.c.l.b16 %v191
        %v322 = vunpack.c.l.b16 %v192
        %v323 = vunpack.c.l.b16 %v193
        %v324 = vunpack.c.l.b16 %v194
        %v325 = vunpack.c.l.b16 %v195
        %v326 = vunpack.c.l.b16 %v196
        %v327 = vunpack.c.l.b16 %v197
        %v328 = vunpack.c.l.b16 %v198
        %v329 = vunpack.c.l.b16 %v199
        %v330 = vunpack.c.l.b16 %v200
        %v331 = vunpack.c.l.b16 %v201
        %v332 = vunpack.c.l.b16 %v202
        %v333 = vunpack.c.l.b16 %v203
        %v334 = vunpack.c.l.b16 %v204
        %v335 = vunpack.c.l.b16 %v205
        %v336 = vunpack.c.l.b16 %v206
        %v337 = vunpack.c.l.b16 %v207
        %v338 = vunpack.c.l.b16 %v208
        %v339 = vunpack.c.l.b16 %v209
        %v340 = vunpack.c.l.b16 %v210
        %v341 = vunpack.c.l.b16 %v211
        %v342 = vunpack.c.l.b16 %v212
        %v343 = vunpack.c.l.b16 %v213
        %v344 = vunpack.c.l.b16 %v214
        %v345 = vunpack.c.l.b16 %v215
        %v346 = vunpack.c.l.b16 %v216
        %v347 = vunpack.c.l.b16 %v217
        %v348 = vunpack.c.l.b16 %v218
        %v349 = vunpack.c.l.b16 %v219
        %v350 = vunpack.c.l.b16 %v220
        %v351 = vunpack.c.l.b16 %v221
        %v352 = vunpack.c.l.b16 %v222
        %v353 = vunpack.c.l.b16 %v223
        %v354 = vunpack.c.l.b16 %v224
        %v355 = vunpack.c.l.b16 %v225
        %v356 = vunpack.c.l.b16 %v226
        %v357 = vunpack.c.l.b16 %v227
        %v358 = vunpack.c.l.b16 %v228
        %v359 = vunpack.c.l.b16 %v229
        %v360 = vunpack.c.l.b16 %v230
        %v361 = vunpack.c.l.b16 %v231
        %v362 = vunpack.c.l.b16 %v232
        %v363 = vunpack.c.l.b16 %v233
        %v364 = vunpack.c.l.b16 %v234
        %v365 = vunpack.c.l.b16 %v235
        %v366 = vunpack.c.l.b16 %v236
        %v367 = vunpack.c.l.b16 %v237
        %v368 = vunpack.c.l.b16 %v238
        %v369 = vunpack.c.l.b16 %v239
        %v370 = vunpack.c.l.b16 %v240
        %v371 = vunpack.c.l.b16 %v241
        %v372 = vunpack.c.l.b16 %v242
        %v373 = vunpack.c.l.b16 %v243
        %v374 = vunpack.c.l.b16 %v244
        %v375 = vunpack.c.l.b16 %v245
        %v376 = vunpack.c.l.b16 %v246
        %v377 = vunpack.c.l.b16 %v247
        %v378 = vunpack.c.l.b16 %v248
        %v379 = vunpack.c.l.b16 %v249
        %v380 = vunpack.c.l.b16 %v250
        %v381 = vunpack.c.l.b16 %v251
        %v382 = vpack.c.b16 %v319, %v318
        %v383 = vpack.c.b16 %v321, %v320
        %v384 = vpack.c.b16 %v323, %v322
        %v385 = vpack.c.b16 %v325, %v324
        %v386 = vpack.c.b16 %v327, %v326
        %v387 = vpack.c.b16 %v329, %v328
        %v388 = vpack.c.b16 %v331, %v330
        %v389 = vpack.c.b16 %v333, %v332
        %v390 = vpack.c.b16 %v335, %v334
        %v391 = vpack.c.b16 %v337, %v336
        %v392 = vpack.c.b16 %v339, %v338
        %v393 = vpack.c.b16 %v341, %v340
        %v394 = vpack.c.b16 %v343, %v342
        %v395 = vpack.c.b16 %v345, %v344
        %v396 = vpack.c.b16 %v347, %v346
        %v397 = vpack.c.b16 %v349, %v348
        %v398 = vpack.c.b16 %v351, %v350
        %v399 = vpack.c.b16 %v353, %v352
        %v400 = vpack.c.b16 %v355, %v354
        %v401 = vpack.c.b16 %v357, %v356
        %v402 = vpack.c.b16 %v359, %v358
        %v403 = vpack.c.b16 %v361, %v360
        %v404 = vpack.c.b16 %v363, %v362
        %v405 = vpack.c.b16 %v365, %v364
        %v406 = vpack.c.b16 %v367, %v366
        %v407 = vpack.c.b16 %v369, %v368
        %v408 = vpack.c.b16 %v371, %v370
        %v409 = vpack.c.b16 %v373, %v372
        %v410 = vpack.c.b16 %v375, %v374
        %v411 = vpack.c.b16 %v377, %v376
        %v412 = vpack.c.b16 %v379, %v378
        %v413 = vpack.c.b16 %v381, %v380
        %v416 = vunpack.c.l.b16 %v252
        %v417 = vunpack.c.l.b16 %v253
        %v418 = vpack.c.b16 %v417, %v416
        %vm420 = vcmask 130048
        %v422 = vsel %vm420, %v382, 0
        %v425 = vsel %vm420, %v383, 0
        %v428 = vsel %vm420, %v384, 0
        %v431 = vsel %vm420, %v385, 0
        %v434 = vsel %vm420, %v386, 0
        %v437 = vsel %vm420, %v387, 0
        %v440 = vsel %vm420, %v388, 0
        %v443 = vsel %vm420, %v389, 0
        %v446 = vsel %vm420, %v390, 0
        %v449 = vsel %vm420, %v391, 0
        %v452 = vsel %vm420, %v392, 0
        %v455 = vsel %vm420, %v393, 0
        %v458 = vsel %vm420, %v394, 0
        %v461 = vsel %vm420, %v395, 0
        %v464 = vsel %vm420, %v396, 0
        %v467 = vsel %vm420, %v397, 0
        %v470 = vsel %vm420, %v398, 0
        %v473 = vsel %vm420, %v399, 0
        %v476 = vsel %vm420, %v400, 0
        %v479 = vsel %vm420, %v401, 0
        %v482 = vsel %vm420, %v402, 0
        %v485 = vsel %vm420, %v403, 0
        %v488 = vsel %vm420, %v404, 0
        %v491 = vsel %vm420, %v405, 0
        %v494 = vsel %vm420, %v406, 0
        %v497 = vsel %vm420, %v407, 0
        %v500 = vsel %vm420, %v408, 0
        %v503 = vsel %vm420, %v409, 0
        %v506 = vsel %vm420, %v410, 0
        %v509 = vsel %vm420, %v411, 0
        %v512 = vsel %vm420, %v412, 0
        %v515 = vsel %vm420, %v413, 0
        %517 = vmatprep.subr.bf16.mxu0 0
        %518 = vmatpush1.bf16.msra.mxu0 0
        %519 = vmatprep.subr.bf16.mxu0 0
        %520 = vmatpush1.bf16.msra.mxu0 0
        %521 = vmatprep.subr.bf16.mxu0 0
        %522 = vmatpush1.bf16.msra.mxu0 0
        %523 = vmatprep.subr.bf16.mxu0 0
        %524 = vmatpush1.bf16.msra.mxu0 0
        %525 = vmatprep.subr.bf16.mxu0 0
        %526 = vmatpush1.bf16.msra.mxu0 0
        %527 = vmatprep.subr.bf16.mxu0 0
        %528 = vmatpush1.bf16.msra.mxu0 0
        %529 = vmatprep.subr.bf16.mxu0 0
        %530 = vmatpush1.bf16.msra.mxu0 0
        %531 = vmatprep.subr.bf16.mxu0 0
        %532 = vmatpush1.bf16.msra.mxu0 %v418
        %533 = vmatprep.subr.bf16.mxu0 0
        %534 = vmatpush2.bf16.msra.mxu0 0
        %535 = vmatprep.subr.bf16.mxu0 0
        %536 = vmatpush2.bf16.msra.mxu0 0
        %537 = vmatprep.subr.bf16.mxu0 0
        %538 = vmatpush2.bf16.msra.mxu0 0
        %539 = vmatprep.subr.bf16.mxu0 0
        %540 = vmatpush2.bf16.msra.mxu0 0
        %541 = vmatprep.subr.bf16.mxu0 0
        %542 = vmatpush2.bf16.msra.mxu0 0
        %543 = vmatprep.subr.bf16.mxu0 0
        %544 = vmatpush2.bf16.msra.mxu0 0
        %545 = vmatprep.subr.bf16.mxu0 0
        %546 = vmatpush2.bf16.msra.mxu0 0
        %547 = vmatprep.subr.bf16.mxu0 0
        %548 = vmatpush2.bf16.msra.mxu0 0
        %549 = vmatprep.mubr.bf16.mxu0 0
        %550 = vmatmul.mubr.bf16.gmra.mxu0 %v422
        %v551 = vpop.f32.mrf.mxu0
        %v552 = vadd.f32 0.0, %v551
        %v553 = vpop.f32.mrf.mxu0
        %v554 = vpop.f32.mrf.mxu0
        %v555 = vadd.f32 0.0, %v554
        %v556 = vpop.f32.mrf.mxu0
        %557 = vmatprep.mubr.bf16.mxu0 0
        %558 = vmatmul.mubr.bf16.gmra.mxu0 %v425
        %v559 = vpop.f32.mrf.mxu0
        %v560 = vadd.f32 0.0, %v559
        %v561 = vpop.f32.mrf.mxu0
        %v562 = vpop.f32.mrf.mxu0
        %v563 = vadd.f32 0.0, %v562
        %v564 = vpop.f32.mrf.mxu0
        %565 = vmatprep.mubr.bf16.mxu0 0
        %566 = vmatmul.mubr.bf16.gmra.mxu0 %v428
        %v567 = vpop.f32.mrf.mxu0
        %v568 = vadd.f32 0.0, %v567
        %v569 = vpop.f32.mrf.mxu0
        %v570 = vpop.f32.mrf.mxu0
        %v571 = vadd.f32 0.0, %v570
        %v572 = vpop.f32.mrf.mxu0
        %573 = vmatprep.mubr.bf16.mxu0 0
        %574 = vmatmul.mubr.bf16.gmra.mxu0 %v431
        %v575 = vpop.f32.mrf.mxu0
        %v576 = vadd.f32 0.0, %v575
        %v577 = vpop.f32.mrf.mxu0
        %v578 = vpop.f32.mrf.mxu0
        %v579 = vadd.f32 0.0, %v578
        %v580 = vpop.f32.mrf.mxu0
        %581 = vmatprep.mubr.bf16.mxu0 0
        %582 = vmatmul.mubr.bf16.gmra.mxu0 %v434
        %v583 = vpop.f32.mrf.mxu0
        %v584 = vadd.f32 0.0, %v583
        %v585 = vpop.f32.mrf.mxu0
        %v586 = vpop.f32.mrf.mxu0
        %v587 = vadd.f32 0.0, %v586
        %v588 = vpop.f32.mrf.mxu0
        %589 = vmatprep.mubr.bf16.mxu0 0
        %590 = vmatmul.mubr.bf16.gmra.mxu0 %v437
        %v591 = vpop.f32.mrf.mxu0
        %v592 = vadd.f32 0.0, %v591
        %v593 = vpop.f32.mrf.mxu0
        %v594 = vpop.f32.mrf.mxu0
        %v595 = vadd.f32 0.0, %v594
        %v596 = vpop.f32.mrf.mxu0
        %597 = vmatprep.mubr.bf16.mxu0 0
        %598 = vmatmul.mubr.bf16.gmra.mxu0 %v440
        %v599 = vpop.f32.mrf.mxu0
        %v600 = vadd.f32 0.0, %v599
        %v601 = vpop.f32.mrf.mxu0
        %v602 = vpop.f32.mrf.mxu0
        %v603 = vadd.f32 0.0, %v602
        %v604 = vpop.f32.mrf.mxu0
        %605 = vmatprep.mubr.bf16.mxu0 0
        %606 = vmatmul.mubr.bf16.gmra.mxu0 %v443
        %v607 = vpop.f32.mrf.mxu0
        %v608 = vadd.f32 0.0, %v607
        %v609 = vpop.f32.mrf.mxu0
        %v610 = vpop.f32.mrf.mxu0
        %v611 = vadd.f32 0.0, %v610
        %v612 = vpop.f32.mrf.mxu0
        %613 = vmatprep.mubr.bf16.mxu0 0
        %614 = vmatmul.mubr.bf16.gmra.mxu0 %v446
        %v615 = vpop.f32.mrf.mxu0
        %v616 = vadd.f32 0.0, %v615
        %v617 = vpop.f32.mrf.mxu0
        %v618 = vpop.f32.mrf.mxu0
        %v619 = vadd.f32 0.0, %v618
        %v620 = vpop.f32.mrf.mxu0
        %621 = vmatprep.mubr.bf16.mxu0 0
        %622 = vmatmul.mubr.bf16.gmra.mxu0 %v449
        %v623 = vpop.f32.mrf.mxu0
        %v624 = vadd.f32 0.0, %v623
        %v625 = vpop.f32.mrf.mxu0
        %v626 = vpop.f32.mrf.mxu0
        %v627 = vadd.f32 0.0, %v626
        %v628 = vpop.f32.mrf.mxu0
        %629 = vmatprep.mubr.bf16.mxu0 0
        %630 = vmatmul.mubr.bf16.gmra.mxu0 %v452
        %v631 = vpop.f32.mrf.mxu0
        %v632 = vadd.f32 0.0, %v631
        %v633 = vpop.f32.mrf.mxu0
        %v634 = vpop.f32.mrf.mxu0
        %v635 = vadd.f32 0.0, %v634
        %v636 = vpop.f32.mrf.mxu0
        %637 = vmatprep.mubr.bf16.mxu0 0
        %638 = vmatmul.mubr.bf16.gmra.mxu0 %v455
        %v639 = vpop.f32.mrf.mxu0
        %v640 = vadd.f32 0.0, %v639
        %v641 = vpop.f32.mrf.mxu0
        %v642 = vpop.f32.mrf.mxu0
        %v643 = vadd.f32 0.0, %v642
        %v644 = vpop.f32.mrf.mxu0
        %645 = vmatprep.mubr.bf16.mxu0 0
        %646 = vmatmul.mubr.bf16.gmra.mxu0 %v458
        %v647 = vpop.f32.mrf.mxu0
        %v648 = vadd.f32 0.0, %v647
        %v649 = vpop.f32.mrf.mxu0
        %v650 = vpop.f32.mrf.mxu0
        %v651 = vadd.f32 0.0, %v650
        %v652 = vpop.f32.mrf.mxu0
        %653 = vmatprep.mubr.bf16.mxu0 0
        %654 = vmatmul.mubr.bf16.gmra.mxu0 %v461
        %v655 = vpop.f32.mrf.mxu0
        %v656 = vadd.f32 0.0, %v655
        %v657 = vpop.f32.mrf.mxu0
        %v658 = vpop.f32.mrf.mxu0
        %v659 = vadd.f32 0.0, %v658
        %v660 = vpop.f32.mrf.mxu0
        %661 = vmatprep.mubr.bf16.mxu0 0
        %662 = vmatmul.mubr.bf16.gmra.mxu0 %v464
        %v663 = vpop.f32.mrf.mxu0
        %v664 = vadd.f32 0.0, %v663
        %v665 = vpop.f32.mrf.mxu0
        %v666 = vpop.f32.mrf.mxu0
        %v667 = vadd.f32 0.0, %v666
        %v668 = vpop.f32.mrf.mxu0
        %669 = vmatprep.mubr.bf16.mxu0 0
        %670 = vmatmul.mubr.bf16.gmra.mxu0 %v467
        %v671 = vpop.f32.mrf.mxu0
        %v672 = vadd.f32 0.0, %v671
        %v673 = vpop.f32.mrf.mxu0
        %v674 = vpop.f32.mrf.mxu0
        %v675 = vadd.f32 0.0, %v674
        %v676 = vpop.f32.mrf.mxu0
        %677 = vmatprep.mubr.bf16.mxu0 0
        %678 = vmatmul.mubr.bf16.gmra.mxu0 %v470
        %v679 = vpop.f32.mrf.mxu0
        %v680 = vadd.f32 0.0, %v679
        %v681 = vpop.f32.mrf.mxu0
        %v682 = vpop.f32.mrf.mxu0
        %v683 = vadd.f32 0.0, %v682
        %v684 = vpop.f32.mrf.mxu0
        %685 = vmatprep.mubr.bf16.mxu0 0
        %686 = vmatmul.mubr.bf16.gmra.mxu0 %v473
        %v687 = vpop.f32.mrf.mxu0
        %v688 = vadd.f32 0.0, %v687
        %v689 = vpop.f32.mrf.mxu0
        %v690 = vpop.f32.mrf.mxu0
        %v691 = vadd.f32 0.0, %v690
        %v692 = vpop.f32.mrf.mxu0
        %693 = vmatprep.mubr.bf16.mxu0 0
        %694 = vmatmul.mubr.bf16.gmra.mxu0 %v476
        %v695 = vpop.f32.mrf.mxu0
        %v696 = vadd.f32 0.0, %v695
        %v697 = vpop.f32.mrf.mxu0
        %v698 = vpop.f32.mrf.mxu0
        %v699 = vadd.f32 0.0, %v698
        %v700 = vpop.f32.mrf.mxu0
        %701 = vmatprep.mubr.bf16.mxu0 0
        %702 = vmatmul.mubr.bf16.gmra.mxu0 %v479
        %v703 = vpop.f32.mrf.mxu0
        %v704 = vadd.f32 0.0, %v703
        %v705 = vpop.f32.mrf.mxu0
        %v706 = vpop.f32.mrf.mxu0
        %v707 = vadd.f32 0.0, %v706
        %v708 = vpop.f32.mrf.mxu0
        %709 = vmatprep.mubr.bf16.mxu0 0
        %710 = vmatmul.mubr.bf16.gmra.mxu0 %v482
        %v711 = vpop.f32.mrf.mxu0
        %v712 = vadd.f32 0.0, %v711
        %v713 = vpop.f32.mrf.mxu0
        %v714 = vpop.f32.mrf.mxu0
        %v715 = vadd.f32 0.0, %v714
        %v716 = vpop.f32.mrf.mxu0
        %717 = vmatprep.mubr.bf16.mxu0 0
        %718 = vmatmul.mubr.bf16.gmra.mxu0 %v485
        %v719 = vpop.f32.mrf.mxu0
        %v720 = vadd.f32 0.0, %v719
        %v721 = vpop.f32.mrf.mxu0
        %v722 = vpop.f32.mrf.mxu0
        %v723 = vadd.f32 0.0, %v722
        %v724 = vpop.f32.mrf.mxu0
        %725 = vmatprep.mubr.bf16.mxu0 0
        %726 = vmatmul.mubr.bf16.gmra.mxu0 %v488
        %v727 = vpop.f32.mrf.mxu0
        %v728 = vadd.f32 0.0, %v727
        %v729 = vpop.f32.mrf.mxu0
        %v730 = vpop.f32.mrf.mxu0
        %v731 = vadd.f32 0.0, %v730
        %v732 = vpop.f32.mrf.mxu0
        %733 = vmatprep.mubr.bf16.mxu0 0
        %734 = vmatmul.mubr.bf16.gmra.mxu0 %v491
        %v735 = vpop.f32.mrf.mxu0
        %v736 = vadd.f32 0.0, %v735
        %v737 = vpop.f32.mrf.mxu0
        %v738 = vpop.f32.mrf.mxu0
        %v739 = vadd.f32 0.0, %v738
        %v740 = vpop.f32.mrf.mxu0
        %741 = vmatprep.mubr.bf16.mxu0 0
        %742 = vmatmul.mubr.bf16.gmra.mxu0 %v494
        %v743 = vpop.f32.mrf.mxu0
        %v744 = vadd.f32 0.0, %v743
        %v745 = vpop.f32.mrf.mxu0
        %v746 = vpop.f32.mrf.mxu0
        %v747 = vadd.f32 0.0, %v746
        %v748 = vpop.f32.mrf.mxu0
        %749 = vmatprep.mubr.bf16.mxu0 0
        %750 = vmatmul.mubr.bf16.gmra.mxu0 %v497
        %v751 = vpop.f32.mrf.mxu0
        %v752 = vadd.f32 0.0, %v751
        %v753 = vpop.f32.mrf.mxu0
        %v754 = vpop.f32.mrf.mxu0
        %v755 = vadd.f32 0.0, %v754
        %v756 = vpop.f32.mrf.mxu0
        %757 = vmatprep.mubr.bf16.mxu0 0
        %758 = vmatmul.mubr.bf16.gmra.mxu0 %v500
        %v759 = vpop.f32.mrf.mxu0
        %v760 = vadd.f32 0.0, %v759
        %v761 = vpop.f32.mrf.mxu0
        %v762 = vpop.f32.mrf.mxu0
        %v763 = vadd.f32 0.0, %v762
        %v764 = vpop.f32.mrf.mxu0
        %765 = vmatprep.mubr.bf16.mxu0 0
        %766 = vmatmul.mubr.bf16.gmra.mxu0 %v503
        %v767 = vpop.f32.mrf.mxu0
        %v768 = vadd.f32 0.0, %v767
        %v769 = vpop.f32.mrf.mxu0
        %v770 = vpop.f32.mrf.mxu0
        %v771 = vadd.f32 0.0, %v770
        %v772 = vpop.f32.mrf.mxu0
        %773 = vmatprep.mubr.bf16.mxu0 0
        %774 = vmatmul.mubr.bf16.gmra.mxu0 %v506
        %v775 = vpop.f32.mrf.mxu0
        %v776 = vadd.f32 0.0, %v775
        %v777 = vpop.f32.mrf.mxu0
        %v778 = vpop.f32.mrf.mxu0
        %v779 = vadd.f32 0.0, %v778
        %v780 = vpop.f32.mrf.mxu0
        %781 = vmatprep.mubr.bf16.mxu0 0
        %782 = vmatmul.mubr.bf16.gmra.mxu0 %v509
        %v783 = vpop.f32.mrf.mxu0
        %v784 = vadd.f32 0.0, %v783
        %v785 = vpop.f32.mrf.mxu0
        %v786 = vpop.f32.mrf.mxu0
        %v787 = vadd.f32 0.0, %v786
        %v788 = vpop.f32.mrf.mxu0
        %789 = vmatprep.mubr.bf16.mxu0 0
        %790 = vmatmul.mubr.bf16.gmra.mxu0 %v512
        %v791 = vpop.f32.mrf.mxu0
        %v792 = vadd.f32 0.0, %v791
        %v793 = vpop.f32.mrf.mxu0
        %v794 = vpop.f32.mrf.mxu0
        %v795 = vadd.f32 0.0, %v794
        %v796 = vpop.f32.mrf.mxu0
        %797 = vmatprep.mubr.bf16.mxu0 0
        %798 = vmatmul.mubr.bf16.gmra.mxu0 %v515
        %v799 = vpop.f32.mrf.mxu0
        %v800 = vadd.f32 0.0, %v799
        %v801 = vpop.f32.mrf.mxu0
        %v802 = vpop.f32.mrf.mxu0
        %v803 = vadd.f32 0.0, %v802
        %v804 = vpop.f32.mrf.mxu0
        %805 = vdwg.mxu0
        %870 = vrot.lane.b32.xlu0 %v552, 96
        %v871 = vpop.permute.xlu0 %870
        %872 = vrot.lane.b32.xlu0 %v555, 96
        %v873 = vpop.permute.xlu0 %872
        %874 = vrot.lane.b32.xlu0 %v560, 96
        %v875 = vpop.permute.xlu0 %874
        %876 = vrot.lane.b32.xlu0 %v563, 96
        %v877 = vpop.permute.xlu0 %876
        %878 = vrot.lane.b32.xlu0 %v568, 96
        %v879 = vpop.permute.xlu0 %878
        %880 = vrot.lane.b32.xlu0 %v571, 96
        %v881 = vpop.permute.xlu0 %880
        %882 = vrot.lane.b32.xlu0 %v576, 96
        %v883 = vpop.permute.xlu0 %882
        %884 = vrot.lane.b32.xlu0 %v579, 96
        %v885 = vpop.permute.xlu0 %884
        %886 = vrot.lane.b32.xlu0 %v584, 96
        %v887 = vpop.permute.xlu0 %886
        %888 = vrot.lane.b32.xlu0 %v587, 96
        %v889 = vpop.permute.xlu0 %888
        %890 = vrot.lane.b32.xlu0 %v592, 96
        %v891 = vpop.permute.xlu0 %890
        %892 = vrot.lane.b32.xlu0 %v595, 96
        %v893 = vpop.permute.xlu0 %892
        %894 = vrot.lane.b32.xlu0 %v600, 96
        %v895 = vpop.permute.xlu0 %894
        %896 = vrot.lane.b32.xlu0 %v603, 96
        %v897 = vpop.permute.xlu0 %896
        %898 = vrot.lane.b32.xlu0 %v608, 96
        %v899 = vpop.permute.xlu0 %898
        %900 = vrot.lane.b32.xlu0 %v611, 96
        %v901 = vpop.permute.xlu0 %900
        %902 = vrot.lane.b32.xlu0 %v616, 96
        %v903 = vpop.permute.xlu0 %902
        %904 = vrot.lane.b32.xlu0 %v619, 96
        %v905 = vpop.permute.xlu0 %904
        %906 = vrot.lane.b32.xlu0 %v624, 96
        %v907 = vpop.permute.xlu0 %906
        %908 = vrot.lane.b32.xlu0 %v627, 96
        %v909 = vpop.permute.xlu0 %908
        %910 = vrot.lane.b32.xlu0 %v632, 96
        %v911 = vpop.permute.xlu0 %910
        %912 = vrot.lane.b32.xlu0 %v635, 96
        %v913 = vpop.permute.xlu0 %912
        %914 = vrot.lane.b32.xlu0 %v640, 96
        %v915 = vpop.permute.xlu0 %914
        %916 = vrot.lane.b32.xlu0 %v643, 96
        %v917 = vpop.permute.xlu0 %916
        %918 = vrot.lane.b32.xlu0 %v648, 96
        %v919 = vpop.permute.xlu0 %918
        %920 = vrot.lane.b32.xlu0 %v651, 96
        %v921 = vpop.permute.xlu0 %920
        %922 = vrot.lane.b32.xlu0 %v656, 96
        %v923 = vpop.permute.xlu0 %922
        %924 = vrot.lane.b32.xlu0 %v659, 96
        %v925 = vpop.permute.xlu0 %924
        %926 = vrot.lane.b32.xlu0 %v664, 96
        %v927 = vpop.permute.xlu0 %926
        %928 = vrot.lane.b32.xlu0 %v667, 96
        %v929 = vpop.permute.xlu0 %928
        %930 = vrot.lane.b32.xlu0 %v672, 96
        %v931 = vpop.permute.xlu0 %930
        %932 = vrot.lane.b32.xlu0 %v675, 96
        %v933 = vpop.permute.xlu0 %932
        %934 = vrot.lane.b32.xlu0 %v680, 96
        %v935 = vpop.permute.xlu0 %934
        %936 = vrot.lane.b32.xlu0 %v683, 96
        %v937 = vpop.permute.xlu0 %936
        %938 = vrot.lane.b32.xlu0 %v688, 96
        %v939 = vpop.permute.xlu0 %938
        %940 = vrot.lane.b32.xlu0 %v691, 96
        %v941 = vpop.permute.xlu0 %940
        %942 = vrot.lane.b32.xlu0 %v696, 96
        %v943 = vpop.permute.xlu0 %942
        %944 = vrot.lane.b32.xlu0 %v699, 96
        %v945 = vpop.permute.xlu0 %944
        %946 = vrot.lane.b32.xlu0 %v704, 96
        %v947 = vpop.permute.xlu0 %946
        %948 = vrot.lane.b32.xlu0 %v707, 96
        %v949 = vpop.permute.xlu0 %948
        %950 = vrot.lane.b32.xlu0 %v712, 96
        %v951 = vpop.permute.xlu0 %950
        %952 = vrot.lane.b32.xlu0 %v715, 96
        %v953 = vpop.permute.xlu0 %952
        %954 = vrot.lane.b32.xlu0 %v720, 96
        %v955 = vpop.permute.xlu0 %954
        %956 = vrot.lane.b32.xlu0 %v723, 96
        %v957 = vpop.permute.xlu0 %956
        %958 = vrot.lane.b32.xlu0 %v728, 96
        %v959 = vpop.permute.xlu0 %958
        %960 = vrot.lane.b32.xlu0 %v731, 96
        %v961 = vpop.permute.xlu0 %960
        %962 = vrot.lane.b32.xlu0 %v736, 96
        %v963 = vpop.permute.xlu0 %962
        %964 = vrot.lane.b32.xlu0 %v739, 96
        %v965 = vpop.permute.xlu0 %964
        %966 = vrot.lane.b32.xlu0 %v744, 96
        %v967 = vpop.permute.xlu0 %966
        %968 = vrot.lane.b32.xlu0 %v747, 96
        %v969 = vpop.permute.xlu0 %968
        %970 = vrot.lane.b32.xlu0 %v752, 96
        %v971 = vpop.permute.xlu0 %970
        %972 = vrot.lane.b32.xlu0 %v755, 96
        %v973 = vpop.permute.xlu0 %972
        %974 = vrot.lane.b32.xlu0 %v760, 96
        %v975 = vpop.permute.xlu0 %974
        %976 = vrot.lane.b32.xlu0 %v763, 96
        %v977 = vpop.permute.xlu0 %976
        %978 = vrot.lane.b32.xlu0 %v768, 96
        %v979 = vpop.permute.xlu0 %978
        %980 = vrot.lane.b32.xlu0 %v771, 96
        %v981 = vpop.permute.xlu0 %980
        %982 = vrot.lane.b32.xlu0 %v776, 96
        %v983 = vpop.permute.xlu0 %982
        %984 = vrot.lane.b32.xlu0 %v779, 96
        %v985 = vpop.permute.xlu0 %984
        %986 = vrot.lane.b32.xlu0 %v784, 96
        %v987 = vpop.permute.xlu0 %986
        %988 = vrot.lane.b32.xlu0 %v787, 96
        %v989 = vpop.permute.xlu0 %988
        %990 = vrot.lane.b32.xlu0 %v792, 96
        %v991 = vpop.permute.xlu0 %990
        %992 = vrot.lane.b32.xlu0 %v795, 96
        %v993 = vpop.permute.xlu0 %992
        %994 = vrot.lane.b32.xlu0 %v800, 96
        %v995 = vpop.permute.xlu0 %994
        %996 = vrot.lane.b32.xlu0 %v803, 96
        %v997 = vpop.permute.xlu0 %996
        %v1062 = vmax.f32 %v552, %v871
        %v1063 = vmax.f32 %v555, %v873
        %v1064 = vmax.f32 %v560, %v875
        %v1065 = vmax.f32 %v563, %v877
        %v1066 = vmax.f32 %v568, %v879
        %v1067 = vmax.f32 %v571, %v881
        %v1068 = vmax.f32 %v576, %v883
        %v1069 = vmax.f32 %v579, %v885
        %v1070 = vmax.f32 %v584, %v887
        %v1071 = vmax.f32 %v587, %v889
        %v1072 = vmax.f32 %v592, %v891
        %v1073 = vmax.f32 %v595, %v893
        %v1074 = vmax.f32 %v600, %v895
        %v1075 = vmax.f32 %v603, %v897
        %v1076 = vmax.f32 %v608, %v899
        %v1077 = vmax.f32 %v611, %v901
        %v1078 = vmax.f32 %v616, %v903
        %v1079 = vmax.f32 %v619, %v905
        %v1080 = vmax.f32 %v624, %v907
        %v1081 = vmax.f32 %v627, %v909
        %v1082 = vmax.f32 %v632, %v911
        %v1083 = vmax.f32 %v635, %v913
        %v1084 = vmax.f32 %v640, %v915
        %v1085 = vmax.f32 %v643, %v917
        %v1086 = vmax.f32 %v648, %v919
        %v1087 = vmax.f32 %v651, %v921
        %v1088 = vmax.f32 %v656, %v923
        %v1089 = vmax.f32 %v659, %v925
        %v1090 = vmax.f32 %v664, %v927
        %v1091 = vmax.f32 %v667, %v929
        %v1092 = vmax.f32 %v672, %v931
        %v1093 = vmax.f32 %v675, %v933
        %v1094 = vmax.f32 %v680, %v935
        %v1095 = vmax.f32 %v683, %v937
        %v1096 = vmax.f32 %v688, %v939
        %v1097 = vmax.f32 %v691, %v941
        %v1098 = vmax.f32 %v696, %v943
        %v1099 = vmax.f32 %v699, %v945
        %v1100 = vmax.f32 %v704, %v947
        %v1101 = vmax.f32 %v707, %v949
        %v1102 = vmax.f32 %v712, %v951
        %v1103 = vmax.f32 %v715, %v953
        %v1104 = vmax.f32 %v720, %v955
        %v1105 = vmax.f32 %v723, %v957
        %v1106 = vmax.f32 %v728, %v959
        %v1107 = vmax.f32 %v731, %v961
        %v1108 = vmax.f32 %v736, %v963
        %v1109 = vmax.f32 %v739, %v965
        %v1110 = vmax.f32 %v744, %v967
        %v1111 = vmax.f32 %v747, %v969
        %v1112 = vmax.f32 %v752, %v971
        %v1113 = vmax.f32 %v755, %v973
        %v1114 = vmax.f32 %v760, %v975
        %v1115 = vmax.f32 %v763, %v977
        %v1116 = vmax.f32 %v768, %v979
        %v1117 = vmax.f32 %v771, %v981
        %v1118 = vmax.f32 %v776, %v983
        %v1119 = vmax.f32 %v779, %v985
        %v1120 = vmax.f32 %v784, %v987
        %v1121 = vmax.f32 %v787, %v989
        %v1122 = vmax.f32 %v792, %v991
        %v1123 = vmax.f32 %v795, %v993
        %v1124 = vmax.f32 %v800, %v995
        %v1125 = vmax.f32 %v803, %v997
        %1190 = vrot.lane.b32.xlu0 %v1062, 64
        %v1191 = vpop.permute.xlu0 %1190
        %1192 = vrot.lane.b32.xlu0 %v1063, 64
        %v1193 = vpop.permute.xlu0 %1192
        %1194 = vrot.lane.b32.xlu0 %v1064, 64
        %v1195 = vpop.permute.xlu0 %1194
        %1196 = vrot.lane.b32.xlu0 %v1065, 64
        %v1197 = vpop.permute.xlu0 %1196
        %1198 = vrot.lane.b32.xlu0 %v1066, 64
        %v1199 = vpop.permute.xlu0 %1198
        %1200 = vrot.lane.b32.xlu0 %v1067, 64
        %v1201 = vpop.permute.xlu0 %1200
        %1202 = vrot.lane.b32.xlu0 %v1068, 64
        %v1203 = vpop.permute.xlu0 %1202
        %1204 = vrot.lane.b32.xlu0 %v1069, 64
        %v1205 = vpop.permute.xlu0 %1204
        %1206 = vrot.lane.b32.xlu0 %v1070, 64
        %v1207 = vpop.permute.xlu0 %1206
        %1208 = vrot.lane.b32.xlu0 %v1071, 64
        %v1209 = vpop.permute.xlu0 %1208
        %1210 = vrot.lane.b32.xlu0 %v1072, 64
        %v1211 = vpop.permute.xlu0 %1210
        %1212 = vrot.lane.b32.xlu0 %v1073, 64
        %v1213 = vpop.permute.xlu0 %1212
        %1214 = vrot.lane.b32.xlu0 %v1074, 64
        %v1215 = vpop.permute.xlu0 %1214
        %1216 = vrot.lane.b32.xlu0 %v1075, 64
        %v1217 = vpop.permute.xlu0 %1216
        %1218 = vrot.lane.b32.xlu0 %v1076, 64
        %v1219 = vpop.permute.xlu0 %1218
        %1220 = vrot.lane.b32.xlu0 %v1077, 64
        %v1221 = vpop.permute.xlu0 %1220
        %1222 = vrot.lane.b32.xlu0 %v1078, 64
        %v1223 = vpop.permute.xlu0 %1222
        %1224 = vrot.lane.b32.xlu0 %v1079, 64
        %v1225 = vpop.permute.xlu0 %1224
        %1226 = vrot.lane.b32.xlu0 %v1080, 64
        %v1227 = vpop.permute.xlu0 %1226
        %1228 = vrot.lane.b32.xlu0 %v1081, 64
        %v1229 = vpop.permute.xlu0 %1228
        %1230 = vrot.lane.b32.xlu0 %v1082, 64
        %v1231 = vpop.permute.xlu0 %1230
        %1232 = vrot.lane.b32.xlu0 %v1083, 64
        %v1233 = vpop.permute.xlu0 %1232
        %1234 = vrot.lane.b32.xlu0 %v1084, 64
        %v1235 = vpop.permute.xlu0 %1234
        %1236 = vrot.lane.b32.xlu0 %v1085, 64
        %v1237 = vpop.permute.xlu0 %1236
        %1238 = vrot.lane.b32.xlu0 %v1086, 64
        %v1239 = vpop.permute.xlu0 %1238
        %1240 = vrot.lane.b32.xlu0 %v1087, 64
        %v1241 = vpop.permute.xlu0 %1240
        %1242 = vrot.lane.b32.xlu0 %v1088, 64
        %v1243 = vpop.permute.xlu0 %1242
        %1244 = vrot.lane.b32.xlu0 %v1089, 64
        %v1245 = vpop.permute.xlu0 %1244
        %1246 = vrot.lane.b32.xlu0 %v1090, 64
        %v1247 = vpop.permute.xlu0 %1246
        %1248 = vrot.lane.b32.xlu0 %v1091, 64
        %v1249 = vpop.permute.xlu0 %1248
        %1250 = vrot.lane.b32.xlu0 %v1092, 64
        %v1251 = vpop.permute.xlu0 %1250
        %1252 = vrot.lane.b32.xlu0 %v1093, 64
        %v1253 = vpop.permute.xlu0 %1252
        %1254 = vrot.lane.b32.xlu0 %v1094, 64
        %v1255 = vpop.permute.xlu0 %1254
        %1256 = vrot.lane.b32.xlu0 %v1095, 64
        %v1257 = vpop.permute.xlu0 %1256
        %1258 = vrot.lane.b32.xlu0 %v1096, 64
        %v1259 = vpop.permute.xlu0 %1258
        %1260 = vrot.lane.b32.xlu0 %v1097, 64
        %v1261 = vpop.permute.xlu0 %1260
        %1262 = vrot.lane.b32.xlu0 %v1098, 64
        %v1263 = vpop.permute.xlu0 %1262
        %1264 = vrot.lane.b32.xlu0 %v1099, 64
        %v1265 = vpop.permute.xlu0 %1264
        %1266 = vrot.lane.b32.xlu0 %v1100, 64
        %v1267 = vpop.permute.xlu0 %1266
        %1268 = vrot.lane.b32.xlu0 %v1101, 64
        %v1269 = vpop.permute.xlu0 %1268
        %1270 = vrot.lane.b32.xlu0 %v1102, 64
        %v1271 = vpop.permute.xlu0 %1270
        %1272 = vrot.lane.b32.xlu0 %v1103, 64
        %v1273 = vpop.permute.xlu0 %1272
        %1274 = vrot.lane.b32.xlu0 %v1104, 64
        %v1275 = vpop.permute.xlu0 %1274
        %1276 = vrot.lane.b32.xlu0 %v1105, 64
        %v1277 = vpop.permute.xlu0 %1276
        %1278 = vrot.lane.b32.xlu0 %v1106, 64
        %v1279 = vpop.permute.xlu0 %1278
        %1280 = vrot.lane.b32.xlu0 %v1107, 64
        %v1281 = vpop.permute.xlu0 %1280
        %1282 = vrot.lane.b32.xlu0 %v1108, 64
        %v1283 = vpop.permute.xlu0 %1282
        %1284 = vrot.lane.b32.xlu0 %v1109, 64
        %v1285 = vpop.permute.xlu0 %1284
        %1286 = vrot.lane.b32.xlu0 %v1110, 64
        %v1287 = vpop.permute.xlu0 %1286
        %1288 = vrot.lane.b32.xlu0 %v1111, 64
        %v1289 = vpop.permute.xlu0 %1288
        %1290 = vrot.lane.b32.xlu0 %v1112, 64
        %v1291 = vpop.permute.xlu0 %1290
        %1292 = vrot.lane.b32.xlu0 %v1113, 64
        %v1293 = vpop.permute.xlu0 %1292
        %1294 = vrot.lane.b32.xlu0 %v1114, 64
        %v1295 = vpop.permute.xlu0 %1294
        %1296 = vrot.lane.b32.xlu0 %v1115, 64
        %v1297 = vpop.permute.xlu0 %1296
        %1298 = vrot.lane.b32.xlu0 %v1116, 64
        %v1299 = vpop.permute.xlu0 %1298
        %1300 = vrot.lane.b32.xlu0 %v1117, 64
        %v1301 = vpop.permute.xlu0 %1300
        %1302 = vrot.lane.b32.xlu0 %v1118, 64
        %v1303 = vpop.permute.xlu0 %1302
        %1304 = vrot.lane.b32.xlu0 %v1119, 64
        %v1305 = vpop.permute.xlu0 %1304
        %1306 = vrot.lane.b32.xlu0 %v1120, 64
        %v1307 = vpop.permute.xlu0 %1306
        %1308 = vrot.lane.b32.xlu0 %v1121, 64
        %v1309 = vpop.permute.xlu0 %1308
        %1310 = vrot.lane.b32.xlu0 %v1122, 64
        %v1311 = vpop.permute.xlu0 %1310
        %1312 = vrot.lane.b32.xlu0 %v1123, 64
        %v1313 = vpop.permute.xlu0 %1312
        %1314 = vrot.lane.b32.xlu0 %v1124, 64
        %v1315 = vpop.permute.xlu0 %1314
        %1316 = vrot.lane.b32.xlu0 %v1125, 64
        %v1317 = vpop.permute.xlu0 %1316
        %v1382 = vmax.f32 %v1062, %v1191
        %v1383 = vmax.f32 %v1063, %v1193
        %v1384 = vmax.f32 %v1064, %v1195
        %v1385 = vmax.f32 %v1065, %v1197
        %v1386 = vmax.f32 %v1066, %v1199
        %v1387 = vmax.f32 %v1067, %v1201
        %v1388 = vmax.f32 %v1068, %v1203
        %v1389 = vmax.f32 %v1069, %v1205
        %v1390 = vmax.f32 %v1070, %v1207
        %v1391 = vmax.f32 %v1071, %v1209
        %v1392 = vmax.f32 %v1072, %v1211
        %v1393 = vmax.f32 %v1073, %v1213
        %v1394 = vmax.f32 %v1074, %v1215
        %v1395 = vmax.f32 %v1075, %v1217
        %v1396 = vmax.f32 %v1076, %v1219
        %v1397 = vmax.f32 %v1077, %v1221
        %v1398 = vmax.f32 %v1078, %v1223
        %v1399 = vmax.f32 %v1079, %v1225
        %v1400 = vmax.f32 %v1080, %v1227
        %v1401 = vmax.f32 %v1081, %v1229
        %v1402 = vmax.f32 %v1082, %v1231
        %v1403 = vmax.f32 %v1083, %v1233
        %v1404 = vmax.f32 %v1084, %v1235
        %v1405 = vmax.f32 %v1085, %v1237
        %v1406 = vmax.f32 %v1086, %v1239
        %v1407 = vmax.f32 %v1087, %v1241
        %v1408 = vmax.f32 %v1088, %v1243
        %v1409 = vmax.f32 %v1089, %v1245
        %v1410 = vmax.f32 %v1090, %v1247
        %v1411 = vmax.f32 %v1091, %v1249
        %v1412 = vmax.f32 %v1092, %v1251
        %v1413 = vmax.f32 %v1093, %v1253
        %v1414 = vmax.f32 %v1094, %v1255
        %v1415 = vmax.f32 %v1095, %v1257
        %v1416 = vmax.f32 %v1096, %v1259
        %v1417 = vmax.f32 %v1097, %v1261
        %v1418 = vmax.f32 %v1098, %v1263
        %v1419 = vmax.f32 %v1099, %v1265
        %v1420 = vmax.f32 %v1100, %v1267
        %v1421 = vmax.f32 %v1101, %v1269
        %v1422 = vmax.f32 %v1102, %v1271
        %v1423 = vmax.f32 %v1103, %v1273
        %v1424 = vmax.f32 %v1104, %v1275
        %v1425 = vmax.f32 %v1105, %v1277
        %v1426 = vmax.f32 %v1106, %v1279
        %v1427 = vmax.f32 %v1107, %v1281
        %v1428 = vmax.f32 %v1108, %v1283
        %v1429 = vmax.f32 %v1109, %v1285
        %v1430 = vmax.f32 %v1110, %v1287
        %v1431 = vmax.f32 %v1111, %v1289
        %v1432 = vmax.f32 %v1112, %v1291
        %v1433 = vmax.f32 %v1113, %v1293
        %v1434 = vmax.f32 %v1114, %v1295
        %v1435 = vmax.f32 %v1115, %v1297
        %v1436 = vmax.f32 %v1116, %v1299
        %v1437 = vmax.f32 %v1117, %v1301
        %v1438 = vmax.f32 %v1118, %v1303
        %v1439 = vmax.f32 %v1119, %v1305
        %v1440 = vmax.f32 %v1120, %v1307
        %v1441 = vmax.f32 %v1121, %v1309
        %v1442 = vmax.f32 %v1122, %v1311
        %v1443 = vmax.f32 %v1123, %v1313
        %v1444 = vmax.f32 %v1124, %v1315
        %v1445 = vmax.f32 %v1125, %v1317
        %v1446 = vld [vmem:[#allocation2] sm:$0x1]
        %v1448 = vlaneseq
        %v1449 = vshrl.u32 %v1448, 7
        %v1450 = vsub.s32 0, %v1449
        %v1451 = vrot.slane %v1446, %v1450
        %v1453 = vadd.f32 %v1382, %v1451
        %v1454 = vadd.f32 %v1383, %v1451
        %v1455 = vadd.f32 %v1384, %v1451
        %v1456 = vadd.f32 %v1385, %v1451
        %v1457 = vadd.f32 %v1386, %v1451
        %v1458 = vadd.f32 %v1387, %v1451
        %v1459 = vadd.f32 %v1388, %v1451
        %v1460 = vadd.f32 %v1389, %v1451
        %v1461 = vadd.f32 %v1390, %v1451
        %v1462 = vadd.f32 %v1391, %v1451
        %v1463 = vadd.f32 %v1392, %v1451
        %v1464 = vadd.f32 %v1393, %v1451
        %v1465 = vadd.f32 %v1394, %v1451
        %v1466 = vadd.f32 %v1395, %v1451
        %v1467 = vadd.f32 %v1396, %v1451
        %v1468 = vadd.f32 %v1397, %v1451
        %v1469 = vadd.f32 %v1398, %v1451
        %v1470 = vadd.f32 %v1399, %v1451
        %v1471 = vadd.f32 %v1400, %v1451
        %v1472 = vadd.f32 %v1401, %v1451
        %v1473 = vadd.f32 %v1402, %v1451
        %v1474 = vadd.f32 %v1403, %v1451
        %v1475 = vadd.f32 %v1404, %v1451
        %v1476 = vadd.f32 %v1405, %v1451
        %v1477 = vadd.f32 %v1406, %v1451
        %v1478 = vadd.f32 %v1407, %v1451
        %v1479 = vadd.f32 %v1408, %v1451
        %v1480 = vadd.f32 %v1409, %v1451
        %v1481 = vadd.f32 %v1410, %v1451
        %v1482 = vadd.f32 %v1411, %v1451
        %v1483 = vadd.f32 %v1412, %v1451
        %v1484 = vadd.f32 %v1413, %v1451
        %v1485 = vadd.f32 %v1414, %v1451
        %v1486 = vadd.f32 %v1415, %v1451
        %v1487 = vadd.f32 %v1416, %v1451
        %v1488 = vadd.f32 %v1417, %v1451
        %v1489 = vadd.f32 %v1418, %v1451
        %v1490 = vadd.f32 %v1419, %v1451
        %v1491 = vadd.f32 %v1420, %v1451
        %v1492 = vadd.f32 %v1421, %v1451
        %v1493 = vadd.f32 %v1422, %v1451
        %v1494 = vadd.f32 %v1423, %v1451
        %v1495 = vadd.f32 %v1424, %v1451
        %v1496 = vadd.f32 %v1425, %v1451
        %v1497 = vadd.f32 %v1426, %v1451
        %v1498 = vadd.f32 %v1427, %v1451
        %v1499 = vadd.f32 %v1428, %v1451
        %v1500 = vadd.f32 %v1429, %v1451
        %v1501 = vadd.f32 %v1430, %v1451
        %v1502 = vadd.f32 %v1431, %v1451
        %v1503 = vadd.f32 %v1432, %v1451
        %v1504 = vadd.f32 %v1433, %v1451
        %v1505 = vadd.f32 %v1434, %v1451
        %v1506 = vadd.f32 %v1435, %v1451
        %v1507 = vadd.f32 %v1436, %v1451
        %v1508 = vadd.f32 %v1437, %v1451
        %v1509 = vadd.f32 %v1438, %v1451
        %v1510 = vadd.f32 %v1439, %v1451
        %v1511 = vadd.f32 %v1440, %v1451
        %v1512 = vadd.f32 %v1441, %v1451
        %v1513 = vadd.f32 %v1442, %v1451
        %v1514 = vadd.f32 %v1443, %v1451
        %v1515 = vadd.f32 %v1444, %v1451
        %v1516 = vadd.f32 %v1445, %v1451
        %v1517 = vmax.f32 %v1453, 0.0
        %v1518 = vmax.f32 %v1454, 0.0
        %v1519 = vmax.f32 %v1455, 0.0
        %v1520 = vmax.f32 %v1456, 0.0
        %v1521 = vmax.f32 %v1457, 0.0
        %v1522 = vmax.f32 %v1458, 0.0
        %v1523 = vmax.f32 %v1459, 0.0
        %v1524 = vmax.f32 %v1460, 0.0
        %v1525 = vmax.f32 %v1461, 0.0
        %v1526 = vmax.f32 %v1462, 0.0
        %v1527 = vmax.f32 %v1463, 0.0
        %v1528 = vmax.f32 %v1464, 0.0
        %v1529 = vmax.f32 %v1465, 0.0
        %v1530 = vmax.f32 %v1466, 0.0
        %v1531 = vmax.f32 %v1467, 0.0
        %v1532 = vmax.f32 %v1468, 0.0
        %v1533 = vmax.f32 %v1469, 0.0
        %v1534 = vmax.f32 %v1470, 0.0
        %v1535 = vmax.f32 %v1471, 0.0
        %v1536 = vmax.f32 %v1472, 0.0
        %v1537 = vmax.f32 %v1473, 0.0
        %v1538 = vmax.f32 %v1474, 0.0
        %v1539 = vmax.f32 %v1475, 0.0
        %v1540 = vmax.f32 %v1476, 0.0
        %v1541 = vmax.f32 %v1477, 0.0
        %v1542 = vmax.f32 %v1478, 0.0
        %v1543 = vmax.f32 %v1479, 0.0
        %v1544 = vmax.f32 %v1480, 0.0
        %v1545 = vmax.f32 %v1481, 0.0
        %v1546 = vmax.f32 %v1482, 0.0
        %v1547 = vmax.f32 %v1483, 0.0
        %v1548 = vmax.f32 %v1484, 0.0
        %v1549 = vmax.f32 %v1485, 0.0
        %v1550 = vmax.f32 %v1486, 0.0
        %v1551 = vmax.f32 %v1487, 0.0
        %v1552 = vmax.f32 %v1488, 0.0
        %v1553 = vmax.f32 %v1489, 0.0
        %v1554 = vmax.f32 %v1490, 0.0
        %v1555 = vmax.f32 %v1491, 0.0
        %v1556 = vmax.f32 %v1492, 0.0
        %v1557 = vmax.f32 %v1493, 0.0
        %v1558 = vmax.f32 %v1494, 0.0
        %v1559 = vmax.f32 %v1495, 0.0
        %v1560 = vmax.f32 %v1496, 0.0
        %v1561 = vmax.f32 %v1497, 0.0
        %v1562 = vmax.f32 %v1498, 0.0
        %v1563 = vmax.f32 %v1499, 0.0
        %v1564 = vmax.f32 %v1500, 0.0
        %v1565 = vmax.f32 %v1501, 0.0
        %v1566 = vmax.f32 %v1502, 0.0
        %v1567 = vmax.f32 %v1503, 0.0
        %v1568 = vmax.f32 %v1504, 0.0
        %v1569 = vmax.f32 %v1505, 0.0
        %v1570 = vmax.f32 %v1506, 0.0
        %v1571 = vmax.f32 %v1507, 0.0
        %v1572 = vmax.f32 %v1508, 0.0
        %v1573 = vmax.f32 %v1509, 0.0
        %v1574 = vmax.f32 %v1510, 0.0
        %v1575 = vmax.f32 %v1511, 0.0
        %v1576 = vmax.f32 %v1512, 0.0
        %v1577 = vmax.f32 %v1513, 0.0
        %v1578 = vmax.f32 %v1514, 0.0
        %v1579 = vmax.f32 %v1515, 0.0
        %v1580 = vmax.f32 %v1516, 0.0
        %v1581 = vpack.c.bf16 %v1518, %v1517
        %v1582 = vpack.c.bf16 %v1520, %v1519
        %v1583 = vpack.c.bf16 %v1522, %v1521
        %v1584 = vpack.c.bf16 %v1524, %v1523
        %v1585 = vpack.c.bf16 %v1526, %v1525
        %v1586 = vpack.c.bf16 %v1528, %v1527
        %v1587 = vpack.c.bf16 %v1530, %v1529
        %v1588 = vpack.c.bf16 %v1532, %v1531
        %v1589 = vpack.c.bf16 %v1534, %v1533
        %v1590 = vpack.c.bf16 %v1536, %v1535
        %v1591 = vpack.c.bf16 %v1538, %v1537
        %v1592 = vpack.c.bf16 %v1540, %v1539
        %v1593 = vpack.c.bf16 %v1542, %v1541
        %v1594 = vpack.c.bf16 %v1544, %v1543
        %v1595 = vpack.c.bf16 %v1546, %v1545
        %v1596 = vpack.c.bf16 %v1548, %v1547
        %v1597 = vpack.c.bf16 %v1550, %v1549
        %v1598 = vpack.c.bf16 %v1552, %v1551
        %v1599 = vpack.c.bf16 %v1554, %v1553
        %v1600 = vpack.c.bf16 %v1556, %v1555
        %v1601 = vpack.c.bf16 %v1558, %v1557
        %v1602 = vpack.c.bf16 %v1560, %v1559
        %v1603 = vpack.c.bf16 %v1562, %v1561
        %v1604 = vpack.c.bf16 %v1564, %v1563
        %v1605 = vpack.c.bf16 %v1566, %v1565
        %v1606 = vpack.c.bf16 %v1568, %v1567
        %v1607 = vpack.c.bf16 %v1570, %v1569
        %v1608 = vpack.c.bf16 %v1572, %v1571
        %v1609 = vpack.c.bf16 %v1574, %v1573
        %v1610 = vpack.c.bf16 %v1576, %v1575
        %v1611 = vpack.c.bf16 %v1578, %v1577
        %v1612 = vpack.c.bf16 %v1580, %v1579
        %v1645 = vunpack.c.l.b16 %v1581
        %v1646 = vunpack.c.h.b16 %v1581
        %v1647 = vunpack.c.l.b16 %v1582
        %v1648 = vunpack.c.h.b16 %v1582
        %v1649 = vunpack.c.l.b16 %v1583
        %v1650 = vunpack.c.h.b16 %v1583
        %v1651 = vunpack.c.l.b16 %v1584
        %v1652 = vunpack.c.h.b16 %v1584
        %v1653 = vunpack.c.l.b16 %v1585
        %v1654 = vunpack.c.h.b16 %v1585
        %v1655 = vunpack.c.l.b16 %v1586
        %v1656 = vunpack.c.h.b16 %v1586
        %v1657 = vunpack.c.l.b16 %v1587
        %v1658 = vunpack.c.h.b16 %v1587
        %v1659 = vunpack.c.l.b16 %v1588
        %v1660 = vunpack.c.h.b16 %v1588
        %v1661 = vunpack.c.l.b16 %v1589
        %v1662 = vunpack.c.h.b16 %v1589
        %v1663 = vunpack.c.l.b16 %v1590
        %v1664 = vunpack.c.h.b16 %v1590
        %v1665 = vunpack.c.l.b16 %v1591
        %v1666 = vunpack.c.h.b16 %v1591
        %v1667 = vunpack.c.l.b16 %v1592
        %v1668 = vunpack.c.h.b16 %v1592
        %v1669 = vunpack.c.l.b16 %v1593
        %v1670 = vunpack.c.h.b16 %v1593
        %v1671 = vunpack.c.l.b16 %v1594
        %v1672 = vunpack.c.h.b16 %v1594
        %v1673 = vunpack.c.l.b16 %v1595
        %v1674 = vunpack.c.h.b16 %v1595
        %v1675 = vunpack.c.l.b16 %v1596
        %v1676 = vunpack.c.h.b16 %v1596
        %v1677 = vunpack.c.l.b16 %v1597
        %v1678 = vunpack.c.h.b16 %v1597
        %v1679 = vunpack.c.l.b16 %v1598
        %v1680 = vunpack.c.h.b16 %v1598
        %v1681 = vunpack.c.l.b16 %v1599
        %v1682 = vunpack.c.h.b16 %v1599
        %v1683 = vunpack.c.l.b16 %v1600
        %v1684 = vunpack.c.h.b16 %v1600
        %v1685 = vunpack.c.l.b16 %v1601
        %v1686 = vunpack.c.h.b16 %v1601
        %v1687 = vunpack.c.l.b16 %v1602
        %v1688 = vunpack.c.h.b16 %v1602
        %v1689 = vunpack.c.l.b16 %v1603
        %v1690 = vunpack.c.h.b16 %v1603
        %v1691 = vunpack.c.l.b16 %v1604
        %v1692 = vunpack.c.h.b16 %v1604
        %v1693 = vunpack.c.l.b16 %v1605
        %v1694 = vunpack.c.h.b16 %v1605
        %v1695 = vunpack.c.l.b16 %v1606
        %v1696 = vunpack.c.h.b16 %v1606
        %v1697 = vunpack.c.l.b16 %v1607
        %v1698 = vunpack.c.h.b16 %v1607
        %v1699 = vunpack.c.l.b16 %v1608
        %v1700 = vunpack.c.h.b16 %v1608
        %v1701 = vunpack.c.l.b16 %v1609
        %v1702 = vunpack.c.h.b16 %v1609
        %v1703 = vunpack.c.l.b16 %v1610
        %v1704 = vunpack.c.h.b16 %v1610
        %v1705 = vunpack.c.l.b16 %v1611
        %v1706 = vunpack.c.h.b16 %v1611
        %v1707 = vunpack.c.l.b16 %v1612
        %v1708 = vunpack.c.h.b16 %v1612
        %v1709 = vpack.c.b16 %v1645, %v1645
        %v1710 = vpack.c.b16 %v1646, %v1646
        %v1711 = vpack.c.b16 %v1647, %v1647
        %v1712 = vpack.c.b16 %v1648, %v1648
        %v1713 = vpack.c.b16 %v1649, %v1649
        %v1714 = vpack.c.b16 %v1650, %v1650
        %v1715 = vpack.c.b16 %v1651, %v1651
        %v1716 = vpack.c.b16 %v1652, %v1652
        %v1717 = vpack.c.b16 %v1653, %v1653
        %v1718 = vpack.c.b16 %v1654, %v1654
        %v1719 = vpack.c.b16 %v1655, %v1655
        %v1720 = vpack.c.b16 %v1656, %v1656
        %v1721 = vpack.c.b16 %v1657, %v1657
        %v1722 = vpack.c.b16 %v1658, %v1658
        %v1723 = vpack.c.b16 %v1659, %v1659
        %v1724 = vpack.c.b16 %v1660, %v1660
        %v1725 = vpack.c.b16 %v1661, %v1661
        %v1726 = vpack.c.b16 %v1662, %v1662
        %v1727 = vpack.c.b16 %v1663, %v1663
        %v1728 = vpack.c.b16 %v1664, %v1664
        %v1729 = vpack.c.b16 %v1665, %v1665
        %v1730 = vpack.c.b16 %v1666, %v1666
        %v1731 = vpack.c.b16 %v1667, %v1667
        %v1732 = vpack.c.b16 %v1668, %v1668
        %v1733 = vpack.c.b16 %v1669, %v1669
        %v1734 = vpack.c.b16 %v1670, %v1670
        %v1735 = vpack.c.b16 %v1671, %v1671
        %v1736 = vpack.c.b16 %v1672, %v1672
        %v1737 = vpack.c.b16 %v1673, %v1673
        %v1738 = vpack.c.b16 %v1674, %v1674
        %v1739 = vpack.c.b16 %v1675, %v1675
        %v1740 = vpack.c.b16 %v1676, %v1676
        %v1741 = vpack.c.b16 %v1677, %v1677
        %v1742 = vpack.c.b16 %v1678, %v1678
        %v1743 = vpack.c.b16 %v1679, %v1679
        %v1744 = vpack.c.b16 %v1680, %v1680
        %v1745 = vpack.c.b16 %v1681, %v1681
        %v1746 = vpack.c.b16 %v1682, %v1682
        %v1747 = vpack.c.b16 %v1683, %v1683
        %v1748 = vpack.c.b16 %v1684, %v1684
        %v1749 = vpack.c.b16 %v1685, %v1685
        %v1750 = vpack.c.b16 %v1686, %v1686
        %v1751 = vpack.c.b16 %v1687, %v1687
        %v1752 = vpack.c.b16 %v1688, %v1688
        %v1753 = vpack.c.b16 %v1689, %v1689
        %v1754 = vpack.c.b16 %v1690, %v1690
        %v1755 = vpack.c.b16 %v1691, %v1691
        %v1756 = vpack.c.b16 %v1692, %v1692
        %v1757 = vpack.c.b16 %v1693, %v1693
        %v1758 = vpack.c.b16 %v1694, %v1694
        %v1759 = vpack.c.b16 %v1695, %v1695
        %v1760 = vpack.c.b16 %v1696, %v1696
        %v1761 = vpack.c.b16 %v1697, %v1697
        %v1762 = vpack.c.b16 %v1698, %v1698
        %v1763 = vpack.c.b16 %v1699, %v1699
        %v1764 = vpack.c.b16 %v1700, %v1700
        %v1765 = vpack.c.b16 %v1701, %v1701
        %v1766 = vpack.c.b16 %v1702, %v1702
        %v1767 = vpack.c.b16 %v1703, %v1703
        %v1768 = vpack.c.b16 %v1704, %v1704
        %v1769 = vpack.c.b16 %v1705, %v1705
        %v1770 = vpack.c.b16 %v1706, %v1706
        %v1771 = vpack.c.b16 %v1707, %v1707
        %v1772 = vpack.c.b16 %v1708, %v1708
        %vm1837 = vcmask 257024
        %1838 = vst.msk [vmem:[%s185] sm:$0xf] %vm1837, %v1709
        %1839 = vst.msk [vmem:[%s185 + $0x4] sm:$0xf] %vm1837, %v1710
        %1840 = vst.msk [vmem:[%s185 + $0x8] sm:$0xf] %vm1837, %v1711
        %1841 = vst.msk [vmem:[%s185 + $0xc] sm:$0xf] %vm1837, %v1712
        %1842 = vst.msk [vmem:[%s185 + $0x10] sm:$0xf] %vm1837, %v1713
        %1843 = vst.msk [vmem:[%s185 + $0x14] sm:$0xf] %vm1837, %v1714
        %1844 = vst.msk [vmem:[%s185 + $0x18] sm:$0xf] %vm1837, %v1715
        %1845 = vst.msk [vmem:[%s185 + $0x1c] sm:$0xf] %vm1837, %v1716
        %1846 = vst.msk [vmem:[%s185 + $0x20] sm:$0xf] %vm1837, %v1717
        %1847 = vst.msk [vmem:[%s185 + $0x24] sm:$0xf] %vm1837, %v1718
        %1848 = vst.msk [vmem:[%s185 + $0x28] sm:$0xf] %vm1837, %v1719
        %1849 = vst.msk [vmem:[%s185 + $0x2c] sm:$0xf] %vm1837, %v1720
        %1850 = vst.msk [vmem:[%s185 + $0x30] sm:$0xf] %vm1837, %v1721
        %1851 = vst.msk [vmem:[%s185 + $0x34] sm:$0xf] %vm1837, %v1722
        %1852 = vst.msk [vmem:[%s185 + $0x38] sm:$0xf] %vm1837, %v1723
        %1853 = vst.msk [vmem:[%s185 + $0x3c] sm:$0xf] %vm1837, %v1724
        %1854 = vst.msk [vmem:[%s185 + $0x40] sm:$0xf] %vm1837, %v1725
        %1855 = vst.msk [vmem:[%s185 + $0x44] sm:$0xf] %vm1837, %v1726
        %1856 = vst.msk [vmem:[%s185 + $0x48] sm:$0xf] %vm1837, %v1727
        %1857 = vst.msk [vmem:[%s185 + $0x4c] sm:$0xf] %vm1837, %v1728
        %1858 = vst.msk [vmem:[%s185 + $0x50] sm:$0xf] %vm1837, %v1729
        %1859 = vst.msk [vmem:[%s185 + $0x54] sm:$0xf] %vm1837, %v1730
        %1860 = vst.msk [vmem:[%s185 + $0x58] sm:$0xf] %vm1837, %v1731
        %1861 = vst.msk [vmem:[%s185 + $0x5c] sm:$0xf] %vm1837, %v1732
        %1862 = vst.msk [vmem:[%s185 + $0x60] sm:$0xf] %vm1837, %v1733
        %1863 = vst.msk [vmem:[%s185 + $0x64] sm:$0xf] %vm1837, %v1734
        %1864 = vst.msk [vmem:[%s185 + $0x68] sm:$0xf] %vm1837, %v1735
        %1865 = vst.msk [vmem:[%s185 + $0x6c] sm:$0xf] %vm1837, %v1736
        %1866 = vst.msk [vmem:[%s185 + $0x70] sm:$0xf] %vm1837, %v1737
        %1867 = vst.msk [vmem:[%s185 + $0x74] sm:$0xf] %vm1837, %v1738
        %1868 = vst.msk [vmem:[%s185 + $0x78] sm:$0xf] %vm1837, %v1739
        %1869 = vst.msk [vmem:[%s185 + $0x7c] sm:$0xf] %vm1837, %v1740
        %1870 = vst.msk [vmem:[%s185 + $0x80] sm:$0xf] %vm1837, %v1741
        %1871 = vst.msk [vmem:[%s185 + $0x84] sm:$0xf] %vm1837, %v1742
        %1872 = vst.msk [vmem:[%s185 + $0x88] sm:$0xf] %vm1837, %v1743
        %1873 = vst.msk [vmem:[%s185 + $0x8c] sm:$0xf] %vm1837, %v1744
        %1874 = vst.msk [vmem:[%s185 + $0x90] sm:$0xf] %vm1837, %v1745
        %1875 = vst.msk [vmem:[%s185 + $0x94] sm:$0xf] %vm1837, %v1746
        %1876 = vst.msk [vmem:[%s185 + $0x98] sm:$0xf] %vm1837, %v1747
        %1877 = vst.msk [vmem:[%s185 + $0x9c] sm:$0xf] %vm1837, %v1748
        %1878 = vst.msk [vmem:[%s185 + $0xa0] sm:$0xf] %vm1837, %v1749
        %1879 = vst.msk [vmem:[%s185 + $0xa4] sm:$0xf] %vm1837, %v1750
        %1880 = vst.msk [vmem:[%s185 + $0xa8] sm:$0xf] %vm1837, %v1751
        %1881 = vst.msk [vmem:[%s185 + $0xac] sm:$0xf] %vm1837, %v1752
        %1882 = vst.msk [vmem:[%s185 + $0xb0] sm:$0xf] %vm1837, %v1753
        %1883 = vst.msk [vmem:[%s185 + $0xb4] sm:$0xf] %vm1837, %v1754
        %1884 = vst.msk [vmem:[%s185 + $0xb8] sm:$0xf] %vm1837, %v1755
        %1885 = vst.msk [vmem:[%s185 + $0xbc] sm:$0xf] %vm1837, %v1756
        %1886 = vst.msk [vmem:[%s185 + $0xc0] sm:$0xf] %vm1837, %v1757
        %1887 = vst.msk [vmem:[%s185 + $0xc4] sm:$0xf] %vm1837, %v1758
        %1888 = vst.msk [vmem:[%s185 + $0xc8] sm:$0xf] %vm1837, %v1759
        %1889 = vst.msk [vmem:[%s185 + $0xcc] sm:$0xf] %vm1837, %v1760
        %1890 = vst.msk [vmem:[%s185 + $0xd0] sm:$0xf] %vm1837, %v1761
        %1891 = vst.msk [vmem:[%s185 + $0xd4] sm:$0xf] %vm1837, %v1762
        %1892 = vst.msk [vmem:[%s185 + $0xd8] sm:$0xf] %vm1837, %v1763
        %1893 = vst.msk [vmem:[%s185 + $0xdc] sm:$0xf] %vm1837, %v1764
        %1894 = vst.msk [vmem:[%s185 + $0xe0] sm:$0xf] %vm1837, %v1765
        %1895 = vst.msk [vmem:[%s185 + $0xe4] sm:$0xf] %vm1837, %v1766
        %1896 = vst.msk [vmem:[%s185 + $0xe8] sm:$0xf] %vm1837, %v1767
        %1897 = vst.msk [vmem:[%s185 + $0xec] sm:$0xf] %vm1837, %v1768
        %1898 = vst.msk [vmem:[%s185 + $0xf0] sm:$0xf] %vm1837, %v1769
        %1899 = vst.msk [vmem:[%s185 + $0xf4] sm:$0xf] %vm1837, %v1770
        %1900 = vst.msk [vmem:[%s185 + $0xf8] sm:$0xf] %vm1837, %v1771
        %1901 = vst.msk [vmem:[%s185 + $0xfc] sm:$0xf] %vm1837, %v1772
        %s1902 = smul.u32 64, %s15
        %p1903 = scmp.lt.s32.totalorder %s1902, 191
        %s1904 = scalar_select %p1903, %s1902, 191
        %s1905 = smul.addr %s1904, 4
        %s1906 = scalar_lea.vmem %s3, %s1905
        // Predicated region
        $region37: #{cnn_forward.3} parent=31 // pred_check
          %p1907 = pneg %p101
        $region38: #{cnn_forward.3} parent=31 // pred_check_branch
          %1909 = sbr.rel (%p1907) target = $region40
        $region39: #{cnn_forward.3} parent=31 // pred_region
          %s1910 = smul.u32 64, %s15
        $region40: #{cnn_forward.3} parent=31 // pred_fallthru
          _
      $region32: #{cnn_forward.3} parent=5 // pred_fallthru
        _
      %p1911 = scmp.le.s32.totalorder 2, %s10
      // Predicated region
      $region41: #{cnn_forward.3} parent=5 // pred_check
        %p1912 = pneg %p1911
      $region42: #{cnn_forward.3} parent=5 // pred_check_branch
        %1914 = sbr.rel (%p1912) target = $region44
      $region43: #{cnn_forward.3} parent=5 // pred_region
        %s1915 = ssub.s32 %s10, 2
        // Predicated region
        $region45: #{cnn_forward.3} parent=43 // pred_check
          %p1916 = pneg %p107
        $region46: #{cnn_forward.3} parent=43 // pred_check_branch
          %1918 = sbr.rel (%p1916) target = $region48
        $region47: #{cnn_forward.3} parent=43 // pred_region
          %s1919 = smul.u32 64, %s16
          %p1920 = scmp.lt.s32.totalorder %s1919, 191
          %s1921 = scalar_select %p1920, %s1919, 191
          %s1922 = smul.addr %s1921, 4
          %s1923 = scalar_lea.vmem %s3, %s1922
        $region48: #{cnn_forward.3} parent=43 // pred_fallthru
          _
      $region44: #{cnn_forward.3} parent=5 // pred_fallthru
        _
    $region6: #{cnn_forward.3} parent=1 // loop_footer
      %s14 = sadd.s32 1, %s10
    $region7: #{cnn_forward.3} parent=1 // loop_footer_branch
      %9 = sbr.rel target = $region3
    $region8: #{cnn_forward.3} parent=1 // loop_exit
      _
    %1924 = vsyncpa [#allocation3], 1
    %s1925 = scalar_lea.sflag [#allocation3], 1
    %1926 = vsyncpa %s1925, 1

// kernel: cnn_forward.4
$region0: #{cnn_forward.4}
  #allocation0 [shape = 'u32[]', space=smem, size = 0x4, offset = 0x4, fixed_abs, tag = 'smem constant byte address 0x4 - core index']
  #allocation1 [shape = 'u32[144,128]{1,0:T(1,128)}', space=vmem, size = 0x12000, scoped, tag = 'internal scratch']
  %s0 = inlined_call_operand.vmem [shape: bf16[368,512], index: 0, kind: input, shape index: {}]
  %s1 = inlined_call_operand.vmem [shape: bf16[512,256], index: 1, kind: input, shape index: {}]
  %s2 = inlined_call_operand.vmem [shape: f32[1,64], index: 2, kind: input, shape index: {}]
  %s3 = inlined_call_operand.vmem [shape: bf16[368,64], index: 3, kind: output, shape index: {}]
  %s4 = sld [smem:[#allocation0]]
  $region22: #{cnn_forward.4} parent=0
    _
  %s6 = ssub.s32 1, %s4
  %s7 = scalar_select 0, %s6, %s4
  // Predicated region
  $region2: #{cnn_forward.4} parent=0 // pred_check
    _
  $region3: #{cnn_forward.4} parent=0 // pred_check_branch
    %9 = sbr.rel (0) target = $region5
  $region4: #{cnn_forward.4} parent=0 // pred_region
    _
  $region5: #{cnn_forward.4} parent=0 // pred_fallthru
    _
  // Predicated region
  $region6: #{cnn_forward.4} parent=0 // pred_check
    _
  $region7: #{cnn_forward.4} parent=0 // pred_check_branch
    %11 = sbr.rel (0) target = $region9
  $region8: #{cnn_forward.4} parent=0 // pred_region
    _
  $region9: #{cnn_forward.4} parent=0 // pred_fallthru
    _
  // Predicated region
  $region10: #{cnn_forward.4} parent=0 // pred_check
    _
  $region11: #{cnn_forward.4} parent=0 // pred_check_branch
    %13 = sbr.rel (0) target = $region13
  $region12: #{cnn_forward.4} parent=0 // pred_region
    _
  $region13: #{cnn_forward.4} parent=0 // pred_fallthru
    _
  %v14 = vld [vmem:[%s0] sm:$0xff]
  %v15 = vld [vmem:[%s0 + $0x8] sm:$0xff]
  %v16 = vld [vmem:[%s0 + $0x10] sm:$0xff]
  %v17 = vld [vmem:[%s0 + $0x18] sm:$0xff]
  %v18 = vld [vmem:[%s0 + $0x20] sm:$0xff]
  %v19 = vld [vmem:[%s0 + $0x28] sm:$0xff]
  %v20 = vld [vmem:[%s0 + $0x30] sm:$0xff]
  %v21 = vld [vmem:[%s0 + $0x38] sm:$0xff]
  %v22 = vld [vmem:[%s0 + $0x40] sm:$0xff]
  %v23 = vld [vmem:[%s0 + $0x48] sm:$0xff]
  %v24 = vld [vmem:[%s0 + $0x50] sm:$0xff]
  %v25 = vld [vmem:[%s0 + $0x58] sm:$0xff]
  %v26 = vld [vmem:[%s0 + $0x60] sm:$0xff]
  %v27 = vld [vmem:[%s0 + $0x68] sm:$0xff]
  %v28 = vld [vmem:[%s0 + $0x70] sm:$0xff]
  %v29 = vld [vmem:[%s0 + $0x78] sm:$0xff]
  %v30 = vld [vmem:[%s0 + $0x80] sm:$0xff]
  %v31 = vld [vmem:[%s0 + $0x88] sm:$0xff]
  %v32 = vld [vmem:[%s0 + $0x90] sm:$0xff]
  %v33 = vld [vmem:[%s0 + $0x98] sm:$0xff]
  %v34 = vld [vmem:[%s0 + $0xa0] sm:$0xff]
  %v35 = vld [vmem:[%s0 + $0xa8] sm:$0xff]
  %v36 = vld [vmem:[%s0 + $0xb0] sm:$0xff]
  %v37 = vld [vmem:[%s0 + $0xb8] sm:$0xff]
  %v38 = vld [vmem:[%s0 + $0xc0] sm:$0xff]
  %v39 = vld [vmem:[%s0 + $0xc8] sm:$0xff]
  %v40 = vld [vmem:[%s0 + $0xd0] sm:$0xff]
  %v41 = vld [vmem:[%s0 + $0xd8] sm:$0xff]
  %v42 = vld [vmem:[%s0 + $0xe0] sm:$0xff]
  %v43 = vld [vmem:[%s0 + $0xe8] sm:$0xff]
  %v44 = vld [vmem:[%s0 + $0xf0] sm:$0xff]
  %v45 = vld [vmem:[%s0 + $0xf8] sm:$0xff]
  %v46 = vld [vmem:[%s0 + $0x100] sm:$0xff]
  %v47 = vld [vmem:[%s0 + $0x108] sm:$0xff]
  %v48 = vld [vmem:[%s0 + $0x110] sm:$0xff]
  %v49 = vld [vmem:[%s0 + $0x118] sm:$0xff]
  %v50 = vld [vmem:[%s0 + $0x120] sm:$0xff]
  %v51 = vld [vmem:[%s0 + $0x128] sm:$0xff]
  %v52 = vld [vmem:[%s0 + $0x130] sm:$0xff]
  %v53 = vld [vmem:[%s0 + $0x138] sm:$0xff]
  %v54 = vld [vmem:[%s0 + $0x140] sm:$0xff]
  %v55 = vld [vmem:[%s0 + $0x148] sm:$0xff]
  %v56 = vld [vmem:[%s0 + $0x150] sm:$0xff]
  %v57 = vld [vmem:[%s0 + $0x158] sm:$0xff]
  %v58 = vld [vmem:[%s0 + $0x160] sm:$0xff]
  %v59 = vld [vmem:[%s0 + $0x168] sm:$0xff]
  %v60 = vld [vmem:[%s0 + $0x170] sm:$0xff]
  %v61 = vld [vmem:[%s0 + $0x178] sm:$0xff]
  %v62 = vld [vmem:[%s0 + $0x180] sm:$0xff]
  %v63 = vld [vmem:[%s0 + $0x188] sm:$0xff]
  %v64 = vld [vmem:[%s0 + $0x190] sm:$0xff]
  %v65 = vld [vmem:[%s0 + $0x198] sm:$0xff]
  %v66 = vld [vmem:[%s0 + $0x1a0] sm:$0xff]
  %v67 = vld [vmem:[%s0 + $0x1a8] sm:$0xff]
  %v68 = vld [vmem:[%s0 + $0x1b0] sm:$0xff]
  %v69 = vld [vmem:[%s0 + $0x1b8] sm:$0xff]
  %v70 = vld [vmem:[%s0 + $0x1c0] sm:$0xff]
  %v71 = vld [vmem:[%s0 + $0x1c8] sm:$0xff]
  %v72 = vld [vmem:[%s0 + $0x1d0] sm:$0xff]
  %v73 = vld [vmem:[%s0 + $0x1d8] sm:$0xff]
  %v74 = vld [vmem:[%s0 + $0x1e0] sm:$0xff]
  %v75 = vld [vmem:[%s0 + $0x1e8] sm:$0xff]
  %v76 = vld [vmem:[%s0 + $0x1f0] sm:$0xff]
  %v77 = vld [vmem:[%s0 + $0x1f8] sm:$0xff]
  %v78 = vld [vmem:[%s0 + $0x200] sm:$0xff]
  %v79 = vld [vmem:[%s0 + $0x208] sm:$0xff]
  %v80 = vld [vmem:[%s0 + $0x210] sm:$0xff]
  %v81 = vld [vmem:[%s0 + $0x218] sm:$0xff]
  %v82 = vld [vmem:[%s0 + $0x220] sm:$0xff]
  %v83 = vld [vmem:[%s0 + $0x228] sm:$0xff]
  %v84 = vld [vmem:[%s0 + $0x230] sm:$0xff]
  %v85 = vld [vmem:[%s0 + $0x238] sm:$0xff]
  %v86 = vld [vmem:[%s0 + $0x240] sm:$0xff]
  %v87 = vld [vmem:[%s0 + $0x248] sm:$0xff]
  %v88 = vld [vmem:[%s0 + $0x250] sm:$0xff]
  %v89 = vld [vmem:[%s0 + $0x258] sm:$0xff]
  %v90 = vld [vmem:[%s0 + $0x260] sm:$0xff]
  %v91 = vld [vmem:[%s0 + $0x268] sm:$0xff]
  %v92 = vld [vmem:[%s0 + $0x270] sm:$0xff]
  %v93 = vld [vmem:[%s0 + $0x278] sm:$0xff]
  %v94 = vld [vmem:[%s0 + $0x280] sm:$0xff]
  %v95 = vld [vmem:[%s0 + $0x288] sm:$0xff]
  %v96 = vld [vmem:[%s0 + $0x290] sm:$0xff]
  %v97 = vld [vmem:[%s0 + $0x298] sm:$0xff]
  %v98 = vld [vmem:[%s0 + $0x2a0] sm:$0xff]
  %v99 = vld [vmem:[%s0 + $0x2a8] sm:$0xff]
  %v100 = vld [vmem:[%s0 + $0x2b0] sm:$0xff]
  %v101 = vld [vmem:[%s0 + $0x2b8] sm:$0xff]
  %v102 = vld [vmem:[%s0 + $0x2c0] sm:$0xff]
  %v103 = vld [vmem:[%s0 + $0x2c8] sm:$0xff]
  %v104 = vld [vmem:[%s0 + $0x2d0] sm:$0xff]
  %v105 = vld [vmem:[%s0 + $0x2d8] sm:$0xff]
  %v106 = vld [vmem:[%s1] sm:$0xff]
  %v107 = vld [vmem:[%s1 + $0x8] sm:$0xff]
  %v108 = vld [vmem:[%s1 + $0x10] sm:$0xff]
  %v109 = vld [vmem:[%s1 + $0x18] sm:$0xff]
  %v110 = vld [vmem:[%s1 + $0x20] sm:$0xff]
  %v111 = vld [vmem:[%s1 + $0x28] sm:$0xff]
  %v112 = vld [vmem:[%s1 + $0x30] sm:$0xff]
  %v113 = vld [vmem:[%s1 + $0x38] sm:$0xff]
  %v114 = vld [vmem:[%s1 + $0x40] sm:$0xff]
  %v115 = vld [vmem:[%s1 + $0x48] sm:$0xff]
  %v116 = vld [vmem:[%s1 + $0x50] sm:$0xff]
  %v117 = vld [vmem:[%s1 + $0x58] sm:$0xff]
  %v118 = vld [vmem:[%s1 + $0x60] sm:$0xff]
  %v119 = vld [vmem:[%s1 + $0x68] sm:$0xff]
  %v120 = vld [vmem:[%s1 + $0x70] sm:$0xff]
  %v121 = vld [vmem:[%s1 + $0x78] sm:$0xff]
  %v122 = vld [vmem:[%s1 + $0x80] sm:$0xff]
  %v123 = vld [vmem:[%s1 + $0x88] sm:$0xff]
  %v124 = vld [vmem:[%s1 + $0x90] sm:$0xff]
  %v125 = vld [vmem:[%s1 + $0x98] sm:$0xff]
  %v126 = vld [vmem:[%s1 + $0xa0] sm:$0xff]
  %v127 = vld [vmem:[%s1 + $0xa8] sm:$0xff]
  %v128 = vld [vmem:[%s1 + $0xb0] sm:$0xff]
  %v129 = vld [vmem:[%s1 + $0xb8] sm:$0xff]
  %v130 = vld [vmem:[%s1 + $0xc0] sm:$0xff]
  %v131 = vld [vmem:[%s1 + $0xc8] sm:$0xff]
  %v132 = vld [vmem:[%s1 + $0xd0] sm:$0xff]
  %v133 = vld [vmem:[%s1 + $0xd8] sm:$0xff]
  %v134 = vld [vmem:[%s1 + $0xe0] sm:$0xff]
  %v135 = vld [vmem:[%s1 + $0xe8] sm:$0xff]
  %v136 = vld [vmem:[%s1 + $0xf0] sm:$0xff]
  %v137 = vld [vmem:[%s1 + $0xf8] sm:$0xff]
  %v138 = vld [vmem:[%s1 + $0x100] sm:$0xff]
  %v139 = vld [vmem:[%s1 + $0x108] sm:$0xff]
  %v140 = vld [vmem:[%s1 + $0x110] sm:$0xff]
  %v141 = vld [vmem:[%s1 + $0x118] sm:$0xff]
  %v142 = vld [vmem:[%s1 + $0x120] sm:$0xff]
  %v143 = vld [vmem:[%s1 + $0x128] sm:$0xff]
  %v144 = vld [vmem:[%s1 + $0x130] sm:$0xff]
  %v145 = vld [vmem:[%s1 + $0x138] sm:$0xff]
  %v146 = vld [vmem:[%s1 + $0x140] sm:$0xff]
  %v147 = vld [vmem:[%s1 + $0x148] sm:$0xff]
  %v148 = vld [vmem:[%s1 + $0x150] sm:$0xff]
  %v149 = vld [vmem:[%s1 + $0x158] sm:$0xff]
  %v150 = vld [vmem:[%s1 + $0x160] sm:$0xff]
  %v151 = vld [vmem:[%s1 + $0x168] sm:$0xff]
  %v152 = vld [vmem:[%s1 + $0x170] sm:$0xff]
  %v153 = vld [vmem:[%s1 + $0x178] sm:$0xff]
  %v154 = vld [vmem:[%s1 + $0x180] sm:$0xff]
  %v155 = vld [vmem:[%s1 + $0x188] sm:$0xff]
  %v156 = vld [vmem:[%s1 + $0x190] sm:$0xff]
  %v157 = vld [vmem:[%s1 + $0x198] sm:$0xff]
  %v158 = vld [vmem:[%s1 + $0x1a0] sm:$0xff]
  %v159 = vld [vmem:[%s1 + $0x1a8] sm:$0xff]
  %v160 = vld [vmem:[%s1 + $0x1b0] sm:$0xff]
  %v161 = vld [vmem:[%s1 + $0x1b8] sm:$0xff]
  %v162 = vld [vmem:[%s1 + $0x1c0] sm:$0xff]
  %v163 = vld [vmem:[%s1 + $0x1c8] sm:$0xff]
  %v164 = vld [vmem:[%s1 + $0x1d0] sm:$0xff]
  %v165 = vld [vmem:[%s1 + $0x1d8] sm:$0xff]
  %v166 = vld [vmem:[%s1 + $0x1e0] sm:$0xff]
  %v167 = vld [vmem:[%s1 + $0x1e8] sm:$0xff]
  %v168 = vld [vmem:[%s1 + $0x1f0] sm:$0xff]
  %v169 = vld [vmem:[%s1 + $0x1f8] sm:$0xff]
  %v262 = vunpack.c.l.b16 %v14
  %v263 = vunpack.c.h.b16 %v14
  %v264 = vunpack.c.l.b16 %v15
  %v265 = vunpack.c.h.b16 %v15
  %v266 = vunpack.c.l.b16 %v16
  %v267 = vunpack.c.h.b16 %v16
  %v268 = vunpack.c.l.b16 %v17
  %v269 = vunpack.c.h.b16 %v17
  %v270 = vunpack.c.l.b16 %v18
  %v271 = vunpack.c.h.b16 %v18
  %v272 = vunpack.c.l.b16 %v19
  %v273 = vunpack.c.h.b16 %v19
  %v274 = vunpack.c.l.b16 %v20
  %v275 = vunpack.c.h.b16 %v20
  %v276 = vunpack.c.l.b16 %v21
  %v277 = vunpack.c.h.b16 %v21
  %v278 = vunpack.c.l.b16 %v22
  %v279 = vunpack.c.h.b16 %v22
  %v280 = vunpack.c.l.b16 %v23
  %v281 = vunpack.c.h.b16 %v23
  %v282 = vunpack.c.l.b16 %v24
  %v283 = vunpack.c.h.b16 %v24
  %v284 = vunpack.c.l.b16 %v25
  %v285 = vunpack.c.h.b16 %v25
  %v286 = vunpack.c.l.b16 %v26
  %v287 = vunpack.c.h.b16 %v26
  %v288 = vunpack.c.l.b16 %v27
  %v289 = vunpack.c.h.b16 %v27
  %v290 = vunpack.c.l.b16 %v28
  %v291 = vunpack.c.h.b16 %v28
  %v292 = vunpack.c.l.b16 %v29
  %v293 = vunpack.c.h.b16 %v29
  %v294 = vunpack.c.l.b16 %v30
  %v295 = vunpack.c.h.b16 %v30
  %v296 = vunpack.c.l.b16 %v31
  %v297 = vunpack.c.h.b16 %v31
  %v298 = vunpack.c.l.b16 %v32
  %v299 = vunpack.c.h.b16 %v32
  %v300 = vunpack.c.l.b16 %v33
  %v301 = vunpack.c.h.b16 %v33
  %v302 = vunpack.c.l.b16 %v34
  %v303 = vunpack.c.h.b16 %v34
  %v304 = vunpack.c.l.b16 %v35
  %v305 = vunpack.c.h.b16 %v35
  %v306 = vunpack.c.l.b16 %v36
  %v307 = vunpack.c.h.b16 %v36
  %v308 = vunpack.c.l.b16 %v37
  %v309 = vunpack.c.h.b16 %v37
  %v310 = vunpack.c.l.b16 %v38
  %v311 = vunpack.c.h.b16 %v38
  %v312 = vunpack.c.l.b16 %v39
  %v313 = vunpack.c.h.b16 %v39
  %v314 = vunpack.c.l.b16 %v40
  %v315 = vunpack.c.h.b16 %v40
  %v316 = vunpack.c.l.b16 %v41
  %v317 = vunpack.c.h.b16 %v41
  %v318 = vunpack.c.l.b16 %v42
  %v319 = vunpack.c.h.b16 %v42
  %v320 = vunpack.c.l.b16 %v43
  %v321 = vunpack.c.h.b16 %v43
  %v322 = vunpack.c.l.b16 %v44
  %v323 = vunpack.c.h.b16 %v44
  %v324 = vunpack.c.l.b16 %v45
  %v325 = vunpack.c.h.b16 %v45
  %v326 = vunpack.c.l.b16 %v46
  %v327 = vunpack.c.h.b16 %v46
  %v328 = vunpack.c.l.b16 %v47
  %v329 = vunpack.c.h.b16 %v47
  %v330 = vunpack.c.l.b16 %v48
  %v331 = vunpack.c.h.b16 %v48
  %v332 = vunpack.c.l.b16 %v49
  %v333 = vunpack.c.h.b16 %v49
  %v334 = vunpack.c.l.b16 %v50
  %v335 = vunpack.c.h.b16 %v50
  %v336 = vunpack.c.l.b16 %v51
  %v337 = vunpack.c.h.b16 %v51
  %v338 = vunpack.c.l.b16 %v52
  %v339 = vunpack.c.h.b16 %v52
  %v340 = vunpack.c.l.b16 %v53
  %v341 = vunpack.c.h.b16 %v53
  %v342 = vunpack.c.l.b16 %v54
  %v343 = vunpack.c.h.b16 %v54
  %v344 = vunpack.c.l.b16 %v55
  %v345 = vunpack.c.h.b16 %v55
  %v346 = vunpack.c.l.b16 %v56
  %v347 = vunpack.c.h.b16 %v56
  %v348 = vunpack.c.l.b16 %v57
  %v349 = vunpack.c.h.b16 %v57
  %v350 = vunpack.c.l.b16 %v58
  %v351 = vunpack.c.h.b16 %v58
  %v352 = vunpack.c.l.b16 %v59
  %v353 = vunpack.c.h.b16 %v59
  %v354 = vunpack.c.l.b16 %v60
  %v355 = vunpack.c.h.b16 %v60
  %v356 = vunpack.c.l.b16 %v61
  %v357 = vunpack.c.h.b16 %v61
  %v358 = vunpack.c.l.b16 %v62
  %v359 = vunpack.c.h.b16 %v62
  %v360 = vunpack.c.l.b16 %v63
  %v361 = vunpack.c.h.b16 %v63
  %v362 = vunpack.c.l.b16 %v64
  %v363 = vunpack.c.h.b16 %v64
  %v364 = vunpack.c.l.b16 %v65
  %v365 = vunpack.c.h.b16 %v65
  %v366 = vunpack.c.l.b16 %v66
  %v367 = vunpack.c.h.b16 %v66
  %v368 = vunpack.c.l.b16 %v67
  %v369 = vunpack.c.h.b16 %v67
  %v370 = vunpack.c.l.b16 %v68
  %v371 = vunpack.c.h.b16 %v68
  %v372 = vunpack.c.l.b16 %v69
  %v373 = vunpack.c.h.b16 %v69
  %v374 = vunpack.c.l.b16 %v70
  %v375 = vunpack.c.h.b16 %v70
  %v376 = vunpack.c.l.b16 %v71
  %v377 = vunpack.c.h.b16 %v71
  %v378 = vunpack.c.l.b16 %v72
  %v379 = vunpack.c.h.b16 %v72
  %v380 = vunpack.c.l.b16 %v73
  %v381 = vunpack.c.h.b16 %v73
  %v382 = vunpack.c.l.b16 %v74
  %v383 = vunpack.c.h.b16 %v74
  %v384 = vunpack.c.l.b16 %v75
  %v385 = vunpack.c.h.b16 %v75
  %v386 = vunpack.c.l.b16 %v76
  %v387 = vunpack.c.h.b16 %v76
  %v388 = vunpack.c.l.b16 %v77
  %v389 = vunpack.c.h.b16 %v77
  %v390 = vunpack.c.l.b16 %v78
  %v391 = vunpack.c.h.b16 %v78
  %v392 = vunpack.c.l.b16 %v79
  %v393 = vunpack.c.h.b16 %v79
  %v394 = vunpack.c.l.b16 %v80
  %v395 = vunpack.c.h.b16 %v80
  %v396 = vunpack.c.l.b16 %v81
  %v397 = vunpack.c.h.b16 %v81
  %v398 = vunpack.c.l.b16 %v82
  %v399 = vunpack.c.h.b16 %v82
  %v400 = vunpack.c.l.b16 %v83
  %v401 = vunpack.c.h.b16 %v83
  %v402 = vunpack.c.l.b16 %v84
  %v403 = vunpack.c.h.b16 %v84
  %v404 = vunpack.c.l.b16 %v85
  %v405 = vunpack.c.h.b16 %v85
  %v406 = vunpack.c.l.b16 %v86
  %v407 = vunpack.c.h.b16 %v86
  %v408 = vunpack.c.l.b16 %v87
  %v409 = vunpack.c.h.b16 %v87
  %v410 = vunpack.c.l.b16 %v88
  %v411 = vunpack.c.h.b16 %v88
  %v412 = vunpack.c.l.b16 %v89
  %v413 = vunpack.c.h.b16 %v89
  %v414 = vunpack.c.l.b16 %v90
  %v415 = vunpack.c.h.b16 %v90
  %v416 = vunpack.c.l.b16 %v91
  %v417 = vunpack.c.h.b16 %v91
  %v418 = vunpack.c.l.b16 %v92
  %v419 = vunpack.c.h.b16 %v92
  %v420 = vunpack.c.l.b16 %v93
  %v421 = vunpack.c.h.b16 %v93
  %v422 = vunpack.c.l.b16 %v94
  %v423 = vunpack.c.h.b16 %v94
  %v424 = vunpack.c.l.b16 %v95
  %v425 = vunpack.c.h.b16 %v95
  %v426 = vunpack.c.l.b16 %v96
  %v427 = vunpack.c.h.b16 %v96
  %v428 = vunpack.c.l.b16 %v97
  %v429 = vunpack.c.h.b16 %v97
  %v430 = vunpack.c.l.b16 %v98
  %v431 = vunpack.c.h.b16 %v98
  %v432 = vunpack.c.l.b16 %v99
  %v433 = vunpack.c.h.b16 %v99
  %v434 = vunpack.c.l.b16 %v100
  %v435 = vunpack.c.h.b16 %v100
  %v436 = vunpack.c.l.b16 %v101
  %v437 = vunpack.c.h.b16 %v101
  %v438 = vunpack.c.l.b16 %v102
  %v439 = vunpack.c.h.b16 %v102
  %v440 = vunpack.c.l.b16 %v103
  %v441 = vunpack.c.h.b16 %v103
  %v442 = vunpack.c.l.b16 %v104
  %v443 = vunpack.c.h.b16 %v104
  %v444 = vunpack.c.l.b16 %v105
  %v445 = vunpack.c.h.b16 %v105
  %v446 = vpack.c.b16 %v266, %v262
  %v447 = vpack.c.b16 %v267, %v263
  %v448 = vpack.c.b16 %v268, %v264
  %v449 = vpack.c.b16 %v269, %v265
  %v450 = vpack.c.b16 %v274, %v270
  %v451 = vpack.c.b16 %v275, %v271
  %v452 = vpack.c.b16 %v276, %v272
  %v453 = vpack.c.b16 %v277, %v273
  %v454 = vpack.c.b16 %v282, %v278
  %v455 = vpack.c.b16 %v283, %v279
  %v456 = vpack.c.b16 %v284, %v280
  %v457 = vpack.c.b16 %v285, %v281
  %v458 = vpack.c.b16 %v290, %v286
  %v459 = vpack.c.b16 %v291, %v287
  %v460 = vpack.c.b16 %v292, %v288
  %v461 = vpack.c.b16 %v293, %v289
  %v462 = vpack.c.b16 %v298, %v294
  %v463 = vpack.c.b16 %v299, %v295
  %v464 = vpack.c.b16 %v300, %v296
  %v465 = vpack.c.b16 %v301, %v297
  %v466 = vpack.c.b16 %v306, %v302
  %v467 = vpack.c.b16 %v307, %v303
  %v468 = vpack.c.b16 %v308, %v304
  %v469 = vpack.c.b16 %v309, %v305
  %v470 = vpack.c.b16 %v314, %v310
  %v471 = vpack.c.b16 %v315, %v311
  %v472 = vpack.c.b16 %v316, %v312
  %v473 = vpack.c.b16 %v317, %v313
  %v474 = vpack.c.b16 %v322, %v318
  %v475 = vpack.c.b16 %v323, %v319
  %v476 = vpack.c.b16 %v324, %v320
  %v477 = vpack.c.b16 %v325, %v321
  %v478 = vpack.c.b16 %v330, %v326
  %v479 = vpack.c.b16 %v331, %v327
  %v480 = vpack.c.b16 %v332, %v328
  %v481 = vpack.c.b16 %v333, %v329
  %v482 = vpack.c.b16 %v338, %v334
  %v483 = vpack.c.b16 %v339, %v335
  %v484 = vpack.c.b16 %v340, %v336
  %v485 = vpack.c.b16 %v341, %v337
  %v486 = vpack.c.b16 %v346, %v342
  %v487 = vpack.c.b16 %v347, %v343
  %v488 = vpack.c.b16 %v348, %v344
  %v489 = vpack.c.b16 %v349, %v345
  %v490 = vpack.c.b16 %v354, %v350
  %v491 = vpack.c.b16 %v355, %v351
  %v492 = vpack.c.b16 %v356, %v352
  %v493 = vpack.c.b16 %v357, %v353
  %v494 = vpack.c.b16 %v362, %v358
  %v495 = vpack.c.b16 %v363, %v359
  %v496 = vpack.c.b16 %v364, %v360
  %v497 = vpack.c.b16 %v365, %v361
  %v498 = vpack.c.b16 %v370, %v366
  %v499 = vpack.c.b16 %v371, %v367
  %v500 = vpack.c.b16 %v372, %v368
  %v501 = vpack.c.b16 %v373, %v369
  %v502 = vpack.c.b16 %v378, %v374
  %v503 = vpack.c.b16 %v379, %v375
  %v504 = vpack.c.b16 %v380, %v376
  %v505 = vpack.c.b16 %v381, %v377
  %v506 = vpack.c.b16 %v386, %v382
  %v507 = vpack.c.b16 %v387, %v383
  %v508 = vpack.c.b16 %v388, %v384
  %v509 = vpack.c.b16 %v389, %v385
  %v510 = vpack.c.b16 %v394, %v390
  %v511 = vpack.c.b16 %v395, %v391
  %v512 = vpack.c.b16 %v396, %v392
  %v513 = vpack.c.b16 %v397, %v393
  %v514 = vpack.c.b16 %v402, %v398
  %v515 = vpack.c.b16 %v403, %v399
  %v516 = vpack.c.b16 %v404, %v400
  %v517 = vpack.c.b16 %v405, %v401
  %v518 = vpack.c.b16 %v410, %v406
  %v519 = vpack.c.b16 %v411, %v407
  %v520 = vpack.c.b16 %v412, %v408
  %v521 = vpack.c.b16 %v413, %v409
  %v522 = vpack.c.b16 %v418, %v414
  %v523 = vpack.c.b16 %v419, %v415
  %v524 = vpack.c.b16 %v420, %v416
  %v525 = vpack.c.b16 %v421, %v417
  %v526 = vpack.c.b16 %v426, %v422
  %v527 = vpack.c.b16 %v427, %v423
  %v528 = vpack.c.b16 %v428, %v424
  %v529 = vpack.c.b16 %v429, %v425
  %v530 = vpack.c.b16 %v434, %v430
  %v531 = vpack.c.b16 %v435, %v431
  %v532 = vpack.c.b16 %v436, %v432
  %v533 = vpack.c.b16 %v437, %v433
  %v534 = vpack.c.b16 %v442, %v438
  %v535 = vpack.c.b16 %v443, %v439
  %v536 = vpack.c.b16 %v444, %v440
  %v537 = vpack.c.b16 %v445, %v441
  %v694 = vunpack.c.l.b16 %v106
  %v695 = vunpack.c.h.b16 %v106
  %v696 = vunpack.c.l.b16 %v107
  %v697 = vunpack.c.h.b16 %v107
  %v698 = vunpack.c.l.b16 %v108
  %v699 = vunpack.c.h.b16 %v108
  %v700 = vunpack.c.l.b16 %v109
  %v701 = vunpack.c.h.b16 %v109
  %v702 = vunpack.c.l.b16 %v110
  %v703 = vunpack.c.h.b16 %v110
  %v704 = vunpack.c.l.b16 %v111
  %v705 = vunpack.c.h.b16 %v111
  %v706 = vunpack.c.l.b16 %v112
  %v707 = vunpack.c.h.b16 %v112
  %v708 = vunpack.c.l.b16 %v113
  %v709 = vunpack.c.h.b16 %v113
  %v710 = vunpack.c.l.b16 %v114
  %v711 = vunpack.c.h.b16 %v114
  %v712 = vunpack.c.l.b16 %v115
  %v713 = vunpack.c.h.b16 %v115
  %v714 = vunpack.c.l.b16 %v116
  %v715 = vunpack.c.h.b16 %v116
  %v716 = vunpack.c.l.b16 %v117
  %v717 = vunpack.c.h.b16 %v117
  %v718 = vunpack.c.l.b16 %v118
  %v719 = vunpack.c.h.b16 %v118
  %v720 = vunpack.c.l.b16 %v119
  %v721 = vunpack.c.h.b16 %v119
  %v722 = vunpack.c.l.b16 %v120
  %v723 = vunpack.c.h.b16 %v120
  %v724 = vunpack.c.l.b16 %v121
  %v725 = vunpack.c.h.b16 %v121
  %v726 = vunpack.c.l.b16 %v122
  %v727 = vunpack.c.h.b16 %v122
  %v728 = vunpack.c.l.b16 %v123
  %v729 = vunpack.c.h.b16 %v123
  %v730 = vunpack.c.l.b16 %v124
  %v731 = vunpack.c.h.b16 %v124
  %v732 = vunpack.c.l.b16 %v125
  %v733 = vunpack.c.h.b16 %v125
  %v734 = vunpack.c.l.b16 %v126
  %v735 = vunpack.c.h.b16 %v126
  %v736 = vunpack.c.l.b16 %v127
  %v737 = vunpack.c.h.b16 %v127
  %v738 = vunpack.c.l.b16 %v128
  %v739 = vunpack.c.h.b16 %v128
  %v740 = vunpack.c.l.b16 %v129
  %v741 = vunpack.c.h.b16 %v129
  %v742 = vunpack.c.l.b16 %v130
  %v743 = vunpack.c.h.b16 %v130
  %v744 = vunpack.c.l.b16 %v131
  %v745 = vunpack.c.h.b16 %v131
  %v746 = vunpack.c.l.b16 %v132
  %v747 = vunpack.c.h.b16 %v132
  %v748 = vunpack.c.l.b16 %v133
  %v749 = vunpack.c.h.b16 %v133
  %v750 = vunpack.c.l.b16 %v134
  %v751 = vunpack.c.h.b16 %v134
  %v752 = vunpack.c.l.b16 %v135
  %v753 = vunpack.c.h.b16 %v135
  %v754 = vunpack.c.l.b16 %v136
  %v755 = vunpack.c.h.b16 %v136
  %v756 = vunpack.c.l.b16 %v137
  %v757 = vunpack.c.h.b16 %v137
  %v758 = vunpack.c.l.b16 %v138
  %v759 = vunpack.c.h.b16 %v138
  %v760 = vunpack.c.l.b16 %v139
  %v761 = vunpack.c.h.b16 %v139
  %v762 = vunpack.c.l.b16 %v140
  %v763 = vunpack.c.h.b16 %v140
  %v764 = vunpack.c.l.b16 %v141
  %v765 = vunpack.c.h.b16 %v141
  %v766 = vunpack.c.l.b16 %v142
  %v767 = vunpack.c.h.b16 %v142
  %v768 = vunpack.c.l.b16 %v143
  %v769 = vunpack.c.h.b16 %v143
  %v770 = vunpack.c.l.b16 %v144
  %v771 = vunpack.c.h.b16 %v144
  %v772 = vunpack.c.l.b16 %v145
  %v773 = vunpack.c.h.b16 %v145
  %v774 = vunpack.c.l.b16 %v146
  %v775 = vunpack.c.h.b16 %v146
  %v776 = vunpack.c.l.b16 %v147
  %v777 = vunpack.c.h.b16 %v147
  %v778 = vunpack.c.l.b16 %v148
  %v779 = vunpack.c.h.b16 %v148
  %v780 = vunpack.c.l.b16 %v149
  %v781 = vunpack.c.h.b16 %v149
  %v782 = vunpack.c.l.b16 %v150
  %v783 = vunpack.c.h.b16 %v150
  %v784 = vunpack.c.l.b16 %v151
  %v785 = vunpack.c.h.b16 %v151
  %v786 = vunpack.c.l.b16 %v152
  %v787 = vunpack.c.h.b16 %v152
  %v788 = vunpack.c.l.b16 %v153
  %v789 = vunpack.c.h.b16 %v153
  %v790 = vunpack.c.l.b16 %v154
  %v791 = vunpack.c.h.b16 %v154
  %v792 = vunpack.c.l.b16 %v155
  %v793 = vunpack.c.h.b16 %v155
  %v794 = vunpack.c.l.b16 %v156
  %v795 = vunpack.c.h.b16 %v156
  %v796 = vunpack.c.l.b16 %v157
  %v797 = vunpack.c.h.b16 %v157
  %v798 = vunpack.c.l.b16 %v158
  %v799 = vunpack.c.h.b16 %v158
  %v800 = vunpack.c.l.b16 %v159
  %v801 = vunpack.c.h.b16 %v159
  %v802 = vunpack.c.l.b16 %v160
  %v803 = vunpack.c.h.b16 %v160
  %v804 = vunpack.c.l.b16 %v161
  %v805 = vunpack.c.h.b16 %v161
  %v806 = vunpack.c.l.b16 %v162
  %v807 = vunpack.c.h.b16 %v162
  %v808 = vunpack.c.l.b16 %v163
  %v809 = vunpack.c.h.b16 %v163
  %v810 = vunpack.c.l.b16 %v164
  %v811 = vunpack.c.h.b16 %v164
  %v812 = vunpack.c.l.b16 %v165
  %v813 = vunpack.c.h.b16 %v165
  %v814 = vunpack.c.l.b16 %v166
  %v815 = vunpack.c.h.b16 %v166
  %v816 = vunpack.c.l.b16 %v167
  %v817 = vunpack.c.h.b16 %v167
  %v818 = vunpack.c.l.b16 %v168
  %v819 = vunpack.c.h.b16 %v168
  %v820 = vunpack.c.l.b16 %v169
  %v821 = vunpack.c.h.b16 %v169
  %v822 = vpack.c.b16 %v696, %v694
  %v823 = vpack.c.b16 %v697, %v695
  %v824 = vpack.c.b16 %v700, %v698
  %v825 = vpack.c.b16 %v701, %v699
  %v826 = vpack.c.b16 %v704, %v702
  %v827 = vpack.c.b16 %v705, %v703
  %v828 = vpack.c.b16 %v708, %v706
  %v829 = vpack.c.b16 %v709, %v707
  %v830 = vpack.c.b16 %v712, %v710
  %v831 = vpack.c.b16 %v713, %v711
  %v832 = vpack.c.b16 %v716, %v714
  %v833 = vpack.c.b16 %v717, %v715
  %v834 = vpack.c.b16 %v720, %v718
  %v835 = vpack.c.b16 %v721, %v719
  %v836 = vpack.c.b16 %v724, %v722
  %v837 = vpack.c.b16 %v725, %v723
  %v838 = vpack.c.b16 %v728, %v726
  %v839 = vpack.c.b16 %v729, %v727
  %v840 = vpack.c.b16 %v732, %v730
  %v841 = vpack.c.b16 %v733, %v731
  %v842 = vpack.c.b16 %v736, %v734
  %v843 = vpack.c.b16 %v737, %v735
  %v844 = vpack.c.b16 %v740, %v738
  %v845 = vpack.c.b16 %v741, %v739
  %v846 = vpack.c.b16 %v744, %v742
  %v847 = vpack.c.b16 %v745, %v743
  %v848 = vpack.c.b16 %v748, %v746
  %v849 = vpack.c.b16 %v749, %v747
  %v850 = vpack.c.b16 %v752, %v750
  %v851 = vpack.c.b16 %v753, %v751
  %v852 = vpack.c.b16 %v756, %v754
  %v853 = vpack.c.b16 %v757, %v755
  %v854 = vpack.c.b16 %v760, %v758
  %v855 = vpack.c.b16 %v761, %v759
  %v856 = vpack.c.b16 %v764, %v762
  %v857 = vpack.c.b16 %v765, %v763
  %v858 = vpack.c.b16 %v768, %v766
  %v859 = vpack.c.b16 %v769, %v767
  %v860 = vpack.c.b16 %v772, %v770
  %v861 = vpack.c.b16 %v773, %v771
  %v862 = vpack.c.b16 %v776, %v774
  %v863 = vpack.c.b16 %v777, %v775
  %v864 = vpack.c.b16 %v780, %v778
  %v865 = vpack.c.b16 %v781, %v779
  %v866 = vpack.c.b16 %v784, %v782
  %v867 = vpack.c.b16 %v785, %v783
  %v868 = vpack.c.b16 %v788, %v786
  %v869 = vpack.c.b16 %v789, %v787
  %v870 = vpack.c.b16 %v792, %v790
  %v871 = vpack.c.b16 %v793, %v791
  %v872 = vpack.c.b16 %v796, %v794
  %v873 = vpack.c.b16 %v797, %v795
  %v874 = vpack.c.b16 %v800, %v798
  %v875 = vpack.c.b16 %v801, %v799
  %v876 = vpack.c.b16 %v804, %v802
  %v877 = vpack.c.b16 %v805, %v803
  %v878 = vpack.c.b16 %v808, %v806
  %v879 = vpack.c.b16 %v809, %v807
  %v880 = vpack.c.b16 %v812, %v810
  %v881 = vpack.c.b16 %v813, %v811
  %v882 = vpack.c.b16 %v816, %v814
  %v883 = vpack.c.b16 %v817, %v815
  %v884 = vpack.c.b16 %v820, %v818
  %v885 = vpack.c.b16 %v821, %v819
  %950 = vmatprep.subr.bf16.mxu0 %v837
  %951 = vmatpush1.bf16.msra.mxu0 %v836
  %952 = vmatprep.subr.bf16.mxu0 %v835
  %953 = vmatpush1.bf16.msra.mxu0 %v834
  %954 = vmatprep.subr.bf16.mxu0 %v833
  %955 = vmatpush1.bf16.msra.mxu0 %v832
  %956 = vmatprep.subr.bf16.mxu0 %v831
  %957 = vmatpush1.bf16.msra.mxu0 %v830
  %958 = vmatprep.subr.bf16.mxu0 %v829
  %959 = vmatpush1.bf16.msra.mxu0 %v828
  %960 = vmatprep.subr.bf16.mxu0 %v827
  %961 = vmatpush1.bf16.msra.mxu0 %v826
  %962 = vmatprep.subr.bf16.mxu0 %v825
  %963 = vmatpush1.bf16.msra.mxu0 %v824
  %964 = vmatprep.subr.bf16.mxu0 %v823
  %965 = vmatpush1.bf16.msra.mxu0 %v822
  %966 = vmatprep.subr.bf16.mxu0 %v853
  %967 = vmatpush2.bf16.msra.mxu0 %v852
  %968 = vmatprep.subr.bf16.mxu0 %v851
  %969 = vmatpush2.bf16.msra.mxu0 %v850
  %970 = vmatprep.subr.bf16.mxu0 %v849
  %971 = vmatpush2.bf16.msra.mxu0 %v848
  %972 = vmatprep.subr.bf16.mxu0 %v847
  %973 = vmatpush2.bf16.msra.mxu0 %v846
  %974 = vmatprep.subr.bf16.mxu0 %v845
  %975 = vmatpush2.bf16.msra.mxu0 %v844
  %976 = vmatprep.subr.bf16.mxu0 %v843
  %977 = vmatpush2.bf16.msra.mxu0 %v842
  %978 = vmatprep.subr.bf16.mxu0 %v841
  %979 = vmatpush2.bf16.msra.mxu0 %v840
  %980 = vmatprep.subr.bf16.mxu0 %v839
  %981 = vmatpush2.bf16.msra.mxu0 %v838
  %982 = vmatprep.mubr.bf16.mxu0 %v447
  %983 = vmatmul.mubr.bf16.gmra.mxu0 %v446
  %v984 = vpop.f32.mrf.mxu0
  %v985 = vadd.f32 0.0, %v984
  %v986 = vpop.f32.mrf.mxu0
  %v987 = vadd.f32 0.0, %v986
  %v988 = vpop.f32.mrf.mxu0
  %v989 = vadd.f32 0.0, %v988
  %v990 = vpop.f32.mrf.mxu0
  %v991 = vadd.f32 0.0, %v990
  %992 = vmatprep.mubr.bf16.mxu0 %v451
  %993 = vmatmul.mubr.bf16.gmra.mxu0 %v450
  %v994 = vpop.f32.mrf.mxu0
  %v995 = vadd.f32 0.0, %v994
  %v996 = vpop.f32.mrf.mxu0
  %v997 = vadd.f32 0.0, %v996
  %v998 = vpop.f32.mrf.mxu0
  %v999 = vadd.f32 0.0, %v998
  %v1000 = vpop.f32.mrf.mxu0
  %v1001 = vadd.f32 0.0, %v1000
  %1002 = vmatprep.mubr.bf16.mxu0 %v455
  %1003 = vmatmul.mubr.bf16.gmra.mxu0 %v454
  %v1004 = vpop.f32.mrf.mxu0
  %v1005 = vadd.f32 0.0, %v1004
  %v1006 = vpop.f32.mrf.mxu0
  %v1007 = vadd.f32 0.0, %v1006
  %v1008 = vpop.f32.mrf.mxu0
  %v1009 = vadd.f32 0.0, %v1008
  %v1010 = vpop.f32.mrf.mxu0
  %v1011 = vadd.f32 0.0, %v1010
  %1012 = vmatprep.mubr.bf16.mxu0 %v459
  %1013 = vmatmul.mubr.bf16.gmra.mxu0 %v458
  %v1014 = vpop.f32.mrf.mxu0
  %v1015 = vadd.f32 0.0, %v1014
  %v1016 = vpop.f32.mrf.mxu0
  %v1017 = vadd.f32 0.0, %v1016
  %v1018 = vpop.f32.mrf.mxu0
  %v1019 = vadd.f32 0.0, %v1018
  %v1020 = vpop.f32.mrf.mxu0
  %v1021 = vadd.f32 0.0, %v1020
  %1022 = vmatprep.mubr.bf16.mxu0 %v463
  %1023 = vmatmul.mubr.bf16.gmra.mxu0 %v462
  %v1024 = vpop.f32.mrf.mxu0
  %v1025 = vadd.f32 0.0, %v1024
  %v1026 = vpop.f32.mrf.mxu0
  %v1027 = vadd.f32 0.0, %v1026
  %v1028 = vpop.f32.mrf.mxu0
  %v1029 = vadd.f32 0.0, %v1028
  %v1030 = vpop.f32.mrf.mxu0
  %v1031 = vadd.f32 0.0, %v1030
  %1032 = vmatprep.mubr.bf16.mxu0 %v467
  %1033 = vmatmul.mubr.bf16.gmra.mxu0 %v466
  %v1034 = vpop.f32.mrf.mxu0
  %v1035 = vadd.f32 0.0, %v1034
  %v1036 = vpop.f32.mrf.mxu0
  %v1037 = vadd.f32 0.0, %v1036
  %v1038 = vpop.f32.mrf.mxu0
  %v1039 = vadd.f32 0.0, %v1038
  %v1040 = vpop.f32.mrf.mxu0
  %v1041 = vadd.f32 0.0, %v1040
  %1042 = vmatprep.mubr.bf16.mxu0 %v471
  %1043 = vmatmul.mubr.bf16.gmra.mxu0 %v470
  %v1044 = vpop.f32.mrf.mxu0
  %v1045 = vadd.f32 0.0, %v1044
  %v1046 = vpop.f32.mrf.mxu0
  %v1047 = vadd.f32 0.0, %v1046
  %v1048 = vpop.f32.mrf.mxu0
  %v1049 = vadd.f32 0.0, %v1048
  %v1050 = vpop.f32.mrf.mxu0
  %v1051 = vadd.f32 0.0, %v1050
  %1052 = vmatprep.mubr.bf16.mxu0 %v475
  %1053 = vmatmul.mubr.bf16.gmra.mxu0 %v474
  %v1054 = vpop.f32.mrf.mxu0
  %v1055 = vadd.f32 0.0, %v1054
  %v1056 = vpop.f32.mrf.mxu0
  %v1057 = vadd.f32 0.0, %v1056
  %v1058 = vpop.f32.mrf.mxu0
  %v1059 = vadd.f32 0.0, %v1058
  %v1060 = vpop.f32.mrf.mxu0
  %v1061 = vadd.f32 0.0, %v1060
  %1062 = vmatprep.mubr.bf16.mxu0 %v479
  %1063 = vmatmul.mubr.bf16.gmra.mxu0 %v478
  %v1064 = vpop.f32.mrf.mxu0
  %v1065 = vadd.f32 0.0, %v1064
  %v1066 = vpop.f32.mrf.mxu0
  %v1067 = vadd.f32 0.0, %v1066
  %v1068 = vpop.f32.mrf.mxu0
  %v1069 = vadd.f32 0.0, %v1068
  %v1070 = vpop.f32.mrf.mxu0
  %v1071 = vadd.f32 0.0, %v1070
  %1072 = vmatprep.mubr.bf16.mxu0 %v483
  %1073 = vmatmul.mubr.bf16.gmra.mxu0 %v482
  %v1074 = vpop.f32.mrf.mxu0
  %v1075 = vadd.f32 0.0, %v1074
  %v1076 = vpop.f32.mrf.mxu0
  %v1077 = vadd.f32 0.0, %v1076
  %v1078 = vpop.f32.mrf.mxu0
  %v1079 = vadd.f32 0.0, %v1078
  %v1080 = vpop.f32.mrf.mxu0
  %v1081 = vadd.f32 0.0, %v1080
  %1082 = vmatprep.mubr.bf16.mxu0 %v487
  %1083 = vmatmul.mubr.bf16.gmra.mxu0 %v486
  %v1084 = vpop.f32.mrf.mxu0
  %v1085 = vadd.f32 0.0, %v1084
  %v1086 = vpop.f32.mrf.mxu0
  %v1087 = vadd.f32 0.0, %v1086
  %v1088 = vpop.f32.mrf.mxu0
  %v1089 = vadd.f32 0.0, %v1088
  %v1090 = vpop.f32.mrf.mxu0
  %v1091 = vadd.f32 0.0, %v1090
  %1092 = vmatprep.mubr.bf16.mxu0 %v491
  %1093 = vmatmul.mubr.bf16.gmra.mxu0 %v490
  %v1094 = vpop.f32.mrf.mxu0
  %v1095 = vadd.f32 0.0, %v1094
  %v1096 = vpop.f32.mrf.mxu0
  %v1097 = vadd.f32 0.0, %v1096
  %v1098 = vpop.f32.mrf.mxu0
  %v1099 = vadd.f32 0.0, %v1098
  %v1100 = vpop.f32.mrf.mxu0
  %v1101 = vadd.f32 0.0, %v1100
  %1102 = vmatprep.mubr.bf16.mxu0 %v495
  %1103 = vmatmul.mubr.bf16.gmra.mxu0 %v494
  %v1104 = vpop.f32.mrf.mxu0
  %v1105 = vadd.f32 0.0, %v1104
  %v1106 = vpop.f32.mrf.mxu0
  %v1107 = vadd.f32 0.0, %v1106
  %v1108 = vpop.f32.mrf.mxu0
  %v1109 = vadd.f32 0.0, %v1108
  %v1110 = vpop.f32.mrf.mxu0
  %v1111 = vadd.f32 0.0, %v1110
  %1112 = vmatprep.mubr.bf16.mxu0 %v499
  %1113 = vmatmul.mubr.bf16.gmra.mxu0 %v498
  %v1114 = vpop.f32.mrf.mxu0
  %v1115 = vadd.f32 0.0, %v1114
  %v1116 = vpop.f32.mrf.mxu0
  %v1117 = vadd.f32 0.0, %v1116
  %v1118 = vpop.f32.mrf.mxu0
  %v1119 = vadd.f32 0.0, %v1118
  %v1120 = vpop.f32.mrf.mxu0
  %v1121 = vadd.f32 0.0, %v1120
  %1122 = vmatprep.mubr.bf16.mxu0 %v503
  %1123 = vmatmul.mubr.bf16.gmra.mxu0 %v502
  %v1124 = vpop.f32.mrf.mxu0
  %v1125 = vadd.f32 0.0, %v1124
  %v1126 = vpop.f32.mrf.mxu0
  %v1127 = vadd.f32 0.0, %v1126
  %v1128 = vpop.f32.mrf.mxu0
  %v1129 = vadd.f32 0.0, %v1128
  %v1130 = vpop.f32.mrf.mxu0
  %v1131 = vadd.f32 0.0, %v1130
  %1132 = vmatprep.mubr.bf16.mxu0 %v507
  %1133 = vmatmul.mubr.bf16.gmra.mxu0 %v506
  %v1134 = vpop.f32.mrf.mxu0
  %v1135 = vadd.f32 0.0, %v1134
  %v1136 = vpop.f32.mrf.mxu0
  %v1137 = vadd.f32 0.0, %v1136
  %v1138 = vpop.f32.mrf.mxu0
  %v1139 = vadd.f32 0.0, %v1138
  %v1140 = vpop.f32.mrf.mxu0
  %v1141 = vadd.f32 0.0, %v1140
  %1142 = vmatprep.mubr.bf16.mxu0 %v511
  %1143 = vmatmul.mubr.bf16.gmra.mxu0 %v510
  %v1144 = vpop.f32.mrf.mxu0
  %v1145 = vadd.f32 0.0, %v1144
  %v1146 = vpop.f32.mrf.mxu0
  %v1147 = vadd.f32 0.0, %v1146
  %v1148 = vpop.f32.mrf.mxu0
  %v1149 = vadd.f32 0.0, %v1148
  %v1150 = vpop.f32.mrf.mxu0
  %v1151 = vadd.f32 0.0, %v1150
  %1152 = vmatprep.mubr.bf16.mxu0 %v515
  %1153 = vmatmul.mubr.bf16.gmra.mxu0 %v514
  %v1154 = vpop.f32.mrf.mxu0
  %v1155 = vadd.f32 0.0, %v1154
  %v1156 = vpop.f32.mrf.mxu0
  %v1157 = vadd.f32 0.0, %v1156
  %v1158 = vpop.f32.mrf.mxu0
  %v1159 = vadd.f32 0.0, %v1158
  %v1160 = vpop.f32.mrf.mxu0
  %v1161 = vadd.f32 0.0, %v1160
  %1162 = vmatprep.mubr.bf16.mxu0 %v519
  %1163 = vmatmul.mubr.bf16.gmra.mxu0 %v518
  %v1164 = vpop.f32.mrf.mxu0
  %v1165 = vadd.f32 0.0, %v1164
  %v1166 = vpop.f32.mrf.mxu0
  %v1167 = vadd.f32 0.0, %v1166
  %v1168 = vpop.f32.mrf.mxu0
  %v1169 = vadd.f32 0.0, %v1168
  %v1170 = vpop.f32.mrf.mxu0
  %v1171 = vadd.f32 0.0, %v1170
  %1172 = vmatprep.mubr.bf16.mxu0 %v523
  %1173 = vmatmul.mubr.bf16.gmra.mxu0 %v522
  %v1174 = vpop.f32.mrf.mxu0
  %v1175 = vadd.f32 0.0, %v1174
  %v1176 = vpop.f32.mrf.mxu0
  %v1177 = vadd.f32 0.0, %v1176
  %v1178 = vpop.f32.mrf.mxu0
  %v1179 = vadd.f32 0.0, %v1178
  %v1180 = vpop.f32.mrf.mxu0
  %v1181 = vadd.f32 0.0, %v1180
  %1182 = vmatprep.mubr.bf16.mxu0 %v527
  %1183 = vmatmul.mubr.bf16.gmra.mxu0 %v526
  %v1184 = vpop.f32.mrf.mxu0
  %v1185 = vadd.f32 0.0, %v1184
  %v1186 = vpop.f32.mrf.mxu0
  %v1187 = vadd.f32 0.0, %v1186
  %v1188 = vpop.f32.mrf.mxu0
  %v1189 = vadd.f32 0.0, %v1188
  %v1190 = vpop.f32.mrf.mxu0
  %v1191 = vadd.f32 0.0, %v1190
  %1192 = vmatprep.mubr.bf16.mxu0 %v531
  %1193 = vmatmul.mubr.bf16.gmra.mxu0 %v530
  %v1194 = vpop.f32.mrf.mxu0
  %v1195 = vadd.f32 0.0, %v1194
  %v1196 = vpop.f32.mrf.mxu0
  %v1197 = vadd.f32 0.0, %v1196
  %v1198 = vpop.f32.mrf.mxu0
  %v1199 = vadd.f32 0.0, %v1198
  %v1200 = vpop.f32.mrf.mxu0
  %v1201 = vadd.f32 0.0, %v1200
  %1202 = vmatprep.mubr.bf16.mxu0 %v535
  %1203 = vmatmul.mubr.bf16.gmra.mxu0 %v534
  %v1204 = vpop.f32.mrf.mxu0
  %v1205 = vadd.f32 0.0, %v1204
  %v1206 = vpop.f32.mrf.mxu0
  %v1207 = vadd.f32 0.0, %v1206
  %v1208 = vpop.f32.mrf.mxu0
  %v1209 = vadd.f32 0.0, %v1208
  %v1210 = vpop.f32.mrf.mxu0
  %v1211 = vadd.f32 0.0, %v1210
  %1212 = vdwg.mxu0
  %1213 = vmatprep.subr.bf16.mxu0 %v869
  %1214 = vmatpush1.bf16.msra.mxu0 %v868
  %1215 = vmatprep.subr.bf16.mxu0 %v867
  %1216 = vmatpush1.bf16.msra.mxu0 %v866
  %1217 = vmatprep.subr.bf16.mxu0 %v865
  %1218 = vmatpush1.bf16.msra.mxu0 %v864
  %1219 = vmatprep.subr.bf16.mxu0 %v863
  %1220 = vmatpush1.bf16.msra.mxu0 %v862
  %1221 = vmatprep.subr.bf16.mxu0 %v861
  %1222 = vmatpush1.bf16.msra.mxu0 %v860
  %1223 = vmatprep.subr.bf16.mxu0 %v859
  %1224 = vmatpush1.bf16.msra.mxu0 %v858
  %1225 = vmatprep.subr.bf16.mxu0 %v857
  %1226 = vmatpush1.bf16.msra.mxu0 %v856
  %1227 = vmatprep.subr.bf16.mxu0 %v855
  %1228 = vmatpush1.bf16.msra.mxu0 %v854
  %1229 = vmatprep.subr.bf16.mxu0 %v885
  %1230 = vmatpush2.bf16.msra.mxu0 %v884
  %1231 = vmatprep.subr.bf16.mxu0 %v883
  %1232 = vmatpush2.bf16.msra.mxu0 %v882
  %1233 = vmatprep.subr.bf16.mxu0 %v881
  %1234 = vmatpush2.bf16.msra.mxu0 %v880
  %1235 = vmatprep.subr.bf16.mxu0 %v879
  %1236 = vmatpush2.bf16.msra.mxu0 %v878
  %1237 = vmatprep.subr.bf16.mxu0 %v877
  %1238 = vmatpush2.bf16.msra.mxu0 %v876
  %1239 = vmatprep.subr.bf16.mxu0 %v875
  %1240 = vmatpush2.bf16.msra.mxu0 %v874
  %1241 = vmatprep.subr.bf16.mxu0 %v873
  %1242 = vmatpush2.bf16.msra.mxu0 %v872
  %1243 = vmatprep.subr.bf16.mxu0 %v871
  %1244 = vmatpush2.bf16.msra.mxu0 %v870
  %1245 = vmatprep.mubr.bf16.mxu0 %v449
  %1246 = vmatmul.mubr.bf16.gmra.mxu0 %v448
  %v1247 = vpop.f32.mrf.mxu0
  %v1248 = vadd.f32 %v985, %v1247
  %v1249 = vpop.f32.mrf.mxu0
  %v1250 = vadd.f32 %v987, %v1249
  %v1251 = vpop.f32.mrf.mxu0
  %v1252 = vadd.f32 %v989, %v1251
  %v1253 = vpop.f32.mrf.mxu0
  %v1254 = vadd.f32 %v991, %v1253
  %1255 = vmatprep.mubr.bf16.mxu0 %v453
  %1256 = vmatmul.mubr.bf16.gmra.mxu0 %v452
  %v1257 = vpop.f32.mrf.mxu0
  %v1258 = vadd.f32 %v995, %v1257
  %v1259 = vpop.f32.mrf.mxu0
  %v1260 = vadd.f32 %v997, %v1259
  %v1261 = vpop.f32.mrf.mxu0
  %v1262 = vadd.f32 %v999, %v1261
  %v1263 = vpop.f32.mrf.mxu0
  %v1264 = vadd.f32 %v1001, %v1263
  %1265 = vmatprep.mubr.bf16.mxu0 %v457
  %1266 = vmatmul.mubr.bf16.gmra.mxu0 %v456
  %v1267 = vpop.f32.mrf.mxu0
  %v1268 = vadd.f32 %v1005, %v1267
  %v1269 = vpop.f32.mrf.mxu0
  %v1270 = vadd.f32 %v1007, %v1269
  %v1271 = vpop.f32.mrf.mxu0
  %v1272 = vadd.f32 %v1009, %v1271
  %v1273 = vpop.f32.mrf.mxu0
  %v1274 = vadd.f32 %v1011, %v1273
  %1275 = vmatprep.mubr.bf16.mxu0 %v461
  %1276 = vmatmul.mubr.bf16.gmra.mxu0 %v460
  %v1277 = vpop.f32.mrf.mxu0
  %v1278 = vadd.f32 %v1015, %v1277
  %v1279 = vpop.f32.mrf.mxu0
  %v1280 = vadd.f32 %v1017, %v1279
  %v1281 = vpop.f32.mrf.mxu0
  %v1282 = vadd.f32 %v1019, %v1281
  %v1283 = vpop.f32.mrf.mxu0
  %v1284 = vadd.f32 %v1021, %v1283
  %1285 = vmatprep.mubr.bf16.mxu0 %v465
  %1286 = vmatmul.mubr.bf16.gmra.mxu0 %v464
  %v1287 = vpop.f32.mrf.mxu0
  %v1288 = vadd.f32 %v1025, %v1287
  %v1289 = vpop.f32.mrf.mxu0
  %v1290 = vadd.f32 %v1027, %v1289
  %v1291 = vpop.f32.mrf.mxu0
  %v1292 = vadd.f32 %v1029, %v1291
  %v1293 = vpop.f32.mrf.mxu0
  %v1294 = vadd.f32 %v1031, %v1293
  %1295 = vmatprep.mubr.bf16.mxu0 %v469
  %1296 = vmatmul.mubr.bf16.gmra.mxu0 %v468
  %v1297 = vpop.f32.mrf.mxu0
  %v1298 = vadd.f32 %v1035, %v1297
  %v1299 = vpop.f32.mrf.mxu0
  %v1300 = vadd.f32 %v1037, %v1299
  %v1301 = vpop.f32.mrf.mxu0
  %v1302 = vadd.f32 %v1039, %v1301
  %v1303 = vpop.f32.mrf.mxu0
  %v1304 = vadd.f32 %v1041, %v1303
  %1305 = vmatprep.mubr.bf16.mxu0 %v473
  %1306 = vmatmul.mubr.bf16.gmra.mxu0 %v472
  %v1307 = vpop.f32.mrf.mxu0
  %v1308 = vadd.f32 %v1045, %v1307
  %v1309 = vpop.f32.mrf.mxu0
  %v1310 = vadd.f32 %v1047, %v1309
  %v1311 = vpop.f32.mrf.mxu0
  %v1312 = vadd.f32 %v1049, %v1311
  %v1313 = vpop.f32.mrf.mxu0
  %v1314 = vadd.f32 %v1051, %v1313
  %1315 = vmatprep.mubr.bf16.mxu0 %v477
  %1316 = vmatmul.mubr.bf16.gmra.mxu0 %v476
  %v1317 = vpop.f32.mrf.mxu0
  %v1318 = vadd.f32 %v1055, %v1317
  %v1319 = vpop.f32.mrf.mxu0
  %v1320 = vadd.f32 %v1057, %v1319
  %v1321 = vpop.f32.mrf.mxu0
  %v1322 = vadd.f32 %v1059, %v1321
  %v1323 = vpop.f32.mrf.mxu0
  %v1324 = vadd.f32 %v1061, %v1323
  %1325 = vmatprep.mubr.bf16.mxu0 %v481
  %1326 = vmatmul.mubr.bf16.gmra.mxu0 %v480
  %v1327 = vpop.f32.mrf.mxu0
  %v1328 = vadd.f32 %v1065, %v1327
  %v1329 = vpop.f32.mrf.mxu0
  %v1330 = vadd.f32 %v1067, %v1329
  %v1331 = vpop.f32.mrf.mxu0
  %v1332 = vadd.f32 %v1069, %v1331
  %v1333 = vpop.f32.mrf.mxu0
  %v1334 = vadd.f32 %v1071, %v1333
  %1335 = vmatprep.mubr.bf16.mxu0 %v485
  %1336 = vmatmul.mubr.bf16.gmra.mxu0 %v484
  %v1337 = vpop.f32.mrf.mxu0
  %v1338 = vadd.f32 %v1075, %v1337
  %v1339 = vpop.f32.mrf.mxu0
  %v1340 = vadd.f32 %v1077, %v1339
  %v1341 = vpop.f32.mrf.mxu0
  %v1342 = vadd.f32 %v1079, %v1341
  %v1343 = vpop.f32.mrf.mxu0
  %v1344 = vadd.f32 %v1081, %v1343
  %1345 = vmatprep.mubr.bf16.mxu0 %v489
  %1346 = vmatmul.mubr.bf16.gmra.mxu0 %v488
  %v1347 = vpop.f32.mrf.mxu0
  %v1348 = vadd.f32 %v1085, %v1347
  %v1349 = vpop.f32.mrf.mxu0
  %v1350 = vadd.f32 %v1087, %v1349
  %v1351 = vpop.f32.mrf.mxu0
  %v1352 = vadd.f32 %v1089, %v1351
  %v1353 = vpop.f32.mrf.mxu0
  %v1354 = vadd.f32 %v1091, %v1353
  %1355 = vmatprep.mubr.bf16.mxu0 %v493
  %1356 = vmatmul.mubr.bf16.gmra.mxu0 %v492
  %v1357 = vpop.f32.mrf.mxu0
  %v1358 = vadd.f32 %v1095, %v1357
  %v1359 = vpop.f32.mrf.mxu0
  %v1360 = vadd.f32 %v1097, %v1359
  %v1361 = vpop.f32.mrf.mxu0
  %v1362 = vadd.f32 %v1099, %v1361
  %v1363 = vpop.f32.mrf.mxu0
  %v1364 = vadd.f32 %v1101, %v1363
  %1365 = vmatprep.mubr.bf16.mxu0 %v497
  %1366 = vmatmul.mubr.bf16.gmra.mxu0 %v496
  %v1367 = vpop.f32.mrf.mxu0
  %v1368 = vadd.f32 %v1105, %v1367
  %v1369 = vpop.f32.mrf.mxu0
  %v1370 = vadd.f32 %v1107, %v1369
  %v1371 = vpop.f32.mrf.mxu0
  %v1372 = vadd.f32 %v1109, %v1371
  %v1373 = vpop.f32.mrf.mxu0
  %v1374 = vadd.f32 %v1111, %v1373
  %1375 = vmatprep.mubr.bf16.mxu0 %v501
  %1376 = vmatmul.mubr.bf16.gmra.mxu0 %v500
  %v1377 = vpop.f32.mrf.mxu0
  %v1378 = vadd.f32 %v1115, %v1377
  %v1379 = vpop.f32.mrf.mxu0
  %v1380 = vadd.f32 %v1117, %v1379
  %v1381 = vpop.f32.mrf.mxu0
  %v1382 = vadd.f32 %v1119, %v1381
  %v1383 = vpop.f32.mrf.mxu0
  %v1384 = vadd.f32 %v1121, %v1383
  %1385 = vmatprep.mubr.bf16.mxu0 %v505
  %1386 = vmatmul.mubr.bf16.gmra.mxu0 %v504
  %v1387 = vpop.f32.mrf.mxu0
  %v1388 = vadd.f32 %v1125, %v1387
  %v1389 = vpop.f32.mrf.mxu0
  %v1390 = vadd.f32 %v1127, %v1389
  %v1391 = vpop.f32.mrf.mxu0
  %v1392 = vadd.f32 %v1129, %v1391
  %v1393 = vpop.f32.mrf.mxu0
  %v1394 = vadd.f32 %v1131, %v1393
  %1395 = vmatprep.mubr.bf16.mxu0 %v509
  %1396 = vmatmul.mubr.bf16.gmra.mxu0 %v508
  %v1397 = vpop.f32.mrf.mxu0
  %v1398 = vadd.f32 %v1135, %v1397
  %v1399 = vpop.f32.mrf.mxu0
  %v1400 = vadd.f32 %v1137, %v1399
  %v1401 = vpop.f32.mrf.mxu0
  %v1402 = vadd.f32 %v1139, %v1401
  %v1403 = vpop.f32.mrf.mxu0
  %v1404 = vadd.f32 %v1141, %v1403
  %1405 = vmatprep.mubr.bf16.mxu0 %v513
  %1406 = vmatmul.mubr.bf16.gmra.mxu0 %v512
  %v1407 = vpop.f32.mrf.mxu0
  %v1408 = vadd.f32 %v1145, %v1407
  %v1409 = vpop.f32.mrf.mxu0
  %v1410 = vadd.f32 %v1147, %v1409
  %v1411 = vpop.f32.mrf.mxu0
  %v1412 = vadd.f32 %v1149, %v1411
  %v1413 = vpop.f32.mrf.mxu0
  %v1414 = vadd.f32 %v1151, %v1413
  %1415 = vmatprep.mubr.bf16.mxu0 %v517
  %1416 = vmatmul.mubr.bf16.gmra.mxu0 %v516
  %v1417 = vpop.f32.mrf.mxu0
  %v1418 = vadd.f32 %v1155, %v1417
  %v1419 = vpop.f32.mrf.mxu0
  %v1420 = vadd.f32 %v1157, %v1419
  %v1421 = vpop.f32.mrf.mxu0
  %v1422 = vadd.f32 %v1159, %v1421
  %v1423 = vpop.f32.mrf.mxu0
  %v1424 = vadd.f32 %v1161, %v1423
  %1425 = vmatprep.mubr.bf16.mxu0 %v521
  %1426 = vmatmul.mubr.bf16.gmra.mxu0 %v520
  %v1427 = vpop.f32.mrf.mxu0
  %v1428 = vadd.f32 %v1165, %v1427
  %v1429 = vpop.f32.mrf.mxu0
  %v1430 = vadd.f32 %v1167, %v1429
  %v1431 = vpop.f32.mrf.mxu0
  %v1432 = vadd.f32 %v1169, %v1431
  %v1433 = vpop.f32.mrf.mxu0
  %v1434 = vadd.f32 %v1171, %v1433
  %1435 = vmatprep.mubr.bf16.mxu0 %v525
  %1436 = vmatmul.mubr.bf16.gmra.mxu0 %v524
  %v1437 = vpop.f32.mrf.mxu0
  %v1438 = vadd.f32 %v1175, %v1437
  %v1439 = vpop.f32.mrf.mxu0
  %v1440 = vadd.f32 %v1177, %v1439
  %v1441 = vpop.f32.mrf.mxu0
  %v1442 = vadd.f32 %v1179, %v1441
  %v1443 = vpop.f32.mrf.mxu0
  %v1444 = vadd.f32 %v1181, %v1443
  %1445 = vmatprep.mubr.bf16.mxu0 %v529
  %1446 = vmatmul.mubr.bf16.gmra.mxu0 %v528
  %v1447 = vpop.f32.mrf.mxu0
  %v1448 = vadd.f32 %v1185, %v1447
  %v1449 = vpop.f32.mrf.mxu0
  %v1450 = vadd.f32 %v1187, %v1449
  %v1451 = vpop.f32.mrf.mxu0
  %v1452 = vadd.f32 %v1189, %v1451
  %v1453 = vpop.f32.mrf.mxu0
  %v1454 = vadd.f32 %v1191, %v1453
  %1455 = vmatprep.mubr.bf16.mxu0 %v533
  %1456 = vmatmul.mubr.bf16.gmra.mxu0 %v532
  %v1457 = vpop.f32.mrf.mxu0
  %v1458 = vadd.f32 %v1195, %v1457
  %v1459 = vpop.f32.mrf.mxu0
  %v1460 = vadd.f32 %v1197, %v1459
  %v1461 = vpop.f32.mrf.mxu0
  %v1462 = vadd.f32 %v1199, %v1461
  %v1463 = vpop.f32.mrf.mxu0
  %v1464 = vadd.f32 %v1201, %v1463
  %1465 = vmatprep.mubr.bf16.mxu0 %v537
  %1466 = vmatmul.mubr.bf16.gmra.mxu0 %v536
  %v1467 = vpop.f32.mrf.mxu0
  %v1468 = vadd.f32 %v1205, %v1467
  %v1469 = vpop.f32.mrf.mxu0
  %v1470 = vadd.f32 %v1207, %v1469
  %v1471 = vpop.f32.mrf.mxu0
  %v1472 = vadd.f32 %v1209, %v1471
  %v1473 = vpop.f32.mrf.mxu0
  %v1474 = vadd.f32 %v1211, %v1473
  %1475 = vdwg.mxu0
  %1522 = vrot.lane.b32.xlu0 %v1248, 64
  %v1523 = vpop.permute.xlu0 %1522
  %1524 = vrot.lane.b32.xlu0 %v1252, 64
  %v1525 = vpop.permute.xlu0 %1524
  %1526 = vrot.lane.b32.xlu0 %v1258, 64
  %v1527 = vpop.permute.xlu0 %1526
  %1528 = vrot.lane.b32.xlu0 %v1262, 64
  %v1529 = vpop.permute.xlu0 %1528
  %1530 = vrot.lane.b32.xlu0 %v1268, 64
  %v1531 = vpop.permute.xlu0 %1530
  %1532 = vrot.lane.b32.xlu0 %v1272, 64
  %v1533 = vpop.permute.xlu0 %1532
  %1534 = vrot.lane.b32.xlu0 %v1278, 64
  %v1535 = vpop.permute.xlu0 %1534
  %1536 = vrot.lane.b32.xlu0 %v1282, 64
  %v1537 = vpop.permute.xlu0 %1536
  %1538 = vrot.lane.b32.xlu0 %v1288, 64
  %v1539 = vpop.permute.xlu0 %1538
  %1540 = vrot.lane.b32.xlu0 %v1292, 64
  %v1541 = vpop.permute.xlu0 %1540
  %1542 = vrot.lane.b32.xlu0 %v1298, 64
  %v1543 = vpop.permute.xlu0 %1542
  %1544 = vrot.lane.b32.xlu0 %v1302, 64
  %v1545 = vpop.permute.xlu0 %1544
  %1546 = vrot.lane.b32.xlu0 %v1308, 64
  %v1547 = vpop.permute.xlu0 %1546
  %1548 = vrot.lane.b32.xlu0 %v1312, 64
  %v1549 = vpop.permute.xlu0 %1548
  %1550 = vrot.lane.b32.xlu0 %v1318, 64
  %v1551 = vpop.permute.xlu0 %1550
  %1552 = vrot.lane.b32.xlu0 %v1322, 64
  %v1553 = vpop.permute.xlu0 %1552
  %1554 = vrot.lane.b32.xlu0 %v1328, 64
  %v1555 = vpop.permute.xlu0 %1554
  %1556 = vrot.lane.b32.xlu0 %v1332, 64
  %v1557 = vpop.permute.xlu0 %1556
  %1558 = vrot.lane.b32.xlu0 %v1338, 64
  %v1559 = vpop.permute.xlu0 %1558
  %1560 = vrot.lane.b32.xlu0 %v1342, 64
  %v1561 = vpop.permute.xlu0 %1560
  %1562 = vrot.lane.b32.xlu0 %v1348, 64
  %v1563 = vpop.permute.xlu0 %1562
  %1564 = vrot.lane.b32.xlu0 %v1352, 64
  %v1565 = vpop.permute.xlu0 %1564
  %1566 = vrot.lane.b32.xlu0 %v1358, 64
  %v1567 = vpop.permute.xlu0 %1566
  %1568 = vrot.lane.b32.xlu0 %v1362, 64
  %v1569 = vpop.permute.xlu0 %1568
  %1570 = vrot.lane.b32.xlu0 %v1368, 64
  %v1571 = vpop.permute.xlu0 %1570
  %1572 = vrot.lane.b32.xlu0 %v1372, 64
  %v1573 = vpop.permute.xlu0 %1572
  %1574 = vrot.lane.b32.xlu0 %v1378, 64
  %v1575 = vpop.permute.xlu0 %1574
  %1576 = vrot.lane.b32.xlu0 %v1382, 64
  %v1577 = vpop.permute.xlu0 %1576
  %1578 = vrot.lane.b32.xlu0 %v1388, 64
  %v1579 = vpop.permute.xlu0 %1578
  %1580 = vrot.lane.b32.xlu0 %v1392, 64
  %v1581 = vpop.permute.xlu0 %1580
  %1582 = vrot.lane.b32.xlu0 %v1398, 64
  %v1583 = vpop.permute.xlu0 %1582
  %1584 = vrot.lane.b32.xlu0 %v1402, 64
  %v1585 = vpop.permute.xlu0 %1584
  %1586 = vrot.lane.b32.xlu0 %v1408, 64
  %v1587 = vpop.permute.xlu0 %1586
  %1588 = vrot.lane.b32.xlu0 %v1412, 64
  %v1589 = vpop.permute.xlu0 %1588
  %1590 = vrot.lane.b32.xlu0 %v1418, 64
  %v1591 = vpop.permute.xlu0 %1590
  %1592 = vrot.lane.b32.xlu0 %v1422, 64
  %v1593 = vpop.permute.xlu0 %1592
  %1594 = vrot.lane.b32.xlu0 %v1428, 64
  %v1595 = vpop.permute.xlu0 %1594
  %1596 = vrot.lane.b32.xlu0 %v1432, 64
  %v1597 = vpop.permute.xlu0 %1596
  %1598 = vrot.lane.b32.xlu0 %v1438, 64
  %v1599 = vpop.permute.xlu0 %1598
  %1600 = vrot.lane.b32.xlu0 %v1442, 64
  %v1601 = vpop.permute.xlu0 %1600
  %1602 = vrot.lane.b32.xlu0 %v1448, 64
  %v1603 = vpop.permute.xlu0 %1602
  %1604 = vrot.lane.b32.xlu0 %v1452, 64
  %v1605 = vpop.permute.xlu0 %1604
  %1606 = vrot.lane.b32.xlu0 %v1458, 64
  %v1607 = vpop.permute.xlu0 %1606
  %1608 = vrot.lane.b32.xlu0 %v1462, 64
  %v1609 = vpop.permute.xlu0 %1608
  %1610 = vrot.lane.b32.xlu0 %v1468, 64
  %v1611 = vpop.permute.xlu0 %1610
  %1612 = vrot.lane.b32.xlu0 %v1472, 64
  %v1613 = vpop.permute.xlu0 %1612
  %v1660 = vmax.f32 %v1248, %v1523
  %v1661 = vmax.f32 %v1252, %v1525
  %v1662 = vmax.f32 %v1258, %v1527
  %v1663 = vmax.f32 %v1262, %v1529
  %v1664 = vmax.f32 %v1268, %v1531
  %v1665 = vmax.f32 %v1272, %v1533
  %v1666 = vmax.f32 %v1278, %v1535
  %v1667 = vmax.f32 %v1282, %v1537
  %v1668 = vmax.f32 %v1288, %v1539
  %v1669 = vmax.f32 %v1292, %v1541
  %v1670 = vmax.f32 %v1298, %v1543
  %v1671 = vmax.f32 %v1302, %v1545
  %v1672 = vmax.f32 %v1308, %v1547
  %v1673 = vmax.f32 %v1312, %v1549
  %v1674 = vmax.f32 %v1318, %v1551
  %v1675 = vmax.f32 %v1322, %v1553
  %v1676 = vmax.f32 %v1328, %v1555
  %v1677 = vmax.f32 %v1332, %v1557
  %v1678 = vmax.f32 %v1338, %v1559
  %v1679 = vmax.f32 %v1342, %v1561
  %v1680 = vmax.f32 %v1348, %v1563
  %v1681 = vmax.f32 %v1352, %v1565
  %v1682 = vmax.f32 %v1358, %v1567
  %v1683 = vmax.f32 %v1362, %v1569
  %v1684 = vmax.f32 %v1368, %v1571
  %v1685 = vmax.f32 %v1372, %v1573
  %v1686 = vmax.f32 %v1378, %v1575
  %v1687 = vmax.f32 %v1382, %v1577
  %v1688 = vmax.f32 %v1388, %v1579
  %v1689 = vmax.f32 %v1392, %v1581
  %v1690 = vmax.f32 %v1398, %v1583
  %v1691 = vmax.f32 %v1402, %v1585
  %v1692 = vmax.f32 %v1408, %v1587
  %v1693 = vmax.f32 %v1412, %v1589
  %v1694 = vmax.f32 %v1418, %v1591
  %v1695 = vmax.f32 %v1422, %v1593
  %v1696 = vmax.f32 %v1428, %v1595
  %v1697 = vmax.f32 %v1432, %v1597
  %v1698 = vmax.f32 %v1438, %v1599
  %v1699 = vmax.f32 %v1442, %v1601
  %v1700 = vmax.f32 %v1448, %v1603
  %v1701 = vmax.f32 %v1452, %v1605
  %v1702 = vmax.f32 %v1458, %v1607
  %v1703 = vmax.f32 %v1462, %v1609
  %v1704 = vmax.f32 %v1468, %v1611
  %v1705 = vmax.f32 %v1472, %v1613
  %1752 = vrot.lane.b32.xlu0 %v1250, 64
  %v1753 = vpop.permute.xlu0 %1752
  %1754 = vrot.lane.b32.xlu0 %v1254, 64
  %v1755 = vpop.permute.xlu0 %1754
  %1756 = vrot.lane.b32.xlu0 %v1260, 64
  %v1757 = vpop.permute.xlu0 %1756
  %1758 = vrot.lane.b32.xlu0 %v1264, 64
  %v1759 = vpop.permute.xlu0 %1758
  %1760 = vrot.lane.b32.xlu0 %v1270, 64
  %v1761 = vpop.permute.xlu0 %1760
  %1762 = vrot.lane.b32.xlu0 %v1274, 64
  %v1763 = vpop.permute.xlu0 %1762
  %1764 = vrot.lane.b32.xlu0 %v1280, 64
  %v1765 = vpop.permute.xlu0 %1764
  %1766 = vrot.lane.b32.xlu0 %v1284, 64
  %v1767 = vpop.permute.xlu0 %1766
  %1768 = vrot.lane.b32.xlu0 %v1290, 64
  %v1769 = vpop.permute.xlu0 %1768
  %1770 = vrot.lane.b32.xlu0 %v1294, 64
  %v1771 = vpop.permute.xlu0 %1770
  %1772 = vrot.lane.b32.xlu0 %v1300, 64
  %v1773 = vpop.permute.xlu0 %1772
  %1774 = vrot.lane.b32.xlu0 %v1304, 64
  %v1775 = vpop.permute.xlu0 %1774
  %1776 = vrot.lane.b32.xlu0 %v1310, 64
  %v1777 = vpop.permute.xlu0 %1776
  %1778 = vrot.lane.b32.xlu0 %v1314, 64
  %v1779 = vpop.permute.xlu0 %1778
  %1780 = vrot.lane.b32.xlu0 %v1320, 64
  %v1781 = vpop.permute.xlu0 %1780
  %1782 = vrot.lane.b32.xlu0 %v1324, 64
  %v1783 = vpop.permute.xlu0 %1782
  %1784 = vrot.lane.b32.xlu0 %v1330, 64
  %v1785 = vpop.permute.xlu0 %1784
  %1786 = vrot.lane.b32.xlu0 %v1334, 64
  %v1787 = vpop.permute.xlu0 %1786
  %1788 = vrot.lane.b32.xlu0 %v1340, 64
  %v1789 = vpop.permute.xlu0 %1788
  %1790 = vrot.lane.b32.xlu0 %v1344, 64
  %v1791 = vpop.permute.xlu0 %1790
  %1792 = vrot.lane.b32.xlu0 %v1350, 64
  %v1793 = vpop.permute.xlu0 %1792
  %1794 = vrot.lane.b32.xlu0 %v1354, 64
  %v1795 = vpop.permute.xlu0 %1794
  %1796 = vrot.lane.b32.xlu0 %v1360, 64
  %v1797 = vpop.permute.xlu0 %1796
  %1798 = vrot.lane.b32.xlu0 %v1364, 64
  %v1799 = vpop.permute.xlu0 %1798
  %1800 = vrot.lane.b32.xlu0 %v1370, 64
  %v1801 = vpop.permute.xlu0 %1800
  %1802 = vrot.lane.b32.xlu0 %v1374, 64
  %v1803 = vpop.permute.xlu0 %1802
  %1804 = vrot.lane.b32.xlu0 %v1380, 64
  %v1805 = vpop.permute.xlu0 %1804
  %1806 = vrot.lane.b32.xlu0 %v1384, 64
  %v1807 = vpop.permute.xlu0 %1806
  %1808 = vrot.lane.b32.xlu0 %v1390, 64
  %v1809 = vpop.permute.xlu0 %1808
  %1810 = vrot.lane.b32.xlu0 %v1394, 64
  %v1811 = vpop.permute.xlu0 %1810
  %1812 = vrot.lane.b32.xlu0 %v1400, 64
  %v1813 = vpop.permute.xlu0 %1812
  %1814 = vrot.lane.b32.xlu0 %v1404, 64
  %v1815 = vpop.permute.xlu0 %1814
  %1816 = vrot.lane.b32.xlu0 %v1410, 64
  %v1817 = vpop.permute.xlu0 %1816
  %1818 = vrot.lane.b32.xlu0 %v1414, 64
  %v1819 = vpop.permute.xlu0 %1818
  %1820 = vrot.lane.b32.xlu0 %v1420, 64
  %v1821 = vpop.permute.xlu0 %1820
  %1822 = vrot.lane.b32.xlu0 %v1424, 64
  %v1823 = vpop.permute.xlu0 %1822
  %1824 = vrot.lane.b32.xlu0 %v1430, 64
  %v1825 = vpop.permute.xlu0 %1824
  %1826 = vrot.lane.b32.xlu0 %v1434, 64
  %v1827 = vpop.permute.xlu0 %1826
  %1828 = vrot.lane.b32.xlu0 %v1440, 64
  %v1829 = vpop.permute.xlu0 %1828
  %1830 = vrot.lane.b32.xlu0 %v1444, 64
  %v1831 = vpop.permute.xlu0 %1830
  %1832 = vrot.lane.b32.xlu0 %v1450, 64
  %v1833 = vpop.permute.xlu0 %1832
  %1834 = vrot.lane.b32.xlu0 %v1454, 64
  %v1835 = vpop.permute.xlu0 %1834
  %1836 = vrot.lane.b32.xlu0 %v1460, 64
  %v1837 = vpop.permute.xlu0 %1836
  %1838 = vrot.lane.b32.xlu0 %v1464, 64
  %v1839 = vpop.permute.xlu0 %1838
  %1840 = vrot.lane.b32.xlu0 %v1470, 64
  %v1841 = vpop.permute.xlu0 %1840
  %1842 = vrot.lane.b32.xlu0 %v1474, 64
  %v1843 = vpop.permute.xlu0 %1842
  %v1890 = vmax.f32 %v1250, %v1753
  %v1891 = vmax.f32 %v1254, %v1755
  %v1892 = vmax.f32 %v1260, %v1757
  %v1893 = vmax.f32 %v1264, %v1759
  %v1894 = vmax.f32 %v1270, %v1761
  %v1895 = vmax.f32 %v1274, %v1763
  %v1896 = vmax.f32 %v1280, %v1765
  %v1897 = vmax.f32 %v1284, %v1767
  %v1898 = vmax.f32 %v1290, %v1769
  %v1899 = vmax.f32 %v1294, %v1771
  %v1900 = vmax.f32 %v1300, %v1773
  %v1901 = vmax.f32 %v1304, %v1775
  %v1902 = vmax.f32 %v1310, %v1777
  %v1903 = vmax.f32 %v1314, %v1779
  %v1904 = vmax.f32 %v1320, %v1781
  %v1905 = vmax.f32 %v1324, %v1783
  %v1906 = vmax.f32 %v1330, %v1785
  %v1907 = vmax.f32 %v1334, %v1787
  %v1908 = vmax.f32 %v1340, %v1789
  %v1909 = vmax.f32 %v1344, %v1791
  %v1910 = vmax.f32 %v1350, %v1793
  %v1911 = vmax.f32 %v1354, %v1795
  %v1912 = vmax.f32 %v1360, %v1797
  %v1913 = vmax.f32 %v1364, %v1799
  %v1914 = vmax.f32 %v1370, %v1801
  %v1915 = vmax.f32 %v1374, %v1803
  %v1916 = vmax.f32 %v1380, %v1805
  %v1917 = vmax.f32 %v1384, %v1807
  %v1918 = vmax.f32 %v1390, %v1809
  %v1919 = vmax.f32 %v1394, %v1811
  %v1920 = vmax.f32 %v1400, %v1813
  %v1921 = vmax.f32 %v1404, %v1815
  %v1922 = vmax.f32 %v1410, %v1817
  %v1923 = vmax.f32 %v1414, %v1819
  %v1924 = vmax.f32 %v1420, %v1821
  %v1925 = vmax.f32 %v1424, %v1823
  %v1926 = vmax.f32 %v1430, %v1825
  %v1927 = vmax.f32 %v1434, %v1827
  %v1928 = vmax.f32 %v1440, %v1829
  %v1929 = vmax.f32 %v1444, %v1831
  %v1930 = vmax.f32 %v1450, %v1833
  %v1931 = vmax.f32 %v1454, %v1835
  %v1932 = vmax.f32 %v1460, %v1837
  %v1933 = vmax.f32 %v1464, %v1839
  %v1934 = vmax.f32 %v1470, %v1841
  %v1935 = vmax.f32 %v1474, %v1843
  %v1936 = vmax.f32 %v1660, %v1890
  %v1937 = vmax.f32 %v1661, %v1891
  %v1938 = vmax.f32 %v1662, %v1892
  %v1939 = vmax.f32 %v1663, %v1893
  %v1940 = vmax.f32 %v1664, %v1894
  %v1941 = vmax.f32 %v1665, %v1895
  %v1942 = vmax.f32 %v1666, %v1896
  %v1943 = vmax.f32 %v1667, %v1897
  %v1944 = vmax.f32 %v1668, %v1898
  %v1945 = vmax.f32 %v1669, %v1899
  %v1946 = vmax.f32 %v1670, %v1900
  %v1947 = vmax.f32 %v1671, %v1901
  %v1948 = vmax.f32 %v1672, %v1902
  %v1949 = vmax.f32 %v1673, %v1903
  %v1950 = vmax.f32 %v1674, %v1904
  %v1951 = vmax.f32 %v1675, %v1905
  %v1952 = vmax.f32 %v1676, %v1906
  %v1953 = vmax.f32 %v1677, %v1907
  %v1954 = vmax.f32 %v1678, %v1908
  %v1955 = vmax.f32 %v1679, %v1909
  %v1956 = vmax.f32 %v1680, %v1910
  %v1957 = vmax.f32 %v1681, %v1911
  %v1958 = vmax.f32 %v1682, %v1912
  %v1959 = vmax.f32 %v1683, %v1913
  %v1960 = vmax.f32 %v1684, %v1914
  %v1961 = vmax.f32 %v1685, %v1915
  %v1962 = vmax.f32 %v1686, %v1916
  %v1963 = vmax.f32 %v1687, %v1917
  %v1964 = vmax.f32 %v1688, %v1918
  %v1965 = vmax.f32 %v1689, %v1919
  %v1966 = vmax.f32 %v1690, %v1920
  %v1967 = vmax.f32 %v1691, %v1921
  %v1968 = vmax.f32 %v1692, %v1922
  %v1969 = vmax.f32 %v1693, %v1923
  %v1970 = vmax.f32 %v1694, %v1924
  %v1971 = vmax.f32 %v1695, %v1925
  %v1972 = vmax.f32 %v1696, %v1926
  %v1973 = vmax.f32 %v1697, %v1927
  %v1974 = vmax.f32 %v1698, %v1928
  %v1975 = vmax.f32 %v1699, %v1929
  %v1976 = vmax.f32 %v1700, %v1930
  %v1977 = vmax.f32 %v1701, %v1931
  %v1978 = vmax.f32 %v1702, %v1932
  %v1979 = vmax.f32 %v1703, %v1933
  %v1980 = vmax.f32 %v1704, %v1934
  %v1981 = vmax.f32 %v1705, %v1935
  %v1982 = vld [vmem:[%s2] sm:$0x1]
  %v1984 = vlaneseq
  %v1985 = vshrl.u32 %v1984, 7
  %v1986 = vsub.s32 0, %v1985
  %v1987 = vrot.slane %v1982, %v1986
  %v1989 = vadd.f32 %v1936, %v1987
  %v1990 = vadd.f32 %v1937, %v1987
  %v1991 = vadd.f32 %v1938, %v1987
  %v1992 = vadd.f32 %v1939, %v1987
  %v1993 = vadd.f32 %v1940, %v1987
  %v1994 = vadd.f32 %v1941, %v1987
  %v1995 = vadd.f32 %v1942, %v1987
  %v1996 = vadd.f32 %v1943, %v1987
  %v1997 = vadd.f32 %v1944, %v1987
  %v1998 = vadd.f32 %v1945, %v1987
  %v1999 = vadd.f32 %v1946, %v1987
  %v2000 = vadd.f32 %v1947, %v1987
  %v2001 = vadd.f32 %v1948, %v1987
  %v2002 = vadd.f32 %v1949, %v1987
  %v2003 = vadd.f32 %v1950, %v1987
  %v2004 = vadd.f32 %v1951, %v1987
  %v2005 = vadd.f32 %v1952, %v1987
  %v2006 = vadd.f32 %v1953, %v1987
  %v2007 = vadd.f32 %v1954, %v1987
  %v2008 = vadd.f32 %v1955, %v1987
  %v2009 = vadd.f32 %v1956, %v1987
  %v2010 = vadd.f32 %v1957, %v1987
  %v2011 = vadd.f32 %v1958, %v1987
  %v2012 = vadd.f32 %v1959, %v1987
  %v2013 = vadd.f32 %v1960, %v1987
  %v2014 = vadd.f32 %v1961, %v1987
  %v2015 = vadd.f32 %v1962, %v1987
  %v2016 = vadd.f32 %v1963, %v1987
  %v2017 = vadd.f32 %v1964, %v1987
  %v2018 = vadd.f32 %v1965, %v1987
  %v2019 = vadd.f32 %v1966, %v1987
  %v2020 = vadd.f32 %v1967, %v1987
  %v2021 = vadd.f32 %v1968, %v1987
  %v2022 = vadd.f32 %v1969, %v1987
  %v2023 = vadd.f32 %v1970, %v1987
  %v2024 = vadd.f32 %v1971, %v1987
  %v2025 = vadd.f32 %v1972, %v1987
  %v2026 = vadd.f32 %v1973, %v1987
  %v2027 = vadd.f32 %v1974, %v1987
  %v2028 = vadd.f32 %v1975, %v1987
  %v2029 = vadd.f32 %v1976, %v1987
  %v2030 = vadd.f32 %v1977, %v1987
  %v2031 = vadd.f32 %v1978, %v1987
  %v2032 = vadd.f32 %v1979, %v1987
  %v2033 = vadd.f32 %v1980, %v1987
  %v2034 = vadd.f32 %v1981, %v1987
  %v2035 = vmax.f32 %v1989, 0.0
  %v2036 = vmax.f32 %v1990, 0.0
  %v2037 = vmax.f32 %v1991, 0.0
  %v2038 = vmax.f32 %v1992, 0.0
  %v2039 = vmax.f32 %v1993, 0.0
  %v2040 = vmax.f32 %v1994, 0.0
  %v2041 = vmax.f32 %v1995, 0.0
  %v2042 = vmax.f32 %v1996, 0.0
  %v2043 = vmax.f32 %v1997, 0.0
  %v2044 = vmax.f32 %v1998, 0.0
  %v2045 = vmax.f32 %v1999, 0.0
  %v2046 = vmax.f32 %v2000, 0.0
  %v2047 = vmax.f32 %v2001, 0.0
  %v2048 = vmax.f32 %v2002, 0.0
  %v2049 = vmax.f32 %v2003, 0.0
  %v2050 = vmax.f32 %v2004, 0.0
  %v2051 = vmax.f32 %v2005, 0.0
  %v2052 = vmax.f32 %v2006, 0.0
  %v2053 = vmax.f32 %v2007, 0.0
  %v2054 = vmax.f32 %v2008, 0.0
  %v2055 = vmax.f32 %v2009, 0.0
  %v2056 = vmax.f32 %v2010, 0.0
  %v2057 = vmax.f32 %v2011, 0.0
  %v2058 = vmax.f32 %v2012, 0.0
  %v2059 = vmax.f32 %v2013, 0.0
  %v2060 = vmax.f32 %v2014, 0.0
  %v2061 = vmax.f32 %v2015, 0.0
  %v2062 = vmax.f32 %v2016, 0.0
  %v2063 = vmax.f32 %v2017, 0.0
  %v2064 = vmax.f32 %v2018, 0.0
  %v2065 = vmax.f32 %v2019, 0.0
  %v2066 = vmax.f32 %v2020, 0.0
  %v2067 = vmax.f32 %v2021, 0.0
  %v2068 = vmax.f32 %v2022, 0.0
  %v2069 = vmax.f32 %v2023, 0.0
  %v2070 = vmax.f32 %v2024, 0.0
  %v2071 = vmax.f32 %v2025, 0.0
  %v2072 = vmax.f32 %v2026, 0.0
  %v2073 = vmax.f32 %v2027, 0.0
  %v2074 = vmax.f32 %v2028, 0.0
  %v2075 = vmax.f32 %v2029, 0.0
  %v2076 = vmax.f32 %v2030, 0.0
  %v2077 = vmax.f32 %v2031, 0.0
  %v2078 = vmax.f32 %v2032, 0.0
  %v2079 = vmax.f32 %v2033, 0.0
  %v2080 = vmax.f32 %v2034, 0.0
  %v2081 = vpack.c.bf16 %v2036, %v2035
  %v2082 = vpack.c.bf16 %v2038, %v2037
  %v2083 = vpack.c.bf16 %v2040, %v2039
  %v2084 = vpack.c.bf16 %v2042, %v2041
  %v2085 = vpack.c.bf16 %v2044, %v2043
  %v2086 = vpack.c.bf16 %v2046, %v2045
  %v2087 = vpack.c.bf16 %v2048, %v2047
  %v2088 = vpack.c.bf16 %v2050, %v2049
  %v2089 = vpack.c.bf16 %v2052, %v2051
  %v2090 = vpack.c.bf16 %v2054, %v2053
  %v2091 = vpack.c.bf16 %v2056, %v2055
  %v2092 = vpack.c.bf16 %v2058, %v2057
  %v2093 = vpack.c.bf16 %v2060, %v2059
  %v2094 = vpack.c.bf16 %v2062, %v2061
  %v2095 = vpack.c.bf16 %v2064, %v2063
  %v2096 = vpack.c.bf16 %v2066, %v2065
  %v2097 = vpack.c.bf16 %v2068, %v2067
  %v2098 = vpack.c.bf16 %v2070, %v2069
  %v2099 = vpack.c.bf16 %v2072, %v2071
  %v2100 = vpack.c.bf16 %v2074, %v2073
  %v2101 = vpack.c.bf16 %v2076, %v2075
  %v2102 = vpack.c.bf16 %v2078, %v2077
  %v2103 = vpack.c.bf16 %v2080, %v2079
  %v2127 = vunpack.c.l.b16 %v2081
  %v2128 = vunpack.c.h.b16 %v2081
  %v2129 = vunpack.c.l.b16 %v2082
  %v2130 = vunpack.c.h.b16 %v2082
  %v2131 = vunpack.c.l.b16 %v2083
  %v2132 = vunpack.c.h.b16 %v2083
  %v2133 = vunpack.c.l.b16 %v2084
  %v2134 = vunpack.c.h.b16 %v2084
  %v2135 = vunpack.c.l.b16 %v2085
  %v2136 = vunpack.c.h.b16 %v2085
  %v2137 = vunpack.c.l.b16 %v2086
  %v2138 = vunpack.c.h.b16 %v2086
  %v2139 = vunpack.c.l.b16 %v2087
  %v2140 = vunpack.c.h.b16 %v2087
  %v2141 = vunpack.c.l.b16 %v2088
  %v2142 = vunpack.c.h.b16 %v2088
  %v2143 = vunpack.c.l.b16 %v2089
  %v2144 = vunpack.c.h.b16 %v2089
  %v2145 = vunpack.c.l.b16 %v2090
  %v2146 = vunpack.c.h.b16 %v2090
  %v2147 = vunpack.c.l.b16 %v2091
  %v2148 = vunpack.c.h.b16 %v2091
  %v2149 = vunpack.c.l.b16 %v2092
  %v2150 = vunpack.c.h.b16 %v2092
  %v2151 = vunpack.c.l.b16 %v2093
  %v2152 = vunpack.c.h.b16 %v2093
  %v2153 = vunpack.c.l.b16 %v2094
  %v2154 = vunpack.c.h.b16 %v2094
  %v2155 = vunpack.c.l.b16 %v2095
  %v2156 = vunpack.c.h.b16 %v2095
  %v2157 = vunpack.c.l.b16 %v2096
  %v2158 = vunpack.c.h.b16 %v2096
  %v2159 = vunpack.c.l.b16 %v2097
  %v2160 = vunpack.c.h.b16 %v2097
  %v2161 = vunpack.c.l.b16 %v2098
  %v2162 = vunpack.c.h.b16 %v2098
  %v2163 = vunpack.c.l.b16 %v2099
  %v2164 = vunpack.c.h.b16 %v2099
  %v2165 = vunpack.c.l.b16 %v2100
  %v2166 = vunpack.c.h.b16 %v2100
  %v2167 = vunpack.c.l.b16 %v2101
  %v2168 = vunpack.c.h.b16 %v2101
  %v2169 = vunpack.c.l.b16 %v2102
  %v2170 = vunpack.c.h.b16 %v2102
  %v2171 = vunpack.c.l.b16 %v2103
  %v2172 = vunpack.c.h.b16 %v2103
  %v2173 = vpack.c.b16 %v2127, %v2127
  %v2174 = vpack.c.b16 %v2128, %v2128
  %v2175 = vpack.c.b16 %v2129, %v2129
  %v2176 = vpack.c.b16 %v2130, %v2130
  %v2177 = vpack.c.b16 %v2131, %v2131
  %v2178 = vpack.c.b16 %v2132, %v2132
  %v2179 = vpack.c.b16 %v2133, %v2133
  %v2180 = vpack.c.b16 %v2134, %v2134
  %v2181 = vpack.c.b16 %v2135, %v2135
  %v2182 = vpack.c.b16 %v2136, %v2136
  %v2183 = vpack.c.b16 %v2137, %v2137
  %v2184 = vpack.c.b16 %v2138, %v2138
  %v2185 = vpack.c.b16 %v2139, %v2139
  %v2186 = vpack.c.b16 %v2140, %v2140
  %v2187 = vpack.c.b16 %v2141, %v2141
  %v2188 = vpack.c.b16 %v2142, %v2142
  %v2189 = vpack.c.b16 %v2143, %v2143
  %v2190 = vpack.c.b16 %v2144, %v2144
  %v2191 = vpack.c.b16 %v2145, %v2145
  %v2192 = vpack.c.b16 %v2146, %v2146
  %v2193 = vpack.c.b16 %v2147, %v2147
  %v2194 = vpack.c.b16 %v2148, %v2148
  %v2195 = vpack.c.b16 %v2149, %v2149
  %v2196 = vpack.c.b16 %v2150, %v2150
  %v2197 = vpack.c.b16 %v2151, %v2151
  %v2198 = vpack.c.b16 %v2152, %v2152
  %v2199 = vpack.c.b16 %v2153, %v2153
  %v2200 = vpack.c.b16 %v2154, %v2154
  %v2201 = vpack.c.b16 %v2155, %v2155
  %v2202 = vpack.c.b16 %v2156, %v2156
  %v2203 = vpack.c.b16 %v2157, %v2157
  %v2204 = vpack.c.b16 %v2158, %v2158
  %v2205 = vpack.c.b16 %v2159, %v2159
  %v2206 = vpack.c.b16 %v2160, %v2160
  %v2207 = vpack.c.b16 %v2161, %v2161
  %v2208 = vpack.c.b16 %v2162, %v2162
  %v2209 = vpack.c.b16 %v2163, %v2163
  %v2210 = vpack.c.b16 %v2164, %v2164
  %v2211 = vpack.c.b16 %v2165, %v2165
  %v2212 = vpack.c.b16 %v2166, %v2166
  %v2213 = vpack.c.b16 %v2167, %v2167
  %v2214 = vpack.c.b16 %v2168, %v2168
  %v2215 = vpack.c.b16 %v2169, %v2169
  %v2216 = vpack.c.b16 %v2170, %v2170
  %v2217 = vpack.c.b16 %v2171, %v2171
  %v2218 = vpack.c.b16 %v2172, %v2172
  %vm2265 = vcmask 519168
  %2266 = vst.msk [vmem:[%s3] sm:$0xf] %vm2265, %v2173
  %2267 = vst.msk [vmem:[%s3 + $0x4] sm:$0xf] %vm2265, %v2174
  %2268 = vst.msk [vmem:[%s3 + $0x8] sm:$0xf] %vm2265, %v2175
  %2269 = vst.msk [vmem:[%s3 + $0xc] sm:$0xf] %vm2265, %v2176
  %2270 = vst.msk [vmem:[%s3 + $0x10] sm:$0xf] %vm2265, %v2177
  %2271 = vst.msk [vmem:[%s3 + $0x14] sm:$0xf] %vm2265, %v2178
  %2272 = vst.msk [vmem:[%s3 + $0x18] sm:$0xf] %vm2265, %v2179
  %2273 = vst.msk [vmem:[%s3 + $0x1c] sm:$0xf] %vm2265, %v2180
  %2274 = vst.msk [vmem:[%s3 + $0x20] sm:$0xf] %vm2265, %v2181
  %2275 = vst.msk [vmem:[%s3 + $0x24] sm:$0xf] %vm2265, %v2182
  %2276 = vst.msk [vmem:[%s3 + $0x28] sm:$0xf] %vm2265, %v2183
  %2277 = vst.msk [vmem:[%s3 + $0x2c] sm:$0xf] %vm2265, %v2184
  %2278 = vst.msk [vmem:[%s3 + $0x30] sm:$0xf] %vm2265, %v2185
  %2279 = vst.msk [vmem:[%s3 + $0x34] sm:$0xf] %vm2265, %v2186
  %2280 = vst.msk [vmem:[%s3 + $0x38] sm:$0xf] %vm2265, %v2187
  %2281 = vst.msk [vmem:[%s3 + $0x3c] sm:$0xf] %vm2265, %v2188
  %2282 = vst.msk [vmem:[%s3 + $0x40] sm:$0xf] %vm2265, %v2189
  %2283 = vst.msk [vmem:[%s3 + $0x44] sm:$0xf] %vm2265, %v2190
  %2284 = vst.msk [vmem:[%s3 + $0x48] sm:$0xf] %vm2265, %v2191
  %2285 = vst.msk [vmem:[%s3 + $0x4c] sm:$0xf] %vm2265, %v2192
  %2286 = vst.msk [vmem:[%s3 + $0x50] sm:$0xf] %vm2265, %v2193
  %2287 = vst.msk [vmem:[%s3 + $0x54] sm:$0xf] %vm2265, %v2194
  %2288 = vst.msk [vmem:[%s3 + $0x58] sm:$0xf] %vm2265, %v2195
  %2289 = vst.msk [vmem:[%s3 + $0x5c] sm:$0xf] %vm2265, %v2196
  %2290 = vst.msk [vmem:[%s3 + $0x60] sm:$0xf] %vm2265, %v2197
  %2291 = vst.msk [vmem:[%s3 + $0x64] sm:$0xf] %vm2265, %v2198
  %2292 = vst.msk [vmem:[%s3 + $0x68] sm:$0xf] %vm2265, %v2199
  %2293 = vst.msk [vmem:[%s3 + $0x6c] sm:$0xf] %vm2265, %v2200
  %2294 = vst.msk [vmem:[%s3 + $0x70] sm:$0xf] %vm2265, %v2201
  %2295 = vst.msk [vmem:[%s3 + $0x74] sm:$0xf] %vm2265, %v2202
  %2296 = vst.msk [vmem:[%s3 + $0x78] sm:$0xf] %vm2265, %v2203
  %2297 = vst.msk [vmem:[%s3 + $0x7c] sm:$0xf] %vm2265, %v2204
  %2298 = vst.msk [vmem:[%s3 + $0x80] sm:$0xf] %vm2265, %v2205
  %2299 = vst.msk [vmem:[%s3 + $0x84] sm:$0xf] %vm2265, %v2206
  %2300 = vst.msk [vmem:[%s3 + $0x88] sm:$0xf] %vm2265, %v2207
  %2301 = vst.msk [vmem:[%s3 + $0x8c] sm:$0xf] %vm2265, %v2208
  %2302 = vst.msk [vmem:[%s3 + $0x90] sm:$0xf] %vm2265, %v2209
  %2303 = vst.msk [vmem:[%s3 + $0x94] sm:$0xf] %vm2265, %v2210
  %2304 = vst.msk [vmem:[%s3 + $0x98] sm:$0xf] %vm2265, %v2211
  %2305 = vst.msk [vmem:[%s3 + $0x9c] sm:$0xf] %vm2265, %v2212
  %2306 = vst.msk [vmem:[%s3 + $0xa0] sm:$0xf] %vm2265, %v2213
  %2307 = vst.msk [vmem:[%s3 + $0xa4] sm:$0xf] %vm2265, %v2214
  %2308 = vst.msk [vmem:[%s3 + $0xa8] sm:$0xf] %vm2265, %v2215
  %2309 = vst.msk [vmem:[%s3 + $0xac] sm:$0xf] %vm2265, %v2216
  %2310 = vst.msk [vmem:[%s3 + $0xb0] sm:$0xf] %vm2265, %v2217
  %2311 = vst.msk [vmem:[%s3 + $0xb4] sm:$0xf] %vm2265, %v2218
  // Predicated region
  $region14: #{cnn_forward.4} parent=0 // pred_check
    _
  $region15: #{cnn_forward.4} parent=0 // pred_check_branch
    %2313 = sbr.rel (0) target = $region17
  $region16: #{cnn_forward.4} parent=0 // pred_region
    _
  $region17: #{cnn_forward.4} parent=0 // pred_fallthru
    _
  // Predicated region
  $region18: #{cnn_forward.4} parent=0 // pred_check
    _
  $region19: #{cnn_forward.4} parent=0 // pred_check_branch
    %2315 = sbr.rel (0) target = $region21
  $region20: #{cnn_forward.4} parent=0 // pred_region
    _
  $region21: #{cnn_forward.4} parent=0 // pred_fallthru
    _

// kernel: cnn_forward.5
$region0: #{cnn_forward.5}
  #allocation0 [shape = 'u32[]', space=smem, size = 0x4, offset = 0x4, fixed_abs, tag = 'smem constant byte address 0x4 - core index']
  #allocation1 [shape = 'u32[144,128]{1,0:T(1,128)}', space=vmem, size = 0x12000, scoped, tag = 'internal scratch']
  #allocation2 [shape = 'f32[1,1]{1,0:T(1,128)S(1)}', space=vmem, size = 0x200, scoped, tag = 'scoped memory for cnn_forward.5']
  %s0 = inlined_call_operand.vmem [shape: bf16[16,11520], index: 0, kind: input, shape index: {}]
  %s1 = inlined_call_operand.vmem [shape: bf16[11520,128], index: 1, kind: input, shape index: {}]
  %s2 = inlined_call_operand.vmem [shape: f32[1,128], index: 2, kind: input, shape index: {}]
  %s3 = inlined_call_operand.vmem [shape: bf16[128,128], index: 3, kind: input, shape index: {}]
  %s4 = inlined_call_operand.vmem [shape: f32[1,128], index: 4, kind: input, shape index: {}]
  %s5 = inlined_call_operand.vmem [shape: bf16[128,1], index: 5, kind: input, shape index: {}]
  %s6 = inlined_call_operand.<no memory space> [shape: f32[1,1], index: 6, kind: input, shape index: {}]
  %s7 = inlined_call_operand.vmem [shape: f32[16,1], index: 7, kind: output, shape index: {}]
  %s8 = sld [smem:[#allocation0]]
  $region38: #{cnn_forward.5} parent=0
    _
  %s10 = ssub.s32 1, %s8
  %s11 = scalar_select 0, %s10, %s8
  %v12 = vstv %s6
  %13 = vst [vmem:[#allocation2] sm:$0x1] %v12
  // Predicated region
  $region2: #{cnn_forward.5} parent=0 // pred_check
    _
  $region3: #{cnn_forward.5} parent=0 // pred_check_branch
    %15 = sbr.rel (0) target = $region5
  $region4: #{cnn_forward.5} parent=0 // pred_region
    _
  $region5: #{cnn_forward.5} parent=0 // pred_fallthru
    _
  // Predicated region
  $region6: #{cnn_forward.5} parent=0 // pred_check
    _
  $region7: #{cnn_forward.5} parent=0 // pred_check_branch
    %17 = sbr.rel (0) target = $region9
  $region8: #{cnn_forward.5} parent=0 // pred_region
    _
  $region9: #{cnn_forward.5} parent=0 // pred_fallthru
    _
  // Predicated region
  $region10: #{cnn_forward.5} parent=0 // pred_check
    _
  $region11: #{cnn_forward.5} parent=0 // pred_check_branch
    %19 = sbr.rel (0) target = $region13
  $region12: #{cnn_forward.5} parent=0 // pred_region
    _
  $region13: #{cnn_forward.5} parent=0 // pred_fallthru
    _
  // Predicated region
  $region14: #{cnn_forward.5} parent=0 // pred_check
    _
  $region15: #{cnn_forward.5} parent=0 // pred_check_branch
    %21 = sbr.rel (0) target = $region17
  $region16: #{cnn_forward.5} parent=0 // pred_region
    _
  $region17: #{cnn_forward.5} parent=0 // pred_fallthru
    _
  // Predicated region
  $region18: #{cnn_forward.5} parent=0 // pred_check
    _
  $region19: #{cnn_forward.5} parent=0 // pred_check_branch
    %23 = sbr.rel (0) target = $region21
  $region20: #{cnn_forward.5} parent=0 // pred_region
    _
  $region21: #{cnn_forward.5} parent=0 // pred_fallthru
    _
  // Predicated region
  $region22: #{cnn_forward.5} parent=0 // pred_check
    _
  $region23: #{cnn_forward.5} parent=0 // pred_check_branch
    %25 = sbr.rel (0) target = $region25
  $region24: #{cnn_forward.5} parent=0 // pred_region
    _
  $region25: #{cnn_forward.5} parent=0 // pred_fallthru
    _
  // Predicated region
  $region26: #{cnn_forward.5} parent=0 // pred_check
    _
  $region27: #{cnn_forward.5} parent=0 // pred_check_branch
    %27 = sbr.rel (0) target = $region29
  $region28: #{cnn_forward.5} parent=0 // pred_region
    _
  $region29: #{cnn_forward.5} parent=0 // pred_fallthru
    _
  %v29 = vld [vmem:[%s0] sm:$0xff]
  %v30 = vld [vmem:[%s0 + $0x8] sm:$0xff]
  %v31 = vld [vmem:[%s0 + $0x10] sm:$0xff]
  %v32 = vld [vmem:[%s0 + $0x18] sm:$0xff]
  %v33 = vld [vmem:[%s0 + $0x20] sm:$0xff]
  %v34 = vld [vmem:[%s0 + $0x28] sm:$0xff]
  %v35 = vld [vmem:[%s0 + $0x30] sm:$0xff]
  %v36 = vld [vmem:[%s0 + $0x38] sm:$0xff]
  %v37 = vld [vmem:[%s0 + $0x40] sm:$0xff]
  %v38 = vld [vmem:[%s0 + $0x48] sm:$0xff]
  %v39 = vld [vmem:[%s0 + $0x50] sm:$0xff]
  %v40 = vld [vmem:[%s0 + $0x58] sm:$0xff]
  %v41 = vld [vmem:[%s0 + $0x60] sm:$0xff]
  %v42 = vld [vmem:[%s0 + $0x68] sm:$0xff]
  %v43 = vld [vmem:[%s0 + $0x70] sm:$0xff]
  %v44 = vld [vmem:[%s0 + $0x78] sm:$0xff]
  %v45 = vld [vmem:[%s0 + $0x80] sm:$0xff]
  %v46 = vld [vmem:[%s0 + $0x88] sm:$0xff]
  %v47 = vld [vmem:[%s0 + $0x90] sm:$0xff]
  %v48 = vld [vmem:[%s0 + $0x98] sm:$0xff]
  %v49 = vld [vmem:[%s0 + $0xa0] sm:$0xff]
  %v50 = vld [vmem:[%s0 + $0xa8] sm:$0xff]
  %v51 = vld [vmem:[%s0 + $0xb0] sm:$0xff]
  %v52 = vld [vmem:[%s0 + $0xb8] sm:$0xff]
  %v53 = vld [vmem:[%s0 + $0xc0] sm:$0xff]
  %v54 = vld [vmem:[%s0 + $0xc8] sm:$0xff]
  %v55 = vld [vmem:[%s0 + $0xd0] sm:$0xff]
  %v56 = vld [vmem:[%s0 + $0xd8] sm:$0xff]
  %v57 = vld [vmem:[%s0 + $0xe0] sm:$0xff]
  %v58 = vld [vmem:[%s0 + $0xe8] sm:$0xff]
  %v59 = vld [vmem:[%s0 + $0xf0] sm:$0xff]
  %v60 = vld [vmem:[%s0 + $0xf8] sm:$0xff]
  %v61 = vld [vmem:[%s0 + $0x100] sm:$0xff]
  %v62 = vld [vmem:[%s0 + $0x108] sm:$0xff]
  %v63 = vld [vmem:[%s0 + $0x110] sm:$0xff]
  %v64 = vld [vmem:[%s0 + $0x118] sm:$0xff]
  %v65 = vld [vmem:[%s0 + $0x120] sm:$0xff]
  %v66 = vld [vmem:[%s0 + $0x128] sm:$0xff]
  %v67 = vld [vmem:[%s0 + $0x130] sm:$0xff]
  %v68 = vld [vmem:[%s0 + $0x138] sm:$0xff]
  %v69 = vld [vmem:[%s0 + $0x140] sm:$0xff]
  %v70 = vld [vmem:[%s0 + $0x148] sm:$0xff]
  %v71 = vld [vmem:[%s0 + $0x150] sm:$0xff]
  %v72 = vld [vmem:[%s0 + $0x158] sm:$0xff]
  %v73 = vld [vmem:[%s0 + $0x160] sm:$0xff]
  %v74 = vld [vmem:[%s0 + $0x168] sm:$0xff]
  %v75 = vld [vmem:[%s0 + $0x170] sm:$0xff]
  %v76 = vld [vmem:[%s0 + $0x178] sm:$0xff]
  %v77 = vld [vmem:[%s0 + $0x180] sm:$0xff]
  %v78 = vld [vmem:[%s0 + $0x188] sm:$0xff]
  %v79 = vld [vmem:[%s0 + $0x190] sm:$0xff]
  %v80 = vld [vmem:[%s0 + $0x198] sm:$0xff]
  %v81 = vld [vmem:[%s0 + $0x1a0] sm:$0xff]
  %v82 = vld [vmem:[%s0 + $0x1a8] sm:$0xff]
  %v83 = vld [vmem:[%s0 + $0x1b0] sm:$0xff]
  %v84 = vld [vmem:[%s0 + $0x1b8] sm:$0xff]
  %v85 = vld [vmem:[%s0 + $0x1c0] sm:$0xff]
  %v86 = vld [vmem:[%s0 + $0x1c8] sm:$0xff]
  %v87 = vld [vmem:[%s0 + $0x1d0] sm:$0xff]
  %v88 = vld [vmem:[%s0 + $0x1d8] sm:$0xff]
  %v89 = vld [vmem:[%s0 + $0x1e0] sm:$0xff]
  %v90 = vld [vmem:[%s0 + $0x1e8] sm:$0xff]
  %v91 = vld [vmem:[%s0 + $0x1f0] sm:$0xff]
  %v92 = vld [vmem:[%s0 + $0x1f8] sm:$0xff]
  %v93 = vld [vmem:[%s0 + $0x200] sm:$0xff]
  %v94 = vld [vmem:[%s0 + $0x208] sm:$0xff]
  %v95 = vld [vmem:[%s0 + $0x210] sm:$0xff]
  %v96 = vld [vmem:[%s0 + $0x218] sm:$0xff]
  %v97 = vld [vmem:[%s0 + $0x220] sm:$0xff]
  %v98 = vld [vmem:[%s0 + $0x228] sm:$0xff]
  %v99 = vld [vmem:[%s0 + $0x230] sm:$0xff]
  %v100 = vld [vmem:[%s0 + $0x238] sm:$0xff]
  %v101 = vld [vmem:[%s0 + $0x240] sm:$0xff]
  %v102 = vld [vmem:[%s0 + $0x248] sm:$0xff]
  %v103 = vld [vmem:[%s0 + $0x250] sm:$0xff]
  %v104 = vld [vmem:[%s0 + $0x258] sm:$0xff]
  %v105 = vld [vmem:[%s0 + $0x260] sm:$0xff]
  %v106 = vld [vmem:[%s0 + $0x268] sm:$0xff]
  %v107 = vld [vmem:[%s0 + $0x270] sm:$0xff]
  %v108 = vld [vmem:[%s0 + $0x278] sm:$0xff]
  %v109 = vld [vmem:[%s0 + $0x280] sm:$0xff]
  %v110 = vld [vmem:[%s0 + $0x288] sm:$0xff]
  %v111 = vld [vmem:[%s0 + $0x290] sm:$0xff]
  %v112 = vld [vmem:[%s0 + $0x298] sm:$0xff]
  %v113 = vld [vmem:[%s0 + $0x2a0] sm:$0xff]
  %v114 = vld [vmem:[%s0 + $0x2a8] sm:$0xff]
  %v115 = vld [vmem:[%s0 + $0x2b0] sm:$0xff]
  %v116 = vld [vmem:[%s0 + $0x2b8] sm:$0xff]
  %v117 = vld [vmem:[%s0 + $0x2c0] sm:$0xff]
  %v118 = vld [vmem:[%s0 + $0x2c8] sm:$0xff]
  %v119 = vld [vmem:[%s1] sm:$0xf]
  %v120 = vld [vmem:[%s1 + $0x4] sm:$0xf]
  %v121 = vld [vmem:[%s1 + $0x8] sm:$0xf]
  %v122 = vld [vmem:[%s1 + $0xc] sm:$0xf]
  %v123 = vld [vmem:[%s1 + $0x10] sm:$0xf]
  %v124 = vld [vmem:[%s1 + $0x14] sm:$0xf]
  %v125 = vld [vmem:[%s1 + $0x18] sm:$0xf]
  %v126 = vld [vmem:[%s1 + $0x1c] sm:$0xf]
  %v127 = vld [vmem:[%s1 + $0x20] sm:$0xf]
  %v128 = vld [vmem:[%s1 + $0x24] sm:$0xf]
  %v129 = vld [vmem:[%s1 + $0x28] sm:$0xf]
  %v130 = vld [vmem:[%s1 + $0x2c] sm:$0xf]
  %v131 = vld [vmem:[%s1 + $0x30] sm:$0xf]
  %v132 = vld [vmem:[%s1 + $0x34] sm:$0xf]
  %v133 = vld [vmem:[%s1 + $0x38] sm:$0xf]
  %v134 = vld [vmem:[%s1 + $0x3c] sm:$0xf]
  %v135 = vld [vmem:[%s1 + $0x40] sm:$0xf]
  %v136 = vld [vmem:[%s1 + $0x44] sm:$0xf]
  %v137 = vld [vmem:[%s1 + $0x48] sm:$0xf]
  %v138 = vld [vmem:[%s1 + $0x4c] sm:$0xf]
  %v139 = vld [vmem:[%s1 + $0x50] sm:$0xf]
  %v140 = vld [vmem:[%s1 + $0x54] sm:$0xf]
  %v141 = vld [vmem:[%s1 + $0x58] sm:$0xf]
  %v142 = vld [vmem:[%s1 + $0x5c] sm:$0xf]
  %v143 = vld [vmem:[%s1 + $0x60] sm:$0xf]
  %v144 = vld [vmem:[%s1 + $0x64] sm:$0xf]
  %v145 = vld [vmem:[%s1 + $0x68] sm:$0xf]
  %v146 = vld [vmem:[%s1 + $0x6c] sm:$0xf]
  %v147 = vld [vmem:[%s1 + $0x70] sm:$0xf]
  %v148 = vld [vmem:[%s1 + $0x74] sm:$0xf]
  %v149 = vld [vmem:[%s1 + $0x78] sm:$0xf]
  %v150 = vld [vmem:[%s1 + $0x7c] sm:$0xf]
  %v151 = vld [vmem:[%s1 + $0x80] sm:$0xf]
  %v152 = vld [vmem:[%s1 + $0x84] sm:$0xf]
  %v153 = vld [vmem:[%s1 + $0x88] sm:$0xf]
  %v154 = vld [vmem:[%s1 + $0x8c] sm:$0xf]
  %v155 = vld [vmem:[%s1 + $0x90] sm:$0xf]
  %v156 = vld [vmem:[%s1 + $0x94] sm:$0xf]
  %v157 = vld [vmem:[%s1 + $0x98] sm:$0xf]
  %v158 = vld [vmem:[%s1 + $0x9c] sm:$0xf]
  %v159 = vld [vmem:[%s1 + $0xa0] sm:$0xf]
  %v160 = vld [vmem:[%s1 + $0xa4] sm:$0xf]
  %v161 = vld [vmem:[%s1 + $0xa8] sm:$0xf]
  %v162 = vld [vmem:[%s1 + $0xac] sm:$0xf]
  %v163 = vld [vmem:[%s1 + $0xb0] sm:$0xf]
  %v164 = vld [vmem:[%s1 + $0xb4] sm:$0xf]
  %v165 = vld [vmem:[%s1 + $0xb8] sm:$0xf]
  %v166 = vld [vmem:[%s1 + $0xbc] sm:$0xf]
  %v167 = vld [vmem:[%s1 + $0xc0] sm:$0xf]
  %v168 = vld [vmem:[%s1 + $0xc4] sm:$0xf]
  %v169 = vld [vmem:[%s1 + $0xc8] sm:$0xf]
  %v170 = vld [vmem:[%s1 + $0xcc] sm:$0xf]
  %v171 = vld [vmem:[%s1 + $0xd0] sm:$0xf]
  %v172 = vld [vmem:[%s1 + $0xd4] sm:$0xf]
  %v173 = vld [vmem:[%s1 + $0xd8] sm:$0xf]
  %v174 = vld [vmem:[%s1 + $0xdc] sm:$0xf]
  %v175 = vld [vmem:[%s1 + $0xe0] sm:$0xf]
  %v176 = vld [vmem:[%s1 + $0xe4] sm:$0xf]
  %v177 = vld [vmem:[%s1 + $0xe8] sm:$0xf]
  %v178 = vld [vmem:[%s1 + $0xec] sm:$0xf]
  %v179 = vld [vmem:[%s1 + $0xf0] sm:$0xf]
  %v180 = vld [vmem:[%s1 + $0xf4] sm:$0xf]
  %v181 = vld [vmem:[%s1 + $0xf8] sm:$0xf]
  %v182 = vld [vmem:[%s1 + $0xfc] sm:$0xf]
  %v183 = vld [vmem:[%s1 + $0x100] sm:$0xf]
  %v184 = vld [vmem:[%s1 + $0x104] sm:$0xf]
  %v185 = vld [vmem:[%s1 + $0x108] sm:$0xf]
  %v186 = vld [vmem:[%s1 + $0x10c] sm:$0xf]
  %v187 = vld [vmem:[%s1 + $0x110] sm:$0xf]
  %v188 = vld [vmem:[%s1 + $0x114] sm:$0xf]
  %v189 = vld [vmem:[%s1 + $0x118] sm:$0xf]
  %v190 = vld [vmem:[%s1 + $0x11c] sm:$0xf]
  %v191 = vld [vmem:[%s1 + $0x120] sm:$0xf]
  %v192 = vld [vmem:[%s1 + $0x124] sm:$0xf]
  %v193 = vld [vmem:[%s1 + $0x128] sm:$0xf]
  %v194 = vld [vmem:[%s1 + $0x12c] sm:$0xf]
  %v195 = vld [vmem:[%s1 + $0x130] sm:$0xf]
  %v196 = vld [vmem:[%s1 + $0x134] sm:$0xf]
  %v197 = vld [vmem:[%s1 + $0x138] sm:$0xf]
  %v198 = vld [vmem:[%s1 + $0x13c] sm:$0xf]
  %v199 = vld [vmem:[%s1 + $0x140] sm:$0xf]
  %v200 = vld [vmem:[%s1 + $0x144] sm:$0xf]
  %v201 = vld [vmem:[%s1 + $0x148] sm:$0xf]
  %v202 = vld [vmem:[%s1 + $0x14c] sm:$0xf]
  %v203 = vld [vmem:[%s1 + $0x150] sm:$0xf]
  %v204 = vld [vmem:[%s1 + $0x154] sm:$0xf]
  %v205 = vld [vmem:[%s1 + $0x158] sm:$0xf]
  %v206 = vld [vmem:[%s1 + $0x15c] sm:$0xf]
  %v207 = vld [vmem:[%s1 + $0x160] sm:$0xf]
  %v208 = vld [vmem:[%s1 + $0x164] sm:$0xf]
  %v209 = vld [vmem:[%s1 + $0x168] sm:$0xf]
  %v210 = vld [vmem:[%s1 + $0x16c] sm:$0xf]
  %v211 = vld [vmem:[%s1 + $0x170] sm:$0xf]
  %v212 = vld [vmem:[%s1 + $0x174] sm:$0xf]
  %v213 = vld [vmem:[%s1 + $0x178] sm:$0xf]
  %v214 = vld [vmem:[%s1 + $0x17c] sm:$0xf]
  %v215 = vld [vmem:[%s1 + $0x180] sm:$0xf]
  %v216 = vld [vmem:[%s1 + $0x184] sm:$0xf]
  %v217 = vld [vmem:[%s1 + $0x188] sm:$0xf]
  %v218 = vld [vmem:[%s1 + $0x18c] sm:$0xf]
  %v219 = vld [vmem:[%s1 + $0x190] sm:$0xf]
  %v220 = vld [vmem:[%s1 + $0x194] sm:$0xf]
  %v221 = vld [vmem:[%s1 + $0x198] sm:$0xf]
  %v222 = vld [vmem:[%s1 + $0x19c] sm:$0xf]
  %v223 = vld [vmem:[%s1 + $0x1a0] sm:$0xf]
  %v224 = vld [vmem:[%s1 + $0x1a4] sm:$0xf]
  %v225 = vld [vmem:[%s1 + $0x1a8] sm:$0xf]
  %v226 = vld [vmem:[%s1 + $0x1ac] sm:$0xf]
  %v227 = vld [vmem:[%s1 + $0x1b0] sm:$0xf]
  %v228 = vld [vmem:[%s1 + $0x1b4] sm:$0xf]
  %v229 = vld [vmem:[%s1 + $0x1b8] sm:$0xf]
  %v230 = vld [vmem:[%s1 + $0x1bc] sm:$0xf]
  %v231 = vld [vmem:[%s1 + $0x1c0] sm:$0xf]
  %v232 = vld [vmem:[%s1 + $0x1c4] sm:$0xf]
  %v233 = vld [vmem:[%s1 + $0x1c8] sm:$0xf]
  %v234 = vld [vmem:[%s1 + $0x1cc] sm:$0xf]
  %v235 = vld [vmem:[%s1 + $0x1d0] sm:$0xf]
  %v236 = vld [vmem:[%s1 + $0x1d4] sm:$0xf]
  %v237 = vld [vmem:[%s1 + $0x1d8] sm:$0xf]
  %v238 = vld [vmem:[%s1 + $0x1dc] sm:$0xf]
  %v239 = vld [vmem:[%s1 + $0x1e0] sm:$0xf]
  %v240 = vld [vmem:[%s1 + $0x1e4] sm:$0xf]
  %v241 = vld [vmem:[%s1 + $0x1e8] sm:$0xf]
  %v242 = vld [vmem:[%s1 + $0x1ec] sm:$0xf]
  %v243 = vld [vmem:[%s1 + $0x1f0] sm:$0xf]
  %v244 = vld [vmem:[%s1 + $0x1f4] sm:$0xf]
  %v245 = vld [vmem:[%s1 + $0x1f8] sm:$0xf]
  %v246 = vld [vmem:[%s1 + $0x1fc] sm:$0xf]
  %v247 = vld [vmem:[%s1 + $0x200] sm:$0xf]
  %v248 = vld [vmem:[%s1 + $0x204] sm:$0xf]
  %v249 = vld [vmem:[%s1 + $0x208] sm:$0xf]
  %v250 = vld [vmem:[%s1 + $0x20c] sm:$0xf]
  %v251 = vld [vmem:[%s1 + $0x210] sm:$0xf]
  %v252 = vld [vmem:[%s1 + $0x214] sm:$0xf]
  %v253 = vld [vmem:[%s1 + $0x218] sm:$0xf]
  %v254 = vld [vmem:[%s1 + $0x21c] sm:$0xf]
  %v255 = vld [vmem:[%s1 + $0x220] sm:$0xf]
  %v256 = vld [vmem:[%s1 + $0x224] sm:$0xf]
  %v257 = vld [vmem:[%s1 + $0x228] sm:$0xf]
  %v258 = vld [vmem:[%s1 + $0x22c] sm:$0xf]
  %v259 = vld [vmem:[%s1 + $0x230] sm:$0xf]
  %v260 = vld [vmem:[%s1 + $0x234] sm:$0xf]
  %v261 = vld [vmem:[%s1 + $0x238] sm:$0xf]
  %v262 = vld [vmem:[%s1 + $0x23c] sm:$0xf]
  %v263 = vld [vmem:[%s1 + $0x240] sm:$0xf]
  %v264 = vld [vmem:[%s1 + $0x244] sm:$0xf]
  %v265 = vld [vmem:[%s1 + $0x248] sm:$0xf]
  %v266 = vld [vmem:[%s1 + $0x24c] sm:$0xf]
  %v267 = vld [vmem:[%s1 + $0x250] sm:$0xf]
  %v268 = vld [vmem:[%s1 + $0x254] sm:$0xf]
  %v269 = vld [vmem:[%s1 + $0x258] sm:$0xf]
  %v270 = vld [vmem:[%s1 + $0x25c] sm:$0xf]
  %v271 = vld [vmem:[%s1 + $0x260] sm:$0xf]
  %v272 = vld [vmem:[%s1 + $0x264] sm:$0xf]
  %v273 = vld [vmem:[%s1 + $0x268] sm:$0xf]
  %v274 = vld [vmem:[%s1 + $0x26c] sm:$0xf]
  %v275 = vld [vmem:[%s1 + $0x270] sm:$0xf]
  %v276 = vld [vmem:[%s1 + $0x274] sm:$0xf]
  %v277 = vld [vmem:[%s1 + $0x278] sm:$0xf]
  %v278 = vld [vmem:[%s1 + $0x27c] sm:$0xf]
  %v279 = vld [vmem:[%s1 + $0x280] sm:$0xf]
  %v280 = vld [vmem:[%s1 + $0x284] sm:$0xf]
  %v281 = vld [vmem:[%s1 + $0x288] sm:$0xf]
  %v282 = vld [vmem:[%s1 + $0x28c] sm:$0xf]
  %v283 = vld [vmem:[%s1 + $0x290] sm:$0xf]
  %v284 = vld [vmem:[%s1 + $0x294] sm:$0xf]
  %v285 = vld [vmem:[%s1 + $0x298] sm:$0xf]
  %v286 = vld [vmem:[%s1 + $0x29c] sm:$0xf]
  %v287 = vld [vmem:[%s1 + $0x2a0] sm:$0xf]
  %v288 = vld [vmem:[%s1 + $0x2a4] sm:$0xf]
  %v289 = vld [vmem:[%s1 + $0x2a8] sm:$0xf]
  %v290 = vld [vmem:[%s1 + $0x2ac] sm:$0xf]
  %v291 = vld [vmem:[%s1 + $0x2b0] sm:$0xf]
  %v292 = vld [vmem:[%s1 + $0x2b4] sm:$0xf]
  %v293 = vld [vmem:[%s1 + $0x2b8] sm:$0xf]
  %v294 = vld [vmem:[%s1 + $0x2bc] sm:$0xf]
  %v295 = vld [vmem:[%s1 + $0x2c0] sm:$0xf]
  %v296 = vld [vmem:[%s1 + $0x2c4] sm:$0xf]
  %v297 = vld [vmem:[%s1 + $0x2c8] sm:$0xf]
  %v298 = vld [vmem:[%s1 + $0x2cc] sm:$0xf]
  %v299 = vld [vmem:[%s1 + $0x2d0] sm:$0xf]
  %v300 = vld [vmem:[%s1 + $0x2d4] sm:$0xf]
  %v301 = vld [vmem:[%s1 + $0x2d8] sm:$0xf]
  %v302 = vld [vmem:[%s1 + $0x2dc] sm:$0xf]
  %v303 = vld [vmem:[%s1 + $0x2e0] sm:$0xf]
  %v304 = vld [vmem:[%s1 + $0x2e4] sm:$0xf]
  %v305 = vld [vmem:[%s1 + $0x2e8] sm:$0xf]
  %v306 = vld [vmem:[%s1 + $0x2ec] sm:$0xf]
  %v307 = vld [vmem:[%s1 + $0x2f0] sm:$0xf]
  %v308 = vld [vmem:[%s1 + $0x2f4] sm:$0xf]
  %v309 = vld [vmem:[%s1 + $0x2f8] sm:$0xf]
  %v310 = vld [vmem:[%s1 + $0x2fc] sm:$0xf]
  %v311 = vld [vmem:[%s1 + $0x300] sm:$0xf]
  %v312 = vld [vmem:[%s1 + $0x304] sm:$0xf]
  %v313 = vld [vmem:[%s1 + $0x308] sm:$0xf]
  %v314 = vld [vmem:[%s1 + $0x30c] sm:$0xf]
  %v315 = vld [vmem:[%s1 + $0x310] sm:$0xf]
  %v316 = vld [vmem:[%s1 + $0x314] sm:$0xf]
  %v317 = vld [vmem:[%s1 + $0x318] sm:$0xf]
  %v318 = vld [vmem:[%s1 + $0x31c] sm:$0xf]
  %v319 = vld [vmem:[%s1 + $0x320] sm:$0xf]
  %v320 = vld [vmem:[%s1 + $0x324] sm:$0xf]
  %v321 = vld [vmem:[%s1 + $0x328] sm:$0xf]
  %v322 = vld [vmem:[%s1 + $0x32c] sm:$0xf]
  %v323 = vld [vmem:[%s1 + $0x330] sm:$0xf]
  %v324 = vld [vmem:[%s1 + $0x334] sm:$0xf]
  %v325 = vld [vmem:[%s1 + $0x338] sm:$0xf]
  %v326 = vld [vmem:[%s1 + $0x33c] sm:$0xf]
  %v327 = vld [vmem:[%s1 + $0x340] sm:$0xf]
  %v328 = vld [vmem:[%s1 + $0x344] sm:$0xf]
  %v329 = vld [vmem:[%s1 + $0x348] sm:$0xf]
  %v330 = vld [vmem:[%s1 + $0x34c] sm:$0xf]
  %v331 = vld [vmem:[%s1 + $0x350] sm:$0xf]
  %v332 = vld [vmem:[%s1 + $0x354] sm:$0xf]
  %v333 = vld [vmem:[%s1 + $0x358] sm:$0xf]
  %v334 = vld [vmem:[%s1 + $0x35c] sm:$0xf]
  %v335 = vld [vmem:[%s1 + $0x360] sm:$0xf]
  %v336 = vld [vmem:[%s1 + $0x364] sm:$0xf]
  %v337 = vld [vmem:[%s1 + $0x368] sm:$0xf]
  %v338 = vld [vmem:[%s1 + $0x36c] sm:$0xf]
  %v339 = vld [vmem:[%s1 + $0x370] sm:$0xf]
  %v340 = vld [vmem:[%s1 + $0x374] sm:$0xf]
  %v341 = vld [vmem:[%s1 + $0x378] sm:$0xf]
  %v342 = vld [vmem:[%s1 + $0x37c] sm:$0xf]
  %v343 = vld [vmem:[%s1 + $0x380] sm:$0xf]
  %v344 = vld [vmem:[%s1 + $0x384] sm:$0xf]
  %v345 = vld [vmem:[%s1 + $0x388] sm:$0xf]
  %v346 = vld [vmem:[%s1 + $0x38c] sm:$0xf]
  %v347 = vld [vmem:[%s1 + $0x390] sm:$0xf]
  %v348 = vld [vmem:[%s1 + $0x394] sm:$0xf]
  %v349 = vld [vmem:[%s1 + $0x398] sm:$0xf]
  %v350 = vld [vmem:[%s1 + $0x39c] sm:$0xf]
  %v351 = vld [vmem:[%s1 + $0x3a0] sm:$0xf]
  %v352 = vld [vmem:[%s1 + $0x3a4] sm:$0xf]
  %v353 = vld [vmem:[%s1 + $0x3a8] sm:$0xf]
  %v354 = vld [vmem:[%s1 + $0x3ac] sm:$0xf]
  %v355 = vld [vmem:[%s1 + $0x3b0] sm:$0xf]
  %v356 = vld [vmem:[%s1 + $0x3b4] sm:$0xf]
  %v357 = vld [vmem:[%s1 + $0x3b8] sm:$0xf]
  %v358 = vld [vmem:[%s1 + $0x3bc] sm:$0xf]
  %v359 = vld [vmem:[%s1 + $0x3c0] sm:$0xf]
  %v360 = vld [vmem:[%s1 + $0x3c4] sm:$0xf]
  %v361 = vld [vmem:[%s1 + $0x3c8] sm:$0xf]
  %v362 = vld [vmem:[%s1 + $0x3cc] sm:$0xf]
  %v363 = vld [vmem:[%s1 + $0x3d0] sm:$0xf]
  %v364 = vld [vmem:[%s1 + $0x3d4] sm:$0xf]
  %v365 = vld [vmem:[%s1 + $0x3d8] sm:$0xf]
  %v366 = vld [vmem:[%s1 + $0x3dc] sm:$0xf]
  %v367 = vld [vmem:[%s1 + $0x3e0] sm:$0xf]
  %v368 = vld [vmem:[%s1 + $0x3e4] sm:$0xf]
  %v369 = vld [vmem:[%s1 + $0x3e8] sm:$0xf]
  %v370 = vld [vmem:[%s1 + $0x3ec] sm:$0xf]
  %v371 = vld [vmem:[%s1 + $0x3f0] sm:$0xf]
  %v372 = vld [vmem:[%s1 + $0x3f4] sm:$0xf]
  %v373 = vld [vmem:[%s1 + $0x3f8] sm:$0xf]
  %v374 = vld [vmem:[%s1 + $0x3fc] sm:$0xf]
  %v375 = vld [vmem:[%s1 + $0x400] sm:$0xf]
  %v376 = vld [vmem:[%s1 + $0x404] sm:$0xf]
  %v377 = vld [vmem:[%s1 + $0x408] sm:$0xf]
  %v378 = vld [vmem:[%s1 + $0x40c] sm:$0xf]
  %v379 = vld [vmem:[%s1 + $0x410] sm:$0xf]
  %v380 = vld [vmem:[%s1 + $0x414] sm:$0xf]
  %v381 = vld [vmem:[%s1 + $0x418] sm:$0xf]
  %v382 = vld [vmem:[%s1 + $0x41c] sm:$0xf]
  %v383 = vld [vmem:[%s1 + $0x420] sm:$0xf]
  %v384 = vld [vmem:[%s1 + $0x424] sm:$0xf]
  %v385 = vld [vmem:[%s1 + $0x428] sm:$0xf]
  %v386 = vld [vmem:[%s1 + $0x42c] sm:$0xf]
  %v387 = vld [vmem:[%s1 + $0x430] sm:$0xf]
  %v388 = vld [vmem:[%s1 + $0x434] sm:$0xf]
  %v389 = vld [vmem:[%s1 + $0x438] sm:$0xf]
  %v390 = vld [vmem:[%s1 + $0x43c] sm:$0xf]
  %v391 = vld [vmem:[%s1 + $0x440] sm:$0xf]
  %v392 = vld [vmem:[%s1 + $0x444] sm:$0xf]
  %v393 = vld [vmem:[%s1 + $0x448] sm:$0xf]
  %v394 = vld [vmem:[%s1 + $0x44c] sm:$0xf]
  %v395 = vld [vmem:[%s1 + $0x450] sm:$0xf]
  %v396 = vld [vmem:[%s1 + $0x454] sm:$0xf]
  %v397 = vld [vmem:[%s1 + $0x458] sm:$0xf]
  %v398 = vld [vmem:[%s1 + $0x45c] sm:$0xf]
  %v399 = vld [vmem:[%s1 + $0x460] sm:$0xf]
  %v400 = vld [vmem:[%s1 + $0x464] sm:$0xf]
  %v401 = vld [vmem:[%s1 + $0x468] sm:$0xf]
  %v402 = vld [vmem:[%s1 + $0x46c] sm:$0xf]
  %v403 = vld [vmem:[%s1 + $0x470] sm:$0xf]
  %v404 = vld [vmem:[%s1 + $0x474] sm:$0xf]
  %v405 = vld [vmem:[%s1 + $0x478] sm:$0xf]
  %v406 = vld [vmem:[%s1 + $0x47c] sm:$0xf]
  %v407 = vld [vmem:[%s1 + $0x480] sm:$0xf]
  %v408 = vld [vmem:[%s1 + $0x484] sm:$0xf]
  %v409 = vld [vmem:[%s1 + $0x488] sm:$0xf]
  %v410 = vld [vmem:[%s1 + $0x48c] sm:$0xf]
  %v411 = vld [vmem:[%s1 + $0x490] sm:$0xf]
  %v412 = vld [vmem:[%s1 + $0x494] sm:$0xf]
  %v413 = vld [vmem:[%s1 + $0x498] sm:$0xf]
  %v414 = vld [vmem:[%s1 + $0x49c] sm:$0xf]
  %v415 = vld [vmem:[%s1 + $0x4a0] sm:$0xf]
  %v416 = vld [vmem:[%s1 + $0x4a4] sm:$0xf]
  %v417 = vld [vmem:[%s1 + $0x4a8] sm:$0xf]
  %v418 = vld [vmem:[%s1 + $0x4ac] sm:$0xf]
  %v419 = vld [vmem:[%s1 + $0x4b0] sm:$0xf]
  %v420 = vld [vmem:[%s1 + $0x4b4] sm:$0xf]
  %v421 = vld [vmem:[%s1 + $0x4b8] sm:$0xf]
  %v422 = vld [vmem:[%s1 + $0x4bc] sm:$0xf]
  %v423 = vld [vmem:[%s1 + $0x4c0] sm:$0xf]
  %v424 = vld [vmem:[%s1 + $0x4c4] sm:$0xf]
  %v425 = vld [vmem:[%s1 + $0x4c8] sm:$0xf]
  %v426 = vld [vmem:[%s1 + $0x4cc] sm:$0xf]
  %v427 = vld [vmem:[%s1 + $0x4d0] sm:$0xf]
  %v428 = vld [vmem:[%s1 + $0x4d4] sm:$0xf]
  %v429 = vld [vmem:[%s1 + $0x4d8] sm:$0xf]
  %v430 = vld [vmem:[%s1 + $0x4dc] sm:$0xf]
  %v431 = vld [vmem:[%s1 + $0x4e0] sm:$0xf]
  %v432 = vld [vmem:[%s1 + $0x4e4] sm:$0xf]
  %v433 = vld [vmem:[%s1 + $0x4e8] sm:$0xf]
  %v434 = vld [vmem:[%s1 + $0x4ec] sm:$0xf]
  %v435 = vld [vmem:[%s1 + $0x4f0] sm:$0xf]
  %v436 = vld [vmem:[%s1 + $0x4f4] sm:$0xf]
  %v437 = vld [vmem:[%s1 + $0x4f8] sm:$0xf]
  %v438 = vld [vmem:[%s1 + $0x4fc] sm:$0xf]
  %v439 = vld [vmem:[%s1 + $0x500] sm:$0xf]
  %v440 = vld [vmem:[%s1 + $0x504] sm:$0xf]
  %v441 = vld [vmem:[%s1 + $0x508] sm:$0xf]
  %v442 = vld [vmem:[%s1 + $0x50c] sm:$0xf]
  %v443 = vld [vmem:[%s1 + $0x510] sm:$0xf]
  %v444 = vld [vmem:[%s1 + $0x514] sm:$0xf]
  %v445 = vld [vmem:[%s1 + $0x518] sm:$0xf]
  %v446 = vld [vmem:[%s1 + $0x51c] sm:$0xf]
  %v447 = vld [vmem:[%s1 + $0x520] sm:$0xf]
  %v448 = vld [vmem:[%s1 + $0x524] sm:$0xf]
  %v449 = vld [vmem:[%s1 + $0x528] sm:$0xf]
  %v450 = vld [vmem:[%s1 + $0x52c] sm:$0xf]
  %v451 = vld [vmem:[%s1 + $0x530] sm:$0xf]
  %v452 = vld [vmem:[%s1 + $0x534] sm:$0xf]
  %v453 = vld [vmem:[%s1 + $0x538] sm:$0xf]
  %v454 = vld [vmem:[%s1 + $0x53c] sm:$0xf]
  %v455 = vld [vmem:[%s1 + $0x540] sm:$0xf]
  %v456 = vld [vmem:[%s1 + $0x544] sm:$0xf]
  %v457 = vld [vmem:[%s1 + $0x548] sm:$0xf]
  %v458 = vld [vmem:[%s1 + $0x54c] sm:$0xf]
  %v459 = vld [vmem:[%s1 + $0x550] sm:$0xf]
  %v460 = vld [vmem:[%s1 + $0x554] sm:$0xf]
  %v461 = vld [vmem:[%s1 + $0x558] sm:$0xf]
  %v462 = vld [vmem:[%s1 + $0x55c] sm:$0xf]
  %v463 = vld [vmem:[%s1 + $0x560] sm:$0xf]
  %v464 = vld [vmem:[%s1 + $0x564] sm:$0xf]
  %v465 = vld [vmem:[%s1 + $0x568] sm:$0xf]
  %v466 = vld [vmem:[%s1 + $0x56c] sm:$0xf]
  %v467 = vld [vmem:[%s1 + $0x570] sm:$0xf]
  %v468 = vld [vmem:[%s1 + $0x574] sm:$0xf]
  %v469 = vld [vmem:[%s1 + $0x578] sm:$0xf]
  %v470 = vld [vmem:[%s1 + $0x57c] sm:$0xf]
  %v471 = vld [vmem:[%s1 + $0x580] sm:$0xf]
  %v472 = vld [vmem:[%s1 + $0x584] sm:$0xf]
  %v473 = vld [vmem:[%s1 + $0x588] sm:$0xf]
  %v474 = vld [vmem:[%s1 + $0x58c] sm:$0xf]
  %v475 = vld [vmem:[%s1 + $0x590] sm:$0xf]
  %v476 = vld [vmem:[%s1 + $0x594] sm:$0xf]
  %v477 = vld [vmem:[%s1 + $0x598] sm:$0xf]
  %v478 = vld [vmem:[%s1 + $0x59c] sm:$0xf]
  %v479 = vld [vmem:[%s1 + $0x5a0] sm:$0xf]
  %v480 = vld [vmem:[%s1 + $0x5a4] sm:$0xf]
  %v481 = vld [vmem:[%s1 + $0x5a8] sm:$0xf]
  %v482 = vld [vmem:[%s1 + $0x5ac] sm:$0xf]
  %v483 = vld [vmem:[%s1 + $0x5b0] sm:$0xf]
  %v484 = vld [vmem:[%s1 + $0x5b4] sm:$0xf]
  %v485 = vld [vmem:[%s1 + $0x5b8] sm:$0xf]
  %v486 = vld [vmem:[%s1 + $0x5bc] sm:$0xf]
  %v487 = vld [vmem:[%s1 + $0x5c0] sm:$0xf]
  %v488 = vld [vmem:[%s1 + $0x5c4] sm:$0xf]
  %v489 = vld [vmem:[%s1 + $0x5c8] sm:$0xf]
  %v490 = vld [vmem:[%s1 + $0x5cc] sm:$0xf]
  %v491 = vld [vmem:[%s1 + $0x5d0] sm:$0xf]
  %v492 = vld [vmem:[%s1 + $0x5d4] sm:$0xf]
  %v493 = vld [vmem:[%s1 + $0x5d8] sm:$0xf]
  %v494 = vld [vmem:[%s1 + $0x5dc] sm:$0xf]
  %v495 = vld [vmem:[%s1 + $0x5e0] sm:$0xf]
  %v496 = vld [vmem:[%s1 + $0x5e4] sm:$0xf]
  %v497 = vld [vmem:[%s1 + $0x5e8] sm:$0xf]
  %v498 = vld [vmem:[%s1 + $0x5ec] sm:$0xf]
  %v499 = vld [vmem:[%s1 + $0x5f0] sm:$0xf]
  %v500 = vld [vmem:[%s1 + $0x5f4] sm:$0xf]
  %v501 = vld [vmem:[%s1 + $0x5f8] sm:$0xf]
  %v502 = vld [vmem:[%s1 + $0x5fc] sm:$0xf]
  %v503 = vld [vmem:[%s1 + $0x600] sm:$0xf]
  %v504 = vld [vmem:[%s1 + $0x604] sm:$0xf]
  %v505 = vld [vmem:[%s1 + $0x608] sm:$0xf]
  %v506 = vld [vmem:[%s1 + $0x60c] sm:$0xf]
  %v507 = vld [vmem:[%s1 + $0x610] sm:$0xf]
  %v508 = vld [vmem:[%s1 + $0x614] sm:$0xf]
  %v509 = vld [vmem:[%s1 + $0x618] sm:$0xf]
  %v510 = vld [vmem:[%s1 + $0x61c] sm:$0xf]
  %v511 = vld [vmem:[%s1 + $0x620] sm:$0xf]
  %v512 = vld [vmem:[%s1 + $0x624] sm:$0xf]
  %v513 = vld [vmem:[%s1 + $0x628] sm:$0xf]
  %v514 = vld [vmem:[%s1 + $0x62c] sm:$0xf]
  %v515 = vld [vmem:[%s1 + $0x630] sm:$0xf]
  %v516 = vld [vmem:[%s1 + $0x634] sm:$0xf]
  %v517 = vld [vmem:[%s1 + $0x638] sm:$0xf]
  %v518 = vld [vmem:[%s1 + $0x63c] sm:$0xf]
  %v519 = vld [vmem:[%s1 + $0x640] sm:$0xf]
  %v520 = vld [vmem:[%s1 + $0x644] sm:$0xf]
  %v521 = vld [vmem:[%s1 + $0x648] sm:$0xf]
  %v522 = vld [vmem:[%s1 + $0x64c] sm:$0xf]
  %v523 = vld [vmem:[%s1 + $0x650] sm:$0xf]
  %v524 = vld [vmem:[%s1 + $0x654] sm:$0xf]
  %v525 = vld [vmem:[%s1 + $0x658] sm:$0xf]
  %v526 = vld [vmem:[%s1 + $0x65c] sm:$0xf]
  %v527 = vld [vmem:[%s1 + $0x660] sm:$0xf]
  %v528 = vld [vmem:[%s1 + $0x664] sm:$0xf]
  %v529 = vld [vmem:[%s1 + $0x668] sm:$0xf]
  %v530 = vld [vmem:[%s1 + $0x66c] sm:$0xf]
  %v531 = vld [vmem:[%s1 + $0x670] sm:$0xf]
  %v532 = vld [vmem:[%s1 + $0x674] sm:$0xf]
  %v533 = vld [vmem:[%s1 + $0x678] sm:$0xf]
  %v534 = vld [vmem:[%s1 + $0x67c] sm:$0xf]
  %v535 = vld [vmem:[%s1 + $0x680] sm:$0xf]
  %v536 = vld [vmem:[%s1 + $0x684] sm:$0xf]
  %v537 = vld [vmem:[%s1 + $0x688] sm:$0xf]
  %v538 = vld [vmem:[%s1 + $0x68c] sm:$0xf]
  %v539 = vld [vmem:[%s1 + $0x690] sm:$0xf]
  %v540 = vld [vmem:[%s1 + $0x694] sm:$0xf]
  %v541 = vld [vmem:[%s1 + $0x698] sm:$0xf]
  %v542 = vld [vmem:[%s1 + $0x69c] sm:$0xf]
  %v543 = vld [vmem:[%s1 + $0x6a0] sm:$0xf]
  %v544 = vld [vmem:[%s1 + $0x6a4] sm:$0xf]
  %v545 = vld [vmem:[%s1 + $0x6a8] sm:$0xf]
  %v546 = vld [vmem:[%s1 + $0x6ac] sm:$0xf]
  %v547 = vld [vmem:[%s1 + $0x6b0] sm:$0xf]
  %v548 = vld [vmem:[%s1 + $0x6b4] sm:$0xf]
  %v549 = vld [vmem:[%s1 + $0x6b8] sm:$0xf]
  %v550 = vld [vmem:[%s1 + $0x6bc] sm:$0xf]
  %v551 = vld [vmem:[%s1 + $0x6c0] sm:$0xf]
  %v552 = vld [vmem:[%s1 + $0x6c4] sm:$0xf]
  %v553 = vld [vmem:[%s1 + $0x6c8] sm:$0xf]
  %v554 = vld [vmem:[%s1 + $0x6cc] sm:$0xf]
  %v555 = vld [vmem:[%s1 + $0x6d0] sm:$0xf]
  %v556 = vld [vmem:[%s1 + $0x6d4] sm:$0xf]
  %v557 = vld [vmem:[%s1 + $0x6d8] sm:$0xf]
  %v558 = vld [vmem:[%s1 + $0x6dc] sm:$0xf]
  %v559 = vld [vmem:[%s1 + $0x6e0] sm:$0xf]
  %v560 = vld [vmem:[%s1 + $0x6e4] sm:$0xf]
  %v561 = vld [vmem:[%s1 + $0x6e8] sm:$0xf]
  %v562 = vld [vmem:[%s1 + $0x6ec] sm:$0xf]
  %v563 = vld [vmem:[%s1 + $0x6f0] sm:$0xf]
  %v564 = vld [vmem:[%s1 + $0x6f4] sm:$0xf]
  %v565 = vld [vmem:[%s1 + $0x6f8] sm:$0xf]
  %v566 = vld [vmem:[%s1 + $0x6fc] sm:$0xf]
  %v567 = vld [vmem:[%s1 + $0x700] sm:$0xf]
  %v568 = vld [vmem:[%s1 + $0x704] sm:$0xf]
  %v569 = vld [vmem:[%s1 + $0x708] sm:$0xf]
  %v570 = vld [vmem:[%s1 + $0x70c] sm:$0xf]
  %v571 = vld [vmem:[%s1 + $0x710] sm:$0xf]
  %v572 = vld [vmem:[%s1 + $0x714] sm:$0xf]
  %v573 = vld [vmem:[%s1 + $0x718] sm:$0xf]
  %v574 = vld [vmem:[%s1 + $0x71c] sm:$0xf]
  %v575 = vld [vmem:[%s1 + $0x720] sm:$0xf]
  %v576 = vld [vmem:[%s1 + $0x724] sm:$0xf]
  %v577 = vld [vmem:[%s1 + $0x728] sm:$0xf]
  %v578 = vld [vmem:[%s1 + $0x72c] sm:$0xf]
  %v579 = vld [vmem:[%s1 + $0x730] sm:$0xf]
  %v580 = vld [vmem:[%s1 + $0x734] sm:$0xf]
  %v581 = vld [vmem:[%s1 + $0x738] sm:$0xf]
  %v582 = vld [vmem:[%s1 + $0x73c] sm:$0xf]
  %v583 = vld [vmem:[%s1 + $0x740] sm:$0xf]
  %v584 = vld [vmem:[%s1 + $0x744] sm:$0xf]
  %v585 = vld [vmem:[%s1 + $0x748] sm:$0xf]
  %v586 = vld [vmem:[%s1 + $0x74c] sm:$0xf]
  %v587 = vld [vmem:[%s1 + $0x750] sm:$0xf]
  %v588 = vld [vmem:[%s1 + $0x754] sm:$0xf]
  %v589 = vld [vmem:[%s1 + $0x758] sm:$0xf]
  %v590 = vld [vmem:[%s1 + $0x75c] sm:$0xf]
  %v591 = vld [vmem:[%s1 + $0x760] sm:$0xf]
  %v592 = vld [vmem:[%s1 + $0x764] sm:$0xf]
  %v593 = vld [vmem:[%s1 + $0x768] sm:$0xf]
  %v594 = vld [vmem:[%s1 + $0x76c] sm:$0xf]
  %v595 = vld [vmem:[%s1 + $0x770] sm:$0xf]
  %v596 = vld [vmem:[%s1 + $0x774] sm:$0xf]
  %v597 = vld [vmem:[%s1 + $0x778] sm:$0xf]
  %v598 = vld [vmem:[%s1 + $0x77c] sm:$0xf]
  %v599 = vld [vmem:[%s1 + $0x780] sm:$0xf]
  %v600 = vld [vmem:[%s1 + $0x784] sm:$0xf]
  %v601 = vld [vmem:[%s1 + $0x788] sm:$0xf]
  %v602 = vld [vmem:[%s1 + $0x78c] sm:$0xf]
  %v603 = vld [vmem:[%s1 + $0x790] sm:$0xf]
  %v604 = vld [vmem:[%s1 + $0x794] sm:$0xf]
  %v605 = vld [vmem:[%s1 + $0x798] sm:$0xf]
  %v606 = vld [vmem:[%s1 + $0x79c] sm:$0xf]
  %v607 = vld [vmem:[%s1 + $0x7a0] sm:$0xf]
  %v608 = vld [vmem:[%s1 + $0x7a4] sm:$0xf]
  %v609 = vld [vmem:[%s1 + $0x7a8] sm:$0xf]
  %v610 = vld [vmem:[%s1 + $0x7ac] sm:$0xf]
  %v611 = vld [vmem:[%s1 + $0x7b0] sm:$0xf]
  %v612 = vld [vmem:[%s1 + $0x7b4] sm:$0xf]
  %v613 = vld [vmem:[%s1 + $0x7b8] sm:$0xf]
  %v614 = vld [vmem:[%s1 + $0x7bc] sm:$0xf]
  %v615 = vld [vmem:[%s1 + $0x7c0] sm:$0xf]
  %v616 = vld [vmem:[%s1 + $0x7c4] sm:$0xf]
  %v617 = vld [vmem:[%s1 + $0x7c8] sm:$0xf]
  %v618 = vld [vmem:[%s1 + $0x7cc] sm:$0xf]
  %v619 = vld [vmem:[%s1 + $0x7d0] sm:$0xf]
  %v620 = vld [vmem:[%s1 + $0x7d4] sm:$0xf]
  %v621 = vld [vmem:[%s1 + $0x7d8] sm:$0xf]
  %v622 = vld [vmem:[%s1 + $0x7dc] sm:$0xf]
  %v623 = vld [vmem:[%s1 + $0x7e0] sm:$0xf]
  %v624 = vld [vmem:[%s1 + $0x7e4] sm:$0xf]
  %v625 = vld [vmem:[%s1 + $0x7e8] sm:$0xf]
  %v626 = vld [vmem:[%s1 + $0x7ec] sm:$0xf]
  %v627 = vld [vmem:[%s1 + $0x7f0] sm:$0xf]
  %v628 = vld [vmem:[%s1 + $0x7f4] sm:$0xf]
  %v629 = vld [vmem:[%s1 + $0x7f8] sm:$0xf]
  %v630 = vld [vmem:[%s1 + $0x7fc] sm:$0xf]
  %v631 = vld [vmem:[%s1 + $0x800] sm:$0xf]
  %v632 = vld [vmem:[%s1 + $0x804] sm:$0xf]
  %v633 = vld [vmem:[%s1 + $0x808] sm:$0xf]
  %v634 = vld [vmem:[%s1 + $0x80c] sm:$0xf]
  %v635 = vld [vmem:[%s1 + $0x810] sm:$0xf]
  %v636 = vld [vmem:[%s1 + $0x814] sm:$0xf]
  %v637 = vld [vmem:[%s1 + $0x818] sm:$0xf]
  %v638 = vld [vmem:[%s1 + $0x81c] sm:$0xf]
  %v639 = vld [vmem:[%s1 + $0x820] sm:$0xf]
  %v640 = vld [vmem:[%s1 + $0x824] sm:$0xf]
  %v641 = vld [vmem:[%s1 + $0x828] sm:$0xf]
  %v642 = vld [vmem:[%s1 + $0x82c] sm:$0xf]
  %v643 = vld [vmem:[%s1 + $0x830] sm:$0xf]
  %v644 = vld [vmem:[%s1 + $0x834] sm:$0xf]
  %v645 = vld [vmem:[%s1 + $0x838] sm:$0xf]
  %v646 = vld [vmem:[%s1 + $0x83c] sm:$0xf]
  %v647 = vld [vmem:[%s1 + $0x840] sm:$0xf]
  %v648 = vld [vmem:[%s1 + $0x844] sm:$0xf]
  %v649 = vld [vmem:[%s1 + $0x848] sm:$0xf]
  %v650 = vld [vmem:[%s1 + $0x84c] sm:$0xf]
  %v651 = vld [vmem:[%s1 + $0x850] sm:$0xf]
  %v652 = vld [vmem:[%s1 + $0x854] sm:$0xf]
  %v653 = vld [vmem:[%s1 + $0x858] sm:$0xf]
  %v654 = vld [vmem:[%s1 + $0x85c] sm:$0xf]
  %v655 = vld [vmem:[%s1 + $0x860] sm:$0xf]
  %v656 = vld [vmem:[%s1 + $0x864] sm:$0xf]
  %v657 = vld [vmem:[%s1 + $0x868] sm:$0xf]
  %v658 = vld [vmem:[%s1 + $0x86c] sm:$0xf]
  %v659 = vld [vmem:[%s1 + $0x870] sm:$0xf]
  %v660 = vld [vmem:[%s1 + $0x874] sm:$0xf]
  %v661 = vld [vmem:[%s1 + $0x878] sm:$0xf]
  %v662 = vld [vmem:[%s1 + $0x87c] sm:$0xf]
  %v663 = vld [vmem:[%s1 + $0x880] sm:$0xf]
  %v664 = vld [vmem:[%s1 + $0x884] sm:$0xf]
  %v665 = vld [vmem:[%s1 + $0x888] sm:$0xf]
  %v666 = vld [vmem:[%s1 + $0x88c] sm:$0xf]
  %v667 = vld [vmem:[%s1 + $0x890] sm:$0xf]
  %v668 = vld [vmem:[%s1 + $0x894] sm:$0xf]
  %v669 = vld [vmem:[%s1 + $0x898] sm:$0xf]
  %v670 = vld [vmem:[%s1 + $0x89c] sm:$0xf]
  %v671 = vld [vmem:[%s1 + $0x8a0] sm:$0xf]
  %v672 = vld [vmem:[%s1 + $0x8a4] sm:$0xf]
  %v673 = vld [vmem:[%s1 + $0x8a8] sm:$0xf]
  %v674 = vld [vmem:[%s1 + $0x8ac] sm:$0xf]
  %v675 = vld [vmem:[%s1 + $0x8b0] sm:$0xf]
  %v676 = vld [vmem:[%s1 + $0x8b4] sm:$0xf]
  %v677 = vld [vmem:[%s1 + $0x8b8] sm:$0xf]
  %v678 = vld [vmem:[%s1 + $0x8bc] sm:$0xf]
  %v679 = vld [vmem:[%s1 + $0x8c0] sm:$0xf]
  %v680 = vld [vmem:[%s1 + $0x8c4] sm:$0xf]
  %v681 = vld [vmem:[%s1 + $0x8c8] sm:$0xf]
  %v682 = vld [vmem:[%s1 + $0x8cc] sm:$0xf]
  %v683 = vld [vmem:[%s1 + $0x8d0] sm:$0xf]
  %v684 = vld [vmem:[%s1 + $0x8d4] sm:$0xf]
  %v685 = vld [vmem:[%s1 + $0x8d8] sm:$0xf]
  %v686 = vld [vmem:[%s1 + $0x8dc] sm:$0xf]
  %v687 = vld [vmem:[%s1 + $0x8e0] sm:$0xf]
  %v688 = vld [vmem:[%s1 + $0x8e4] sm:$0xf]
  %v689 = vld [vmem:[%s1 + $0x8e8] sm:$0xf]
  %v690 = vld [vmem:[%s1 + $0x8ec] sm:$0xf]
  %v691 = vld [vmem:[%s1 + $0x8f0] sm:$0xf]
  %v692 = vld [vmem:[%s1 + $0x8f4] sm:$0xf]
  %v693 = vld [vmem:[%s1 + $0x8f8] sm:$0xf]
  %v694 = vld [vmem:[%s1 + $0x8fc] sm:$0xf]
  %v695 = vld [vmem:[%s1 + $0x900] sm:$0xf]
  %v696 = vld [vmem:[%s1 + $0x904] sm:$0xf]
  %v697 = vld [vmem:[%s1 + $0x908] sm:$0xf]
  %v698 = vld [vmem:[%s1 + $0x90c] sm:$0xf]
  %v699 = vld [vmem:[%s1 + $0x910] sm:$0xf]
  %v700 = vld [vmem:[%s1 + $0x914] sm:$0xf]
  %v701 = vld [vmem:[%s1 + $0x918] sm:$0xf]
  %v702 = vld [vmem:[%s1 + $0x91c] sm:$0xf]
  %v703 = vld [vmem:[%s1 + $0x920] sm:$0xf]
  %v704 = vld [vmem:[%s1 + $0x924] sm:$0xf]
  %v705 = vld [vmem:[%s1 + $0x928] sm:$0xf]
  %v706 = vld [vmem:[%s1 + $0x92c] sm:$0xf]
  %v707 = vld [vmem:[%s1 + $0x930] sm:$0xf]
  %v708 = vld [vmem:[%s1 + $0x934] sm:$0xf]
  %v709 = vld [vmem:[%s1 + $0x938] sm:$0xf]
  %v710 = vld [vmem:[%s1 + $0x93c] sm:$0xf]
  %v711 = vld [vmem:[%s1 + $0x940] sm:$0xf]
  %v712 = vld [vmem:[%s1 + $0x944] sm:$0xf]
  %v713 = vld [vmem:[%s1 + $0x948] sm:$0xf]
  %v714 = vld [vmem:[%s1 + $0x94c] sm:$0xf]
  %v715 = vld [vmem:[%s1 + $0x950] sm:$0xf]
  %v716 = vld [vmem:[%s1 + $0x954] sm:$0xf]
  %v717 = vld [vmem:[%s1 + $0x958] sm:$0xf]
  %v718 = vld [vmem:[%s1 + $0x95c] sm:$0xf]
  %v719 = vld [vmem:[%s1 + $0x960] sm:$0xf]
  %v720 = vld [vmem:[%s1 + $0x964] sm:$0xf]
  %v721 = vld [vmem:[%s1 + $0x968] sm:$0xf]
  %v722 = vld [vmem:[%s1 + $0x96c] sm:$0xf]
  %v723 = vld [vmem:[%s1 + $0x970] sm:$0xf]
  %v724 = vld [vmem:[%s1 + $0x974] sm:$0xf]
  %v725 = vld [vmem:[%s1 + $0x978] sm:$0xf]
  %v726 = vld [vmem:[%s1 + $0x97c] sm:$0xf]
  %v727 = vld [vmem:[%s1 + $0x980] sm:$0xf]
  %v728 = vld [vmem:[%s1 + $0x984] sm:$0xf]
  %v729 = vld [vmem:[%s1 + $0x988] sm:$0xf]
  %v730 = vld [vmem:[%s1 + $0x98c] sm:$0xf]
  %v731 = vld [vmem:[%s1 + $0x990] sm:$0xf]
  %v732 = vld [vmem:[%s1 + $0x994] sm:$0xf]
  %v733 = vld [vmem:[%s1 + $0x998] sm:$0xf]
  %v734 = vld [vmem:[%s1 + $0x99c] sm:$0xf]
  %v735 = vld [vmem:[%s1 + $0x9a0] sm:$0xf]
  %v736 = vld [vmem:[%s1 + $0x9a4] sm:$0xf]
  %v737 = vld [vmem:[%s1 + $0x9a8] sm:$0xf]
  %v738 = vld [vmem:[%s1 + $0x9ac] sm:$0xf]
  %v739 = vld [vmem:[%s1 + $0x9b0] sm:$0xf]
  %v740 = vld [vmem:[%s1 + $0x9b4] sm:$0xf]
  %v741 = vld [vmem:[%s1 + $0x9b8] sm:$0xf]
  %v742 = vld [vmem:[%s1 + $0x9bc] sm:$0xf]
  %v743 = vld [vmem:[%s1 + $0x9c0] sm:$0xf]
  %v744 = vld [vmem:[%s1 + $0x9c4] sm:$0xf]
  %v745 = vld [vmem:[%s1 + $0x9c8] sm:$0xf]
  %v746 = vld [vmem:[%s1 + $0x9cc] sm:$0xf]
  %v747 = vld [vmem:[%s1 + $0x9d0] sm:$0xf]
  %v748 = vld [vmem:[%s1 + $0x9d4] sm:$0xf]
  %v749 = vld [vmem:[%s1 + $0x9d8] sm:$0xf]
  %v750 = vld [vmem:[%s1 + $0x9dc] sm:$0xf]
  %v751 = vld [vmem:[%s1 + $0x9e0] sm:$0xf]
  %v752 = vld [vmem:[%s1 + $0x9e4] sm:$0xf]
  %v753 = vld [vmem:[%s1 + $0x9e8] sm:$0xf]
  %v754 = vld [vmem:[%s1 + $0x9ec] sm:$0xf]
  %v755 = vld [vmem:[%s1 + $0x9f0] sm:$0xf]
  %v756 = vld [vmem:[%s1 + $0x9f4] sm:$0xf]
  %v757 = vld [vmem:[%s1 + $0x9f8] sm:$0xf]
  %v758 = vld [vmem:[%s1 + $0x9fc] sm:$0xf]
  %v759 = vld [vmem:[%s1 + $0xa00] sm:$0xf]
  %v760 = vld [vmem:[%s1 + $0xa04] sm:$0xf]
  %v761 = vld [vmem:[%s1 + $0xa08] sm:$0xf]
  %v762 = vld [vmem:[%s1 + $0xa0c] sm:$0xf]
  %v763 = vld [vmem:[%s1 + $0xa10] sm:$0xf]
  %v764 = vld [vmem:[%s1 + $0xa14] sm:$0xf]
  %v765 = vld [vmem:[%s1 + $0xa18] sm:$0xf]
  %v766 = vld [vmem:[%s1 + $0xa1c] sm:$0xf]
  %v767 = vld [vmem:[%s1 + $0xa20] sm:$0xf]
  %v768 = vld [vmem:[%s1 + $0xa24] sm:$0xf]
  %v769 = vld [vmem:[%s1 + $0xa28] sm:$0xf]
  %v770 = vld [vmem:[%s1 + $0xa2c] sm:$0xf]
  %v771 = vld [vmem:[%s1 + $0xa30] sm:$0xf]
  %v772 = vld [vmem:[%s1 + $0xa34] sm:$0xf]
  %v773 = vld [vmem:[%s1 + $0xa38] sm:$0xf]
  %v774 = vld [vmem:[%s1 + $0xa3c] sm:$0xf]
  %v775 = vld [vmem:[%s1 + $0xa40] sm:$0xf]
  %v776 = vld [vmem:[%s1 + $0xa44] sm:$0xf]
  %v777 = vld [vmem:[%s1 + $0xa48] sm:$0xf]
  %v778 = vld [vmem:[%s1 + $0xa4c] sm:$0xf]
  %v779 = vld [vmem:[%s1 + $0xa50] sm:$0xf]
  %v780 = vld [vmem:[%s1 + $0xa54] sm:$0xf]
  %v781 = vld [vmem:[%s1 + $0xa58] sm:$0xf]
  %v782 = vld [vmem:[%s1 + $0xa5c] sm:$0xf]
  %v783 = vld [vmem:[%s1 + $0xa60] sm:$0xf]
  %v784 = vld [vmem:[%s1 + $0xa64] sm:$0xf]
  %v785 = vld [vmem:[%s1 + $0xa68] sm:$0xf]
  %v786 = vld [vmem:[%s1 + $0xa6c] sm:$0xf]
  %v787 = vld [vmem:[%s1 + $0xa70] sm:$0xf]
  %v788 = vld [vmem:[%s1 + $0xa74] sm:$0xf]
  %v789 = vld [vmem:[%s1 + $0xa78] sm:$0xf]
  %v790 = vld [vmem:[%s1 + $0xa7c] sm:$0xf]
  %v791 = vld [vmem:[%s1 + $0xa80] sm:$0xf]
  %v792 = vld [vmem:[%s1 + $0xa84] sm:$0xf]
  %v793 = vld [vmem:[%s1 + $0xa88] sm:$0xf]
  %v794 = vld [vmem:[%s1 + $0xa8c] sm:$0xf]
  %v795 = vld [vmem:[%s1 + $0xa90] sm:$0xf]
  %v796 = vld [vmem:[%s1 + $0xa94] sm:$0xf]
  %v797 = vld [vmem:[%s1 + $0xa98] sm:$0xf]
  %v798 = vld [vmem:[%s1 + $0xa9c] sm:$0xf]
  %v799 = vld [vmem:[%s1 + $0xaa0] sm:$0xf]
  %v800 = vld [vmem:[%s1 + $0xaa4] sm:$0xf]
  %v801 = vld [vmem:[%s1 + $0xaa8] sm:$0xf]
  %v802 = vld [vmem:[%s1 + $0xaac] sm:$0xf]
  %v803 = vld [vmem:[%s1 + $0xab0] sm:$0xf]
  %v804 = vld [vmem:[%s1 + $0xab4] sm:$0xf]
  %v805 = vld [vmem:[%s1 + $0xab8] sm:$0xf]
  %v806 = vld [vmem:[%s1 + $0xabc] sm:$0xf]
  %v807 = vld [vmem:[%s1 + $0xac0] sm:$0xf]
  %v808 = vld [vmem:[%s1 + $0xac4] sm:$0xf]
  %v809 = vld [vmem:[%s1 + $0xac8] sm:$0xf]
  %v810 = vld [vmem:[%s1 + $0xacc] sm:$0xf]
  %v811 = vld [vmem:[%s1 + $0xad0] sm:$0xf]
  %v812 = vld [vmem:[%s1 + $0xad4] sm:$0xf]
  %v813 = vld [vmem:[%s1 + $0xad8] sm:$0xf]
  %v814 = vld [vmem:[%s1 + $0xadc] sm:$0xf]
  %v815 = vld [vmem:[%s1 + $0xae0] sm:$0xf]
  %v816 = vld [vmem:[%s1 + $0xae4] sm:$0xf]
  %v817 = vld [vmem:[%s1 + $0xae8] sm:$0xf]
  %v818 = vld [vmem:[%s1 + $0xaec] sm:$0xf]
  %v819 = vld [vmem:[%s1 + $0xaf0] sm:$0xf]
  %v820 = vld [vmem:[%s1 + $0xaf4] sm:$0xf]
  %v821 = vld [vmem:[%s1 + $0xaf8] sm:$0xf]
  %v822 = vld [vmem:[%s1 + $0xafc] sm:$0xf]
  %v823 = vld [vmem:[%s1 + $0xb00] sm:$0xf]
  %v824 = vld [vmem:[%s1 + $0xb04] sm:$0xf]
  %v825 = vld [vmem:[%s1 + $0xb08] sm:$0xf]
  %v826 = vld [vmem:[%s1 + $0xb0c] sm:$0xf]
  %v827 = vld [vmem:[%s1 + $0xb10] sm:$0xf]
  %v828 = vld [vmem:[%s1 + $0xb14] sm:$0xf]
  %v829 = vld [vmem:[%s1 + $0xb18] sm:$0xf]
  %v830 = vld [vmem:[%s1 + $0xb1c] sm:$0xf]
  %v831 = vld [vmem:[%s1 + $0xb20] sm:$0xf]
  %v832 = vld [vmem:[%s1 + $0xb24] sm:$0xf]
  %v833 = vld [vmem:[%s1 + $0xb28] sm:$0xf]
  %v834 = vld [vmem:[%s1 + $0xb2c] sm:$0xf]
  %v835 = vld [vmem:[%s1 + $0xb30] sm:$0xf]
  %v836 = vld [vmem:[%s1 + $0xb34] sm:$0xf]
  %v837 = vld [vmem:[%s1 + $0xb38] sm:$0xf]
  %v838 = vld [vmem:[%s1 + $0xb3c] sm:$0xf]
  %v839 = vld [vmem:[%s1 + $0xb40] sm:$0xf]
  %v840 = vld [vmem:[%s1 + $0xb44] sm:$0xf]
  %v841 = vld [vmem:[%s1 + $0xb48] sm:$0xf]
  %v842 = vld [vmem:[%s1 + $0xb4c] sm:$0xf]
  %v843 = vld [vmem:[%s1 + $0xb50] sm:$0xf]
  %v844 = vld [vmem:[%s1 + $0xb54] sm:$0xf]
  %v845 = vld [vmem:[%s1 + $0xb58] sm:$0xf]
  %v846 = vld [vmem:[%s1 + $0xb5c] sm:$0xf]
  %v847 = vld [vmem:[%s1 + $0xb60] sm:$0xf]
  %v848 = vld [vmem:[%s1 + $0xb64] sm:$0xf]
  %v849 = vld [vmem:[%s1 + $0xb68] sm:$0xf]
  %v850 = vld [vmem:[%s1 + $0xb6c] sm:$0xf]
  %v851 = vld [vmem:[%s1 + $0xb70] sm:$0xf]
  %v852 = vld [vmem:[%s1 + $0xb74] sm:$0xf]
  %v853 = vld [vmem:[%s1 + $0xb78] sm:$0xf]
  %v854 = vld [vmem:[%s1 + $0xb7c] sm:$0xf]
  %v855 = vld [vmem:[%s1 + $0xb80] sm:$0xf]
  %v856 = vld [vmem:[%s1 + $0xb84] sm:$0xf]
  %v857 = vld [vmem:[%s1 + $0xb88] sm:$0xf]
  %v858 = vld [vmem:[%s1 + $0xb8c] sm:$0xf]
  %v859 = vld [vmem:[%s1 + $0xb90] sm:$0xf]
  %v860 = vld [vmem:[%s1 + $0xb94] sm:$0xf]
  %v861 = vld [vmem:[%s1 + $0xb98] sm:$0xf]
  %v862 = vld [vmem:[%s1 + $0xb9c] sm:$0xf]
  %v863 = vld [vmem:[%s1 + $0xba0] sm:$0xf]
  %v864 = vld [vmem:[%s1 + $0xba4] sm:$0xf]
  %v865 = vld [vmem:[%s1 + $0xba8] sm:$0xf]
  %v866 = vld [vmem:[%s1 + $0xbac] sm:$0xf]
  %v867 = vld [vmem:[%s1 + $0xbb0] sm:$0xf]
  %v868 = vld [vmem:[%s1 + $0xbb4] sm:$0xf]
  %v869 = vld [vmem:[%s1 + $0xbb8] sm:$0xf]
  %v870 = vld [vmem:[%s1 + $0xbbc] sm:$0xf]
  %v871 = vld [vmem:[%s1 + $0xbc0] sm:$0xf]
  %v872 = vld [vmem:[%s1 + $0xbc4] sm:$0xf]
  %v873 = vld [vmem:[%s1 + $0xbc8] sm:$0xf]
  %v874 = vld [vmem:[%s1 + $0xbcc] sm:$0xf]
  %v875 = vld [vmem:[%s1 + $0xbd0] sm:$0xf]
  %v876 = vld [vmem:[%s1 + $0xbd4] sm:$0xf]
  %v877 = vld [vmem:[%s1 + $0xbd8] sm:$0xf]
  %v878 = vld [vmem:[%s1 + $0xbdc] sm:$0xf]
  %v879 = vld [vmem:[%s1 + $0xbe0] sm:$0xf]
  %v880 = vld [vmem:[%s1 + $0xbe4] sm:$0xf]
  %v881 = vld [vmem:[%s1 + $0xbe8] sm:$0xf]
  %v882 = vld [vmem:[%s1 + $0xbec] sm:$0xf]
  %v883 = vld [vmem:[%s1 + $0xbf0] sm:$0xf]
  %v884 = vld [vmem:[%s1 + $0xbf4] sm:$0xf]
  %v885 = vld [vmem:[%s1 + $0xbf8] sm:$0xf]
  %v886 = vld [vmem:[%s1 + $0xbfc] sm:$0xf]
  %v887 = vld [vmem:[%s1 + $0xc00] sm:$0xf]
  %v888 = vld [vmem:[%s1 + $0xc04] sm:$0xf]
  %v889 = vld [vmem:[%s1 + $0xc08] sm:$0xf]
  %v890 = vld [vmem:[%s1 + $0xc0c] sm:$0xf]
  %v891 = vld [vmem:[%s1 + $0xc10] sm:$0xf]
  %v892 = vld [vmem:[%s1 + $0xc14] sm:$0xf]
  %v893 = vld [vmem:[%s1 + $0xc18] sm:$0xf]
  %v894 = vld [vmem:[%s1 + $0xc1c] sm:$0xf]
  %v895 = vld [vmem:[%s1 + $0xc20] sm:$0xf]
  %v896 = vld [vmem:[%s1 + $0xc24] sm:$0xf]
  %v897 = vld [vmem:[%s1 + $0xc28] sm:$0xf]
  %v898 = vld [vmem:[%s1 + $0xc2c] sm:$0xf]
  %v899 = vld [vmem:[%s1 + $0xc30] sm:$0xf]
  %v900 = vld [vmem:[%s1 + $0xc34] sm:$0xf]
  %v901 = vld [vmem:[%s1 + $0xc38] sm:$0xf]
  %v902 = vld [vmem:[%s1 + $0xc3c] sm:$0xf]
  %v903 = vld [vmem:[%s1 + $0xc40] sm:$0xf]
  %v904 = vld [vmem:[%s1 + $0xc44] sm:$0xf]
  %v905 = vld [vmem:[%s1 + $0xc48] sm:$0xf]
  %v906 = vld [vmem:[%s1 + $0xc4c] sm:$0xf]
  %v907 = vld [vmem:[%s1 + $0xc50] sm:$0xf]
  %v908 = vld [vmem:[%s1 + $0xc54] sm:$0xf]
  %v909 = vld [vmem:[%s1 + $0xc58] sm:$0xf]
  %v910 = vld [vmem:[%s1 + $0xc5c] sm:$0xf]
  %v911 = vld [vmem:[%s1 + $0xc60] sm:$0xf]
  %v912 = vld [vmem:[%s1 + $0xc64] sm:$0xf]
  %v913 = vld [vmem:[%s1 + $0xc68] sm:$0xf]
  %v914 = vld [vmem:[%s1 + $0xc6c] sm:$0xf]
  %v915 = vld [vmem:[%s1 + $0xc70] sm:$0xf]
  %v916 = vld [vmem:[%s1 + $0xc74] sm:$0xf]
  %v917 = vld [vmem:[%s1 + $0xc78] sm:$0xf]
  %v918 = vld [vmem:[%s1 + $0xc7c] sm:$0xf]
  %v919 = vld [vmem:[%s1 + $0xc80] sm:$0xf]
  %v920 = vld [vmem:[%s1 + $0xc84] sm:$0xf]
  %v921 = vld [vmem:[%s1 + $0xc88] sm:$0xf]
  %v922 = vld [vmem:[%s1 + $0xc8c] sm:$0xf]
  %v923 = vld [vmem:[%s1 + $0xc90] sm:$0xf]
  %v924 = vld [vmem:[%s1 + $0xc94] sm:$0xf]
  %v925 = vld [vmem:[%s1 + $0xc98] sm:$0xf]
  %v926 = vld [vmem:[%s1 + $0xc9c] sm:$0xf]
  %v927 = vld [vmem:[%s1 + $0xca0] sm:$0xf]
  %v928 = vld [vmem:[%s1 + $0xca4] sm:$0xf]
  %v929 = vld [vmem:[%s1 + $0xca8] sm:$0xf]
  %v930 = vld [vmem:[%s1 + $0xcac] sm:$0xf]
  %v931 = vld [vmem:[%s1 + $0xcb0] sm:$0xf]
  %v932 = vld [vmem:[%s1 + $0xcb4] sm:$0xf]
  %v933 = vld [vmem:[%s1 + $0xcb8] sm:$0xf]
  %v934 = vld [vmem:[%s1 + $0xcbc] sm:$0xf]
  %v935 = vld [vmem:[%s1 + $0xcc0] sm:$0xf]
  %v936 = vld [vmem:[%s1 + $0xcc4] sm:$0xf]
  %v937 = vld [vmem:[%s1 + $0xcc8] sm:$0xf]
  %v938 = vld [vmem:[%s1 + $0xccc] sm:$0xf]
  %v939 = vld [vmem:[%s1 + $0xcd0] sm:$0xf]
  %v940 = vld [vmem:[%s1 + $0xcd4] sm:$0xf]
  %v941 = vld [vmem:[%s1 + $0xcd8] sm:$0xf]
  %v942 = vld [vmem:[%s1 + $0xcdc] sm:$0xf]
  %v943 = vld [vmem:[%s1 + $0xce0] sm:$0xf]
  %v944 = vld [vmem:[%s1 + $0xce4] sm:$0xf]
  %v945 = vld [vmem:[%s1 + $0xce8] sm:$0xf]
  %v946 = vld [vmem:[%s1 + $0xcec] sm:$0xf]
  %v947 = vld [vmem:[%s1 + $0xcf0] sm:$0xf]
  %v948 = vld [vmem:[%s1 + $0xcf4] sm:$0xf]
  %v949 = vld [vmem:[%s1 + $0xcf8] sm:$0xf]
  %v950 = vld [vmem:[%s1 + $0xcfc] sm:$0xf]
  %v951 = vld [vmem:[%s1 + $0xd00] sm:$0xf]
  %v952 = vld [vmem:[%s1 + $0xd04] sm:$0xf]
  %v953 = vld [vmem:[%s1 + $0xd08] sm:$0xf]
  %v954 = vld [vmem:[%s1 + $0xd0c] sm:$0xf]
  %v955 = vld [vmem:[%s1 + $0xd10] sm:$0xf]
  %v956 = vld [vmem:[%s1 + $0xd14] sm:$0xf]
  %v957 = vld [vmem:[%s1 + $0xd18] sm:$0xf]
  %v958 = vld [vmem:[%s1 + $0xd1c] sm:$0xf]
  %v959 = vld [vmem:[%s1 + $0xd20] sm:$0xf]
  %v960 = vld [vmem:[%s1 + $0xd24] sm:$0xf]
  %v961 = vld [vmem:[%s1 + $0xd28] sm:$0xf]
  %v962 = vld [vmem:[%s1 + $0xd2c] sm:$0xf]
  %v963 = vld [vmem:[%s1 + $0xd30] sm:$0xf]
  %v964 = vld [vmem:[%s1 + $0xd34] sm:$0xf]
  %v965 = vld [vmem:[%s1 + $0xd38] sm:$0xf]
  %v966 = vld [vmem:[%s1 + $0xd3c] sm:$0xf]
  %v967 = vld [vmem:[%s1 + $0xd40] sm:$0xf]
  %v968 = vld [vmem:[%s1 + $0xd44] sm:$0xf]
  %v969 = vld [vmem:[%s1 + $0xd48] sm:$0xf]
  %v970 = vld [vmem:[%s1 + $0xd4c] sm:$0xf]
  %v971 = vld [vmem:[%s1 + $0xd50] sm:$0xf]
  %v972 = vld [vmem:[%s1 + $0xd54] sm:$0xf]
  %v973 = vld [vmem:[%s1 + $0xd58] sm:$0xf]
  %v974 = vld [vmem:[%s1 + $0xd5c] sm:$0xf]
  %v975 = vld [vmem:[%s1 + $0xd60] sm:$0xf]
  %v976 = vld [vmem:[%s1 + $0xd64] sm:$0xf]
  %v977 = vld [vmem:[%s1 + $0xd68] sm:$0xf]
  %v978 = vld [vmem:[%s1 + $0xd6c] sm:$0xf]
  %v979 = vld [vmem:[%s1 + $0xd70] sm:$0xf]
  %v980 = vld [vmem:[%s1 + $0xd74] sm:$0xf]
  %v981 = vld [vmem:[%s1 + $0xd78] sm:$0xf]
  %v982 = vld [vmem:[%s1 + $0xd7c] sm:$0xf]
  %v983 = vld [vmem:[%s1 + $0xd80] sm:$0xf]
  %v984 = vld [vmem:[%s1 + $0xd84] sm:$0xf]
  %v985 = vld [vmem:[%s1 + $0xd88] sm:$0xf]
  %v986 = vld [vmem:[%s1 + $0xd8c] sm:$0xf]
  %v987 = vld [vmem:[%s1 + $0xd90] sm:$0xf]
  %v988 = vld [vmem:[%s1 + $0xd94] sm:$0xf]
  %v989 = vld [vmem:[%s1 + $0xd98] sm:$0xf]
  %v990 = vld [vmem:[%s1 + $0xd9c] sm:$0xf]
  %v991 = vld [vmem:[%s1 + $0xda0] sm:$0xf]
  %v992 = vld [vmem:[%s1 + $0xda4] sm:$0xf]
  %v993 = vld [vmem:[%s1 + $0xda8] sm:$0xf]
  %v994 = vld [vmem:[%s1 + $0xdac] sm:$0xf]
  %v995 = vld [vmem:[%s1 + $0xdb0] sm:$0xf]
  %v996 = vld [vmem:[%s1 + $0xdb4] sm:$0xf]
  %v997 = vld [vmem:[%s1 + $0xdb8] sm:$0xf]
  %v998 = vld [vmem:[%s1 + $0xdbc] sm:$0xf]
  %v999 = vld [vmem:[%s1 + $0xdc0] sm:$0xf]
  %v1000 = vld [vmem:[%s1 + $0xdc4] sm:$0xf]
  %v1001 = vld [vmem:[%s1 + $0xdc8] sm:$0xf]
  %v1002 = vld [vmem:[%s1 + $0xdcc] sm:$0xf]
  %v1003 = vld [vmem:[%s1 + $0xdd0] sm:$0xf]
  %v1004 = vld [vmem:[%s1 + $0xdd4] sm:$0xf]
  %v1005 = vld [vmem:[%s1 + $0xdd8] sm:$0xf]
  %v1006 = vld [vmem:[%s1 + $0xddc] sm:$0xf]
  %v1007 = vld [vmem:[%s1 + $0xde0] sm:$0xf]
  %v1008 = vld [vmem:[%s1 + $0xde4] sm:$0xf]
  %v1009 = vld [vmem:[%s1 + $0xde8] sm:$0xf]
  %v1010 = vld [vmem:[%s1 + $0xdec] sm:$0xf]
  %v1011 = vld [vmem:[%s1 + $0xdf0] sm:$0xf]
  %v1012 = vld [vmem:[%s1 + $0xdf4] sm:$0xf]
  %v1013 = vld [vmem:[%s1 + $0xdf8] sm:$0xf]
  %v1014 = vld [vmem:[%s1 + $0xdfc] sm:$0xf]
  %v1015 = vld [vmem:[%s1 + $0xe00] sm:$0xf]
  %v1016 = vld [vmem:[%s1 + $0xe04] sm:$0xf]
  %v1017 = vld [vmem:[%s1 + $0xe08] sm:$0xf]
  %v1018 = vld [vmem:[%s1 + $0xe0c] sm:$0xf]
  %v1019 = vld [vmem:[%s1 + $0xe10] sm:$0xf]
  %v1020 = vld [vmem:[%s1 + $0xe14] sm:$0xf]
  %v1021 = vld [vmem:[%s1 + $0xe18] sm:$0xf]
  %v1022 = vld [vmem:[%s1 + $0xe1c] sm:$0xf]
  %v1023 = vld [vmem:[%s1 + $0xe20] sm:$0xf]
  %v1024 = vld [vmem:[%s1 + $0xe24] sm:$0xf]
  %v1025 = vld [vmem:[%s1 + $0xe28] sm:$0xf]
  %v1026 = vld [vmem:[%s1 + $0xe2c] sm:$0xf]
  %v1027 = vld [vmem:[%s1 + $0xe30] sm:$0xf]
  %v1028 = vld [vmem:[%s1 + $0xe34] sm:$0xf]
  %v1029 = vld [vmem:[%s1 + $0xe38] sm:$0xf]
  %v1030 = vld [vmem:[%s1 + $0xe3c] sm:$0xf]
  %v1031 = vld [vmem:[%s1 + $0xe40] sm:$0xf]
  %v1032 = vld [vmem:[%s1 + $0xe44] sm:$0xf]
  %v1033 = vld [vmem:[%s1 + $0xe48] sm:$0xf]
  %v1034 = vld [vmem:[%s1 + $0xe4c] sm:$0xf]
  %v1035 = vld [vmem:[%s1 + $0xe50] sm:$0xf]
  %v1036 = vld [vmem:[%s1 + $0xe54] sm:$0xf]
  %v1037 = vld [vmem:[%s1 + $0xe58] sm:$0xf]
  %v1038 = vld [vmem:[%s1 + $0xe5c] sm:$0xf]
  %v1039 = vld [vmem:[%s1 + $0xe60] sm:$0xf]
  %v1040 = vld [vmem:[%s1 + $0xe64] sm:$0xf]
  %v1041 = vld [vmem:[%s1 + $0xe68] sm:$0xf]
  %v1042 = vld [vmem:[%s1 + $0xe6c] sm:$0xf]
  %v1043 = vld [vmem:[%s1 + $0xe70] sm:$0xf]
  %v1044 = vld [vmem:[%s1 + $0xe74] sm:$0xf]
  %v1045 = vld [vmem:[%s1 + $0xe78] sm:$0xf]
  %v1046 = vld [vmem:[%s1 + $0xe7c] sm:$0xf]
  %v1047 = vld [vmem:[%s1 + $0xe80] sm:$0xf]
  %v1048 = vld [vmem:[%s1 + $0xe84] sm:$0xf]
  %v1049 = vld [vmem:[%s1 + $0xe88] sm:$0xf]
  %v1050 = vld [vmem:[%s1 + $0xe8c] sm:$0xf]
  %v1051 = vld [vmem:[%s1 + $0xe90] sm:$0xf]
  %v1052 = vld [vmem:[%s1 + $0xe94] sm:$0xf]
  %v1053 = vld [vmem:[%s1 + $0xe98] sm:$0xf]
  %v1054 = vld [vmem:[%s1 + $0xe9c] sm:$0xf]
  %v1055 = vld [vmem:[%s1 + $0xea0] sm:$0xf]
  %v1056 = vld [vmem:[%s1 + $0xea4] sm:$0xf]
  %v1057 = vld [vmem:[%s1 + $0xea8] sm:$0xf]
  %v1058 = vld [vmem:[%s1 + $0xeac] sm:$0xf]
  %v1059 = vld [vmem:[%s1 + $0xeb0] sm:$0xf]
  %v1060 = vld [vmem:[%s1 + $0xeb4] sm:$0xf]
  %v1061 = vld [vmem:[%s1 + $0xeb8] sm:$0xf]
  %v1062 = vld [vmem:[%s1 + $0xebc] sm:$0xf]
  %v1063 = vld [vmem:[%s1 + $0xec0] sm:$0xf]
  %v1064 = vld [vmem:[%s1 + $0xec4] sm:$0xf]
  %v1065 = vld [vmem:[%s1 + $0xec8] sm:$0xf]
  %v1066 = vld [vmem:[%s1 + $0xecc] sm:$0xf]
  %v1067 = vld [vmem:[%s1 + $0xed0] sm:$0xf]
  %v1068 = vld [vmem:[%s1 + $0xed4] sm:$0xf]
  %v1069 = vld [vmem:[%s1 + $0xed8] sm:$0xf]
  %v1070 = vld [vmem:[%s1 + $0xedc] sm:$0xf]
  %v1071 = vld [vmem:[%s1 + $0xee0] sm:$0xf]
  %v1072 = vld [vmem:[%s1 + $0xee4] sm:$0xf]
  %v1073 = vld [vmem:[%s1 + $0xee8] sm:$0xf]
  %v1074 = vld [vmem:[%s1 + $0xeec] sm:$0xf]
  %v1075 = vld [vmem:[%s1 + $0xef0] sm:$0xf]
  %v1076 = vld [vmem:[%s1 + $0xef4] sm:$0xf]
  %v1077 = vld [vmem:[%s1 + $0xef8] sm:$0xf]
  %v1078 = vld [vmem:[%s1 + $0xefc] sm:$0xf]
  %v1079 = vld [vmem:[%s1 + $0xf00] sm:$0xf]
  %v1080 = vld [vmem:[%s1 + $0xf04] sm:$0xf]
  %v1081 = vld [vmem:[%s1 + $0xf08] sm:$0xf]
  %v1082 = vld [vmem:[%s1 + $0xf0c] sm:$0xf]
  %v1083 = vld [vmem:[%s1 + $0xf10] sm:$0xf]
  %v1084 = vld [vmem:[%s1 + $0xf14] sm:$0xf]
  %v1085 = vld [vmem:[%s1 + $0xf18] sm:$0xf]
  %v1086 = vld [vmem:[%s1 + $0xf1c] sm:$0xf]
  %v1087 = vld [vmem:[%s1 + $0xf20] sm:$0xf]
  %v1088 = vld [vmem:[%s1 + $0xf24] sm:$0xf]
  %v1089 = vld [vmem:[%s1 + $0xf28] sm:$0xf]
  %v1090 = vld [vmem:[%s1 + $0xf2c] sm:$0xf]
  %v1091 = vld [vmem:[%s1 + $0xf30] sm:$0xf]
  %v1092 = vld [vmem:[%s1 + $0xf34] sm:$0xf]
  %v1093 = vld [vmem:[%s1 + $0xf38] sm:$0xf]
  %v1094 = vld [vmem:[%s1 + $0xf3c] sm:$0xf]
  %v1095 = vld [vmem:[%s1 + $0xf40] sm:$0xf]
  %v1096 = vld [vmem:[%s1 + $0xf44] sm:$0xf]
  %v1097 = vld [vmem:[%s1 + $0xf48] sm:$0xf]
  %v1098 = vld [vmem:[%s1 + $0xf4c] sm:$0xf]
  %v1099 = vld [vmem:[%s1 + $0xf50] sm:$0xf]
  %v1100 = vld [vmem:[%s1 + $0xf54] sm:$0xf]
  %v1101 = vld [vmem:[%s1 + $0xf58] sm:$0xf]
  %v1102 = vld [vmem:[%s1 + $0xf5c] sm:$0xf]
  %v1103 = vld [vmem:[%s1 + $0xf60] sm:$0xf]
  %v1104 = vld [vmem:[%s1 + $0xf64] sm:$0xf]
  %v1105 = vld [vmem:[%s1 + $0xf68] sm:$0xf]
  %v1106 = vld [vmem:[%s1 + $0xf6c] sm:$0xf]
  %v1107 = vld [vmem:[%s1 + $0xf70] sm:$0xf]
  %v1108 = vld [vmem:[%s1 + $0xf74] sm:$0xf]
  %v1109 = vld [vmem:[%s1 + $0xf78] sm:$0xf]
  %v1110 = vld [vmem:[%s1 + $0xf7c] sm:$0xf]
  %v1111 = vld [vmem:[%s1 + $0xf80] sm:$0xf]
  %v1112 = vld [vmem:[%s1 + $0xf84] sm:$0xf]
  %v1113 = vld [vmem:[%s1 + $0xf88] sm:$0xf]
  %v1114 = vld [vmem:[%s1 + $0xf8c] sm:$0xf]
  %v1115 = vld [vmem:[%s1 + $0xf90] sm:$0xf]
  %v1116 = vld [vmem:[%s1 + $0xf94] sm:$0xf]
  %v1117 = vld [vmem:[%s1 + $0xf98] sm:$0xf]
  %v1118 = vld [vmem:[%s1 + $0xf9c] sm:$0xf]
  %v1119 = vld [vmem:[%s1 + $0xfa0] sm:$0xf]
  %v1120 = vld [vmem:[%s1 + $0xfa4] sm:$0xf]
  %v1121 = vld [vmem:[%s1 + $0xfa8] sm:$0xf]
  %v1122 = vld [vmem:[%s1 + $0xfac] sm:$0xf]
  %v1123 = vld [vmem:[%s1 + $0xfb0] sm:$0xf]
  %v1124 = vld [vmem:[%s1 + $0xfb4] sm:$0xf]
  %v1125 = vld [vmem:[%s1 + $0xfb8] sm:$0xf]
  %v1126 = vld [vmem:[%s1 + $0xfbc] sm:$0xf]
  %v1127 = vld [vmem:[%s1 + $0xfc0] sm:$0xf]
  %v1128 = vld [vmem:[%s1 + $0xfc4] sm:$0xf]
  %v1129 = vld [vmem:[%s1 + $0xfc8] sm:$0xf]
  %v1130 = vld [vmem:[%s1 + $0xfcc] sm:$0xf]
  %v1131 = vld [vmem:[%s1 + $0xfd0] sm:$0xf]
  %v1132 = vld [vmem:[%s1 + $0xfd4] sm:$0xf]
  %v1133 = vld [vmem:[%s1 + $0xfd8] sm:$0xf]
  %v1134 = vld [vmem:[%s1 + $0xfdc] sm:$0xf]
  %v1135 = vld [vmem:[%s1 + $0xfe0] sm:$0xf]
  %v1136 = vld [vmem:[%s1 + $0xfe4] sm:$0xf]
  %v1137 = vld [vmem:[%s1 + $0xfe8] sm:$0xf]
  %v1138 = vld [vmem:[%s1 + $0xfec] sm:$0xf]
  %v1139 = vld [vmem:[%s1 + $0xff0] sm:$0xf]
  %v1140 = vld [vmem:[%s1 + $0xff4] sm:$0xf]
  %v1141 = vld [vmem:[%s1 + $0xff8] sm:$0xf]
  %v1142 = vld [vmem:[%s1 + $0xffc] sm:$0xf]
  %v1143 = vld [vmem:[%s1 + $0x1000] sm:$0xf]
  %v1144 = vld [vmem:[%s1 + $0x1004] sm:$0xf]
  %v1145 = vld [vmem:[%s1 + $0x1008] sm:$0xf]
  %v1146 = vld [vmem:[%s1 + $0x100c] sm:$0xf]
  %v1147 = vld [vmem:[%s1 + $0x1010] sm:$0xf]
  %v1148 = vld [vmem:[%s1 + $0x1014] sm:$0xf]
  %v1149 = vld [vmem:[%s1 + $0x1018] sm:$0xf]
  %v1150 = vld [vmem:[%s1 + $0x101c] sm:$0xf]
  %v1151 = vld [vmem:[%s1 + $0x1020] sm:$0xf]
  %v1152 = vld [vmem:[%s1 + $0x1024] sm:$0xf]
  %v1153 = vld [vmem:[%s1 + $0x1028] sm:$0xf]
  %v1154 = vld [vmem:[%s1 + $0x102c] sm:$0xf]
  %v1155 = vld [vmem:[%s1 + $0x1030] sm:$0xf]
  %v1156 = vld [vmem:[%s1 + $0x1034] sm:$0xf]
  %v1157 = vld [vmem:[%s1 + $0x1038] sm:$0xf]
  %v1158 = vld [vmem:[%s1 + $0x103c] sm:$0xf]
  %v1159 = vld [vmem:[%s1 + $0x1040] sm:$0xf]
  %v1160 = vld [vmem:[%s1 + $0x1044] sm:$0xf]
  %v1161 = vld [vmem:[%s1 + $0x1048] sm:$0xf]
  %v1162 = vld [vmem:[%s1 + $0x104c] sm:$0xf]
  %v1163 = vld [vmem:[%s1 + $0x1050] sm:$0xf]
  %v1164 = vld [vmem:[%s1 + $0x1054] sm:$0xf]
  %v1165 = vld [vmem:[%s1 + $0x1058] sm:$0xf]
  %v1166 = vld [vmem:[%s1 + $0x105c] sm:$0xf]
  %v1167 = vld [vmem:[%s1 + $0x1060] sm:$0xf]
  %v1168 = vld [vmem:[%s1 + $0x1064] sm:$0xf]
  %v1169 = vld [vmem:[%s1 + $0x1068] sm:$0xf]
  %v1170 = vld [vmem:[%s1 + $0x106c] sm:$0xf]
  %v1171 = vld [vmem:[%s1 + $0x1070] sm:$0xf]
  %v1172 = vld [vmem:[%s1 + $0x1074] sm:$0xf]
  %v1173 = vld [vmem:[%s1 + $0x1078] sm:$0xf]
  %v1174 = vld [vmem:[%s1 + $0x107c] sm:$0xf]
  %v1175 = vld [vmem:[%s1 + $0x1080] sm:$0xf]
  %v1176 = vld [vmem:[%s1 + $0x1084] sm:$0xf]
  %v1177 = vld [vmem:[%s1 + $0x1088] sm:$0xf]
  %v1178 = vld [vmem:[%s1 + $0x108c] sm:$0xf]
  %v1179 = vld [vmem:[%s1 + $0x1090] sm:$0xf]
  %v1180 = vld [vmem:[%s1 + $0x1094] sm:$0xf]
  %v1181 = vld [vmem:[%s1 + $0x1098] sm:$0xf]
  %v1182 = vld [vmem:[%s1 + $0x109c] sm:$0xf]
  %v1183 = vld [vmem:[%s1 + $0x10a0] sm:$0xf]
  %v1184 = vld [vmem:[%s1 + $0x10a4] sm:$0xf]
  %v1185 = vld [vmem:[%s1 + $0x10a8] sm:$0xf]
  %v1186 = vld [vmem:[%s1 + $0x10ac] sm:$0xf]
  %v1187 = vld [vmem:[%s1 + $0x10b0] sm:$0xf]
  %v1188 = vld [vmem:[%s1 + $0x10b4] sm:$0xf]
  %v1189 = vld [vmem:[%s1 + $0x10b8] sm:$0xf]
  %v1190 = vld [vmem:[%s1 + $0x10bc] sm:$0xf]
  %v1191 = vld [vmem:[%s1 + $0x10c0] sm:$0xf]
  %v1192 = vld [vmem:[%s1 + $0x10c4] sm:$0xf]
  %v1193 = vld [vmem:[%s1 + $0x10c8] sm:$0xf]
  %v1194 = vld [vmem:[%s1 + $0x10cc] sm:$0xf]
  %v1195 = vld [vmem:[%s1 + $0x10d0] sm:$0xf]
  %v1196 = vld [vmem:[%s1 + $0x10d4] sm:$0xf]
  %v1197 = vld [vmem:[%s1 + $0x10d8] sm:$0xf]
  %v1198 = vld [vmem:[%s1 + $0x10dc] sm:$0xf]
  %v1199 = vld [vmem:[%s1 + $0x10e0] sm:$0xf]
  %v1200 = vld [vmem:[%s1 + $0x10e4] sm:$0xf]
  %v1201 = vld [vmem:[%s1 + $0x10e8] sm:$0xf]
  %v1202 = vld [vmem:[%s1 + $0x10ec] sm:$0xf]
  %v1203 = vld [vmem:[%s1 + $0x10f0] sm:$0xf]
  %v1204 = vld [vmem:[%s1 + $0x10f4] sm:$0xf]
  %v1205 = vld [vmem:[%s1 + $0x10f8] sm:$0xf]
  %v1206 = vld [vmem:[%s1 + $0x10fc] sm:$0xf]
  %v1207 = vld [vmem:[%s1 + $0x1100] sm:$0xf]
  %v1208 = vld [vmem:[%s1 + $0x1104] sm:$0xf]
  %v1209 = vld [vmem:[%s1 + $0x1108] sm:$0xf]
  %v1210 = vld [vmem:[%s1 + $0x110c] sm:$0xf]
  %v1211 = vld [vmem:[%s1 + $0x1110] sm:$0xf]
  %v1212 = vld [vmem:[%s1 + $0x1114] sm:$0xf]
  %v1213 = vld [vmem:[%s1 + $0x1118] sm:$0xf]
  %v1214 = vld [vmem:[%s1 + $0x111c] sm:$0xf]
  %v1215 = vld [vmem:[%s1 + $0x1120] sm:$0xf]
  %v1216 = vld [vmem:[%s1 + $0x1124] sm:$0xf]
  %v1217 = vld [vmem:[%s1 + $0x1128] sm:$0xf]
  %v1218 = vld [vmem:[%s1 + $0x112c] sm:$0xf]
  %v1219 = vld [vmem:[%s1 + $0x1130] sm:$0xf]
  %v1220 = vld [vmem:[%s1 + $0x1134] sm:$0xf]
  %v1221 = vld [vmem:[%s1 + $0x1138] sm:$0xf]
  %v1222 = vld [vmem:[%s1 + $0x113c] sm:$0xf]
  %v1223 = vld [vmem:[%s1 + $0x1140] sm:$0xf]
  %v1224 = vld [vmem:[%s1 + $0x1144] sm:$0xf]
  %v1225 = vld [vmem:[%s1 + $0x1148] sm:$0xf]
  %v1226 = vld [vmem:[%s1 + $0x114c] sm:$0xf]
  %v1227 = vld [vmem:[%s1 + $0x1150] sm:$0xf]
  %v1228 = vld [vmem:[%s1 + $0x1154] sm:$0xf]
  %v1229 = vld [vmem:[%s1 + $0x1158] sm:$0xf]
  %v1230 = vld [vmem:[%s1 + $0x115c] sm:$0xf]
  %v1231 = vld [vmem:[%s1 + $0x1160] sm:$0xf]
  %v1232 = vld [vmem:[%s1 + $0x1164] sm:$0xf]
  %v1233 = vld [vmem:[%s1 + $0x1168] sm:$0xf]
  %v1234 = vld [vmem:[%s1 + $0x116c] sm:$0xf]
  %v1235 = vld [vmem:[%s1 + $0x1170] sm:$0xf]
  %v1236 = vld [vmem:[%s1 + $0x1174] sm:$0xf]
  %v1237 = vld [vmem:[%s1 + $0x1178] sm:$0xf]
  %v1238 = vld [vmem:[%s1 + $0x117c] sm:$0xf]
  %v1239 = vld [vmem:[%s1 + $0x1180] sm:$0xf]
  %v1240 = vld [vmem:[%s1 + $0x1184] sm:$0xf]
  %v1241 = vld [vmem:[%s1 + $0x1188] sm:$0xf]
  %v1242 = vld [vmem:[%s1 + $0x118c] sm:$0xf]
  %v1243 = vld [vmem:[%s1 + $0x1190] sm:$0xf]
  %v1244 = vld [vmem:[%s1 + $0x1194] sm:$0xf]
  %v1245 = vld [vmem:[%s1 + $0x1198] sm:$0xf]
  %v1246 = vld [vmem:[%s1 + $0x119c] sm:$0xf]
  %v1247 = vld [vmem:[%s1 + $0x11a0] sm:$0xf]
  %v1248 = vld [vmem:[%s1 + $0x11a4] sm:$0xf]
  %v1249 = vld [vmem:[%s1 + $0x11a8] sm:$0xf]
  %v1250 = vld [vmem:[%s1 + $0x11ac] sm:$0xf]
  %v1251 = vld [vmem:[%s1 + $0x11b0] sm:$0xf]
  %v1252 = vld [vmem:[%s1 + $0x11b4] sm:$0xf]
  %v1253 = vld [vmem:[%s1 + $0x11b8] sm:$0xf]
  %v1254 = vld [vmem:[%s1 + $0x11bc] sm:$0xf]
  %v1255 = vld [vmem:[%s1 + $0x11c0] sm:$0xf]
  %v1256 = vld [vmem:[%s1 + $0x11c4] sm:$0xf]
  %v1257 = vld [vmem:[%s1 + $0x11c8] sm:$0xf]
  %v1258 = vld [vmem:[%s1 + $0x11cc] sm:$0xf]
  %v1259 = vld [vmem:[%s1 + $0x11d0] sm:$0xf]
  %v1260 = vld [vmem:[%s1 + $0x11d4] sm:$0xf]
  %v1261 = vld [vmem:[%s1 + $0x11d8] sm:$0xf]
  %v1262 = vld [vmem:[%s1 + $0x11dc] sm:$0xf]
  %v1263 = vld [vmem:[%s1 + $0x11e0] sm:$0xf]
  %v1264 = vld [vmem:[%s1 + $0x11e4] sm:$0xf]
  %v1265 = vld [vmem:[%s1 + $0x11e8] sm:$0xf]
  %v1266 = vld [vmem:[%s1 + $0x11ec] sm:$0xf]
  %v1267 = vld [vmem:[%s1 + $0x11f0] sm:$0xf]
  %v1268 = vld [vmem:[%s1 + $0x11f4] sm:$0xf]
  %v1269 = vld [vmem:[%s1 + $0x11f8] sm:$0xf]
  %v1270 = vld [vmem:[%s1 + $0x11fc] sm:$0xf]
  %v1271 = vld [vmem:[%s1 + $0x1200] sm:$0xf]
  %v1272 = vld [vmem:[%s1 + $0x1204] sm:$0xf]
  %v1273 = vld [vmem:[%s1 + $0x1208] sm:$0xf]
  %v1274 = vld [vmem:[%s1 + $0x120c] sm:$0xf]
  %v1275 = vld [vmem:[%s1 + $0x1210] sm:$0xf]
  %v1276 = vld [vmem:[%s1 + $0x1214] sm:$0xf]
  %v1277 = vld [vmem:[%s1 + $0x1218] sm:$0xf]
  %v1278 = vld [vmem:[%s1 + $0x121c] sm:$0xf]
  %v1279 = vld [vmem:[%s1 + $0x1220] sm:$0xf]
  %v1280 = vld [vmem:[%s1 + $0x1224] sm:$0xf]
  %v1281 = vld [vmem:[%s1 + $0x1228] sm:$0xf]
  %v1282 = vld [vmem:[%s1 + $0x122c] sm:$0xf]
  %v1283 = vld [vmem:[%s1 + $0x1230] sm:$0xf]
  %v1284 = vld [vmem:[%s1 + $0x1234] sm:$0xf]
  %v1285 = vld [vmem:[%s1 + $0x1238] sm:$0xf]
  %v1286 = vld [vmem:[%s1 + $0x123c] sm:$0xf]
  %v1287 = vld [vmem:[%s1 + $0x1240] sm:$0xf]
  %v1288 = vld [vmem:[%s1 + $0x1244] sm:$0xf]
  %v1289 = vld [vmem:[%s1 + $0x1248] sm:$0xf]
  %v1290 = vld [vmem:[%s1 + $0x124c] sm:$0xf]
  %v1291 = vld [vmem:[%s1 + $0x1250] sm:$0xf]
  %v1292 = vld [vmem:[%s1 + $0x1254] sm:$0xf]
  %v1293 = vld [vmem:[%s1 + $0x1258] sm:$0xf]
  %v1294 = vld [vmem:[%s1 + $0x125c] sm:$0xf]
  %v1295 = vld [vmem:[%s1 + $0x1260] sm:$0xf]
  %v1296 = vld [vmem:[%s1 + $0x1264] sm:$0xf]
  %v1297 = vld [vmem:[%s1 + $0x1268] sm:$0xf]
  %v1298 = vld [vmem:[%s1 + $0x126c] sm:$0xf]
  %v1299 = vld [vmem:[%s1 + $0x1270] sm:$0xf]
  %v1300 = vld [vmem:[%s1 + $0x1274] sm:$0xf]
  %v1301 = vld [vmem:[%s1 + $0x1278] sm:$0xf]
  %v1302 = vld [vmem:[%s1 + $0x127c] sm:$0xf]
  %v1303 = vld [vmem:[%s1 + $0x1280] sm:$0xf]
  %v1304 = vld [vmem:[%s1 + $0x1284] sm:$0xf]
  %v1305 = vld [vmem:[%s1 + $0x1288] sm:$0xf]
  %v1306 = vld [vmem:[%s1 + $0x128c] sm:$0xf]
  %v1307 = vld [vmem:[%s1 + $0x1290] sm:$0xf]
  %v1308 = vld [vmem:[%s1 + $0x1294] sm:$0xf]
  %v1309 = vld [vmem:[%s1 + $0x1298] sm:$0xf]
  %v1310 = vld [vmem:[%s1 + $0x129c] sm:$0xf]
  %v1311 = vld [vmem:[%s1 + $0x12a0] sm:$0xf]
  %v1312 = vld [vmem:[%s1 + $0x12a4] sm:$0xf]
  %v1313 = vld [vmem:[%s1 + $0x12a8] sm:$0xf]
  %v1314 = vld [vmem:[%s1 + $0x12ac] sm:$0xf]
  %v1315 = vld [vmem:[%s1 + $0x12b0] sm:$0xf]
  %v1316 = vld [vmem:[%s1 + $0x12b4] sm:$0xf]
  %v1317 = vld [vmem:[%s1 + $0x12b8] sm:$0xf]
  %v1318 = vld [vmem:[%s1 + $0x12bc] sm:$0xf]
  %v1319 = vld [vmem:[%s1 + $0x12c0] sm:$0xf]
  %v1320 = vld [vmem:[%s1 + $0x12c4] sm:$0xf]
  %v1321 = vld [vmem:[%s1 + $0x12c8] sm:$0xf]
  %v1322 = vld [vmem:[%s1 + $0x12cc] sm:$0xf]
  %v1323 = vld [vmem:[%s1 + $0x12d0] sm:$0xf]
  %v1324 = vld [vmem:[%s1 + $0x12d4] sm:$0xf]
  %v1325 = vld [vmem:[%s1 + $0x12d8] sm:$0xf]
  %v1326 = vld [vmem:[%s1 + $0x12dc] sm:$0xf]
  %v1327 = vld [vmem:[%s1 + $0x12e0] sm:$0xf]
  %v1328 = vld [vmem:[%s1 + $0x12e4] sm:$0xf]
  %v1329 = vld [vmem:[%s1 + $0x12e8] sm:$0xf]
  %v1330 = vld [vmem:[%s1 + $0x12ec] sm:$0xf]
  %v1331 = vld [vmem:[%s1 + $0x12f0] sm:$0xf]
  %v1332 = vld [vmem:[%s1 + $0x12f4] sm:$0xf]
  %v1333 = vld [vmem:[%s1 + $0x12f8] sm:$0xf]
  %v1334 = vld [vmem:[%s1 + $0x12fc] sm:$0xf]
  %v1335 = vld [vmem:[%s1 + $0x1300] sm:$0xf]
  %v1336 = vld [vmem:[%s1 + $0x1304] sm:$0xf]
  %v1337 = vld [vmem:[%s1 + $0x1308] sm:$0xf]
  %v1338 = vld [vmem:[%s1 + $0x130c] sm:$0xf]
  %v1339 = vld [vmem:[%s1 + $0x1310] sm:$0xf]
  %v1340 = vld [vmem:[%s1 + $0x1314] sm:$0xf]
  %v1341 = vld [vmem:[%s1 + $0x1318] sm:$0xf]
  %v1342 = vld [vmem:[%s1 + $0x131c] sm:$0xf]
  %v1343 = vld [vmem:[%s1 + $0x1320] sm:$0xf]
  %v1344 = vld [vmem:[%s1 + $0x1324] sm:$0xf]
  %v1345 = vld [vmem:[%s1 + $0x1328] sm:$0xf]
  %v1346 = vld [vmem:[%s1 + $0x132c] sm:$0xf]
  %v1347 = vld [vmem:[%s1 + $0x1330] sm:$0xf]
  %v1348 = vld [vmem:[%s1 + $0x1334] sm:$0xf]
  %v1349 = vld [vmem:[%s1 + $0x1338] sm:$0xf]
  %v1350 = vld [vmem:[%s1 + $0x133c] sm:$0xf]
  %v1351 = vld [vmem:[%s1 + $0x1340] sm:$0xf]
  %v1352 = vld [vmem:[%s1 + $0x1344] sm:$0xf]
  %v1353 = vld [vmem:[%s1 + $0x1348] sm:$0xf]
  %v1354 = vld [vmem:[%s1 + $0x134c] sm:$0xf]
  %v1355 = vld [vmem:[%s1 + $0x1350] sm:$0xf]
  %v1356 = vld [vmem:[%s1 + $0x1354] sm:$0xf]
  %v1357 = vld [vmem:[%s1 + $0x1358] sm:$0xf]
  %v1358 = vld [vmem:[%s1 + $0x135c] sm:$0xf]
  %v1359 = vld [vmem:[%s1 + $0x1360] sm:$0xf]
  %v1360 = vld [vmem:[%s1 + $0x1364] sm:$0xf]
  %v1361 = vld [vmem:[%s1 + $0x1368] sm:$0xf]
  %v1362 = vld [vmem:[%s1 + $0x136c] sm:$0xf]
  %v1363 = vld [vmem:[%s1 + $0x1370] sm:$0xf]
  %v1364 = vld [vmem:[%s1 + $0x1374] sm:$0xf]
  %v1365 = vld [vmem:[%s1 + $0x1378] sm:$0xf]
  %v1366 = vld [vmem:[%s1 + $0x137c] sm:$0xf]
  %v1367 = vld [vmem:[%s1 + $0x1380] sm:$0xf]
  %v1368 = vld [vmem:[%s1 + $0x1384] sm:$0xf]
  %v1369 = vld [vmem:[%s1 + $0x1388] sm:$0xf]
  %v1370 = vld [vmem:[%s1 + $0x138c] sm:$0xf]
  %v1371 = vld [vmem:[%s1 + $0x1390] sm:$0xf]
  %v1372 = vld [vmem:[%s1 + $0x1394] sm:$0xf]
  %v1373 = vld [vmem:[%s1 + $0x1398] sm:$0xf]
  %v1374 = vld [vmem:[%s1 + $0x139c] sm:$0xf]
  %v1375 = vld [vmem:[%s1 + $0x13a0] sm:$0xf]
  %v1376 = vld [vmem:[%s1 + $0x13a4] sm:$0xf]
  %v1377 = vld [vmem:[%s1 + $0x13a8] sm:$0xf]
  %v1378 = vld [vmem:[%s1 + $0x13ac] sm:$0xf]
  %v1379 = vld [vmem:[%s1 + $0x13b0] sm:$0xf]
  %v1380 = vld [vmem:[%s1 + $0x13b4] sm:$0xf]
  %v1381 = vld [vmem:[%s1 + $0x13b8] sm:$0xf]
  %v1382 = vld [vmem:[%s1 + $0x13bc] sm:$0xf]
  %v1383 = vld [vmem:[%s1 + $0x13c0] sm:$0xf]
  %v1384 = vld [vmem:[%s1 + $0x13c4] sm:$0xf]
  %v1385 = vld [vmem:[%s1 + $0x13c8] sm:$0xf]
  %v1386 = vld [vmem:[%s1 + $0x13cc] sm:$0xf]
  %v1387 = vld [vmem:[%s1 + $0x13d0] sm:$0xf]
  %v1388 = vld [vmem:[%s1 + $0x13d4] sm:$0xf]
  %v1389 = vld [vmem:[%s1 + $0x13d8] sm:$0xf]
  %v1390 = vld [vmem:[%s1 + $0x13dc] sm:$0xf]
  %v1391 = vld [vmem:[%s1 + $0x13e0] sm:$0xf]
  %v1392 = vld [vmem:[%s1 + $0x13e4] sm:$0xf]
  %v1393 = vld [vmem:[%s1 + $0x13e8] sm:$0xf]
  %v1394 = vld [vmem:[%s1 + $0x13ec] sm:$0xf]
  %v1395 = vld [vmem:[%s1 + $0x13f0] sm:$0xf]
  %v1396 = vld [vmem:[%s1 + $0x13f4] sm:$0xf]
  %v1397 = vld [vmem:[%s1 + $0x13f8] sm:$0xf]
  %v1398 = vld [vmem:[%s1 + $0x13fc] sm:$0xf]
  %v1399 = vld [vmem:[%s1 + $0x1400] sm:$0xf]
  %v1400 = vld [vmem:[%s1 + $0x1404] sm:$0xf]
  %v1401 = vld [vmem:[%s1 + $0x1408] sm:$0xf]
  %v1402 = vld [vmem:[%s1 + $0x140c] sm:$0xf]
  %v1403 = vld [vmem:[%s1 + $0x1410] sm:$0xf]
  %v1404 = vld [vmem:[%s1 + $0x1414] sm:$0xf]
  %v1405 = vld [vmem:[%s1 + $0x1418] sm:$0xf]
  %v1406 = vld [vmem:[%s1 + $0x141c] sm:$0xf]
  %v1407 = vld [vmem:[%s1 + $0x1420] sm:$0xf]
  %v1408 = vld [vmem:[%s1 + $0x1424] sm:$0xf]
  %v1409 = vld [vmem:[%s1 + $0x1428] sm:$0xf]
  %v1410 = vld [vmem:[%s1 + $0x142c] sm:$0xf]
  %v1411 = vld [vmem:[%s1 + $0x1430] sm:$0xf]
  %v1412 = vld [vmem:[%s1 + $0x1434] sm:$0xf]
  %v1413 = vld [vmem:[%s1 + $0x1438] sm:$0xf]
  %v1414 = vld [vmem:[%s1 + $0x143c] sm:$0xf]
  %v1415 = vld [vmem:[%s1 + $0x1440] sm:$0xf]
  %v1416 = vld [vmem:[%s1 + $0x1444] sm:$0xf]
  %v1417 = vld [vmem:[%s1 + $0x1448] sm:$0xf]
  %v1418 = vld [vmem:[%s1 + $0x144c] sm:$0xf]
  %v1419 = vld [vmem:[%s1 + $0x1450] sm:$0xf]
  %v1420 = vld [vmem:[%s1 + $0x1454] sm:$0xf]
  %v1421 = vld [vmem:[%s1 + $0x1458] sm:$0xf]
  %v1422 = vld [vmem:[%s1 + $0x145c] sm:$0xf]
  %v1423 = vld [vmem:[%s1 + $0x1460] sm:$0xf]
  %v1424 = vld [vmem:[%s1 + $0x1464] sm:$0xf]
  %v1425 = vld [vmem:[%s1 + $0x1468] sm:$0xf]
  %v1426 = vld [vmem:[%s1 + $0x146c] sm:$0xf]
  %v1427 = vld [vmem:[%s1 + $0x1470] sm:$0xf]
  %v1428 = vld [vmem:[%s1 + $0x1474] sm:$0xf]
  %v1429 = vld [vmem:[%s1 + $0x1478] sm:$0xf]
  %v1430 = vld [vmem:[%s1 + $0x147c] sm:$0xf]
  %v1431 = vld [vmem:[%s1 + $0x1480] sm:$0xf]
  %v1432 = vld [vmem:[%s1 + $0x1484] sm:$0xf]
  %v1433 = vld [vmem:[%s1 + $0x1488] sm:$0xf]
  %v1434 = vld [vmem:[%s1 + $0x148c] sm:$0xf]
  %v1435 = vld [vmem:[%s1 + $0x1490] sm:$0xf]
  %v1436 = vld [vmem:[%s1 + $0x1494] sm:$0xf]
  %v1437 = vld [vmem:[%s1 + $0x1498] sm:$0xf]
  %v1438 = vld [vmem:[%s1 + $0x149c] sm:$0xf]
  %v1439 = vld [vmem:[%s1 + $0x14a0] sm:$0xf]
  %v1440 = vld [vmem:[%s1 + $0x14a4] sm:$0xf]
  %v1441 = vld [vmem:[%s1 + $0x14a8] sm:$0xf]
  %v1442 = vld [vmem:[%s1 + $0x14ac] sm:$0xf]
  %v1443 = vld [vmem:[%s1 + $0x14b0] sm:$0xf]
  %v1444 = vld [vmem:[%s1 + $0x14b4] sm:$0xf]
  %v1445 = vld [vmem:[%s1 + $0x14b8] sm:$0xf]
  %v1446 = vld [vmem:[%s1 + $0x14bc] sm:$0xf]
  %v1447 = vld [vmem:[%s1 + $0x14c0] sm:$0xf]
  %v1448 = vld [vmem:[%s1 + $0x14c4] sm:$0xf]
  %v1449 = vld [vmem:[%s1 + $0x14c8] sm:$0xf]
  %v1450 = vld [vmem:[%s1 + $0x14cc] sm:$0xf]
  %v1451 = vld [vmem:[%s1 + $0x14d0] sm:$0xf]
  %v1452 = vld [vmem:[%s1 + $0x14d4] sm:$0xf]
  %v1453 = vld [vmem:[%s1 + $0x14d8] sm:$0xf]
  %v1454 = vld [vmem:[%s1 + $0x14dc] sm:$0xf]
  %v1455 = vld [vmem:[%s1 + $0x14e0] sm:$0xf]
  %v1456 = vld [vmem:[%s1 + $0x14e4] sm:$0xf]
  %v1457 = vld [vmem:[%s1 + $0x14e8] sm:$0xf]
  %v1458 = vld [vmem:[%s1 + $0x14ec] sm:$0xf]
  %v1459 = vld [vmem:[%s1 + $0x14f0] sm:$0xf]
  %v1460 = vld [vmem:[%s1 + $0x14f4] sm:$0xf]
  %v1461 = vld [vmem:[%s1 + $0x14f8] sm:$0xf]
  %v1462 = vld [vmem:[%s1 + $0x14fc] sm:$0xf]
  %v1463 = vld [vmem:[%s1 + $0x1500] sm:$0xf]
  %v1464 = vld [vmem:[%s1 + $0x1504] sm:$0xf]
  %v1465 = vld [vmem:[%s1 + $0x1508] sm:$0xf]
  %v1466 = vld [vmem:[%s1 + $0x150c] sm:$0xf]
  %v1467 = vld [vmem:[%s1 + $0x1510] sm:$0xf]
  %v1468 = vld [vmem:[%s1 + $0x1514] sm:$0xf]
  %v1469 = vld [vmem:[%s1 + $0x1518] sm:$0xf]
  %v1470 = vld [vmem:[%s1 + $0x151c] sm:$0xf]
  %v1471 = vld [vmem:[%s1 + $0x1520] sm:$0xf]
  %v1472 = vld [vmem:[%s1 + $0x1524] sm:$0xf]
  %v1473 = vld [vmem:[%s1 + $0x1528] sm:$0xf]
  %v1474 = vld [vmem:[%s1 + $0x152c] sm:$0xf]
  %v1475 = vld [vmem:[%s1 + $0x1530] sm:$0xf]
  %v1476 = vld [vmem:[%s1 + $0x1534] sm:$0xf]
  %v1477 = vld [vmem:[%s1 + $0x1538] sm:$0xf]
  %v1478 = vld [vmem:[%s1 + $0x153c] sm:$0xf]
  %v1479 = vld [vmem:[%s1 + $0x1540] sm:$0xf]
  %v1480 = vld [vmem:[%s1 + $0x1544] sm:$0xf]
  %v1481 = vld [vmem:[%s1 + $0x1548] sm:$0xf]
  %v1482 = vld [vmem:[%s1 + $0x154c] sm:$0xf]
  %v1483 = vld [vmem:[%s1 + $0x1550] sm:$0xf]
  %v1484 = vld [vmem:[%s1 + $0x1554] sm:$0xf]
  %v1485 = vld [vmem:[%s1 + $0x1558] sm:$0xf]
  %v1486 = vld [vmem:[%s1 + $0x155c] sm:$0xf]
  %v1487 = vld [vmem:[%s1 + $0x1560] sm:$0xf]
  %v1488 = vld [vmem:[%s1 + $0x1564] sm:$0xf]
  %v1489 = vld [vmem:[%s1 + $0x1568] sm:$0xf]
  %v1490 = vld [vmem:[%s1 + $0x156c] sm:$0xf]
  %v1491 = vld [vmem:[%s1 + $0x1570] sm:$0xf]
  %v1492 = vld [vmem:[%s1 + $0x1574] sm:$0xf]
  %v1493 = vld [vmem:[%s1 + $0x1578] sm:$0xf]
  %v1494 = vld [vmem:[%s1 + $0x157c] sm:$0xf]
  %v1495 = vld [vmem:[%s1 + $0x1580] sm:$0xf]
  %v1496 = vld [vmem:[%s1 + $0x1584] sm:$0xf]
  %v1497 = vld [vmem:[%s1 + $0x1588] sm:$0xf]
  %v1498 = vld [vmem:[%s1 + $0x158c] sm:$0xf]
  %v1499 = vld [vmem:[%s1 + $0x1590] sm:$0xf]
  %v1500 = vld [vmem:[%s1 + $0x1594] sm:$0xf]
  %v1501 = vld [vmem:[%s1 + $0x1598] sm:$0xf]
  %v1502 = vld [vmem:[%s1 + $0x159c] sm:$0xf]
  %v1503 = vld [vmem:[%s1 + $0x15a0] sm:$0xf]
  %v1504 = vld [vmem:[%s1 + $0x15a4] sm:$0xf]
  %v1505 = vld [vmem:[%s1 + $0x15a8] sm:$0xf]
  %v1506 = vld [vmem:[%s1 + $0x15ac] sm:$0xf]
  %v1507 = vld [vmem:[%s1 + $0x15b0] sm:$0xf]
  %v1508 = vld [vmem:[%s1 + $0x15b4] sm:$0xf]
  %v1509 = vld [vmem:[%s1 + $0x15b8] sm:$0xf]
  %v1510 = vld [vmem:[%s1 + $0x15bc] sm:$0xf]
  %v1511 = vld [vmem:[%s1 + $0x15c0] sm:$0xf]
  %v1512 = vld [vmem:[%s1 + $0x15c4] sm:$0xf]
  %v1513 = vld [vmem:[%s1 + $0x15c8] sm:$0xf]
  %v1514 = vld [vmem:[%s1 + $0x15cc] sm:$0xf]
  %v1515 = vld [vmem:[%s1 + $0x15d0] sm:$0xf]
  %v1516 = vld [vmem:[%s1 + $0x15d4] sm:$0xf]
  %v1517 = vld [vmem:[%s1 + $0x15d8] sm:$0xf]
  %v1518 = vld [vmem:[%s1 + $0x15dc] sm:$0xf]
  %v1519 = vld [vmem:[%s1 + $0x15e0] sm:$0xf]
  %v1520 = vld [vmem:[%s1 + $0x15e4] sm:$0xf]
  %v1521 = vld [vmem:[%s1 + $0x15e8] sm:$0xf]
  %v1522 = vld [vmem:[%s1 + $0x15ec] sm:$0xf]
  %v1523 = vld [vmem:[%s1 + $0x15f0] sm:$0xf]
  %v1524 = vld [vmem:[%s1 + $0x15f4] sm:$0xf]
  %v1525 = vld [vmem:[%s1 + $0x15f8] sm:$0xf]
  %v1526 = vld [vmem:[%s1 + $0x15fc] sm:$0xf]
  %v1527 = vld [vmem:[%s1 + $0x1600] sm:$0xf]
  %v1528 = vld [vmem:[%s1 + $0x1604] sm:$0xf]
  %v1529 = vld [vmem:[%s1 + $0x1608] sm:$0xf]
  %v1530 = vld [vmem:[%s1 + $0x160c] sm:$0xf]
  %v1531 = vld [vmem:[%s1 + $0x1610] sm:$0xf]
  %v1532 = vld [vmem:[%s1 + $0x1614] sm:$0xf]
  %v1533 = vld [vmem:[%s1 + $0x1618] sm:$0xf]
  %v1534 = vld [vmem:[%s1 + $0x161c] sm:$0xf]
  %v1535 = vld [vmem:[%s1 + $0x1620] sm:$0xf]
  %v1536 = vld [vmem:[%s1 + $0x1624] sm:$0xf]
  %v1537 = vld [vmem:[%s1 + $0x1628] sm:$0xf]
  %v1538 = vld [vmem:[%s1 + $0x162c] sm:$0xf]
  %v1539 = vld [vmem:[%s1 + $0x1630] sm:$0xf]
  %v1540 = vld [vmem:[%s1 + $0x1634] sm:$0xf]
  %v1541 = vld [vmem:[%s1 + $0x1638] sm:$0xf]
  %v1542 = vld [vmem:[%s1 + $0x163c] sm:$0xf]
  %v1543 = vld [vmem:[%s1 + $0x1640] sm:$0xf]
  %v1544 = vld [vmem:[%s1 + $0x1644] sm:$0xf]
  %v1545 = vld [vmem:[%s1 + $0x1648] sm:$0xf]
  %v1546 = vld [vmem:[%s1 + $0x164c] sm:$0xf]
  %v1547 = vld [vmem:[%s1 + $0x1650] sm:$0xf]
  %v1548 = vld [vmem:[%s1 + $0x1654] sm:$0xf]
  %v1549 = vld [vmem:[%s1 + $0x1658] sm:$0xf]
  %v1550 = vld [vmem:[%s1 + $0x165c] sm:$0xf]
  %v1551 = vld [vmem:[%s1 + $0x1660] sm:$0xf]
  %v1552 = vld [vmem:[%s1 + $0x1664] sm:$0xf]
  %v1553 = vld [vmem:[%s1 + $0x1668] sm:$0xf]
  %v1554 = vld [vmem:[%s1 + $0x166c] sm:$0xf]
  %v1555 = vld [vmem:[%s1 + $0x1670] sm:$0xf]
  %v1556 = vld [vmem:[%s1 + $0x1674] sm:$0xf]
  %v1557 = vld [vmem:[%s1 + $0x1678] sm:$0xf]
  %v1558 = vld [vmem:[%s1 + $0x167c] sm:$0xf]
  %v1559 = vld [vmem:[%s2] sm:$0x1]
  %v1561 = vlaneseq
  %v1562 = vshrl.u32 %v1561, 7
  %v1563 = vsub.s32 0, %v1562
  %v1564 = vrot.slane %v1559, %v1563
  %v1656 = vunpack.c.l.b16 %v29
  %v1657 = vunpack.c.h.b16 %v29
  %v1658 = vunpack.c.l.b16 %v30
  %v1659 = vunpack.c.h.b16 %v30
  %v1660 = vunpack.c.l.b16 %v31
  %v1661 = vunpack.c.h.b16 %v31
  %v1662 = vunpack.c.l.b16 %v32
  %v1663 = vunpack.c.h.b16 %v32
  %v1664 = vunpack.c.l.b16 %v33
  %v1665 = vunpack.c.h.b16 %v33
  %v1666 = vunpack.c.l.b16 %v34
  %v1667 = vunpack.c.h.b16 %v34
  %v1668 = vunpack.c.l.b16 %v35
  %v1669 = vunpack.c.h.b16 %v35
  %v1670 = vunpack.c.l.b16 %v36
  %v1671 = vunpack.c.h.b16 %v36
  %v1672 = vunpack.c.l.b16 %v37
  %v1673 = vunpack.c.h.b16 %v37
  %v1674 = vunpack.c.l.b16 %v38
  %v1675 = vunpack.c.h.b16 %v38
  %v1676 = vunpack.c.l.b16 %v39
  %v1677 = vunpack.c.h.b16 %v39
  %v1678 = vunpack.c.l.b16 %v40
  %v1679 = vunpack.c.h.b16 %v40
  %v1680 = vunpack.c.l.b16 %v41
  %v1681 = vunpack.c.h.b16 %v41
  %v1682 = vunpack.c.l.b16 %v42
  %v1683 = vunpack.c.h.b16 %v42
  %v1684 = vunpack.c.l.b16 %v43
  %v1685 = vunpack.c.h.b16 %v43
  %v1686 = vunpack.c.l.b16 %v44
  %v1687 = vunpack.c.h.b16 %v44
  %v1688 = vunpack.c.l.b16 %v45
  %v1689 = vunpack.c.h.b16 %v45
  %v1690 = vunpack.c.l.b16 %v46
  %v1691 = vunpack.c.h.b16 %v46
  %v1692 = vunpack.c.l.b16 %v47
  %v1693 = vunpack.c.h.b16 %v47
  %v1694 = vunpack.c.l.b16 %v48
  %v1695 = vunpack.c.h.b16 %v48
  %v1696 = vunpack.c.l.b16 %v49
  %v1697 = vunpack.c.h.b16 %v49
  %v1698 = vunpack.c.l.b16 %v50
  %v1699 = vunpack.c.h.b16 %v50
  %v1700 = vunpack.c.l.b16 %v51
  %v1701 = vunpack.c.h.b16 %v51
  %v1702 = vunpack.c.l.b16 %v52
  %v1703 = vunpack.c.h.b16 %v52
  %v1704 = vunpack.c.l.b16 %v53
  %v1705 = vunpack.c.h.b16 %v53
  %v1706 = vunpack.c.l.b16 %v54
  %v1707 = vunpack.c.h.b16 %v54
  %v1708 = vunpack.c.l.b16 %v55
  %v1709 = vunpack.c.h.b16 %v55
  %v1710 = vunpack.c.l.b16 %v56
  %v1711 = vunpack.c.h.b16 %v56
  %v1712 = vunpack.c.l.b16 %v57
  %v1713 = vunpack.c.h.b16 %v57
  %v1714 = vunpack.c.l.b16 %v58
  %v1715 = vunpack.c.h.b16 %v58
  %v1716 = vunpack.c.l.b16 %v59
  %v1717 = vunpack.c.h.b16 %v59
  %v1718 = vunpack.c.l.b16 %v60
  %v1719 = vunpack.c.h.b16 %v60
  %v1720 = vunpack.c.l.b16 %v61
  %v1721 = vunpack.c.h.b16 %v61
  %v1722 = vunpack.c.l.b16 %v62
  %v1723 = vunpack.c.h.b16 %v62
  %v1724 = vunpack.c.l.b16 %v63
  %v1725 = vunpack.c.h.b16 %v63
  %v1726 = vunpack.c.l.b16 %v64
  %v1727 = vunpack.c.h.b16 %v64
  %v1728 = vunpack.c.l.b16 %v65
  %v1729 = vunpack.c.h.b16 %v65
  %v1730 = vunpack.c.l.b16 %v66
  %v1731 = vunpack.c.h.b16 %v66
  %v1732 = vunpack.c.l.b16 %v67
  %v1733 = vunpack.c.h.b16 %v67
  %v1734 = vunpack.c.l.b16 %v68
  %v1735 = vunpack.c.h.b16 %v68
  %v1736 = vunpack.c.l.b16 %v69
  %v1737 = vunpack.c.h.b16 %v69
  %v1738 = vunpack.c.l.b16 %v70
  %v1739 = vunpack.c.h.b16 %v70
  %v1740 = vunpack.c.l.b16 %v71
  %v1741 = vunpack.c.h.b16 %v71
  %v1742 = vunpack.c.l.b16 %v72
  %v1743 = vunpack.c.h.b16 %v72
  %v1744 = vunpack.c.l.b16 %v73
  %v1745 = vunpack.c.h.b16 %v73
  %v1746 = vunpack.c.l.b16 %v74
  %v1747 = vunpack.c.h.b16 %v74
  %v1748 = vunpack.c.l.b16 %v75
  %v1749 = vunpack.c.h.b16 %v75
  %v1750 = vunpack.c.l.b16 %v76
  %v1751 = vunpack.c.h.b16 %v76
  %v1752 = vunpack.c.l.b16 %v77
  %v1753 = vunpack.c.h.b16 %v77
  %v1754 = vunpack.c.l.b16 %v78
  %v1755 = vunpack.c.h.b16 %v78
  %v1756 = vunpack.c.l.b16 %v79
  %v1757 = vunpack.c.h.b16 %v79
  %v1758 = vunpack.c.l.b16 %v80
  %v1759 = vunpack.c.h.b16 %v80
  %v1760 = vunpack.c.l.b16 %v81
  %v1761 = vunpack.c.h.b16 %v81
  %v1762 = vunpack.c.l.b16 %v82
  %v1763 = vunpack.c.h.b16 %v82
  %v1764 = vunpack.c.l.b16 %v83
  %v1765 = vunpack.c.h.b16 %v83
  %v1766 = vunpack.c.l.b16 %v84
  %v1767 = vunpack.c.h.b16 %v84
  %v1768 = vunpack.c.l.b16 %v85
  %v1769 = vunpack.c.h.b16 %v85
  %v1770 = vunpack.c.l.b16 %v86
  %v1771 = vunpack.c.h.b16 %v86
  %v1772 = vunpack.c.l.b16 %v87
  %v1773 = vunpack.c.h.b16 %v87
  %v1774 = vunpack.c.l.b16 %v88
  %v1775 = vunpack.c.h.b16 %v88
  %v1776 = vunpack.c.l.b16 %v89
  %v1777 = vunpack.c.h.b16 %v89
  %v1778 = vunpack.c.l.b16 %v90
  %v1779 = vunpack.c.h.b16 %v90
  %v1780 = vunpack.c.l.b16 %v91
  %v1781 = vunpack.c.h.b16 %v91
  %v1782 = vunpack.c.l.b16 %v92
  %v1783 = vunpack.c.h.b16 %v92
  %v1784 = vunpack.c.l.b16 %v93
  %v1785 = vunpack.c.h.b16 %v93
  %v1786 = vunpack.c.l.b16 %v94
  %v1787 = vunpack.c.h.b16 %v94
  %v1788 = vunpack.c.l.b16 %v95
  %v1789 = vunpack.c.h.b16 %v95
  %v1790 = vunpack.c.l.b16 %v96
  %v1791 = vunpack.c.h.b16 %v96
  %v1792 = vunpack.c.l.b16 %v97
  %v1793 = vunpack.c.h.b16 %v97
  %v1794 = vunpack.c.l.b16 %v98
  %v1795 = vunpack.c.h.b16 %v98
  %v1796 = vunpack.c.l.b16 %v99
  %v1797 = vunpack.c.h.b16 %v99
  %v1798 = vunpack.c.l.b16 %v100
  %v1799 = vunpack.c.h.b16 %v100
  %v1800 = vunpack.c.l.b16 %v101
  %v1801 = vunpack.c.h.b16 %v101
  %v1802 = vunpack.c.l.b16 %v102
  %v1803 = vunpack.c.h.b16 %v102
  %v1804 = vunpack.c.l.b16 %v103
  %v1805 = vunpack.c.h.b16 %v103
  %v1806 = vunpack.c.l.b16 %v104
  %v1807 = vunpack.c.h.b16 %v104
  %v1808 = vunpack.c.l.b16 %v105
  %v1809 = vunpack.c.h.b16 %v105
  %v1810 = vunpack.c.l.b16 %v106
  %v1811 = vunpack.c.h.b16 %v106
  %v1812 = vunpack.c.l.b16 %v107
  %v1813 = vunpack.c.h.b16 %v107
  %v1814 = vunpack.c.l.b16 %v108
  %v1815 = vunpack.c.h.b16 %v108
  %v1816 = vunpack.c.l.b16 %v109
  %v1817 = vunpack.c.h.b16 %v109
  %v1818 = vunpack.c.l.b16 %v110
  %v1819 = vunpack.c.h.b16 %v110
  %v1820 = vunpack.c.l.b16 %v111
  %v1821 = vunpack.c.h.b16 %v111
  %v1822 = vunpack.c.l.b16 %v112
  %v1823 = vunpack.c.h.b16 %v112
  %v1824 = vunpack.c.l.b16 %v113
  %v1825 = vunpack.c.h.b16 %v113
  %v1826 = vunpack.c.l.b16 %v114
  %v1827 = vunpack.c.h.b16 %v114
  %v1828 = vunpack.c.l.b16 %v115
  %v1829 = vunpack.c.h.b16 %v115
  %v1830 = vunpack.c.l.b16 %v116
  %v1831 = vunpack.c.h.b16 %v116
  %v1832 = vunpack.c.l.b16 %v117
  %v1833 = vunpack.c.h.b16 %v117
  %v1834 = vunpack.c.l.b16 %v118
  %v1835 = vunpack.c.h.b16 %v118
  %v1836 = vpack.c.b16 %v1746, %v1656
  %v1837 = vpack.c.b16 %v1747, %v1657
  %v1838 = vpack.c.b16 %v1748, %v1658
  %v1839 = vpack.c.b16 %v1749, %v1659
  %v1840 = vpack.c.b16 %v1750, %v1660
  %v1841 = vpack.c.b16 %v1751, %v1661
  %v1842 = vpack.c.b16 %v1752, %v1662
  %v1843 = vpack.c.b16 %v1753, %v1663
  %v1844 = vpack.c.b16 %v1754, %v1664
  %v1845 = vpack.c.b16 %v1755, %v1665
  %v1846 = vpack.c.b16 %v1756, %v1666
  %v1847 = vpack.c.b16 %v1757, %v1667
  %v1848 = vpack.c.b16 %v1758, %v1668
  %v1849 = vpack.c.b16 %v1759, %v1669
  %v1850 = vpack.c.b16 %v1760, %v1670
  %v1851 = vpack.c.b16 %v1761, %v1671
  %v1852 = vpack.c.b16 %v1762, %v1672
  %v1853 = vpack.c.b16 %v1763, %v1673
  %v1854 = vpack.c.b16 %v1764, %v1674
  %v1855 = vpack.c.b16 %v1765, %v1675
  %v1856 = vpack.c.b16 %v1766, %v1676
  %v1857 = vpack.c.b16 %v1767, %v1677
  %v1858 = vpack.c.b16 %v1768, %v1678
  %v1859 = vpack.c.b16 %v1769, %v1679
  %v1860 = vpack.c.b16 %v1770, %v1680
  %v1861 = vpack.c.b16 %v1771, %v1681
  %v1862 = vpack.c.b16 %v1772, %v1682
  %v1863 = vpack.c.b16 %v1773, %v1683
  %v1864 = vpack.c.b16 %v1774, %v1684
  %v1865 = vpack.c.b16 %v1775, %v1685
  %v1866 = vpack.c.b16 %v1776, %v1686
  %v1867 = vpack.c.b16 %v1777, %v1687
  %v1868 = vpack.c.b16 %v1778, %v1688
  %v1869 = vpack.c.b16 %v1779, %v1689
  %v1870 = vpack.c.b16 %v1780, %v1690
  %v1871 = vpack.c.b16 %v1781, %v1691
  %v1872 = vpack.c.b16 %v1782, %v1692
  %v1873 = vpack.c.b16 %v1783, %v1693
  %v1874 = vpack.c.b16 %v1784, %v1694
  %v1875 = vpack.c.b16 %v1785, %v1695
  %v1876 = vpack.c.b16 %v1786, %v1696
  %v1877 = vpack.c.b16 %v1787, %v1697
  %v1878 = vpack.c.b16 %v1788, %v1698
  %v1879 = vpack.c.b16 %v1789, %v1699
  %v1880 = vpack.c.b16 %v1790, %v1700
  %v1881 = vpack.c.b16 %v1791, %v1701
  %v1882 = vpack.c.b16 %v1792, %v1702
  %v1883 = vpack.c.b16 %v1793, %v1703
  %v1884 = vpack.c.b16 %v1794, %v1704
  %v1885 = vpack.c.b16 %v1795, %v1705
  %v1886 = vpack.c.b16 %v1796, %v1706
  %v1887 = vpack.c.b16 %v1797, %v1707
  %v1888 = vpack.c.b16 %v1798, %v1708
  %v1889 = vpack.c.b16 %v1799, %v1709
  %v1890 = vpack.c.b16 %v1800, %v1710
  %v1891 = vpack.c.b16 %v1801, %v1711
  %v1892 = vpack.c.b16 %v1802, %v1712
  %v1893 = vpack.c.b16 %v1803, %v1713
  %v1894 = vpack.c.b16 %v1804, %v1714
  %v1895 = vpack.c.b16 %v1805, %v1715
  %v1896 = vpack.c.b16 %v1806, %v1716
  %v1897 = vpack.c.b16 %v1807, %v1717
  %v1898 = vpack.c.b16 %v1808, %v1718
  %v1899 = vpack.c.b16 %v1809, %v1719
  %v1900 = vpack.c.b16 %v1810, %v1720
  %v1901 = vpack.c.b16 %v1811, %v1721
  %v1902 = vpack.c.b16 %v1812, %v1722
  %v1903 = vpack.c.b16 %v1813, %v1723
  %v1904 = vpack.c.b16 %v1814, %v1724
  %v1905 = vpack.c.b16 %v1815, %v1725
  %v1906 = vpack.c.b16 %v1816, %v1726
  %v1907 = vpack.c.b16 %v1817, %v1727
  %v1908 = vpack.c.b16 %v1818, %v1728
  %v1909 = vpack.c.b16 %v1819, %v1729
  %v1910 = vpack.c.b16 %v1820, %v1730
  %v1911 = vpack.c.b16 %v1821, %v1731
  %v1912 = vpack.c.b16 %v1822, %v1732
  %v1913 = vpack.c.b16 %v1823, %v1733
  %v1914 = vpack.c.b16 %v1824, %v1734
  %v1915 = vpack.c.b16 %v1825, %v1735
  %v1916 = vpack.c.b16 %v1826, %v1736
  %v1917 = vpack.c.b16 %v1827, %v1737
  %v1918 = vpack.c.b16 %v1828, %v1738
  %v1919 = vpack.c.b16 %v1829, %v1739
  %v1920 = vpack.c.b16 %v1830, %v1740
  %v1921 = vpack.c.b16 %v1831, %v1741
  %v1922 = vpack.c.b16 %v1832, %v1742
  %v1923 = vpack.c.b16 %v1833, %v1743
  %v1924 = vpack.c.b16 %v1834, %v1744
  %v1925 = vpack.c.b16 %v1835, %v1745
  %v3456 = vunpack.c.l.b16 %v119
  %v3457 = vunpack.c.l.b16 %v120
  %v3458 = vunpack.c.l.b16 %v121
  %v3459 = vunpack.c.l.b16 %v122
  %v3460 = vunpack.c.l.b16 %v123
  %v3461 = vunpack.c.l.b16 %v124
  %v3462 = vunpack.c.l.b16 %v125
  %v3463 = vunpack.c.l.b16 %v126
  %v3464 = vunpack.c.l.b16 %v127
  %v3465 = vunpack.c.l.b16 %v128
  %v3466 = vunpack.c.l.b16 %v129
  %v3467 = vunpack.c.l.b16 %v130
  %v3468 = vunpack.c.l.b16 %v131
  %v3469 = vunpack.c.l.b16 %v132
  %v3470 = vunpack.c.l.b16 %v133
  %v3471 = vunpack.c.l.b16 %v134
  %v3472 = vunpack.c.l.b16 %v135
  %v3473 = vunpack.c.l.b16 %v136
  %v3474 = vunpack.c.l.b16 %v137
  %v3475 = vunpack.c.l.b16 %v138
  %v3476 = vunpack.c.l.b16 %v139
  %v3477 = vunpack.c.l.b16 %v140
  %v3478 = vunpack.c.l.b16 %v141
  %v3479 = vunpack.c.l.b16 %v142
  %v3480 = vunpack.c.l.b16 %v143
  %v3481 = vunpack.c.l.b16 %v144
  %v3482 = vunpack.c.l.b16 %v145
  %v3483 = vunpack.c.l.b16 %v146
  %v3484 = vunpack.c.l.b16 %v147
  %v3485 = vunpack.c.l.b16 %v148
  %v3486 = vunpack.c.l.b16 %v149
  %v3487 = vunpack.c.l.b16 %v150
  %v3488 = vunpack.c.l.b16 %v151
  %v3489 = vunpack.c.l.b16 %v152
  %v3490 = vunpack.c.l.b16 %v153
  %v3491 = vunpack.c.l.b16 %v154
  %v3492 = vunpack.c.l.b16 %v155
  %v3493 = vunpack.c.l.b16 %v156
  %v3494 = vunpack.c.l.b16 %v157
  %v3495 = vunpack.c.l.b16 %v158
  %v3496 = vunpack.c.l.b16 %v159
  %v3497 = vunpack.c.l.b16 %v160
  %v3498 = vunpack.c.l.b16 %v161
  %v3499 = vunpack.c.l.b16 %v162
  %v3500 = vunpack.c.l.b16 %v163
  %v3501 = vunpack.c.l.b16 %v164
  %v3502 = vunpack.c.l.b16 %v165
  %v3503 = vunpack.c.l.b16 %v166
  %v3504 = vunpack.c.l.b16 %v167
  %v3505 = vunpack.c.l.b16 %v168
  %v3506 = vunpack.c.l.b16 %v169
  %v3507 = vunpack.c.l.b16 %v170
  %v3508 = vunpack.c.l.b16 %v171
  %v3509 = vunpack.c.l.b16 %v172
  %v3510 = vunpack.c.l.b16 %v173
  %v3511 = vunpack.c.l.b16 %v174
  %v3512 = vunpack.c.l.b16 %v175
  %v3513 = vunpack.c.l.b16 %v176
  %v3514 = vunpack.c.l.b16 %v177
  %v3515 = vunpack.c.l.b16 %v178
  %v3516 = vunpack.c.l.b16 %v179
  %v3517 = vunpack.c.l.b16 %v180
  %v3518 = vunpack.c.l.b16 %v181
  %v3519 = vunpack.c.l.b16 %v182
  %v3520 = vunpack.c.l.b16 %v183
  %v3521 = vunpack.c.l.b16 %v184
  %v3522 = vunpack.c.l.b16 %v185
  %v3523 = vunpack.c.l.b16 %v186
  %v3524 = vunpack.c.l.b16 %v187
  %v3525 = vunpack.c.l.b16 %v188
  %v3526 = vunpack.c.l.b16 %v189
  %v3527 = vunpack.c.l.b16 %v190
  %v3528 = vunpack.c.l.b16 %v191
  %v3529 = vunpack.c.l.b16 %v192
  %v3530 = vunpack.c.l.b16 %v193
  %v3531 = vunpack.c.l.b16 %v194
  %v3532 = vunpack.c.l.b16 %v195
  %v3533 = vunpack.c.l.b16 %v196
  %v3534 = vunpack.c.l.b16 %v197
  %v3535 = vunpack.c.l.b16 %v198
  %v3536 = vunpack.c.l.b16 %v199
  %v3537 = vunpack.c.l.b16 %v200
  %v3538 = vunpack.c.l.b16 %v201
  %v3539 = vunpack.c.l.b16 %v202
  %v3540 = vunpack.c.l.b16 %v203
  %v3541 = vunpack.c.l.b16 %v204
  %v3542 = vunpack.c.l.b16 %v205
  %v3543 = vunpack.c.l.b16 %v206
  %v3544 = vunpack.c.l.b16 %v207
  %v3545 = vunpack.c.l.b16 %v208
  %v3546 = vunpack.c.l.b16 %v209
  %v3547 = vunpack.c.l.b16 %v210
  %v3548 = vunpack.c.l.b16 %v211
  %v3549 = vunpack.c.l.b16 %v212
  %v3550 = vunpack.c.l.b16 %v213
  %v3551 = vunpack.c.l.b16 %v214
  %v3552 = vunpack.c.l.b16 %v215
  %v3553 = vunpack.c.l.b16 %v216
  %v3554 = vunpack.c.l.b16 %v217
  %v3555 = vunpack.c.l.b16 %v218
  %v3556 = vunpack.c.l.b16 %v219
  %v3557 = vunpack.c.l.b16 %v220
  %v3558 = vunpack.c.l.b16 %v221
  %v3559 = vunpack.c.l.b16 %v222
  %v3560 = vunpack.c.l.b16 %v223
  %v3561 = vunpack.c.l.b16 %v224
  %v3562 = vunpack.c.l.b16 %v225
  %v3563 = vunpack.c.l.b16 %v226
  %v3564 = vunpack.c.l.b16 %v227
  %v3565 = vunpack.c.l.b16 %v228
  %v3566 = vunpack.c.l.b16 %v229
  %v3567 = vunpack.c.l.b16 %v230
  %v3568 = vunpack.c.l.b16 %v231
  %v3569 = vunpack.c.l.b16 %v232
  %v3570 = vunpack.c.l.b16 %v233
  %v3571 = vunpack.c.l.b16 %v234
  %v3572 = vunpack.c.l.b16 %v235
  %v3573 = vunpack.c.l.b16 %v236
  %v3574 = vunpack.c.l.b16 %v237
  %v3575 = vunpack.c.l.b16 %v238
  %v3576 = vunpack.c.l.b16 %v239
  %v3577 = vunpack.c.l.b16 %v240
  %v3578 = vunpack.c.l.b16 %v241
  %v3579 = vunpack.c.l.b16 %v242
  %v3580 = vunpack.c.l.b16 %v243
  %v3581 = vunpack.c.l.b16 %v244
  %v3582 = vunpack.c.l.b16 %v245
  %v3583 = vunpack.c.l.b16 %v246
  %v3584 = vunpack.c.l.b16 %v247
  %v3585 = vunpack.c.l.b16 %v248
  %v3586 = vunpack.c.l.b16 %v249
  %v3587 = vunpack.c.l.b16 %v250
  %v3588 = vunpack.c.l.b16 %v251
  %v3589 = vunpack.c.l.b16 %v252
  %v3590 = vunpack.c.l.b16 %v253
  %v3591 = vunpack.c.l.b16 %v254
  %v3592 = vunpack.c.l.b16 %v255
  %v3593 = vunpack.c.l.b16 %v256
  %v3594 = vunpack.c.l.b16 %v257
  %v3595 = vunpack.c.l.b16 %v258
  %v3596 = vunpack.c.l.b16 %v259
  %v3597 = vunpack.c.l.b16 %v260
  %v3598 = vunpack.c.l.b16 %v261
  %v3599 = vunpack.c.l.b16 %v262
  %v3600 = vunpack.c.l.b16 %v263
  %v3601 = vunpack.c.l.b16 %v264
  %v3602 = vunpack.c.l.b16 %v265
  %v3603 = vunpack.c.l.b16 %v266
  %v3604 = vunpack.c.l.b16 %v267
  %v3605 = vunpack.c.l.b16 %v268
  %v3606 = vunpack.c.l.b16 %v269
  %v3607 = vunpack.c.l.b16 %v270
  %v3608 = vunpack.c.l.b16 %v271
  %v3609 = vunpack.c.l.b16 %v272
  %v3610 = vunpack.c.l.b16 %v273
  %v3611 = vunpack.c.l.b16 %v274
  %v3612 = vunpack.c.l.b16 %v275
  %v3613 = vunpack.c.l.b16 %v276
  %v3614 = vunpack.c.l.b16 %v277
  %v3615 = vunpack.c.l.b16 %v278
  %v3616 = vunpack.c.l.b16 %v279
  %v3617 = vunpack.c.l.b16 %v280
  %v3618 = vunpack.c.l.b16 %v281
  %v3619 = vunpack.c.l.b16 %v282
  %v3620 = vunpack.c.l.b16 %v283
  %v3621 = vunpack.c.l.b16 %v284
  %v3622 = vunpack.c.l.b16 %v285
  %v3623 = vunpack.c.l.b16 %v286
  %v3624 = vunpack.c.l.b16 %v287
  %v3625 = vunpack.c.l.b16 %v288
  %v3626 = vunpack.c.l.b16 %v289
  %v3627 = vunpack.c.l.b16 %v290
  %v3628 = vunpack.c.l.b16 %v291
  %v3629 = vunpack.c.l.b16 %v292
  %v3630 = vunpack.c.l.b16 %v293
  %v3631 = vunpack.c.l.b16 %v294
  %v3632 = vunpack.c.l.b16 %v295
  %v3633 = vunpack.c.l.b16 %v296
  %v3634 = vunpack.c.l.b16 %v297
  %v3635 = vunpack.c.l.b16 %v298
  %v3636 = vunpack.c.l.b16 %v299
  %v3637 = vunpack.c.l.b16 %v300
  %v3638 = vunpack.c.l.b16 %v301
  %v3639 = vunpack.c.l.b16 %v302
  %v3640 = vunpack.c.l.b16 %v303
  %v3641 = vunpack.c.l.b16 %v304
  %v3642 = vunpack.c.l.b16 %v305
  %v3643 = vunpack.c.l.b16 %v306
  %v3644 = vunpack.c.l.b16 %v307
  %v3645 = vunpack.c.l.b16 %v308
  %v3646 = vunpack.c.l.b16 %v309
  %v3647 = vunpack.c.l.b16 %v310
  %v3648 = vunpack.c.l.b16 %v311
  %v3649 = vunpack.c.l.b16 %v312
  %v3650 = vunpack.c.l.b16 %v313
  %v3651 = vunpack.c.l.b16 %v314
  %v3652 = vunpack.c.l.b16 %v315
  %v3653 = vunpack.c.l.b16 %v316
  %v3654 = vunpack.c.l.b16 %v317
  %v3655 = vunpack.c.l.b16 %v318
  %v3656 = vunpack.c.l.b16 %v319
  %v3657 = vunpack.c.l.b16 %v320
  %v3658 = vunpack.c.l.b16 %v321
  %v3659 = vunpack.c.l.b16 %v322
  %v3660 = vunpack.c.l.b16 %v323
  %v3661 = vunpack.c.l.b16 %v324
  %v3662 = vunpack.c.l.b16 %v325
  %v3663 = vunpack.c.l.b16 %v326
  %v3664 = vunpack.c.l.b16 %v327
  %v3665 = vunpack.c.l.b16 %v328
  %v3666 = vunpack.c.l.b16 %v329
  %v3667 = vunpack.c.l.b16 %v330
  %v3668 = vunpack.c.l.b16 %v331
  %v3669 = vunpack.c.l.b16 %v332
  %v3670 = vunpack.c.l.b16 %v333
  %v3671 = vunpack.c.l.b16 %v334
  %v3672 = vunpack.c.l.b16 %v335
  %v3673 = vunpack.c.l.b16 %v336
  %v3674 = vunpack.c.l.b16 %v337
  %v3675 = vunpack.c.l.b16 %v338
  %v3676 = vunpack.c.l.b16 %v339
  %v3677 = vunpack.c.l.b16 %v340
  %v3678 = vunpack.c.l.b16 %v341
  %v3679 = vunpack.c.l.b16 %v342
  %v3680 = vunpack.c.l.b16 %v343
  %v3681 = vunpack.c.l.b16 %v344
  %v3682 = vunpack.c.l.b16 %v345
  %v3683 = vunpack.c.l.b16 %v346
  %v3684 = vunpack.c.l.b16 %v347
  %v3685 = vunpack.c.l.b16 %v348
  %v3686 = vunpack.c.l.b16 %v349
  %v3687 = vunpack.c.l.b16 %v350
  %v3688 = vunpack.c.l.b16 %v351
  %v3689 = vunpack.c.l.b16 %v352
  %v3690 = vunpack.c.l.b16 %v353
  %v3691 = vunpack.c.l.b16 %v354
  %v3692 = vunpack.c.l.b16 %v355
  %v3693 = vunpack.c.l.b16 %v356
  %v3694 = vunpack.c.l.b16 %v357
  %v3695 = vunpack.c.l.b16 %v358
  %v3696 = vunpack.c.l.b16 %v359
  %v3697 = vunpack.c.l.b16 %v360
  %v3698 = vunpack.c.l.b16 %v361
  %v3699 = vunpack.c.l.b16 %v362
  %v3700 = vunpack.c.l.b16 %v363
  %v3701 = vunpack.c.l.b16 %v364
  %v3702 = vunpack.c.l.b16 %v365
  %v3703 = vunpack.c.l.b16 %v366
  %v3704 = vunpack.c.l.b16 %v367
  %v3705 = vunpack.c.l.b16 %v368
  %v3706 = vunpack.c.l.b16 %v369
  %v3707 = vunpack.c.l.b16 %v370
  %v3708 = vunpack.c.l.b16 %v371
  %v3709 = vunpack.c.l.b16 %v372
  %v3710 = vunpack.c.l.b16 %v373
  %v3711 = vunpack.c.l.b16 %v374
  %v3712 = vunpack.c.l.b16 %v375
  %v3713 = vunpack.c.l.b16 %v376
  %v3714 = vunpack.c.l.b16 %v377
  %v3715 = vunpack.c.l.b16 %v378
  %v3716 = vunpack.c.l.b16 %v379
  %v3717 = vunpack.c.l.b16 %v380
  %v3718 = vunpack.c.l.b16 %v381
  %v3719 = vunpack.c.l.b16 %v382
  %v3720 = vunpack.c.l.b16 %v383
  %v3721 = vunpack.c.l.b16 %v384
  %v3722 = vunpack.c.l.b16 %v385
  %v3723 = vunpack.c.l.b16 %v386
  %v3724 = vunpack.c.l.b16 %v387
  %v3725 = vunpack.c.l.b16 %v388
  %v3726 = vunpack.c.l.b16 %v389
  %v3727 = vunpack.c.l.b16 %v390
  %v3728 = vunpack.c.l.b16 %v391
  %v3729 = vunpack.c.l.b16 %v392
  %v3730 = vunpack.c.l.b16 %v393
  %v3731 = vunpack.c.l.b16 %v394
  %v3732 = vunpack.c.l.b16 %v395
  %v3733 = vunpack.c.l.b16 %v396
  %v3734 = vunpack.c.l.b16 %v397
  %v3735 = vunpack.c.l.b16 %v398
  %v3736 = vunpack.c.l.b16 %v399
  %v3737 = vunpack.c.l.b16 %v400
  %v3738 = vunpack.c.l.b16 %v401
  %v3739 = vunpack.c.l.b16 %v402
  %v3740 = vunpack.c.l.b16 %v403
  %v3741 = vunpack.c.l.b16 %v404
  %v3742 = vunpack.c.l.b16 %v405
  %v3743 = vunpack.c.l.b16 %v406
  %v3744 = vunpack.c.l.b16 %v407
  %v3745 = vunpack.c.l.b16 %v408
  %v3746 = vunpack.c.l.b16 %v409
  %v3747 = vunpack.c.l.b16 %v410
  %v3748 = vunpack.c.l.b16 %v411
  %v3749 = vunpack.c.l.b16 %v412
  %v3750 = vunpack.c.l.b16 %v413
  %v3751 = vunpack.c.l.b16 %v414
  %v3752 = vunpack.c.l.b16 %v415
  %v3753 = vunpack.c.l.b16 %v416
  %v3754 = vunpack.c.l.b16 %v417
  %v3755 = vunpack.c.l.b16 %v418
  %v3756 = vunpack.c.l.b16 %v419
  %v3757 = vunpack.c.l.b16 %v420
  %v3758 = vunpack.c.l.b16 %v421
  %v3759 = vunpack.c.l.b16 %v422
  %v3760 = vunpack.c.l.b16 %v423
  %v3761 = vunpack.c.l.b16 %v424
  %v3762 = vunpack.c.l.b16 %v425
  %v3763 = vunpack.c.l.b16 %v426
  %v3764 = vunpack.c.l.b16 %v427
  %v3765 = vunpack.c.l.b16 %v428
  %v3766 = vunpack.c.l.b16 %v429
  %v3767 = vunpack.c.l.b16 %v430
  %v3768 = vunpack.c.l.b16 %v431
  %v3769 = vunpack.c.l.b16 %v432
  %v3770 = vunpack.c.l.b16 %v433
  %v3771 = vunpack.c.l.b16 %v434
  %v3772 = vunpack.c.l.b16 %v435
  %v3773 = vunpack.c.l.b16 %v436
  %v3774 = vunpack.c.l.b16 %v437
  %v3775 = vunpack.c.l.b16 %v438
  %v3776 = vunpack.c.l.b16 %v439
  %v3777 = vunpack.c.l.b16 %v440
  %v3778 = vunpack.c.l.b16 %v441
  %v3779 = vunpack.c.l.b16 %v442
  %v3780 = vunpack.c.l.b16 %v443
  %v3781 = vunpack.c.l.b16 %v444
  %v3782 = vunpack.c.l.b16 %v445
  %v3783 = vunpack.c.l.b16 %v446
  %v3784 = vunpack.c.l.b16 %v447
  %v3785 = vunpack.c.l.b16 %v448
  %v3786 = vunpack.c.l.b16 %v449
  %v3787 = vunpack.c.l.b16 %v450
  %v3788 = vunpack.c.l.b16 %v451
  %v3789 = vunpack.c.l.b16 %v452
  %v3790 = vunpack.c.l.b16 %v453
  %v3791 = vunpack.c.l.b16 %v454
  %v3792 = vunpack.c.l.b16 %v455
  %v3793 = vunpack.c.l.b16 %v456
  %v3794 = vunpack.c.l.b16 %v457
  %v3795 = vunpack.c.l.b16 %v458
  %v3796 = vunpack.c.l.b16 %v459
  %v3797 = vunpack.c.l.b16 %v460
  %v3798 = vunpack.c.l.b16 %v461
  %v3799 = vunpack.c.l.b16 %v462
  %v3800 = vunpack.c.l.b16 %v463
  %v3801 = vunpack.c.l.b16 %v464
  %v3802 = vunpack.c.l.b16 %v465
  %v3803 = vunpack.c.l.b16 %v466
  %v3804 = vunpack.c.l.b16 %v467
  %v3805 = vunpack.c.l.b16 %v468
  %v3806 = vunpack.c.l.b16 %v469
  %v3807 = vunpack.c.l.b16 %v470
  %v3808 = vunpack.c.l.b16 %v471
  %v3809 = vunpack.c.l.b16 %v472
  %v3810 = vunpack.c.l.b16 %v473
  %v3811 = vunpack.c.l.b16 %v474
  %v3812 = vunpack.c.l.b16 %v475
  %v3813 = vunpack.c.l.b16 %v476
  %v3814 = vunpack.c.l.b16 %v477
  %v3815 = vunpack.c.l.b16 %v478
  %v3816 = vunpack.c.l.b16 %v479
  %v3817 = vunpack.c.l.b16 %v480
  %v3818 = vunpack.c.l.b16 %v481
  %v3819 = vunpack.c.l.b16 %v482
  %v3820 = vunpack.c.l.b16 %v483
  %v3821 = vunpack.c.l.b16 %v484
  %v3822 = vunpack.c.l.b16 %v485
  %v3823 = vunpack.c.l.b16 %v486
  %v3824 = vunpack.c.l.b16 %v487
  %v3825 = vunpack.c.l.b16 %v488
  %v3826 = vunpack.c.l.b16 %v489
  %v3827 = vunpack.c.l.b16 %v490
  %v3828 = vunpack.c.l.b16 %v491
  %v3829 = vunpack.c.l.b16 %v492
  %v3830 = vunpack.c.l.b16 %v493
  %v3831 = vunpack.c.l.b16 %v494
  %v3832 = vunpack.c.l.b16 %v495
  %v3833 = vunpack.c.l.b16 %v496
  %v3834 = vunpack.c.l.b16 %v497
  %v3835 = vunpack.c.l.b16 %v498
  %v3836 = vunpack.c.l.b16 %v499
  %v3837 = vunpack.c.l.b16 %v500
  %v3838 = vunpack.c.l.b16 %v501
  %v3839 = vunpack.c.l.b16 %v502
  %v3840 = vunpack.c.l.b16 %v503
  %v3841 = vunpack.c.l.b16 %v504
  %v3842 = vunpack.c.l.b16 %v505
  %v3843 = vunpack.c.l.b16 %v506
  %v3844 = vunpack.c.l.b16 %v507
  %v3845 = vunpack.c.l.b16 %v508
  %v3846 = vunpack.c.l.b16 %v509
  %v3847 = vunpack.c.l.b16 %v510
  %v3848 = vunpack.c.l.b16 %v511
  %v3849 = vunpack.c.l.b16 %v512
  %v3850 = vunpack.c.l.b16 %v513
  %v3851 = vunpack.c.l.b16 %v514
  %v3852 = vunpack.c.l.b16 %v515
  %v3853 = vunpack.c.l.b16 %v516
  %v3854 = vunpack.c.l.b16 %v517
  %v3855 = vunpack.c.l.b16 %v518
  %v3856 = vunpack.c.l.b16 %v519
  %v3857 = vunpack.c.l.b16 %v520
  %v3858 = vunpack.c.l.b16 %v521
  %v3859 = vunpack.c.l.b16 %v522
  %v3860 = vunpack.c.l.b16 %v523
  %v3861 = vunpack.c.l.b16 %v524
  %v3862 = vunpack.c.l.b16 %v525
  %v3863 = vunpack.c.l.b16 %v526
  %v3864 = vunpack.c.l.b16 %v527
  %v3865 = vunpack.c.l.b16 %v528
  %v3866 = vunpack.c.l.b16 %v529
  %v3867 = vunpack.c.l.b16 %v530
  %v3868 = vunpack.c.l.b16 %v531
  %v3869 = vunpack.c.l.b16 %v532
  %v3870 = vunpack.c.l.b16 %v533
  %v3871 = vunpack.c.l.b16 %v534
  %v3872 = vunpack.c.l.b16 %v535
  %v3873 = vunpack.c.l.b16 %v536
  %v3874 = vunpack.c.l.b16 %v537
  %v3875 = vunpack.c.l.b16 %v538
  %v3876 = vunpack.c.l.b16 %v539
  %v3877 = vunpack.c.l.b16 %v540
  %v3878 = vunpack.c.l.b16 %v541
  %v3879 = vunpack.c.l.b16 %v542
  %v3880 = vunpack.c.l.b16 %v543
  %v3881 = vunpack.c.l.b16 %v544
  %v3882 = vunpack.c.l.b16 %v545
  %v3883 = vunpack.c.l.b16 %v546
  %v3884 = vunpack.c.l.b16 %v547
  %v3885 = vunpack.c.l.b16 %v548
  %v3886 = vunpack.c.l.b16 %v549
  %v3887 = vunpack.c.l.b16 %v550
  %v3888 = vunpack.c.l.b16 %v551
  %v3889 = vunpack.c.l.b16 %v552
  %v3890 = vunpack.c.l.b16 %v553
  %v3891 = vunpack.c.l.b16 %v554
  %v3892 = vunpack.c.l.b16 %v555
  %v3893 = vunpack.c.l.b16 %v556
  %v3894 = vunpack.c.l.b16 %v557
  %v3895 = vunpack.c.l.b16 %v558
  %v3896 = vunpack.c.l.b16 %v559
  %v3897 = vunpack.c.l.b16 %v560
  %v3898 = vunpack.c.l.b16 %v561
  %v3899 = vunpack.c.l.b16 %v562
  %v3900 = vunpack.c.l.b16 %v563
  %v3901 = vunpack.c.l.b16 %v564
  %v3902 = vunpack.c.l.b16 %v565
  %v3903 = vunpack.c.l.b16 %v566
  %v3904 = vunpack.c.l.b16 %v567
  %v3905 = vunpack.c.l.b16 %v568
  %v3906 = vunpack.c.l.b16 %v569
  %v3907 = vunpack.c.l.b16 %v570
  %v3908 = vunpack.c.l.b16 %v571
  %v3909 = vunpack.c.l.b16 %v572
  %v3910 = vunpack.c.l.b16 %v573
  %v3911 = vunpack.c.l.b16 %v574
  %v3912 = vunpack.c.l.b16 %v575
  %v3913 = vunpack.c.l.b16 %v576
  %v3914 = vunpack.c.l.b16 %v577
  %v3915 = vunpack.c.l.b16 %v578
  %v3916 = vunpack.c.l.b16 %v579
  %v3917 = vunpack.c.l.b16 %v580
  %v3918 = vunpack.c.l.b16 %v581
  %v3919 = vunpack.c.l.b16 %v582
  %v3920 = vunpack.c.l.b16 %v583
  %v3921 = vunpack.c.l.b16 %v584
  %v3922 = vunpack.c.l.b16 %v585
  %v3923 = vunpack.c.l.b16 %v586
  %v3924 = vunpack.c.l.b16 %v587
  %v3925 = vunpack.c.l.b16 %v588
  %v3926 = vunpack.c.l.b16 %v589
  %v3927 = vunpack.c.l.b16 %v590
  %v3928 = vunpack.c.l.b16 %v591
  %v3929 = vunpack.c.l.b16 %v592
  %v3930 = vunpack.c.l.b16 %v593
  %v3931 = vunpack.c.l.b16 %v594
  %v3932 = vunpack.c.l.b16 %v595
  %v3933 = vunpack.c.l.b16 %v596
  %v3934 = vunpack.c.l.b16 %v597
  %v3935 = vunpack.c.l.b16 %v598
  %v3936 = vunpack.c.l.b16 %v599
  %v3937 = vunpack.c.l.b16 %v600
  %v3938 = vunpack.c.l.b16 %v601
  %v3939 = vunpack.c.l.b16 %v602
  %v3940 = vunpack.c.l.b16 %v603
  %v3941 = vunpack.c.l.b16 %v604
  %v3942 = vunpack.c.l.b16 %v605
  %v3943 = vunpack.c.l.b16 %v606
  %v3944 = vunpack.c.l.b16 %v607
  %v3945 = vunpack.c.l.b16 %v608
  %v3946 = vunpack.c.l.b16 %v609
  %v3947 = vunpack.c.l.b16 %v610
  %v3948 = vunpack.c.l.b16 %v611
  %v3949 = vunpack.c.l.b16 %v612
  %v3950 = vunpack.c.l.b16 %v613
  %v3951 = vunpack.c.l.b16 %v614
  %v3952 = vunpack.c.l.b16 %v615
  %v3953 = vunpack.c.l.b16 %v616
  %v3954 = vunpack.c.l.b16 %v617
  %v3955 = vunpack.c.l.b16 %v618
  %v3956 = vunpack.c.l.b16 %v619
  %v3957 = vunpack.c.l.b16 %v620
  %v3958 = vunpack.c.l.b16 %v621
  %v3959 = vunpack.c.l.b16 %v622
  %v3960 = vunpack.c.l.b16 %v623
  %v3961 = vunpack.c.l.b16 %v624
  %v3962 = vunpack.c.l.b16 %v625
  %v3963 = vunpack.c.l.b16 %v626
  %v3964 = vunpack.c.l.b16 %v627
  %v3965 = vunpack.c.l.b16 %v628
  %v3966 = vunpack.c.l.b16 %v629
  %v3967 = vunpack.c.l.b16 %v630
  %v3968 = vunpack.c.l.b16 %v631
  %v3969 = vunpack.c.l.b16 %v632
  %v3970 = vunpack.c.l.b16 %v633
  %v3971 = vunpack.c.l.b16 %v634
  %v3972 = vunpack.c.l.b16 %v635
  %v3973 = vunpack.c.l.b16 %v636
  %v3974 = vunpack.c.l.b16 %v637
  %v3975 = vunpack.c.l.b16 %v638
  %v3976 = vunpack.c.l.b16 %v639
  %v3977 = vunpack.c.l.b16 %v640
  %v3978 = vunpack.c.l.b16 %v641
  %v3979 = vunpack.c.l.b16 %v642
  %v3980 = vunpack.c.l.b16 %v643
  %v3981 = vunpack.c.l.b16 %v644
  %v3982 = vunpack.c.l.b16 %v645
  %v3983 = vunpack.c.l.b16 %v646
  %v3984 = vunpack.c.l.b16 %v647
  %v3985 = vunpack.c.l.b16 %v648
  %v3986 = vunpack.c.l.b16 %v649
  %v3987 = vunpack.c.l.b16 %v650
  %v3988 = vunpack.c.l.b16 %v651
  %v3989 = vunpack.c.l.b16 %v652
  %v3990 = vunpack.c.l.b16 %v653
  %v3991 = vunpack.c.l.b16 %v654
  %v3992 = vunpack.c.l.b16 %v655
  %v3993 = vunpack.c.l.b16 %v656
  %v3994 = vunpack.c.l.b16 %v657
  %v3995 = vunpack.c.l.b16 %v658
  %v3996 = vunpack.c.l.b16 %v659
  %v3997 = vunpack.c.l.b16 %v660
  %v3998 = vunpack.c.l.b16 %v661
  %v3999 = vunpack.c.l.b16 %v662
  %v4000 = vunpack.c.l.b16 %v663
  %v4001 = vunpack.c.l.b16 %v664
  %v4002 = vunpack.c.l.b16 %v665
  %v4003 = vunpack.c.l.b16 %v666
  %v4004 = vunpack.c.l.b16 %v667
  %v4005 = vunpack.c.l.b16 %v668
  %v4006 = vunpack.c.l.b16 %v669
  %v4007 = vunpack.c.l.b16 %v670
  %v4008 = vunpack.c.l.b16 %v671
  %v4009 = vunpack.c.l.b16 %v672
  %v4010 = vunpack.c.l.b16 %v673
  %v4011 = vunpack.c.l.b16 %v674
  %v4012 = vunpack.c.l.b16 %v675
  %v4013 = vunpack.c.l.b16 %v676
  %v4014 = vunpack.c.l.b16 %v677
  %v4015 = vunpack.c.l.b16 %v678
  %v4016 = vunpack.c.l.b16 %v679
  %v4017 = vunpack.c.l.b16 %v680
  %v4018 = vunpack.c.l.b16 %v681
  %v4019 = vunpack.c.l.b16 %v682
  %v4020 = vunpack.c.l.b16 %v683
  %v4021 = vunpack.c.l.b16 %v684
  %v4022 = vunpack.c.l.b16 %v685
  %v4023 = vunpack.c.l.b16 %v686
  %v4024 = vunpack.c.l.b16 %v687
  %v4025 = vunpack.c.l.b16 %v688
  %v4026 = vunpack.c.l.b16 %v689
  %v4027 = vunpack.c.l.b16 %v690
  %v4028 = vunpack.c.l.b16 %v691
  %v4029 = vunpack.c.l.b16 %v692
  %v4030 = vunpack.c.l.b16 %v693
  %v4031 = vunpack.c.l.b16 %v694
  %v4032 = vunpack.c.l.b16 %v695
  %v4033 = vunpack.c.l.b16 %v696
  %v4034 = vunpack.c.l.b16 %v697
  %v4035 = vunpack.c.l.b16 %v698
  %v4036 = vunpack.c.l.b16 %v699
  %v4037 = vunpack.c.l.b16 %v700
  %v4038 = vunpack.c.l.b16 %v701
  %v4039 = vunpack.c.l.b16 %v702
  %v4040 = vunpack.c.l.b16 %v703
  %v4041 = vunpack.c.l.b16 %v704
  %v4042 = vunpack.c.l.b16 %v705
  %v4043 = vunpack.c.l.b16 %v706
  %v4044 = vunpack.c.l.b16 %v707
  %v4045 = vunpack.c.l.b16 %v708
  %v4046 = vunpack.c.l.b16 %v709
  %v4047 = vunpack.c.l.b16 %v710
  %v4048 = vunpack.c.l.b16 %v711
  %v4049 = vunpack.c.l.b16 %v712
  %v4050 = vunpack.c.l.b16 %v713
  %v4051 = vunpack.c.l.b16 %v714
  %v4052 = vunpack.c.l.b16 %v715
  %v4053 = vunpack.c.l.b16 %v716
  %v4054 = vunpack.c.l.b16 %v717
  %v4055 = vunpack.c.l.b16 %v718
  %v4056 = vunpack.c.l.b16 %v719
  %v4057 = vunpack.c.l.b16 %v720
  %v4058 = vunpack.c.l.b16 %v721
  %v4059 = vunpack.c.l.b16 %v722
  %v4060 = vunpack.c.l.b16 %v723
  %v4061 = vunpack.c.l.b16 %v724
  %v4062 = vunpack.c.l.b16 %v725
  %v4063 = vunpack.c.l.b16 %v726
  %v4064 = vunpack.c.l.b16 %v727
  %v4065 = vunpack.c.l.b16 %v728
  %v4066 = vunpack.c.l.b16 %v729
  %v4067 = vunpack.c.l.b16 %v730
  %v4068 = vunpack.c.l.b16 %v731
  %v4069 = vunpack.c.l.b16 %v732
  %v4070 = vunpack.c.l.b16 %v733
  %v4071 = vunpack.c.l.b16 %v734
  %v4072 = vunpack.c.l.b16 %v735
  %v4073 = vunpack.c.l.b16 %v736
  %v4074 = vunpack.c.l.b16 %v737
  %v4075 = vunpack.c.l.b16 %v738
  %v4076 = vunpack.c.l.b16 %v739
  %v4077 = vunpack.c.l.b16 %v740
  %v4078 = vunpack.c.l.b16 %v741
  %v4079 = vunpack.c.l.b16 %v742
  %v4080 = vunpack.c.l.b16 %v743
  %v4081 = vunpack.c.l.b16 %v744
  %v4082 = vunpack.c.l.b16 %v745
  %v4083 = vunpack.c.l.b16 %v746
  %v4084 = vunpack.c.l.b16 %v747
  %v4085 = vunpack.c.l.b16 %v748
  %v4086 = vunpack.c.l.b16 %v749
  %v4087 = vunpack.c.l.b16 %v750
  %v4088 = vunpack.c.l.b16 %v751
  %v4089 = vunpack.c.l.b16 %v752
  %v4090 = vunpack.c.l.b16 %v753
  %v4091 = vunpack.c.l.b16 %v754
  %v4092 = vunpack.c.l.b16 %v755
  %v4093 = vunpack.c.l.b16 %v756
  %v4094 = vunpack.c.l.b16 %v757
  %v4095 = vunpack.c.l.b16 %v758
  %v4096 = vunpack.c.l.b16 %v759
  %v4097 = vunpack.c.l.b16 %v760
  %v4098 = vunpack.c.l.b16 %v761
  %v4099 = vunpack.c.l.b16 %v762
  %v4100 = vunpack.c.l.b16 %v763
  %v4101 = vunpack.c.l.b16 %v764
  %v4102 = vunpack.c.l.b16 %v765
  %v4103 = vunpack.c.l.b16 %v766
  %v4104 = vunpack.c.l.b16 %v767
  %v4105 = vunpack.c.l.b16 %v768
  %v4106 = vunpack.c.l.b16 %v769
  %v4107 = vunpack.c.l.b16 %v770
  %v4108 = vunpack.c.l.b16 %v771
  %v4109 = vunpack.c.l.b16 %v772
  %v4110 = vunpack.c.l.b16 %v773
  %v4111 = vunpack.c.l.b16 %v774
  %v4112 = vunpack.c.l.b16 %v775
  %v4113 = vunpack.c.l.b16 %v776
  %v4114 = vunpack.c.l.b16 %v777
  %v4115 = vunpack.c.l.b16 %v778
  %v4116 = vunpack.c.l.b16 %v779
  %v4117 = vunpack.c.l.b16 %v780
  %v4118 = vunpack.c.l.b16 %v781
  %v4119 = vunpack.c.l.b16 %v782
  %v4120 = vunpack.c.l.b16 %v783
  %v4121 = vunpack.c.l.b16 %v784
  %v4122 = vunpack.c.l.b16 %v785
  %v4123 = vunpack.c.l.b16 %v786
  %v4124 = vunpack.c.l.b16 %v787
  %v4125 = vunpack.c.l.b16 %v788
  %v4126 = vunpack.c.l.b16 %v789
  %v4127 = vunpack.c.l.b16 %v790
  %v4128 = vunpack.c.l.b16 %v791
  %v4129 = vunpack.c.l.b16 %v792
  %v4130 = vunpack.c.l.b16 %v793
  %v4131 = vunpack.c.l.b16 %v794
  %v4132 = vunpack.c.l.b16 %v795
  %v4133 = vunpack.c.l.b16 %v796
  %v4134 = vunpack.c.l.b16 %v797
  %v4135 = vunpack.c.l.b16 %v798
  %v4136 = vunpack.c.l.b16 %v799
  %v4137 = vunpack.c.l.b16 %v800
  %v4138 = vunpack.c.l.b16 %v801
  %v4139 = vunpack.c.l.b16 %v802
  %v4140 = vunpack.c.l.b16 %v803
  %v4141 = vunpack.c.l.b16 %v804
  %v4142 = vunpack.c.l.b16 %v805
  %v4143 = vunpack.c.l.b16 %v806
  %v4144 = vunpack.c.l.b16 %v807
  %v4145 = vunpack.c.l.b16 %v808
  %v4146 = vunpack.c.l.b16 %v809
  %v4147 = vunpack.c.l.b16 %v810
  %v4148 = vunpack.c.l.b16 %v811
  %v4149 = vunpack.c.l.b16 %v812
  %v4150 = vunpack.c.l.b16 %v813
  %v4151 = vunpack.c.l.b16 %v814
  %v4152 = vunpack.c.l.b16 %v815
  %v4153 = vunpack.c.l.b16 %v816
  %v4154 = vunpack.c.l.b16 %v817
  %v4155 = vunpack.c.l.b16 %v818
  %v4156 = vunpack.c.l.b16 %v819
  %v4157 = vunpack.c.l.b16 %v820
  %v4158 = vunpack.c.l.b16 %v821
  %v4159 = vunpack.c.l.b16 %v822
  %v4160 = vunpack.c.l.b16 %v823
  %v4161 = vunpack.c.l.b16 %v824
  %v4162 = vunpack.c.l.b16 %v825
  %v4163 = vunpack.c.l.b16 %v826
  %v4164 = vunpack.c.l.b16 %v827
  %v4165 = vunpack.c.l.b16 %v828
  %v4166 = vunpack.c.l.b16 %v829
  %v4167 = vunpack.c.l.b16 %v830
  %v4168 = vunpack.c.l.b16 %v831
  %v4169 = vunpack.c.l.b16 %v832
  %v4170 = vunpack.c.l.b16 %v833
  %v4171 = vunpack.c.l.b16 %v834
  %v4172 = vunpack.c.l.b16 %v835
  %v4173 = vunpack.c.l.b16 %v836
  %v4174 = vunpack.c.l.b16 %v837
  %v4175 = vunpack.c.l.b16 %v838
  %v4176 = vunpack.c.l.b16 %v839
  %v4177 = vunpack.c.l.b16 %v840
  %v4178 = vunpack.c.l.b16 %v841
  %v4179 = vunpack.c.l.b16 %v842
  %v4180 = vunpack.c.l.b16 %v843
  %v4181 = vunpack.c.l.b16 %v844
  %v4182 = vunpack.c.l.b16 %v845
  %v4183 = vunpack.c.l.b16 %v846
  %v4184 = vunpack.c.l.b16 %v847
  %v4185 = vunpack.c.l.b16 %v848
  %v4186 = vunpack.c.l.b16 %v849
  %v4187 = vunpack.c.l.b16 %v850
  %v4188 = vunpack.c.l.b16 %v851
  %v4189 = vunpack.c.l.b16 %v852
  %v4190 = vunpack.c.l.b16 %v853
  %v4191 = vunpack.c.l.b16 %v854
  %v4192 = vunpack.c.l.b16 %v855
  %v4193 = vunpack.c.l.b16 %v856
  %v4194 = vunpack.c.l.b16 %v857
  %v4195 = vunpack.c.l.b16 %v858
  %v4196 = vunpack.c.l.b16 %v859
  %v4197 = vunpack.c.l.b16 %v860
  %v4198 = vunpack.c.l.b16 %v861
  %v4199 = vunpack.c.l.b16 %v862
  %v4200 = vunpack.c.l.b16 %v863
  %v4201 = vunpack.c.l.b16 %v864
  %v4202 = vunpack.c.l.b16 %v865
  %v4203 = vunpack.c.l.b16 %v866
  %v4204 = vunpack.c.l.b16 %v867
  %v4205 = vunpack.c.l.b16 %v868
  %v4206 = vunpack.c.l.b16 %v869
  %v4207 = vunpack.c.l.b16 %v870
  %v4208 = vunpack.c.l.b16 %v871
  %v4209 = vunpack.c.l.b16 %v872
  %v4210 = vunpack.c.l.b16 %v873
  %v4211 = vunpack.c.l.b16 %v874
  %v4212 = vunpack.c.l.b16 %v875
  %v4213 = vunpack.c.l.b16 %v876
  %v4214 = vunpack.c.l.b16 %v877
  %v4215 = vunpack.c.l.b16 %v878
  %v4216 = vunpack.c.l.b16 %v879
  %v4217 = vunpack.c.l.b16 %v880
  %v4218 = vunpack.c.l.b16 %v881
  %v4219 = vunpack.c.l.b16 %v882
  %v4220 = vunpack.c.l.b16 %v883
  %v4221 = vunpack.c.l.b16 %v884
  %v4222 = vunpack.c.l.b16 %v885
  %v4223 = vunpack.c.l.b16 %v886
  %v4224 = vunpack.c.l.b16 %v887
  %v4225 = vunpack.c.l.b16 %v888
  %v4226 = vunpack.c.l.b16 %v889
  %v4227 = vunpack.c.l.b16 %v890
  %v4228 = vunpack.c.l.b16 %v891
  %v4229 = vunpack.c.l.b16 %v892
  %v4230 = vunpack.c.l.b16 %v893
  %v4231 = vunpack.c.l.b16 %v894
  %v4232 = vunpack.c.l.b16 %v895
  %v4233 = vunpack.c.l.b16 %v896
  %v4234 = vunpack.c.l.b16 %v897
  %v4235 = vunpack.c.l.b16 %v898
  %v4236 = vunpack.c.l.b16 %v899
  %v4237 = vunpack.c.l.b16 %v900
  %v4238 = vunpack.c.l.b16 %v901
  %v4239 = vunpack.c.l.b16 %v902
  %v4240 = vunpack.c.l.b16 %v903
  %v4241 = vunpack.c.l.b16 %v904
  %v4242 = vunpack.c.l.b16 %v905
  %v4243 = vunpack.c.l.b16 %v906
  %v4244 = vunpack.c.l.b16 %v907
  %v4245 = vunpack.c.l.b16 %v908
  %v4246 = vunpack.c.l.b16 %v909
  %v4247 = vunpack.c.l.b16 %v910
  %v4248 = vunpack.c.l.b16 %v911
  %v4249 = vunpack.c.l.b16 %v912
  %v4250 = vunpack.c.l.b16 %v913
  %v4251 = vunpack.c.l.b16 %v914
  %v4252 = vunpack.c.l.b16 %v915
  %v4253 = vunpack.c.l.b16 %v916
  %v4254 = vunpack.c.l.b16 %v917
  %v4255 = vunpack.c.l.b16 %v918
  %v4256 = vunpack.c.l.b16 %v919
  %v4257 = vunpack.c.l.b16 %v920
  %v4258 = vunpack.c.l.b16 %v921
  %v4259 = vunpack.c.l.b16 %v922
  %v4260 = vunpack.c.l.b16 %v923
  %v4261 = vunpack.c.l.b16 %v924
  %v4262 = vunpack.c.l.b16 %v925
  %v4263 = vunpack.c.l.b16 %v926
  %v4264 = vunpack.c.l.b16 %v927
  %v4265 = vunpack.c.l.b16 %v928
  %v4266 = vunpack.c.l.b16 %v929
  %v4267 = vunpack.c.l.b16 %v930
  %v4268 = vunpack.c.l.b16 %v931
  %v4269 = vunpack.c.l.b16 %v932
  %v4270 = vunpack.c.l.b16 %v933
  %v4271 = vunpack.c.l.b16 %v934
  %v4272 = vunpack.c.l.b16 %v935
  %v4273 = vunpack.c.l.b16 %v936
  %v4274 = vunpack.c.l.b16 %v937
  %v4275 = vunpack.c.l.b16 %v938
  %v4276 = vunpack.c.l.b16 %v939
  %v4277 = vunpack.c.l.b16 %v940
  %v4278 = vunpack.c.l.b16 %v941
  %v4279 = vunpack.c.l.b16 %v942
  %v4280 = vunpack.c.l.b16 %v943
  %v4281 = vunpack.c.l.b16 %v944
  %v4282 = vunpack.c.l.b16 %v945
  %v4283 = vunpack.c.l.b16 %v946
  %v4284 = vunpack.c.l.b16 %v947
  %v4285 = vunpack.c.l.b16 %v948
  %v4286 = vunpack.c.l.b16 %v949
  %v4287 = vunpack.c.l.b16 %v950
  %v4288 = vunpack.c.l.b16 %v951
  %v4289 = vunpack.c.l.b16 %v952
  %v4290 = vunpack.c.l.b16 %v953
  %v4291 = vunpack.c.l.b16 %v954
  %v4292 = vunpack.c.l.b16 %v955
  %v4293 = vunpack.c.l.b16 %v956
  %v4294 = vunpack.c.l.b16 %v957
  %v4295 = vunpack.c.l.b16 %v958
  %v4296 = vunpack.c.l.b16 %v959
  %v4297 = vunpack.c.l.b16 %v960
  %v4298 = vunpack.c.l.b16 %v961
  %v4299 = vunpack.c.l.b16 %v962
  %v4300 = vunpack.c.l.b16 %v963
  %v4301 = vunpack.c.l.b16 %v964
  %v4302 = vunpack.c.l.b16 %v965
  %v4303 = vunpack.c.l.b16 %v966
  %v4304 = vunpack.c.l.b16 %v967
  %v4305 = vunpack.c.l.b16 %v968
  %v4306 = vunpack.c.l.b16 %v969
  %v4307 = vunpack.c.l.b16 %v970
  %v4308 = vunpack.c.l.b16 %v971
  %v4309 = vunpack.c.l.b16 %v972
  %v4310 = vunpack.c.l.b16 %v973
  %v4311 = vunpack.c.l.b16 %v974
  %v4312 = vunpack.c.l.b16 %v975
  %v4313 = vunpack.c.l.b16 %v976
  %v4314 = vunpack.c.l.b16 %v977
  %v4315 = vunpack.c.l.b16 %v978
  %v4316 = vunpack.c.l.b16 %v979
  %v4317 = vunpack.c.l.b16 %v980
  %v4318 = vunpack.c.l.b16 %v981
  %v4319 = vunpack.c.l.b16 %v982
  %v4320 = vunpack.c.l.b16 %v983
  %v4321 = vunpack.c.l.b16 %v984
  %v4322 = vunpack.c.l.b16 %v985
  %v4323 = vunpack.c.l.b16 %v986
  %v4324 = vunpack.c.l.b16 %v987
  %v4325 = vunpack.c.l.b16 %v988
  %v4326 = vunpack.c.l.b16 %v989
  %v4327 = vunpack.c.l.b16 %v990
  %v4328 = vunpack.c.l.b16 %v991
  %v4329 = vunpack.c.l.b16 %v992
  %v4330 = vunpack.c.l.b16 %v993
  %v4331 = vunpack.c.l.b16 %v994
  %v4332 = vunpack.c.l.b16 %v995
  %v4333 = vunpack.c.l.b16 %v996
  %v4334 = vunpack.c.l.b16 %v997
  %v4335 = vunpack.c.l.b16 %v998
  %v4336 = vunpack.c.l.b16 %v999
  %v4337 = vunpack.c.l.b16 %v1000
  %v4338 = vunpack.c.l.b16 %v1001
  %v4339 = vunpack.c.l.b16 %v1002
  %v4340 = vunpack.c.l.b16 %v1003
  %v4341 = vunpack.c.l.b16 %v1004
  %v4342 = vunpack.c.l.b16 %v1005
  %v4343 = vunpack.c.l.b16 %v1006
  %v4344 = vunpack.c.l.b16 %v1007
  %v4345 = vunpack.c.l.b16 %v1008
  %v4346 = vunpack.c.l.b16 %v1009
  %v4347 = vunpack.c.l.b16 %v1010
  %v4348 = vunpack.c.l.b16 %v1011
  %v4349 = vunpack.c.l.b16 %v1012
  %v4350 = vunpack.c.l.b16 %v1013
  %v4351 = vunpack.c.l.b16 %v1014
  %v4352 = vunpack.c.l.b16 %v1015
  %v4353 = vunpack.c.l.b16 %v1016
  %v4354 = vunpack.c.l.b16 %v1017
  %v4355 = vunpack.c.l.b16 %v1018
  %v4356 = vunpack.c.l.b16 %v1019
  %v4357 = vunpack.c.l.b16 %v1020
  %v4358 = vunpack.c.l.b16 %v1021
  %v4359 = vunpack.c.l.b16 %v1022
  %v4360 = vunpack.c.l.b16 %v1023
  %v4361 = vunpack.c.l.b16 %v1024
  %v4362 = vunpack.c.l.b16 %v1025
  %v4363 = vunpack.c.l.b16 %v1026
  %v4364 = vunpack.c.l.b16 %v1027
  %v4365 = vunpack.c.l.b16 %v1028
  %v4366 = vunpack.c.l.b16 %v1029
  %v4367 = vunpack.c.l.b16 %v1030
  %v4368 = vunpack.c.l.b16 %v1031
  %v4369 = vunpack.c.l.b16 %v1032
  %v4370 = vunpack.c.l.b16 %v1033
  %v4371 = vunpack.c.l.b16 %v1034
  %v4372 = vunpack.c.l.b16 %v1035
  %v4373 = vunpack.c.l.b16 %v1036
  %v4374 = vunpack.c.l.b16 %v1037
  %v4375 = vunpack.c.l.b16 %v1038
  %v4376 = vunpack.c.l.b16 %v1039
  %v4377 = vunpack.c.l.b16 %v1040
  %v4378 = vunpack.c.l.b16 %v1041
  %v4379 = vunpack.c.l.b16 %v1042
  %v4380 = vunpack.c.l.b16 %v1043
  %v4381 = vunpack.c.l.b16 %v1044
  %v4382 = vunpack.c.l.b16 %v1045
  %v4383 = vunpack.c.l.b16 %v1046
  %v4384 = vunpack.c.l.b16 %v1047
  %v4385 = vunpack.c.l.b16 %v1048
  %v4386 = vunpack.c.l.b16 %v1049
  %v4387 = vunpack.c.l.b16 %v1050
  %v4388 = vunpack.c.l.b16 %v1051
  %v4389 = vunpack.c.l.b16 %v1052
  %v4390 = vunpack.c.l.b16 %v1053
  %v4391 = vunpack.c.l.b16 %v1054
  %v4392 = vunpack.c.l.b16 %v1055
  %v4393 = vunpack.c.l.b16 %v1056
  %v4394 = vunpack.c.l.b16 %v1057
  %v4395 = vunpack.c.l.b16 %v1058
  %v4396 = vunpack.c.l.b16 %v1059
  %v4397 = vunpack.c.l.b16 %v1060
  %v4398 = vunpack.c.l.b16 %v1061
  %v4399 = vunpack.c.l.b16 %v1062
  %v4400 = vunpack.c.l.b16 %v1063
  %v4401 = vunpack.c.l.b16 %v1064
  %v4402 = vunpack.c.l.b16 %v1065
  %v4403 = vunpack.c.l.b16 %v1066
  %v4404 = vunpack.c.l.b16 %v1067
  %v4405 = vunpack.c.l.b16 %v1068
  %v4406 = vunpack.c.l.b16 %v1069
  %v4407 = vunpack.c.l.b16 %v1070
  %v4408 = vunpack.c.l.b16 %v1071
  %v4409 = vunpack.c.l.b16 %v1072
  %v4410 = vunpack.c.l.b16 %v1073
  %v4411 = vunpack.c.l.b16 %v1074
  %v4412 = vunpack.c.l.b16 %v1075
  %v4413 = vunpack.c.l.b16 %v1076
  %v4414 = vunpack.c.l.b16 %v1077
  %v4415 = vunpack.c.l.b16 %v1078
  %v4416 = vunpack.c.l.b16 %v1079
  %v4417 = vunpack.c.l.b16 %v1080
  %v4418 = vunpack.c.l.b16 %v1081
  %v4419 = vunpack.c.l.b16 %v1082
  %v4420 = vunpack.c.l.b16 %v1083
  %v4421 = vunpack.c.l.b16 %v1084
  %v4422 = vunpack.c.l.b16 %v1085
  %v4423 = vunpack.c.l.b16 %v1086
  %v4424 = vunpack.c.l.b16 %v1087
  %v4425 = vunpack.c.l.b16 %v1088
  %v4426 = vunpack.c.l.b16 %v1089
  %v4427 = vunpack.c.l.b16 %v1090
  %v4428 = vunpack.c.l.b16 %v1091
  %v4429 = vunpack.c.l.b16 %v1092
  %v4430 = vunpack.c.l.b16 %v1093
  %v4431 = vunpack.c.l.b16 %v1094
  %v4432 = vunpack.c.l.b16 %v1095
  %v4433 = vunpack.c.l.b16 %v1096
  %v4434 = vunpack.c.l.b16 %v1097
  %v4435 = vunpack.c.l.b16 %v1098
  %v4436 = vunpack.c.l.b16 %v1099
  %v4437 = vunpack.c.l.b16 %v1100
  %v4438 = vunpack.c.l.b16 %v1101
  %v4439 = vunpack.c.l.b16 %v1102
  %v4440 = vunpack.c.l.b16 %v1103
  %v4441 = vunpack.c.l.b16 %v1104
  %v4442 = vunpack.c.l.b16 %v1105
  %v4443 = vunpack.c.l.b16 %v1106
  %v4444 = vunpack.c.l.b16 %v1107
  %v4445 = vunpack.c.l.b16 %v1108
  %v4446 = vunpack.c.l.b16 %v1109
  %v4447 = vunpack.c.l.b16 %v1110
  %v4448 = vunpack.c.l.b16 %v1111
  %v4449 = vunpack.c.l.b16 %v1112
  %v4450 = vunpack.c.l.b16 %v1113
  %v4451 = vunpack.c.l.b16 %v1114
  %v4452 = vunpack.c.l.b16 %v1115
  %v4453 = vunpack.c.l.b16 %v1116
  %v4454 = vunpack.c.l.b16 %v1117
  %v4455 = vunpack.c.l.b16 %v1118
  %v4456 = vunpack.c.l.b16 %v1119
  %v4457 = vunpack.c.l.b16 %v1120
  %v4458 = vunpack.c.l.b16 %v1121
  %v4459 = vunpack.c.l.b16 %v1122
  %v4460 = vunpack.c.l.b16 %v1123
  %v4461 = vunpack.c.l.b16 %v1124
  %v4462 = vunpack.c.l.b16 %v1125
  %v4463 = vunpack.c.l.b16 %v1126
  %v4464 = vunpack.c.l.b16 %v1127
  %v4465 = vunpack.c.l.b16 %v1128
  %v4466 = vunpack.c.l.b16 %v1129
  %v4467 = vunpack.c.l.b16 %v1130
  %v4468 = vunpack.c.l.b16 %v1131
  %v4469 = vunpack.c.l.b16 %v1132
  %v4470 = vunpack.c.l.b16 %v1133
  %v4471 = vunpack.c.l.b16 %v1134
  %v4472 = vunpack.c.l.b16 %v1135
  %v4473 = vunpack.c.l.b16 %v1136
  %v4474 = vunpack.c.l.b16 %v1137
  %v4475 = vunpack.c.l.b16 %v1138
  %v4476 = vunpack.c.l.b16 %v1139
  %v4477 = vunpack.c.l.b16 %v1140
  %v4478 = vunpack.c.l.b16 %v1141
  %v4479 = vunpack.c.l.b16 %v1142
  %v4480 = vunpack.c.l.b16 %v1143
  %v4481 = vunpack.c.l.b16 %v1144
  %v4482 = vunpack.c.l.b16 %v1145
  %v4483 = vunpack.c.l.b16 %v1146
  %v4484 = vunpack.c.l.b16 %v1147
  %v4485 = vunpack.c.l.b16 %v1148
  %v4486 = vunpack.c.l.b16 %v1149
  %v4487 = vunpack.c.l.b16 %v1150
  %v4488 = vunpack.c.l.b16 %v1151
  %v4489 = vunpack.c.l.b16 %v1152
  %v4490 = vunpack.c.l.b16 %v1153
  %v4491 = vunpack.c.l.b16 %v1154
  %v4492 = vunpack.c.l.b16 %v1155
  %v4493 = vunpack.c.l.b16 %v1156
  %v4494 = vunpack.c.l.b16 %v1157
  %v4495 = vunpack.c.l.b16 %v1158
  %v4496 = vunpack.c.l.b16 %v1159
  %v4497 = vunpack.c.l.b16 %v1160
  %v4498 = vunpack.c.l.b16 %v1161
  %v4499 = vunpack.c.l.b16 %v1162
  %v4500 = vunpack.c.l.b16 %v1163
  %v4501 = vunpack.c.l.b16 %v1164
  %v4502 = vunpack.c.l.b16 %v1165
  %v4503 = vunpack.c.l.b16 %v1166
  %v4504 = vunpack.c.l.b16 %v1167
  %v4505 = vunpack.c.l.b16 %v1168
  %v4506 = vunpack.c.l.b16 %v1169
  %v4507 = vunpack.c.l.b16 %v1170
  %v4508 = vunpack.c.l.b16 %v1171
  %v4509 = vunpack.c.l.b16 %v1172
  %v4510 = vunpack.c.l.b16 %v1173
  %v4511 = vunpack.c.l.b16 %v1174
  %v4512 = vunpack.c.l.b16 %v1175
  %v4513 = vunpack.c.l.b16 %v1176
  %v4514 = vunpack.c.l.b16 %v1177
  %v4515 = vunpack.c.l.b16 %v1178
  %v4516 = vunpack.c.l.b16 %v1179
  %v4517 = vunpack.c.l.b16 %v1180
  %v4518 = vunpack.c.l.b16 %v1181
  %v4519 = vunpack.c.l.b16 %v1182
  %v4520 = vunpack.c.l.b16 %v1183
  %v4521 = vunpack.c.l.b16 %v1184
  %v4522 = vunpack.c.l.b16 %v1185
  %v4523 = vunpack.c.l.b16 %v1186
  %v4524 = vunpack.c.l.b16 %v1187
  %v4525 = vunpack.c.l.b16 %v1188
  %v4526 = vunpack.c.l.b16 %v1189
  %v4527 = vunpack.c.l.b16 %v1190
  %v4528 = vunpack.c.l.b16 %v1191
  %v4529 = vunpack.c.l.b16 %v1192
  %v4530 = vunpack.c.l.b16 %v1193
  %v4531 = vunpack.c.l.b16 %v1194
  %v4532 = vunpack.c.l.b16 %v1195
  %v4533 = vunpack.c.l.b16 %v1196
  %v4534 = vunpack.c.l.b16 %v1197
  %v4535 = vunpack.c.l.b16 %v1198
  %v4536 = vunpack.c.l.b16 %v1199
  %v4537 = vunpack.c.l.b16 %v1200
  %v4538 = vunpack.c.l.b16 %v1201
  %v4539 = vunpack.c.l.b16 %v1202
  %v4540 = vunpack.c.l.b16 %v1203
  %v4541 = vunpack.c.l.b16 %v1204
  %v4542 = vunpack.c.l.b16 %v1205
  %v4543 = vunpack.c.l.b16 %v1206
  %v4544 = vunpack.c.l.b16 %v1207
  %v4545 = vunpack.c.l.b16 %v1208
  %v4546 = vunpack.c.l.b16 %v1209
  %v4547 = vunpack.c.l.b16 %v1210
  %v4548 = vunpack.c.l.b16 %v1211
  %v4549 = vunpack.c.l.b16 %v1212
  %v4550 = vunpack.c.l.b16 %v1213
  %v4551 = vunpack.c.l.b16 %v1214
  %v4552 = vunpack.c.l.b16 %v1215
  %v4553 = vunpack.c.l.b16 %v1216
  %v4554 = vunpack.c.l.b16 %v1217
  %v4555 = vunpack.c.l.b16 %v1218
  %v4556 = vunpack.c.l.b16 %v1219
  %v4557 = vunpack.c.l.b16 %v1220
  %v4558 = vunpack.c.l.b16 %v1221
  %v4559 = vunpack.c.l.b16 %v1222
  %v4560 = vunpack.c.l.b16 %v1223
  %v4561 = vunpack.c.l.b16 %v1224
  %v4562 = vunpack.c.l.b16 %v1225
  %v4563 = vunpack.c.l.b16 %v1226
  %v4564 = vunpack.c.l.b16 %v1227
  %v4565 = vunpack.c.l.b16 %v1228
  %v4566 = vunpack.c.l.b16 %v1229
  %v4567 = vunpack.c.l.b16 %v1230
  %v4568 = vunpack.c.l.b16 %v1231
  %v4569 = vunpack.c.l.b16 %v1232
  %v4570 = vunpack.c.l.b16 %v1233
  %v4571 = vunpack.c.l.b16 %v1234
  %v4572 = vunpack.c.l.b16 %v1235
  %v4573 = vunpack.c.l.b16 %v1236
  %v4574 = vunpack.c.l.b16 %v1237
  %v4575 = vunpack.c.l.b16 %v1238
  %v4576 = vunpack.c.l.b16 %v1239
  %v4577 = vunpack.c.l.b16 %v1240
  %v4578 = vunpack.c.l.b16 %v1241
  %v4579 = vunpack.c.l.b16 %v1242
  %v4580 = vunpack.c.l.b16 %v1243
  %v4581 = vunpack.c.l.b16 %v1244
  %v4582 = vunpack.c.l.b16 %v1245
  %v4583 = vunpack.c.l.b16 %v1246
  %v4584 = vunpack.c.l.b16 %v1247
  %v4585 = vunpack.c.l.b16 %v1248
  %v4586 = vunpack.c.l.b16 %v1249
  %v4587 = vunpack.c.l.b16 %v1250
  %v4588 = vunpack.c.l.b16 %v1251
  %v4589 = vunpack.c.l.b16 %v1252
  %v4590 = vunpack.c.l.b16 %v1253
  %v4591 = vunpack.c.l.b16 %v1254
  %v4592 = vunpack.c.l.b16 %v1255
  %v4593 = vunpack.c.l.b16 %v1256
  %v4594 = vunpack.c.l.b16 %v1257
  %v4595 = vunpack.c.l.b16 %v1258
  %v4596 = vunpack.c.l.b16 %v1259
  %v4597 = vunpack.c.l.b16 %v1260
  %v4598 = vunpack.c.l.b16 %v1261
  %v4599 = vunpack.c.l.b16 %v1262
  %v4600 = vunpack.c.l.b16 %v1263
  %v4601 = vunpack.c.l.b16 %v1264
  %v4602 = vunpack.c.l.b16 %v1265
  %v4603 = vunpack.c.l.b16 %v1266
  %v4604 = vunpack.c.l.b16 %v1267
  %v4605 = vunpack.c.l.b16 %v1268
  %v4606 = vunpack.c.l.b16 %v1269
  %v4607 = vunpack.c.l.b16 %v1270
  %v4608 = vunpack.c.l.b16 %v1271
  %v4609 = vunpack.c.l.b16 %v1272
  %v4610 = vunpack.c.l.b16 %v1273
  %v4611 = vunpack.c.l.b16 %v1274
  %v4612 = vunpack.c.l.b16 %v1275
  %v4613 = vunpack.c.l.b16 %v1276
  %v4614 = vunpack.c.l.b16 %v1277
  %v4615 = vunpack.c.l.b16 %v1278
  %v4616 = vunpack.c.l.b16 %v1279
  %v4617 = vunpack.c.l.b16 %v1280
  %v4618 = vunpack.c.l.b16 %v1281
  %v4619 = vunpack.c.l.b16 %v1282
  %v4620 = vunpack.c.l.b16 %v1283
  %v4621 = vunpack.c.l.b16 %v1284
  %v4622 = vunpack.c.l.b16 %v1285
  %v4623 = vunpack.c.l.b16 %v1286
  %v4624 = vunpack.c.l.b16 %v1287
  %v4625 = vunpack.c.l.b16 %v1288
  %v4626 = vunpack.c.l.b16 %v1289
  %v4627 = vunpack.c.l.b16 %v1290
  %v4628 = vunpack.c.l.b16 %v1291
  %v4629 = vunpack.c.l.b16 %v1292
  %v4630 = vunpack.c.l.b16 %v1293
  %v4631 = vunpack.c.l.b16 %v1294
  %v4632 = vunpack.c.l.b16 %v1295
  %v4633 = vunpack.c.l.b16 %v1296
  %v4634 = vunpack.c.l.b16 %v1297
  %v4635 = vunpack.c.l.b16 %v1298
  %v4636 = vunpack.c.l.b16 %v1299
  %v4637 = vunpack.c.l.b16 %v1300
  %v4638 = vunpack.c.l.b16 %v1301
  %v4639 = vunpack.c.l.b16 %v1302
  %v4640 = vunpack.c.l.b16 %v1303
  %v4641 = vunpack.c.l.b16 %v1304
  %v4642 = vunpack.c.l.b16 %v1305
  %v4643 = vunpack.c.l.b16 %v1306
  %v4644 = vunpack.c.l.b16 %v1307
  %v4645 = vunpack.c.l.b16 %v1308
  %v4646 = vunpack.c.l.b16 %v1309
  %v4647 = vunpack.c.l.b16 %v1310
  %v4648 = vunpack.c.l.b16 %v1311
  %v4649 = vunpack.c.l.b16 %v1312
  %v4650 = vunpack.c.l.b16 %v1313
  %v4651 = vunpack.c.l.b16 %v1314
  %v4652 = vunpack.c.l.b16 %v1315
  %v4653 = vunpack.c.l.b16 %v1316
  %v4654 = vunpack.c.l.b16 %v1317
  %v4655 = vunpack.c.l.b16 %v1318
  %v4656 = vunpack.c.l.b16 %v1319
  %v4657 = vunpack.c.l.b16 %v1320
  %v4658 = vunpack.c.l.b16 %v1321
  %v4659 = vunpack.c.l.b16 %v1322
  %v4660 = vunpack.c.l.b16 %v1323
  %v4661 = vunpack.c.l.b16 %v1324
  %v4662 = vunpack.c.l.b16 %v1325
  %v4663 = vunpack.c.l.b16 %v1326
  %v4664 = vunpack.c.l.b16 %v1327
  %v4665 = vunpack.c.l.b16 %v1328
  %v4666 = vunpack.c.l.b16 %v1329
  %v4667 = vunpack.c.l.b16 %v1330
  %v4668 = vunpack.c.l.b16 %v1331
  %v4669 = vunpack.c.l.b16 %v1332
  %v4670 = vunpack.c.l.b16 %v1333
  %v4671 = vunpack.c.l.b16 %v1334
  %v4672 = vunpack.c.l.b16 %v1335
  %v4673 = vunpack.c.l.b16 %v1336
  %v4674 = vunpack.c.l.b16 %v1337
  %v4675 = vunpack.c.l.b16 %v1338
  %v4676 = vunpack.c.l.b16 %v1339
  %v4677 = vunpack.c.l.b16 %v1340
  %v4678 = vunpack.c.l.b16 %v1341
  %v4679 = vunpack.c.l.b16 %v1342
  %v4680 = vunpack.c.l.b16 %v1343
  %v4681 = vunpack.c.l.b16 %v1344
  %v4682 = vunpack.c.l.b16 %v1345
  %v4683 = vunpack.c.l.b16 %v1346
  %v4684 = vunpack.c.l.b16 %v1347
  %v4685 = vunpack.c.l.b16 %v1348
  %v4686 = vunpack.c.l.b16 %v1349
  %v4687 = vunpack.c.l.b16 %v1350
  %v4688 = vunpack.c.l.b16 %v1351
  %v4689 = vunpack.c.l.b16 %v1352
  %v4690 = vunpack.c.l.b16 %v1353
  %v4691 = vunpack.c.l.b16 %v1354
  %v4692 = vunpack.c.l.b16 %v1355
  %v4693 = vunpack.c.l.b16 %v1356
  %v4694 = vunpack.c.l.b16 %v1357
  %v4695 = vunpack.c.l.b16 %v1358
  %v4696 = vunpack.c.l.b16 %v1359
  %v4697 = vunpack.c.l.b16 %v1360
  %v4698 = vunpack.c.l.b16 %v1361
  %v4699 = vunpack.c.l.b16 %v1362
  %v4700 = vunpack.c.l.b16 %v1363
  %v4701 = vunpack.c.l.b16 %v1364
  %v4702 = vunpack.c.l.b16 %v1365
  %v4703 = vunpack.c.l.b16 %v1366
  %v4704 = vunpack.c.l.b16 %v1367
  %v4705 = vunpack.c.l.b16 %v1368
  %v4706 = vunpack.c.l.b16 %v1369
  %v4707 = vunpack.c.l.b16 %v1370
  %v4708 = vunpack.c.l.b16 %v1371
  %v4709 = vunpack.c.l.b16 %v1372
  %v4710 = vunpack.c.l.b16 %v1373
  %v4711 = vunpack.c.l.b16 %v1374
  %v4712 = vunpack.c.l.b16 %v1375
  %v4713 = vunpack.c.l.b16 %v1376
  %v4714 = vunpack.c.l.b16 %v1377
  %v4715 = vunpack.c.l.b16 %v1378
  %v4716 = vunpack.c.l.b16 %v1379
  %v4717 = vunpack.c.l.b16 %v1380
  %v4718 = vunpack.c.l.b16 %v1381
  %v4719 = vunpack.c.l.b16 %v1382
  %v4720 = vunpack.c.l.b16 %v1383
  %v4721 = vunpack.c.l.b16 %v1384
  %v4722 = vunpack.c.l.b16 %v1385
  %v4723 = vunpack.c.l.b16 %v1386
  %v4724 = vunpack.c.l.b16 %v1387
  %v4725 = vunpack.c.l.b16 %v1388
  %v4726 = vunpack.c.l.b16 %v1389
  %v4727 = vunpack.c.l.b16 %v1390
  %v4728 = vunpack.c.l.b16 %v1391
  %v4729 = vunpack.c.l.b16 %v1392
  %v4730 = vunpack.c.l.b16 %v1393
  %v4731 = vunpack.c.l.b16 %v1394
  %v4732 = vunpack.c.l.b16 %v1395
  %v4733 = vunpack.c.l.b16 %v1396
  %v4734 = vunpack.c.l.b16 %v1397
  %v4735 = vunpack.c.l.b16 %v1398
  %v4736 = vunpack.c.l.b16 %v1399
  %v4737 = vunpack.c.l.b16 %v1400
  %v4738 = vunpack.c.l.b16 %v1401
  %v4739 = vunpack.c.l.b16 %v1402
  %v4740 = vunpack.c.l.b16 %v1403
  %v4741 = vunpack.c.l.b16 %v1404
  %v4742 = vunpack.c.l.b16 %v1405
  %v4743 = vunpack.c.l.b16 %v1406
  %v4744 = vunpack.c.l.b16 %v1407
  %v4745 = vunpack.c.l.b16 %v1408
  %v4746 = vunpack.c.l.b16 %v1409
  %v4747 = vunpack.c.l.b16 %v1410
  %v4748 = vunpack.c.l.b16 %v1411
  %v4749 = vunpack.c.l.b16 %v1412
  %v4750 = vunpack.c.l.b16 %v1413
  %v4751 = vunpack.c.l.b16 %v1414
  %v4752 = vunpack.c.l.b16 %v1415
  %v4753 = vunpack.c.l.b16 %v1416
  %v4754 = vunpack.c.l.b16 %v1417
  %v4755 = vunpack.c.l.b16 %v1418
  %v4756 = vunpack.c.l.b16 %v1419
  %v4757 = vunpack.c.l.b16 %v1420
  %v4758 = vunpack.c.l.b16 %v1421
  %v4759 = vunpack.c.l.b16 %v1422
  %v4760 = vunpack.c.l.b16 %v1423
  %v4761 = vunpack.c.l.b16 %v1424
  %v4762 = vunpack.c.l.b16 %v1425
  %v4763 = vunpack.c.l.b16 %v1426
  %v4764 = vunpack.c.l.b16 %v1427
  %v4765 = vunpack.c.l.b16 %v1428
  %v4766 = vunpack.c.l.b16 %v1429
  %v4767 = vunpack.c.l.b16 %v1430
  %v4768 = vunpack.c.l.b16 %v1431
  %v4769 = vunpack.c.l.b16 %v1432
  %v4770 = vunpack.c.l.b16 %v1433
  %v4771 = vunpack.c.l.b16 %v1434
  %v4772 = vunpack.c.l.b16 %v1435
  %v4773 = vunpack.c.l.b16 %v1436
  %v4774 = vunpack.c.l.b16 %v1437
  %v4775 = vunpack.c.l.b16 %v1438
  %v4776 = vunpack.c.l.b16 %v1439
  %v4777 = vunpack.c.l.b16 %v1440
  %v4778 = vunpack.c.l.b16 %v1441
  %v4779 = vunpack.c.l.b16 %v1442
  %v4780 = vunpack.c.l.b16 %v1443
  %v4781 = vunpack.c.l.b16 %v1444
  %v4782 = vunpack.c.l.b16 %v1445
  %v4783 = vunpack.c.l.b16 %v1446
  %v4784 = vunpack.c.l.b16 %v1447
  %v4785 = vunpack.c.l.b16 %v1448
  %v4786 = vunpack.c.l.b16 %v1449
  %v4787 = vunpack.c.l.b16 %v1450
  %v4788 = vunpack.c.l.b16 %v1451
  %v4789 = vunpack.c.l.b16 %v1452
  %v4790 = vunpack.c.l.b16 %v1453
  %v4791 = vunpack.c.l.b16 %v1454
  %v4792 = vunpack.c.l.b16 %v1455
  %v4793 = vunpack.c.l.b16 %v1456
  %v4794 = vunpack.c.l.b16 %v1457
  %v4795 = vunpack.c.l.b16 %v1458
  %v4796 = vunpack.c.l.b16 %v1459
  %v4797 = vunpack.c.l.b16 %v1460
  %v4798 = vunpack.c.l.b16 %v1461
  %v4799 = vunpack.c.l.b16 %v1462
  %v4800 = vunpack.c.l.b16 %v1463
  %v4801 = vunpack.c.l.b16 %v1464
  %v4802 = vunpack.c.l.b16 %v1465
  %v4803 = vunpack.c.l.b16 %v1466
  %v4804 = vunpack.c.l.b16 %v1467
  %v4805 = vunpack.c.l.b16 %v1468
  %v4806 = vunpack.c.l.b16 %v1469
  %v4807 = vunpack.c.l.b16 %v1470
  %v4808 = vunpack.c.l.b16 %v1471
  %v4809 = vunpack.c.l.b16 %v1472
  %v4810 = vunpack.c.l.b16 %v1473
  %v4811 = vunpack.c.l.b16 %v1474
  %v4812 = vunpack.c.l.b16 %v1475
  %v4813 = vunpack.c.l.b16 %v1476
  %v4814 = vunpack.c.l.b16 %v1477
  %v4815 = vunpack.c.l.b16 %v1478
  %v4816 = vunpack.c.l.b16 %v1479
  %v4817 = vunpack.c.l.b16 %v1480
  %v4818 = vunpack.c.l.b16 %v1481
  %v4819 = vunpack.c.l.b16 %v1482
  %v4820 = vunpack.c.l.b16 %v1483
  %v4821 = vunpack.c.l.b16 %v1484
  %v4822 = vunpack.c.l.b16 %v1485
  %v4823 = vunpack.c.l.b16 %v1486
  %v4824 = vunpack.c.l.b16 %v1487
  %v4825 = vunpack.c.l.b16 %v1488
  %v4826 = vunpack.c.l.b16 %v1489
  %v4827 = vunpack.c.l.b16 %v1490
  %v4828 = vunpack.c.l.b16 %v1491
  %v4829 = vunpack.c.l.b16 %v1492
  %v4830 = vunpack.c.l.b16 %v1493
  %v4831 = vunpack.c.l.b16 %v1494
  %v4832 = vunpack.c.l.b16 %v1495
  %v4833 = vunpack.c.l.b16 %v1496
  %v4834 = vunpack.c.l.b16 %v1497
  %v4835 = vunpack.c.l.b16 %v1498
  %v4836 = vunpack.c.l.b16 %v1499
  %v4837 = vunpack.c.l.b16 %v1500
  %v4838 = vunpack.c.l.b16 %v1501
  %v4839 = vunpack.c.l.b16 %v1502
  %v4840 = vunpack.c.l.b16 %v1503
  %v4841 = vunpack.c.l.b16 %v1504
  %v4842 = vunpack.c.l.b16 %v1505
  %v4843 = vunpack.c.l.b16 %v1506
  %v4844 = vunpack.c.l.b16 %v1507
  %v4845 = vunpack.c.l.b16 %v1508
  %v4846 = vunpack.c.l.b16 %v1509
  %v4847 = vunpack.c.l.b16 %v1510
  %v4848 = vunpack.c.l.b16 %v1511
  %v4849 = vunpack.c.l.b16 %v1512
  %v4850 = vunpack.c.l.b16 %v1513
  %v4851 = vunpack.c.l.b16 %v1514
  %v4852 = vunpack.c.l.b16 %v1515
  %v4853 = vunpack.c.l.b16 %v1516
  %v4854 = vunpack.c.l.b16 %v1517
  %v4855 = vunpack.c.l.b16 %v1518
  %v4856 = vunpack.c.l.b16 %v1519
  %v4857 = vunpack.c.l.b16 %v1520
  %v4858 = vunpack.c.l.b16 %v1521
  %v4859 = vunpack.c.l.b16 %v1522
  %v4860 = vunpack.c.l.b16 %v1523
  %v4861 = vunpack.c.l.b16 %v1524
  %v4862 = vunpack.c.l.b16 %v1525
  %v4863 = vunpack.c.l.b16 %v1526
  %v4864 = vunpack.c.l.b16 %v1527
  %v4865 = vunpack.c.l.b16 %v1528
  %v4866 = vunpack.c.l.b16 %v1529
  %v4867 = vunpack.c.l.b16 %v1530
  %v4868 = vunpack.c.l.b16 %v1531
  %v4869 = vunpack.c.l.b16 %v1532
  %v4870 = vunpack.c.l.b16 %v1533
  %v4871 = vunpack.c.l.b16 %v1534
  %v4872 = vunpack.c.l.b16 %v1535
  %v4873 = vunpack.c.l.b16 %v1536
  %v4874 = vunpack.c.l.b16 %v1537
  %v4875 = vunpack.c.l.b16 %v1538
  %v4876 = vunpack.c.l.b16 %v1539
  %v4877 = vunpack.c.l.b16 %v1540
  %v4878 = vunpack.c.l.b16 %v1541
  %v4879 = vunpack.c.l.b16 %v1542
  %v4880 = vunpack.c.l.b16 %v1543
  %v4881 = vunpack.c.l.b16 %v1544
  %v4882 = vunpack.c.l.b16 %v1545
  %v4883 = vunpack.c.l.b16 %v1546
  %v4884 = vunpack.c.l.b16 %v1547
  %v4885 = vunpack.c.l.b16 %v1548
  %v4886 = vunpack.c.l.b16 %v1549
  %v4887 = vunpack.c.l.b16 %v1550
  %v4888 = vunpack.c.l.b16 %v1551
  %v4889 = vunpack.c.l.b16 %v1552
  %v4890 = vunpack.c.l.b16 %v1553
  %v4891 = vunpack.c.l.b16 %v1554
  %v4892 = vunpack.c.l.b16 %v1555
  %v4893 = vunpack.c.l.b16 %v1556
  %v4894 = vunpack.c.l.b16 %v1557
  %v4895 = vunpack.c.l.b16 %v1558
  %v4896 = vpack.c.b16 %v3457, %v3456
  %v4897 = vpack.c.b16 %v3459, %v3458
  %v4898 = vpack.c.b16 %v3461, %v3460
  %v4899 = vpack.c.b16 %v3463, %v3462
  %v4900 = vpack.c.b16 %v3465, %v3464
  %v4901 = vpack.c.b16 %v3467, %v3466
  %v4902 = vpack.c.b16 %v3469, %v3468
  %v4903 = vpack.c.b16 %v3471, %v3470
  %v4904 = vpack.c.b16 %v3473, %v3472
  %v4905 = vpack.c.b16 %v3475, %v3474
  %v4906 = vpack.c.b16 %v3477, %v3476
  %v4907 = vpack.c.b16 %v3479, %v3478
  %v4908 = vpack.c.b16 %v3481, %v3480
  %v4909 = vpack.c.b16 %v3483, %v3482
  %v4910 = vpack.c.b16 %v3485, %v3484
  %v4911 = vpack.c.b16 %v3487, %v3486
  %v4912 = vpack.c.b16 %v3489, %v3488
  %v4913 = vpack.c.b16 %v3491, %v3490
  %v4914 = vpack.c.b16 %v3493, %v3492
  %v4915 = vpack.c.b16 %v3495, %v3494
  %v4916 = vpack.c.b16 %v3497, %v3496
  %v4917 = vpack.c.b16 %v3499, %v3498
  %v4918 = vpack.c.b16 %v3501, %v3500
  %v4919 = vpack.c.b16 %v3503, %v3502
  %v4920 = vpack.c.b16 %v3505, %v3504
  %v4921 = vpack.c.b16 %v3507, %v3506
  %v4922 = vpack.c.b16 %v3509, %v3508
  %v4923 = vpack.c.b16 %v3511, %v3510
  %v4924 = vpack.c.b16 %v3513, %v3512
  %v4925 = vpack.c.b16 %v3515, %v3514
  %v4926 = vpack.c.b16 %v3517, %v3516
  %v4927 = vpack.c.b16 %v3519, %v3518
  %v4928 = vpack.c.b16 %v3521, %v3520
  %v4929 = vpack.c.b16 %v3523, %v3522
  %v4930 = vpack.c.b16 %v3525, %v3524
  %v4931 = vpack.c.b16 %v3527, %v3526
  %v4932 = vpack.c.b16 %v3529, %v3528
  %v4933 = vpack.c.b16 %v3531, %v3530
  %v4934 = vpack.c.b16 %v3533, %v3532
  %v4935 = vpack.c.b16 %v3535, %v3534
  %v4936 = vpack.c.b16 %v3537, %v3536
  %v4937 = vpack.c.b16 %v3539, %v3538
  %v4938 = vpack.c.b16 %v3541, %v3540
  %v4939 = vpack.c.b16 %v3543, %v3542
  %v4940 = vpack.c.b16 %v3545, %v3544
  %v4941 = vpack.c.b16 %v3547, %v3546
  %v4942 = vpack.c.b16 %v3549, %v3548
  %v4943 = vpack.c.b16 %v3551, %v3550
  %v4944 = vpack.c.b16 %v3553, %v3552
  %v4945 = vpack.c.b16 %v3555, %v3554
  %v4946 = vpack.c.b16 %v3557, %v3556
  %v4947 = vpack.c.b16 %v3559, %v3558
  %v4948 = vpack.c.b16 %v3561, %v3560
  %v4949 = vpack.c.b16 %v3563, %v3562
  %v4950 = vpack.c.b16 %v3565, %v3564
  %v4951 = vpack.c.b16 %v3567, %v3566
  %v4952 = vpack.c.b16 %v3569, %v3568
  %v4953 = vpack.c.b16 %v3571, %v3570
  %v4954 = vpack.c.b16 %v3573, %v3572
  %v4955 = vpack.c.b16 %v3575, %v3574
  %v4956 = vpack.c.b16 %v3577, %v3576
  %v4957 = vpack.c.b16 %v3579, %v3578
  %v4958 = vpack.c.b16 %v3581, %v3580
  %v4959 = vpack.c.b16 %v3583, %v3582
  %v4960 = vpack.c.b16 %v3585, %v3584
  %v4961 = vpack.c.b16 %v3587, %v3586
  %v4962 = vpack.c.b16 %v3589, %v3588
  %v4963 = vpack.c.b16 %v3591, %v3590
  %v4964 = vpack.c.b16 %v3593, %v3592
  %v4965 = vpack.c.b16 %v3595, %v3594
  %v4966 = vpack.c.b16 %v3597, %v3596
  %v4967 = vpack.c.b16 %v3599, %v3598
  %v4968 = vpack.c.b16 %v3601, %v3600
  %v4969 = vpack.c.b16 %v3603, %v3602
  %v4970 = vpack.c.b16 %v3605, %v3604
  %v4971 = vpack.c.b16 %v3607, %v3606
  %v4972 = vpack.c.b16 %v3609, %v3608
  %v4973 = vpack.c.b16 %v3611, %v3610
  %v4974 = vpack.c.b16 %v3613, %v3612
  %v4975 = vpack.c.b16 %v3615, %v3614
  %v4976 = vpack.c.b16 %v3617, %v3616
  %v4977 = vpack.c.b16 %v3619, %v3618
  %v4978 = vpack.c.b16 %v3621, %v3620
  %v4979 = vpack.c.b16 %v3623, %v3622
  %v4980 = vpack.c.b16 %v3625, %v3624
  %v4981 = vpack.c.b16 %v3627, %v3626
  %v4982 = vpack.c.b16 %v3629, %v3628
  %v4983 = vpack.c.b16 %v3631, %v3630
  %v4984 = vpack.c.b16 %v3633, %v3632
  %v4985 = vpack.c.b16 %v3635, %v3634
  %v4986 = vpack.c.b16 %v3637, %v3636
  %v4987 = vpack.c.b16 %v3639, %v3638
  %v4988 = vpack.c.b16 %v3641, %v3640
  %v4989 = vpack.c.b16 %v3643, %v3642
  %v4990 = vpack.c.b16 %v3645, %v3644
  %v4991 = vpack.c.b16 %v3647, %v3646
  %v4992 = vpack.c.b16 %v3649, %v3648
  %v4993 = vpack.c.b16 %v3651, %v3650
  %v4994 = vpack.c.b16 %v3653, %v3652
  %v4995 = vpack.c.b16 %v3655, %v3654
  %v4996 = vpack.c.b16 %v3657, %v3656
  %v4997 = vpack.c.b16 %v3659, %v3658
  %v4998 = vpack.c.b16 %v3661, %v3660
  %v4999 = vpack.c.b16 %v3663, %v3662
  %v5000 = vpack.c.b16 %v3665, %v3664
  %v5001 = vpack.c.b16 %v3667, %v3666
  %v5002 = vpack.c.b16 %v3669, %v3668
  %v5003 = vpack.c.b16 %v3671, %v3670
  %v5004 = vpack.c.b16 %v3673, %v3672
  %v5005 = vpack.c.b16 %v3675, %v3674
  %v5006 = vpack.c.b16 %v3677, %v3676
  %v5007 = vpack.c.b16 %v3679, %v3678
  %v5008 = vpack.c.b16 %v3681, %v3680
  %v5009 = vpack.c.b16 %v3683, %v3682
  %v5010 = vpack.c.b16 %v3685, %v3684
  %v5011 = vpack.c.b16 %v3687, %v3686
  %v5012 = vpack.c.b16 %v3689, %v3688
  %v5013 = vpack.c.b16 %v3691, %v3690
  %v5014 = vpack.c.b16 %v3693, %v3692
  %v5015 = vpack.c.b16 %v3695, %v3694
  %v5016 = vpack.c.b16 %v3697, %v3696
  %v5017 = vpack.c.b16 %v3699, %v3698
  %v5018 = vpack.c.b16 %v3701, %v3700
  %v5019 = vpack.c.b16 %v3703, %v3702
  %v5020 = vpack.c.b16 %v3705, %v3704
  %v5021 = vpack.c.b16 %v3707, %v3706
  %v5022 = vpack.c.b16 %v3709, %v3708
  %v5023 = vpack.c.b16 %v3711, %v3710
  %v5024 = vpack.c.b16 %v3713, %v3712
  %v5025 = vpack.c.b16 %v3715, %v3714
  %v5026 = vpack.c.b16 %v3717, %v3716
  %v5027 = vpack.c.b16 %v3719, %v3718
  %v5028 = vpack.c.b16 %v3721, %v3720
  %v5029 = vpack.c.b16 %v3723, %v3722
  %v5030 = vpack.c.b16 %v3725, %v3724
  %v5031 = vpack.c.b16 %v3727, %v3726
  %v5032 = vpack.c.b16 %v3729, %v3728
  %v5033 = vpack.c.b16 %v3731, %v3730
  %v5034 = vpack.c.b16 %v3733, %v3732
  %v5035 = vpack.c.b16 %v3735, %v3734
  %v5036 = vpack.c.b16 %v3737, %v3736
  %v5037 = vpack.c.b16 %v3739, %v3738
  %v5038 = vpack.c.b16 %v3741, %v3740
  %v5039 = vpack.c.b16 %v3743, %v3742
  %v5040 = vpack.c.b16 %v3745, %v3744
  %v5041 = vpack.c.b16 %v3747, %v3746
  %v5042 = vpack.c.b16 %v3749, %v3748
  %v5043 = vpack.c.b16 %v3751, %v3750
  %v5044 = vpack.c.b16 %v3753, %v3752
  %v5045 = vpack.c.b16 %v3755, %v3754
  %v5046 = vpack.c.b16 %v3757, %v3756
  %v5047 = vpack.c.b16 %v3759, %v3758
  %v5048 = vpack.c.b16 %v3761, %v3760
  %v5049 = vpack.c.b16 %v3763, %v3762
  %v5050 = vpack.c.b16 %v3765, %v3764
  %v5051 = vpack.c.b16 %v3767, %v3766
  %v5052 = vpack.c.b16 %v3769, %v3768
  %v5053 = vpack.c.b16 %v3771, %v3770
  %v5054 = vpack.c.b16 %v3773, %v3772
  %v5055 = vpack.c.b16 %v3775, %v3774
  %v5056 = vpack.c.b16 %v3777, %v3776
  %v5057 = vpack.c.b16 %v3779, %v3778
  %v5058 = vpack.c.b16 %v3781, %v3780
  %v5059 = vpack.c.b16 %v3783, %v3782
  %v5060 = vpack.c.b16 %v3785, %v3784
  %v5061 = vpack.c.b16 %v3787, %v3786
  %v5062 = vpack.c.b16 %v3789, %v3788
  %v5063 = vpack.c.b16 %v3791, %v3790
  %v5064 = vpack.c.b16 %v3793, %v3792
  %v5065 = vpack.c.b16 %v3795, %v3794
  %v5066 = vpack.c.b16 %v3797, %v3796
  %v5067 = vpack.c.b16 %v3799, %v3798
  %v5068 = vpack.c.b16 %v3801, %v3800
  %v5069 = vpack.c.b16 %v3803, %v3802
  %v5070 = vpack.c.b16 %v3805, %v3804
  %v5071 = vpack.c.b16 %v3807, %v3806
  %v5072 = vpack.c.b16 %v3809, %v3808
  %v5073 = vpack.c.b16 %v3811, %v3810
  %v5074 = vpack.c.b16 %v3813, %v3812
  %v5075 = vpack.c.b16 %v3815, %v3814
  %v5076 = vpack.c.b16 %v3817, %v3816
  %v5077 = vpack.c.b16 %v3819, %v3818
  %v5078 = vpack.c.b16 %v3821, %v3820
  %v5079 = vpack.c.b16 %v3823, %v3822
  %v5080 = vpack.c.b16 %v3825, %v3824
  %v5081 = vpack.c.b16 %v3827, %v3826
  %v5082 = vpack.c.b16 %v3829, %v3828
  %v5083 = vpack.c.b16 %v3831, %v3830
  %v5084 = vpack.c.b16 %v3833, %v3832
  %v5085 = vpack.c.b16 %v3835, %v3834
  %v5086 = vpack.c.b16 %v3837, %v3836
  %v5087 = vpack.c.b16 %v3839, %v3838
  %v5088 = vpack.c.b16 %v3841, %v3840
  %v5089 = vpack.c.b16 %v3843, %v3842
  %v5090 = vpack.c.b16 %v3845, %v3844
  %v5091 = vpack.c.b16 %v3847, %v3846
  %v5092 = vpack.c.b16 %v3849, %v3848
  %v5093 = vpack.c.b16 %v3851, %v3850
  %v5094 = vpack.c.b16 %v3853, %v3852
  %v5095 = vpack.c.b16 %v3855, %v3854
  %v5096 = vpack.c.b16 %v3857, %v3856
  %v5097 = vpack.c.b16 %v3859, %v3858
  %v5098 = vpack.c.b16 %v3861, %v3860
  %v5099 = vpack.c.b16 %v3863, %v3862
  %v5100 = vpack.c.b16 %v3865, %v3864
  %v5101 = vpack.c.b16 %v3867, %v3866
  %v5102 = vpack.c.b16 %v3869, %v3868
  %v5103 = vpack.c.b16 %v3871, %v3870
  %v5104 = vpack.c.b16 %v3873, %v3872
  %v5105 = vpack.c.b16 %v3875, %v3874
  %v5106 = vpack.c.b16 %v3877, %v3876
  %v5107 = vpack.c.b16 %v3879, %v3878
  %v5108 = vpack.c.b16 %v3881, %v3880
  %v5109 = vpack.c.b16 %v3883, %v3882
  %v5110 = vpack.c.b16 %v3885, %v3884
  %v5111 = vpack.c.b16 %v3887, %v3886
  %v5112 = vpack.c.b16 %v3889, %v3888
  %v5113 = vpack.c.b16 %v3891, %v3890
  %v5114 = vpack.c.b16 %v3893, %v3892
  %v5115 = vpack.c.b16 %v3895, %v3894
  %v5116 = vpack.c.b16 %v3897, %v3896
  %v5117 = vpack.c.b16 %v3899, %v3898
  %v5118 = vpack.c.b16 %v3901, %v3900
  %v5119 = vpack.c.b16 %v3903, %v3902
  %v5120 = vpack.c.b16 %v3905, %v3904
  %v5121 = vpack.c.b16 %v3907, %v3906
  %v5122 = vpack.c.b16 %v3909, %v3908
  %v5123 = vpack.c.b16 %v3911, %v3910
  %v5124 = vpack.c.b16 %v3913, %v3912
  %v5125 = vpack.c.b16 %v3915, %v3914
  %v5126 = vpack.c.b16 %v3917, %v3916
  %v5127 = vpack.c.b16 %v3919, %v3918
  %v5128 = vpack.c.b16 %v3921, %v3920
  %v5129 = vpack.c.b16 %v3923, %v3922
  %v5130 = vpack.c.b16 %v3925, %v3924
  %v5131 = vpack.c.b16 %v3927, %v3926
  %v5132 = vpack.c.b16 %v3929, %v3928
  %v5133 = vpack.c.b16 %v3931, %v3930
  %v5134 = vpack.c.b16 %v3933, %v3932
  %v5135 = vpack.c.b16 %v3935, %v3934
  %v5136 = vpack.c.b16 %v3937, %v3936
  %v5137 = vpack.c.b16 %v3939, %v3938
  %v5138 = vpack.c.b16 %v3941, %v3940
  %v5139 = vpack.c.b16 %v3943, %v3942
  %v5140 = vpack.c.b16 %v3945, %v3944
  %v5141 = vpack.c.b16 %v3947, %v3946
  %v5142 = vpack.c.b16 %v3949, %v3948
  %v5143 = vpack.c.b16 %v3951, %v3950
  %v5144 = vpack.c.b16 %v3953, %v3952
  %v5145 = vpack.c.b16 %v3955, %v3954
  %v5146 = vpack.c.b16 %v3957, %v3956
  %v5147 = vpack.c.b16 %v3959, %v3958
  %v5148 = vpack.c.b16 %v3961, %v3960
  %v5149 = vpack.c.b16 %v3963, %v3962
  %v5150 = vpack.c.b16 %v3965, %v3964
  %v5151 = vpack.c.b16 %v3967, %v3966
  %v5152 = vpack.c.b16 %v3969, %v3968
  %v5153 = vpack.c.b16 %v3971, %v3970
  %v5154 = vpack.c.b16 %v3973, %v3972
  %v5155 = vpack.c.b16 %v3975, %v3974
  %v5156 = vpack.c.b16 %v3977, %v3976
  %v5157 = vpack.c.b16 %v3979, %v3978
  %v5158 = vpack.c.b16 %v3981, %v3980
  %v5159 = vpack.c.b16 %v3983, %v3982
  %v5160 = vpack.c.b16 %v3985, %v3984
  %v5161 = vpack.c.b16 %v3987, %v3986
  %v5162 = vpack.c.b16 %v3989, %v3988
  %v5163 = vpack.c.b16 %v3991, %v3990
  %v5164 = vpack.c.b16 %v3993, %v3992
  %v5165 = vpack.c.b16 %v3995, %v3994
  %v5166 = vpack.c.b16 %v3997, %v3996
  %v5167 = vpack.c.b16 %v3999, %v3998
  %v5168 = vpack.c.b16 %v4001, %v4000
  %v5169 = vpack.c.b16 %v4003, %v4002
  %v5170 = vpack.c.b16 %v4005, %v4004
  %v5171 = vpack.c.b16 %v4007, %v4006
  %v5172 = vpack.c.b16 %v4009, %v4008
  %v5173 = vpack.c.b16 %v4011, %v4010
  %v5174 = vpack.c.b16 %v4013, %v4012
  %v5175 = vpack.c.b16 %v4015, %v4014
  %v5176 = vpack.c.b16 %v4017, %v4016
  %v5177 = vpack.c.b16 %v4019, %v4018
  %v5178 = vpack.c.b16 %v4021, %v4020
  %v5179 = vpack.c.b16 %v4023, %v4022
  %v5180 = vpack.c.b16 %v4025, %v4024
  %v5181 = vpack.c.b16 %v4027, %v4026
  %v5182 = vpack.c.b16 %v4029, %v4028
  %v5183 = vpack.c.b16 %v4031, %v4030
  %v5184 = vpack.c.b16 %v4033, %v4032
  %v5185 = vpack.c.b16 %v4035, %v4034
  %v5186 = vpack.c.b16 %v4037, %v4036
  %v5187 = vpack.c.b16 %v4039, %v4038
  %v5188 = vpack.c.b16 %v4041, %v4040
  %v5189 = vpack.c.b16 %v4043, %v4042
  %v5190 = vpack.c.b16 %v4045, %v4044
  %v5191 = vpack.c.b16 %v4047, %v4046
  %v5192 = vpack.c.b16 %v4049, %v4048
  %v5193 = vpack.c.b16 %v4051, %v4050
  %v5194 = vpack.c.b16 %v4053, %v4052
  %v5195 = vpack.c.b16 %v4055, %v4054
  %v5196 = vpack.c.b16 %v4057, %v4056
  %v5197 = vpack.c.b16 %v4059, %v4058
  %v5198 = vpack.c.b16 %v4061, %v4060
  %v5199 = vpack.c.b16 %v4063, %v4062
  %v5200 = vpack.c.b16 %v4065, %v4064
  %v5201 = vpack.c.b16 %v4067, %v4066
  %v5202 = vpack.c.b16 %v4069, %v4068
  %v5203 = vpack.c.b16 %v4071, %v4070
  %v5204 = vpack.c.b16 %v4073, %v4072
  %v5205 = vpack.c.b16 %v4075, %v4074
  %v5206 = vpack.c.b16 %v4077, %v4076
  %v5207 = vpack.c.b16 %v4079, %v4078
  %v5208 = vpack.c.b16 %v4081, %v4080
  %v5209 = vpack.c.b16 %v4083, %v4082
  %v5210 = vpack.c.b16 %v4085, %v4084
  %v5211 = vpack.c.b16 %v4087, %v4086
  %v5212 = vpack.c.b16 %v4089, %v4088
  %v5213 = vpack.c.b16 %v4091, %v4090
  %v5214 = vpack.c.b16 %v4093, %v4092
  %v5215 = vpack.c.b16 %v4095, %v4094
  %v5216 = vpack.c.b16 %v4097, %v4096
  %v5217 = vpack.c.b16 %v4099, %v4098
  %v5218 = vpack.c.b16 %v4101, %v4100
  %v5219 = vpack.c.b16 %v4103, %v4102
  %v5220 = vpack.c.b16 %v4105, %v4104
  %v5221 = vpack.c.b16 %v4107, %v4106
  %v5222 = vpack.c.b16 %v4109, %v4108
  %v5223 = vpack.c.b16 %v4111, %v4110
  %v5224 = vpack.c.b16 %v4113, %v4112
  %v5225 = vpack.c.b16 %v4115, %v4114
  %v5226 = vpack.c.b16 %v4117, %v4116
  %v5227 = vpack.c.b16 %v4119, %v4118
  %v5228 = vpack.c.b16 %v4121, %v4120
  %v5229 = vpack.c.b16 %v4123, %v4122
  %v5230 = vpack.c.b16 %v4125, %v4124
  %v5231 = vpack.c.b16 %v4127, %v4126
  %v5232 = vpack.c.b16 %v4129, %v4128
  %v5233 = vpack.c.b16 %v4131, %v4130
  %v5234 = vpack.c.b16 %v4133, %v4132
  %v5235 = vpack.c.b16 %v4135, %v4134
  %v5236 = vpack.c.b16 %v4137, %v4136
  %v5237 = vpack.c.b16 %v4139, %v4138
  %v5238 = vpack.c.b16 %v4141, %v4140
  %v5239 = vpack.c.b16 %v4143, %v4142
  %v5240 = vpack.c.b16 %v4145, %v4144
  %v5241 = vpack.c.b16 %v4147, %v4146
  %v5242 = vpack.c.b16 %v4149, %v4148
  %v5243 = vpack.c.b16 %v4151, %v4150
  %v5244 = vpack.c.b16 %v4153, %v4152
  %v5245 = vpack.c.b16 %v4155, %v4154
  %v5246 = vpack.c.b16 %v4157, %v4156
  %v5247 = vpack.c.b16 %v4159, %v4158
  %v5248 = vpack.c.b16 %v4161, %v4160
  %v5249 = vpack.c.b16 %v4163, %v4162
  %v5250 = vpack.c.b16 %v4165, %v4164
  %v5251 = vpack.c.b16 %v4167, %v4166
  %v5252 = vpack.c.b16 %v4169, %v4168
  %v5253 = vpack.c.b16 %v4171, %v4170
  %v5254 = vpack.c.b16 %v4173, %v4172
  %v5255 = vpack.c.b16 %v4175, %v4174
  %v5256 = vpack.c.b16 %v4177, %v4176
  %v5257 = vpack.c.b16 %v4179, %v4178
  %v5258 = vpack.c.b16 %v4181, %v4180
  %v5259 = vpack.c.b16 %v4183, %v4182
  %v5260 = vpack.c.b16 %v4185, %v4184
  %v5261 = vpack.c.b16 %v4187, %v4186
  %v5262 = vpack.c.b16 %v4189, %v4188
  %v5263 = vpack.c.b16 %v4191, %v4190
  %v5264 = vpack.c.b16 %v4193, %v4192
  %v5265 = vpack.c.b16 %v4195, %v4194
  %v5266 = vpack.c.b16 %v4197, %v4196
  %v5267 = vpack.c.b16 %v4199, %v4198
  %v5268 = vpack.c.b16 %v4201, %v4200
  %v5269 = vpack.c.b16 %v4203, %v4202
  %v5270 = vpack.c.b16 %v4205, %v4204
  %v5271 = vpack.c.b16 %v4207, %v4206
  %v5272 = vpack.c.b16 %v4209, %v4208
  %v5273 = vpack.c.b16 %v4211, %v4210
  %v5274 = vpack.c.b16 %v4213, %v4212
  %v5275 = vpack.c.b16 %v4215, %v4214
  %v5276 = vpack.c.b16 %v4217, %v4216
  %v5277 = vpack.c.b16 %v4219, %v4218
  %v5278 = vpack.c.b16 %v4221, %v4220
  %v5279 = vpack.c.b16 %v4223, %v4222
  %v5280 = vpack.c.b16 %v4225, %v4224
  %v5281 = vpack.c.b16 %v4227, %v4226
  %v5282 = vpack.c.b16 %v4229, %v4228
  %v5283 = vpack.c.b16 %v4231, %v4230
  %v5284 = vpack.c.b16 %v4233, %v4232
  %v5285 = vpack.c.b16 %v4235, %v4234
  %v5286 = vpack.c.b16 %v4237, %v4236
  %v5287 = vpack.c.b16 %v4239, %v4238
  %v5288 = vpack.c.b16 %v4241, %v4240
  %v5289 = vpack.c.b16 %v4243, %v4242
  %v5290 = vpack.c.b16 %v4245, %v4244
  %v5291 = vpack.c.b16 %v4247, %v4246
  %v5292 = vpack.c.b16 %v4249, %v4248
  %v5293 = vpack.c.b16 %v4251, %v4250
  %v5294 = vpack.c.b16 %v4253, %v4252
  %v5295 = vpack.c.b16 %v4255, %v4254
  %v5296 = vpack.c.b16 %v4257, %v4256
  %v5297 = vpack.c.b16 %v4259, %v4258
  %v5298 = vpack.c.b16 %v4261, %v4260
  %v5299 = vpack.c.b16 %v4263, %v4262
  %v5300 = vpack.c.b16 %v4265, %v4264
  %v5301 = vpack.c.b16 %v4267, %v4266
  %v5302 = vpack.c.b16 %v4269, %v4268
  %v5303 = vpack.c.b16 %v4271, %v4270
  %v5304 = vpack.c.b16 %v4273, %v4272
  %v5305 = vpack.c.b16 %v4275, %v4274
  %v5306 = vpack.c.b16 %v4277, %v4276
  %v5307 = vpack.c.b16 %v4279, %v4278
  %v5308 = vpack.c.b16 %v4281, %v4280
  %v5309 = vpack.c.b16 %v4283, %v4282
  %v5310 = vpack.c.b16 %v4285, %v4284
  %v5311 = vpack.c.b16 %v4287, %v4286
  %v5312 = vpack.c.b16 %v4289, %v4288
  %v5313 = vpack.c.b16 %v4291, %v4290
  %v5314 = vpack.c.b16 %v4293, %v4292
  %v5315 = vpack.c.b16 %v4295, %v4294
  %v5316 = vpack.c.b16 %v4297, %v4296
  %v5317 = vpack.c.b16 %v4299, %v4298
  %v5318 = vpack.c.b16 %v4301, %v4300
  %v5319 = vpack.c.b16 %v4303, %v4302
  %v5320 = vpack.c.b16 %v4305, %v4304
  %v5321 = vpack.c.b16 %v4307, %v4306
  %v5322 = vpack.c.b16 %v4309, %v4308
  %v5323 = vpack.c.b16 %v4311, %v4310
  %v5324 = vpack.c.b16 %v4313, %v4312
  %v5325 = vpack.c.b16 %v4315, %v4314
  %v5326 = vpack.c.b16 %v4317, %v4316
  %v5327 = vpack.c.b16 %v4319, %v4318
  %v5328 = vpack.c.b16 %v4321, %v4320
  %v5329 = vpack.c.b16 %v4323, %v4322
  %v5330 = vpack.c.b16 %v4325, %v4324
  %v5331 = vpack.c.b16 %v4327, %v4326
  %v5332 = vpack.c.b16 %v4329, %v4328
  %v5333 = vpack.c.b16 %v4331, %v4330
  %v5334 = vpack.c.b16 %v4333, %v4332
  %v5335 = vpack.c.b16 %v4335, %v4334
  %v5336 = vpack.c.b16 %v4337, %v4336
  %v5337 = vpack.c.b16 %v4339, %v4338
  %v5338 = vpack.c.b16 %v4341, %v4340
  %v5339 = vpack.c.b16 %v4343, %v4342
  %v5340 = vpack.c.b16 %v4345, %v4344
  %v5341 = vpack.c.b16 %v4347, %v4346
  %v5342 = vpack.c.b16 %v4349, %v4348
  %v5343 = vpack.c.b16 %v4351, %v4350
  %v5344 = vpack.c.b16 %v4353, %v4352
  %v5345 = vpack.c.b16 %v4355, %v4354
  %v5346 = vpack.c.b16 %v4357, %v4356
  %v5347 = vpack.c.b16 %v4359, %v4358
  %v5348 = vpack.c.b16 %v4361, %v4360
  %v5349 = vpack.c.b16 %v4363, %v4362
  %v5350 = vpack.c.b16 %v4365, %v4364
  %v5351 = vpack.c.b16 %v4367, %v4366
  %v5352 = vpack.c.b16 %v4369, %v4368
  %v5353 = vpack.c.b16 %v4371, %v4370
  %v5354 = vpack.c.b16 %v4373, %v4372
  %v5355 = vpack.c.b16 %v4375, %v4374
  %v5356 = vpack.c.b16 %v4377, %v4376
  %v5357 = vpack.c.b16 %v4379, %v4378
  %v5358 = vpack.c.b16 %v4381, %v4380
  %v5359 = vpack.c.b16 %v4383, %v4382
  %v5360 = vpack.c.b16 %v4385, %v4384
  %v5361 = vpack.c.b16 %v4387, %v4386
  %v5362 = vpack.c.b16 %v4389, %v4388
  %v5363 = vpack.c.b16 %v4391, %v4390
  %v5364 = vpack.c.b16 %v4393, %v4392
  %v5365 = vpack.c.b16 %v4395, %v4394
  %v5366 = vpack.c.b16 %v4397, %v4396
  %v5367 = vpack.c.b16 %v4399, %v4398
  %v5368 = vpack.c.b16 %v4401, %v4400
  %v5369 = vpack.c.b16 %v4403, %v4402
  %v5370 = vpack.c.b16 %v4405, %v4404
  %v5371 = vpack.c.b16 %v4407, %v4406
  %v5372 = vpack.c.b16 %v4409, %v4408
  %v5373 = vpack.c.b16 %v4411, %v4410
  %v5374 = vpack.c.b16 %v4413, %v4412
  %v5375 = vpack.c.b16 %v4415, %v4414
  %v5376 = vpack.c.b16 %v4417, %v4416
  %v5377 = vpack.c.b16 %v4419, %v4418
  %v5378 = vpack.c.b16 %v4421, %v4420
  %v5379 = vpack.c.b16 %v4423, %v4422
  %v5380 = vpack.c.b16 %v4425, %v4424
  %v5381 = vpack.c.b16 %v4427, %v4426
  %v5382 = vpack.c.b16 %v4429, %v4428
  %v5383 = vpack.c.b16 %v4431, %v4430
  %v5384 = vpack.c.b16 %v4433, %v4432
  %v5385 = vpack.c.b16 %v4435, %v4434
  %v5386 = vpack.c.b16 %v4437, %v4436
  %v5387 = vpack.c.b16 %v4439, %v4438
  %v5388 = vpack.c.b16 %v4441, %v4440
  %v5389 = vpack.c.b16 %v4443, %v4442
  %v5390 = vpack.c.b16 %v4445, %v4444
  %v5391 = vpack.c.b16 %v4447, %v4446
  %v5392 = vpack.c.b16 %v4449, %v4448
  %v5393 = vpack.c.b16 %v4451, %v4450
  %v5394 = vpack.c.b16 %v4453, %v4452
  %v5395 = vpack.c.b16 %v4455, %v4454
  %v5396 = vpack.c.b16 %v4457, %v4456
  %v5397 = vpack.c.b16 %v4459, %v4458
  %v5398 = vpack.c.b16 %v4461, %v4460
  %v5399 = vpack.c.b16 %v4463, %v4462
  %v5400 = vpack.c.b16 %v4465, %v4464
  %v5401 = vpack.c.b16 %v4467, %v4466
  %v5402 = vpack.c.b16 %v4469, %v4468
  %v5403 = vpack.c.b16 %v4471, %v4470
  %v5404 = vpack.c.b16 %v4473, %v4472
  %v5405 = vpack.c.b16 %v4475, %v4474
  %v5406 = vpack.c.b16 %v4477, %v4476
  %v5407 = vpack.c.b16 %v4479, %v4478
  %v5408 = vpack.c.b16 %v4481, %v4480
  %v5409 = vpack.c.b16 %v4483, %v4482
  %v5410 = vpack.c.b16 %v4485, %v4484
  %v5411 = vpack.c.b16 %v4487, %v4486
  %v5412 = vpack.c.b16 %v4489, %v4488
  %v5413 = vpack.c.b16 %v4491, %v4490
  %v5414 = vpack.c.b16 %v4493, %v4492
  %v5415 = vpack.c.b16 %v4495, %v4494
  %v5416 = vpack.c.b16 %v4497, %v4496
  %v5417 = vpack.c.b16 %v4499, %v4498
  %v5418 = vpack.c.b16 %v4501, %v4500
  %v5419 = vpack.c.b16 %v4503, %v4502
  %v5420 = vpack.c.b16 %v4505, %v4504
  %v5421 = vpack.c.b16 %v4507, %v4506
  %v5422 = vpack.c.b16 %v4509, %v4508
  %v5423 = vpack.c.b16 %v4511, %v4510
  %v5424 = vpack.c.b16 %v4513, %v4512
  %v5425 = vpack.c.b16 %v4515, %v4514
  %v5426 = vpack.c.b16 %v4517, %v4516
  %v5427 = vpack.c.b16 %v4519, %v4518
  %v5428 = vpack.c.b16 %v4521, %v4520
  %v5429 = vpack.c.b16 %v4523, %v4522
  %v5430 = vpack.c.b16 %v4525, %v4524
  %v5431 = vpack.c.b16 %v4527, %v4526
  %v5432 = vpack.c.b16 %v4529, %v4528
  %v5433 = vpack.c.b16 %v4531, %v4530
  %v5434 = vpack.c.b16 %v4533, %v4532
  %v5435 = vpack.c.b16 %v4535, %v4534
  %v5436 = vpack.c.b16 %v4537, %v4536
  %v5437 = vpack.c.b16 %v4539, %v4538
  %v5438 = vpack.c.b16 %v4541, %v4540
  %v5439 = vpack.c.b16 %v4543, %v4542
  %v5440 = vpack.c.b16 %v4545, %v4544
  %v5441 = vpack.c.b16 %v4547, %v4546
  %v5442 = vpack.c.b16 %v4549, %v4548
  %v5443 = vpack.c.b16 %v4551, %v4550
  %v5444 = vpack.c.b16 %v4553, %v4552
  %v5445 = vpack.c.b16 %v4555, %v4554
  %v5446 = vpack.c.b16 %v4557, %v4556
  %v5447 = vpack.c.b16 %v4559, %v4558
  %v5448 = vpack.c.b16 %v4561, %v4560
  %v5449 = vpack.c.b16 %v4563, %v4562
  %v5450 = vpack.c.b16 %v4565, %v4564
  %v5451 = vpack.c.b16 %v4567, %v4566
  %v5452 = vpack.c.b16 %v4569, %v4568
  %v5453 = vpack.c.b16 %v4571, %v4570
  %v5454 = vpack.c.b16 %v4573, %v4572
  %v5455 = vpack.c.b16 %v4575, %v4574
  %v5456 = vpack.c.b16 %v4577, %v4576
  %v5457 = vpack.c.b16 %v4579, %v4578
  %v5458 = vpack.c.b16 %v4581, %v4580
  %v5459 = vpack.c.b16 %v4583, %v4582
  %v5460 = vpack.c.b16 %v4585, %v4584
  %v5461 = vpack.c.b16 %v4587, %v4586
  %v5462 = vpack.c.b16 %v4589, %v4588
  %v5463 = vpack.c.b16 %v4591, %v4590
  %v5464 = vpack.c.b16 %v4593, %v4592
  %v5465 = vpack.c.b16 %v4595, %v4594
  %v5466 = vpack.c.b16 %v4597, %v4596
  %v5467 = vpack.c.b16 %v4599, %v4598
  %v5468 = vpack.c.b16 %v4601, %v4600
  %v5469 = vpack.c.b16 %v4603, %v4602
  %v5470 = vpack.c.b16 %v4605, %v4604
  %v5471 = vpack.c.b16 %v4607, %v4606
  %v5472 = vpack.c.b16 %v4609, %v4608
  %v5473 = vpack.c.b16 %v4611, %v4610
  %v5474 = vpack.c.b16 %v4613, %v4612
  %v5475 = vpack.c.b16 %v4615, %v4614
  %v5476 = vpack.c.b16 %v4617, %v4616
  %v5477 = vpack.c.b16 %v4619, %v4618
  %v5478 = vpack.c.b16 %v4621, %v4620
  %v5479 = vpack.c.b16 %v4623, %v4622
  %v5480 = vpack.c.b16 %v4625, %v4624
  %v5481 = vpack.c.b16 %v4627, %v4626
  %v5482 = vpack.c.b16 %v4629, %v4628
  %v5483 = vpack.c.b16 %v4631, %v4630
  %v5484 = vpack.c.b16 %v4633, %v4632
  %v5485 = vpack.c.b16 %v4635, %v4634
  %v5486 = vpack.c.b16 %v4637, %v4636
  %v5487 = vpack.c.b16 %v4639, %v4638
  %v5488 = vpack.c.b16 %v4641, %v4640
  %v5489 = vpack.c.b16 %v4643, %v4642
  %v5490 = vpack.c.b16 %v4645, %v4644
  %v5491 = vpack.c.b16 %v4647, %v4646
  %v5492 = vpack.c.b16 %v4649, %v4648
  %v5493 = vpack.c.b16 %v4651, %v4650
  %v5494 = vpack.c.b16 %v4653, %v4652
  %v5495 = vpack.c.b16 %v4655, %v4654
  %v5496 = vpack.c.b16 %v4657, %v4656
  %v5497 = vpack.c.b16 %v4659, %v4658
  %v5498 = vpack.c.b16 %v4661, %v4660
  %v5499 = vpack.c.b16 %v4663, %v4662
  %v5500 = vpack.c.b16 %v4665, %v4664
  %v5501 = vpack.c.b16 %v4667, %v4666
  %v5502 = vpack.c.b16 %v4669, %v4668
  %v5503 = vpack.c.b16 %v4671, %v4670
  %v5504 = vpack.c.b16 %v4673, %v4672
  %v5505 = vpack.c.b16 %v4675, %v4674
  %v5506 = vpack.c.b16 %v4677, %v4676
  %v5507 = vpack.c.b16 %v4679, %v4678
  %v5508 = vpack.c.b16 %v4681, %v4680
  %v5509 = vpack.c.b16 %v4683, %v4682
  %v5510 = vpack.c.b16 %v4685, %v4684
  %v5511 = vpack.c.b16 %v4687, %v4686
  %v5512 = vpack.c.b16 %v4689, %v4688
  %v5513 = vpack.c.b16 %v4691, %v4690
  %v5514 = vpack.c.b16 %v4693, %v4692
  %v5515 = vpack.c.b16 %v4695, %v4694
  %v5516 = vpack.c.b16 %v4697, %v4696
  %v5517 = vpack.c.b16 %v4699, %v4698
  %v5518 = vpack.c.b16 %v4701, %v4700
  %v5519 = vpack.c.b16 %v4703, %v4702
  %v5520 = vpack.c.b16 %v4705, %v4704
  %v5521 = vpack.c.b16 %v4707, %v4706
  %v5522 = vpack.c.b16 %v4709, %v4708
  %v5523 = vpack.c.b16 %v4711, %v4710
  %v5524 = vpack.c.b16 %v4713, %v4712
  %v5525 = vpack.c.b16 %v4715, %v4714
  %v5526 = vpack.c.b16 %v4717, %v4716
  %v5527 = vpack.c.b16 %v4719, %v4718
  %v5528 = vpack.c.b16 %v4721, %v4720
  %v5529 = vpack.c.b16 %v4723, %v4722
  %v5530 = vpack.c.b16 %v4725, %v4724
  %v5531 = vpack.c.b16 %v4727, %v4726
  %v5532 = vpack.c.b16 %v4729, %v4728
  %v5533 = vpack.c.b16 %v4731, %v4730
  %v5534 = vpack.c.b16 %v4733, %v4732
  %v5535 = vpack.c.b16 %v4735, %v4734
  %v5536 = vpack.c.b16 %v4737, %v4736
  %v5537 = vpack.c.b16 %v4739, %v4738
  %v5538 = vpack.c.b16 %v4741, %v4740
  %v5539 = vpack.c.b16 %v4743, %v4742
  %v5540 = vpack.c.b16 %v4745, %v4744
  %v5541 = vpack.c.b16 %v4747, %v4746
  %v5542 = vpack.c.b16 %v4749, %v4748
  %v5543 = vpack.c.b16 %v4751, %v4750
  %v5544 = vpack.c.b16 %v4753, %v4752
  %v5545 = vpack.c.b16 %v4755, %v4754
  %v5546 = vpack.c.b16 %v4757, %v4756
  %v5547 = vpack.c.b16 %v4759, %v4758
  %v5548 = vpack.c.b16 %v4761, %v4760
  %v5549 = vpack.c.b16 %v4763, %v4762
  %v5550 = vpack.c.b16 %v4765, %v4764
  %v5551 = vpack.c.b16 %v4767, %v4766
  %v5552 = vpack.c.b16 %v4769, %v4768
  %v5553 = vpack.c.b16 %v4771, %v4770
  %v5554 = vpack.c.b16 %v4773, %v4772
  %v5555 = vpack.c.b16 %v4775, %v4774
  %v5556 = vpack.c.b16 %v4777, %v4776
  %v5557 = vpack.c.b16 %v4779, %v4778
  %v5558 = vpack.c.b16 %v4781, %v4780
  %v5559 = vpack.c.b16 %v4783, %v4782
  %v5560 = vpack.c.b16 %v4785, %v4784
  %v5561 = vpack.c.b16 %v4787, %v4786
  %v5562 = vpack.c.b16 %v4789, %v4788
  %v5563 = vpack.c.b16 %v4791, %v4790
  %v5564 = vpack.c.b16 %v4793, %v4792
  %v5565 = vpack.c.b16 %v4795, %v4794
  %v5566 = vpack.c.b16 %v4797, %v4796
  %v5567 = vpack.c.b16 %v4799, %v4798
  %v5568 = vpack.c.b16 %v4801, %v4800
  %v5569 = vpack.c.b16 %v4803, %v4802
  %v5570 = vpack.c.b16 %v4805, %v4804
  %v5571 = vpack.c.b16 %v4807, %v4806
  %v5572 = vpack.c.b16 %v4809, %v4808
  %v5573 = vpack.c.b16 %v4811, %v4810
  %v5574 = vpack.c.b16 %v4813, %v4812
  %v5575 = vpack.c.b16 %v4815, %v4814
  %v5576 = vpack.c.b16 %v4817, %v4816
  %v5577 = vpack.c.b16 %v4819, %v4818
  %v5578 = vpack.c.b16 %v4821, %v4820
  %v5579 = vpack.c.b16 %v4823, %v4822
  %v5580 = vpack.c.b16 %v4825, %v4824
  %v5581 = vpack.c.b16 %v4827, %v4826
  %v5582 = vpack.c.b16 %v4829, %v4828
  %v5583 = vpack.c.b16 %v4831, %v4830
  %v5584 = vpack.c.b16 %v4833, %v4832
  %v5585 = vpack.c.b16 %v4835, %v4834
  %v5586 = vpack.c.b16 %v4837, %v4836
  %v5587 = vpack.c.b16 %v4839, %v4838
  %v5588 = vpack.c.b16 %v4841, %v4840
  %v5589 = vpack.c.b16 %v4843, %v4842
  %v5590 = vpack.c.b16 %v4845, %v4844
  %v5591 = vpack.c.b16 %v4847, %v4846
  %v5592 = vpack.c.b16 %v4849, %v4848
  %v5593 = vpack.c.b16 %v4851, %v4850
  %v5594 = vpack.c.b16 %v4853, %v4852
  %v5595 = vpack.c.b16 %v4855, %v4854
  %v5596 = vpack.c.b16 %v4857, %v4856
  %v5597 = vpack.c.b16 %v4859, %v4858
  %v5598 = vpack.c.b16 %v4861, %v4860
  %v5599 = vpack.c.b16 %v4863, %v4862
  %v5600 = vpack.c.b16 %v4865, %v4864
  %v5601 = vpack.c.b16 %v4867, %v4866
  %v5602 = vpack.c.b16 %v4869, %v4868
  %v5603 = vpack.c.b16 %v4871, %v4870
  %v5604 = vpack.c.b16 %v4873, %v4872
  %v5605 = vpack.c.b16 %v4875, %v4874
  %v5606 = vpack.c.b16 %v4877, %v4876
  %v5607 = vpack.c.b16 %v4879, %v4878
  %v5608 = vpack.c.b16 %v4881, %v4880
  %v5609 = vpack.c.b16 %v4883, %v4882
  %v5610 = vpack.c.b16 %v4885, %v4884
  %v5611 = vpack.c.b16 %v4887, %v4886
  %v5612 = vpack.c.b16 %v4889, %v4888
  %v5613 = vpack.c.b16 %v4891, %v4890
  %v5614 = vpack.c.b16 %v4893, %v4892
  %v5615 = vpack.c.b16 %v4895, %v4894
  %6336 = vmatprep.subr.bf16.mxu0 0
  %6337 = vmatpush1.bf16.msra.mxu0 %v4903
  %6338 = vmatprep.subr.bf16.mxu0 0
  %6339 = vmatpush1.bf16.msra.mxu0 %v4902
  %6340 = vmatprep.subr.bf16.mxu0 0
  %6341 = vmatpush1.bf16.msra.mxu0 %v4901
  %6342 = vmatprep.subr.bf16.mxu0 0
  %6343 = vmatpush1.bf16.msra.mxu0 %v4900
  %6344 = vmatprep.subr.bf16.mxu0 0
  %6345 = vmatpush1.bf16.msra.mxu0 %v4899
  %6346 = vmatprep.subr.bf16.mxu0 0
  %6347 = vmatpush1.bf16.msra.mxu0 %v4898
  %6348 = vmatprep.subr.bf16.mxu0 0
  %6349 = vmatpush1.bf16.msra.mxu0 %v4897
  %6350 = vmatprep.subr.bf16.mxu0 0
  %6351 = vmatpush1.bf16.msra.mxu0 %v4896
  %6352 = vmatprep.subr.bf16.mxu0 0
  %6353 = vmatpush2.bf16.msra.mxu0 %v4911
  %6354 = vmatprep.subr.bf16.mxu0 0
  %6355 = vmatpush2.bf16.msra.mxu0 %v4910
  %6356 = vmatprep.subr.bf16.mxu0 0
  %6357 = vmatpush2.bf16.msra.mxu0 %v4909
  %6358 = vmatprep.subr.bf16.mxu0 0
  %6359 = vmatpush2.bf16.msra.mxu0 %v4908
  %6360 = vmatprep.subr.bf16.mxu0 0
  %6361 = vmatpush2.bf16.msra.mxu0 %v4907
  %6362 = vmatprep.subr.bf16.mxu0 0
  %6363 = vmatpush2.bf16.msra.mxu0 %v4906
  %6364 = vmatprep.subr.bf16.mxu0 0
  %6365 = vmatpush2.bf16.msra.mxu0 %v4905
  %6366 = vmatprep.subr.bf16.mxu0 0
  %6367 = vmatpush2.bf16.msra.mxu0 %v4904
  %6368 = vmatprep.mubr.bf16.mxu0 %v1837
  %6369 = vmatmul.mubr.bf16.gmra.mxu0 %v1836
  %v6370 = vpop.f32.mrf.mxu0
  %v6371 = vadd.f32 %v1564, %v6370
  %v6372 = vpop.f32.mrf.mxu0
  %v6373 = vpop.f32.mrf.mxu0
  %v6374 = vadd.f32 %v1564, %v6373
  %v6375 = vpop.f32.mrf.mxu0
  %6376 = vdwg.mxu0
  %6377 = vmatprep.subr.bf16.mxu0 0
  %6378 = vmatpush1.bf16.msra.mxu0 %v4919
  %6379 = vmatprep.subr.bf16.mxu0 0
  %6380 = vmatpush1.bf16.msra.mxu0 %v4918
  %6381 = vmatprep.subr.bf16.mxu0 0
  %6382 = vmatpush1.bf16.msra.mxu0 %v4917
  %6383 = vmatprep.subr.bf16.mxu0 0
  %6384 = vmatpush1.bf16.msra.mxu0 %v4916
  %6385 = vmatprep.subr.bf16.mxu0 0
  %6386 = vmatpush1.bf16.msra.mxu0 %v4915
  %6387 = vmatprep.subr.bf16.mxu0 0
  %6388 = vmatpush1.bf16.msra.mxu0 %v4914
  %6389 = vmatprep.subr.bf16.mxu0 0
  %6390 = vmatpush1.bf16.msra.mxu0 %v4913
  %6391 = vmatprep.subr.bf16.mxu0 0
  %6392 = vmatpush1.bf16.msra.mxu0 %v4912
  %6393 = vmatprep.subr.bf16.mxu0 0
  %6394 = vmatpush2.bf16.msra.mxu0 %v4927
  %6395 = vmatprep.subr.bf16.mxu0 0
  %6396 = vmatpush2.bf16.msra.mxu0 %v4926
  %6397 = vmatprep.subr.bf16.mxu0 0
  %6398 = vmatpush2.bf16.msra.mxu0 %v4925
  %6399 = vmatprep.subr.bf16.mxu0 0
  %6400 = vmatpush2.bf16.msra.mxu0 %v4924
  %6401 = vmatprep.subr.bf16.mxu0 0
  %6402 = vmatpush2.bf16.msra.mxu0 %v4923
  %6403 = vmatprep.subr.bf16.mxu0 0
  %6404 = vmatpush2.bf16.msra.mxu0 %v4922
  %6405 = vmatprep.subr.bf16.mxu0 0
  %6406 = vmatpush2.bf16.msra.mxu0 %v4921
  %6407 = vmatprep.subr.bf16.mxu0 0
  %6408 = vmatpush2.bf16.msra.mxu0 %v4920
  %6409 = vmatprep.mubr.bf16.mxu0 %v1839
  %6410 = vmatmul.mubr.bf16.gmra.mxu0 %v1838
  %v6411 = vpop.f32.mrf.mxu0
  %v6412 = vadd.f32 %v6371, %v6411
  %v6413 = vpop.f32.mrf.mxu0
  %v6414 = vpop.f32.mrf.mxu0
  %v6415 = vadd.f32 %v6374, %v6414
  %v6416 = vpop.f32.mrf.mxu0
  %6417 = vdwg.mxu0
  %6418 = vmatprep.subr.bf16.mxu0 0
  %6419 = vmatpush1.bf16.msra.mxu0 %v4935
  %6420 = vmatprep.subr.bf16.mxu0 0
  %6421 = vmatpush1.bf16.msra.mxu0 %v4934
  %6422 = vmatprep.subr.bf16.mxu0 0
  %6423 = vmatpush1.bf16.msra.mxu0 %v4933
  %6424 = vmatprep.subr.bf16.mxu0 0
  %6425 = vmatpush1.bf16.msra.mxu0 %v4932
  %6426 = vmatprep.subr.bf16.mxu0 0
  %6427 = vmatpush1.bf16.msra.mxu0 %v4931
  %6428 = vmatprep.subr.bf16.mxu0 0
  %6429 = vmatpush1.bf16.msra.mxu0 %v4930
  %6430 = vmatprep.subr.bf16.mxu0 0
  %6431 = vmatpush1.bf16.msra.mxu0 %v4929
  %6432 = vmatprep.subr.bf16.mxu0 0
  %6433 = vmatpush1.bf16.msra.mxu0 %v4928
  %6434 = vmatprep.subr.bf16.mxu0 0
  %6435 = vmatpush2.bf16.msra.mxu0 %v4943
  %6436 = vmatprep.subr.bf16.mxu0 0
  %6437 = vmatpush2.bf16.msra.mxu0 %v4942
  %6438 = vmatprep.subr.bf16.mxu0 0
  %6439 = vmatpush2.bf16.msra.mxu0 %v4941
  %6440 = vmatprep.subr.bf16.mxu0 0
  %6441 = vmatpush2.bf16.msra.mxu0 %v4940
  %6442 = vmatprep.subr.bf16.mxu0 0
  %6443 = vmatpush2.bf16.msra.mxu0 %v4939
  %6444 = vmatprep.subr.bf16.mxu0 0
  %6445 = vmatpush2.bf16.msra.mxu0 %v4938
  %6446 = vmatprep.subr.bf16.mxu0 0
  %6447 = vmatpush2.bf16.msra.mxu0 %v4937
  %6448 = vmatprep.subr.bf16.mxu0 0
  %6449 = vmatpush2.bf16.msra.mxu0 %v4936
  %6450 = vmatprep.mubr.bf16.mxu0 %v1841
  %6451 = vmatmul.mubr.bf16.gmra.mxu0 %v1840
  %v6452 = vpop.f32.mrf.mxu0
  %v6453 = vadd.f32 %v6412, %v6452
  %v6454 = vpop.f32.mrf.mxu0
  %v6455 = vpop.f32.mrf.mxu0
  %v6456 = vadd.f32 %v6415, %v6455
  %v6457 = vpop.f32.mrf.mxu0
  %6458 = vdwg.mxu0
  %6459 = vmatprep.subr.bf16.mxu0 0
  %6460 = vmatpush1.bf16.msra.mxu0 %v4951
  %6461 = vmatprep.subr.bf16.mxu0 0
  %6462 = vmatpush1.bf16.msra.mxu0 %v4950
  %6463 = vmatprep.subr.bf16.mxu0 0
  %6464 = vmatpush1.bf16.msra.mxu0 %v4949
  %6465 = vmatprep.subr.bf16.mxu0 0
  %6466 = vmatpush1.bf16.msra.mxu0 %v4948
  %6467 = vmatprep.subr.bf16.mxu0 0
  %6468 = vmatpush1.bf16.msra.mxu0 %v4947
  %6469 = vmatprep.subr.bf16.mxu0 0
  %6470 = vmatpush1.bf16.msra.mxu0 %v4946
  %6471 = vmatprep.subr.bf16.mxu0 0
  %6472 = vmatpush1.bf16.msra.mxu0 %v4945
  %6473 = vmatprep.subr.bf16.mxu0 0
  %6474 = vmatpush1.bf16.msra.mxu0 %v4944
  %6475 = vmatprep.subr.bf16.mxu0 0
  %6476 = vmatpush2.bf16.msra.mxu0 %v4959
  %6477 = vmatprep.subr.bf16.mxu0 0
  %6478 = vmatpush2.bf16.msra.mxu0 %v4958
  %6479 = vmatprep.subr.bf16.mxu0 0
  %6480 = vmatpush2.bf16.msra.mxu0 %v4957
  %6481 = vmatprep.subr.bf16.mxu0 0
  %6482 = vmatpush2.bf16.msra.mxu0 %v4956
  %6483 = vmatprep.subr.bf16.mxu0 0
  %6484 = vmatpush2.bf16.msra.mxu0 %v4955
  %6485 = vmatprep.subr.bf16.mxu0 0
  %6486 = vmatpush2.bf16.msra.mxu0 %v4954
  %6487 = vmatprep.subr.bf16.mxu0 0
  %6488 = vmatpush2.bf16.msra.mxu0 %v4953
  %6489 = vmatprep.subr.bf16.mxu0 0
  %6490 = vmatpush2.bf16.msra.mxu0 %v4952
  %6491 = vmatprep.mubr.bf16.mxu0 %v1843
  %6492 = vmatmul.mubr.bf16.gmra.mxu0 %v1842
  %v6493 = vpop.f32.mrf.mxu0
  %v6494 = vadd.f32 %v6453, %v6493
  %v6495 = vpop.f32.mrf.mxu0
  %v6496 = vpop.f32.mrf.mxu0
  %v6497 = vadd.f32 %v6456, %v6496
  %v6498 = vpop.f32.mrf.mxu0
  %6499 = vdwg.mxu0
  %6500 = vmatprep.subr.bf16.mxu0 0
  %6501 = vmatpush1.bf16.msra.mxu0 %v4967
  %6502 = vmatprep.subr.bf16.mxu0 0
  %6503 = vmatpush1.bf16.msra.mxu0 %v4966
  %6504 = vmatprep.subr.bf16.mxu0 0
  %6505 = vmatpush1.bf16.msra.mxu0 %v4965
  %6506 = vmatprep.subr.bf16.mxu0 0
  %6507 = vmatpush1.bf16.msra.mxu0 %v4964
  %6508 = vmatprep.subr.bf16.mxu0 0
  %6509 = vmatpush1.bf16.msra.mxu0 %v4963
  %6510 = vmatprep.subr.bf16.mxu0 0
  %6511 = vmatpush1.bf16.msra.mxu0 %v4962
  %6512 = vmatprep.subr.bf16.mxu0 0
  %6513 = vmatpush1.bf16.msra.mxu0 %v4961
  %6514 = vmatprep.subr.bf16.mxu0 0
  %6515 = vmatpush1.bf16.msra.mxu0 %v4960
  %6516 = vmatprep.subr.bf16.mxu0 0
  %6517 = vmatpush2.bf16.msra.mxu0 %v4975
  %6518 = vmatprep.subr.bf16.mxu0 0
  %6519 = vmatpush2.bf16.msra.mxu0 %v4974
  %6520 = vmatprep.subr.bf16.mxu0 0
  %6521 = vmatpush2.bf16.msra.mxu0 %v4973
  %6522 = vmatprep.subr.bf16.mxu0 0
  %6523 = vmatpush2.bf16.msra.mxu0 %v4972
  %6524 = vmatprep.subr.bf16.mxu0 0
  %6525 = vmatpush2.bf16.msra.mxu0 %v4971
  %6526 = vmatprep.subr.bf16.mxu0 0
  %6527 = vmatpush2.bf16.msra.mxu0 %v4970
  %6528 = vmatprep.subr.bf16.mxu0 0
  %6529 = vmatpush2.bf16.msra.mxu0 %v4969
  %6530 = vmatprep.subr.bf16.mxu0 0
  %6531 = vmatpush2.bf16.msra.mxu0 %v4968
  %6532 = vmatprep.mubr.bf16.mxu0 %v1845
  %6533 = vmatmul.mubr.bf16.gmra.mxu0 %v1844
  %v6534 = vpop.f32.mrf.mxu0
  %v6535 = vadd.f32 %v6494, %v6534
  %v6536 = vpop.f32.mrf.mxu0
  %v6537 = vpop.f32.mrf.mxu0
  %v6538 = vadd.f32 %v6497, %v6537
  %v6539 = vpop.f32.mrf.mxu0
  %6540 = vdwg.mxu0
  %6541 = vmatprep.subr.bf16.mxu0 0
  %6542 = vmatpush1.bf16.msra.mxu0 %v4983
  %6543 = vmatprep.subr.bf16.mxu0 0
  %6544 = vmatpush1.bf16.msra.mxu0 %v4982
  %6545 = vmatprep.subr.bf16.mxu0 0
  %6546 = vmatpush1.bf16.msra.mxu0 %v4981
  %6547 = vmatprep.subr.bf16.mxu0 0
  %6548 = vmatpush1.bf16.msra.mxu0 %v4980
  %6549 = vmatprep.subr.bf16.mxu0 0
  %6550 = vmatpush1.bf16.msra.mxu0 %v4979
  %6551 = vmatprep.subr.bf16.mxu0 0
  %6552 = vmatpush1.bf16.msra.mxu0 %v4978
  %6553 = vmatprep.subr.bf16.mxu0 0
  %6554 = vmatpush1.bf16.msra.mxu0 %v4977
  %6555 = vmatprep.subr.bf16.mxu0 0
  %6556 = vmatpush1.bf16.msra.mxu0 %v4976
  %6557 = vmatprep.subr.bf16.mxu0 0
  %6558 = vmatpush2.bf16.msra.mxu0 %v4991
  %6559 = vmatprep.subr.bf16.mxu0 0
  %6560 = vmatpush2.bf16.msra.mxu0 %v4990
  %6561 = vmatprep.subr.bf16.mxu0 0
  %6562 = vmatpush2.bf16.msra.mxu0 %v4989
  %6563 = vmatprep.subr.bf16.mxu0 0
  %6564 = vmatpush2.bf16.msra.mxu0 %v4988
  %6565 = vmatprep.subr.bf16.mxu0 0
  %6566 = vmatpush2.bf16.msra.mxu0 %v4987
  %6567 = vmatprep.subr.bf16.mxu0 0
  %6568 = vmatpush2.bf16.msra.mxu0 %v4986
  %6569 = vmatprep.subr.bf16.mxu0 0
  %6570 = vmatpush2.bf16.msra.mxu0 %v4985
  %6571 = vmatprep.subr.bf16.mxu0 0
  %6572 = vmatpush2.bf16.msra.mxu0 %v4984
  %6573 = vmatprep.mubr.bf16.mxu0 %v1847
  %6574 = vmatmul.mubr.bf16.gmra.mxu0 %v1846
  %v6575 = vpop.f32.mrf.mxu0
  %v6576 = vadd.f32 %v6535, %v6575
  %v6577 = vpop.f32.mrf.mxu0
  %v6578 = vpop.f32.mrf.mxu0
  %v6579 = vadd.f32 %v6538, %v6578
  %v6580 = vpop.f32.mrf.mxu0
  %6581 = vdwg.mxu0
  %6582 = vmatprep.subr.bf16.mxu0 0
  %6583 = vmatpush1.bf16.msra.mxu0 %v4999
  %6584 = vmatprep.subr.bf16.mxu0 0
  %6585 = vmatpush1.bf16.msra.mxu0 %v4998
  %6586 = vmatprep.subr.bf16.mxu0 0
  %6587 = vmatpush1.bf16.msra.mxu0 %v4997
  %6588 = vmatprep.subr.bf16.mxu0 0
  %6589 = vmatpush1.bf16.msra.mxu0 %v4996
  %6590 = vmatprep.subr.bf16.mxu0 0
  %6591 = vmatpush1.bf16.msra.mxu0 %v4995
  %6592 = vmatprep.subr.bf16.mxu0 0
  %6593 = vmatpush1.bf16.msra.mxu0 %v4994
  %6594 = vmatprep.subr.bf16.mxu0 0
  %6595 = vmatpush1.bf16.msra.mxu0 %v4993
  %6596 = vmatprep.subr.bf16.mxu0 0
  %6597 = vmatpush1.bf16.msra.mxu0 %v4992
  %6598 = vmatprep.subr.bf16.mxu0 0
  %6599 = vmatpush2.bf16.msra.mxu0 %v5007
  %6600 = vmatprep.subr.bf16.mxu0 0
  %6601 = vmatpush2.bf16.msra.mxu0 %v5006
  %6602 = vmatprep.subr.bf16.mxu0 0
  %6603 = vmatpush2.bf16.msra.mxu0 %v5005
  %6604 = vmatprep.subr.bf16.mxu0 0
  %6605 = vmatpush2.bf16.msra.mxu0 %v5004
  %6606 = vmatprep.subr.bf16.mxu0 0
  %6607 = vmatpush2.bf16.msra.mxu0 %v5003
  %6608 = vmatprep.subr.bf16.mxu0 0
  %6609 = vmatpush2.bf16.msra.mxu0 %v5002
  %6610 = vmatprep.subr.bf16.mxu0 0
  %6611 = vmatpush2.bf16.msra.mxu0 %v5001
  %6612 = vmatprep.subr.bf16.mxu0 0
  %6613 = vmatpush2.bf16.msra.mxu0 %v5000
  %6614 = vmatprep.mubr.bf16.mxu0 %v1849
  %6615 = vmatmul.mubr.bf16.gmra.mxu0 %v1848
  %v6616 = vpop.f32.mrf.mxu0
  %v6617 = vadd.f32 %v6576, %v6616
  %v6618 = vpop.f32.mrf.mxu0
  %v6619 = vpop.f32.mrf.mxu0
  %v6620 = vadd.f32 %v6579, %v6619
  %v6621 = vpop.f32.mrf.mxu0
  %6622 = vdwg.mxu0
  %6623 = vmatprep.subr.bf16.mxu0 0
  %6624 = vmatpush1.bf16.msra.mxu0 %v5015
  %6625 = vmatprep.subr.bf16.mxu0 0
  %6626 = vmatpush1.bf16.msra.mxu0 %v5014
  %6627 = vmatprep.subr.bf16.mxu0 0
  %6628 = vmatpush1.bf16.msra.mxu0 %v5013
  %6629 = vmatprep.subr.bf16.mxu0 0
  %6630 = vmatpush1.bf16.msra.mxu0 %v5012
  %6631 = vmatprep.subr.bf16.mxu0 0
  %6632 = vmatpush1.bf16.msra.mxu0 %v5011
  %6633 = vmatprep.subr.bf16.mxu0 0
  %6634 = vmatpush1.bf16.msra.mxu0 %v5010
  %6635 = vmatprep.subr.bf16.mxu0 0
  %6636 = vmatpush1.bf16.msra.mxu0 %v5009
  %6637 = vmatprep.subr.bf16.mxu0 0
  %6638 = vmatpush1.bf16.msra.mxu0 %v5008
  %6639 = vmatprep.subr.bf16.mxu0 0
  %6640 = vmatpush2.bf16.msra.mxu0 %v5023
  %6641 = vmatprep.subr.bf16.mxu0 0
  %6642 = vmatpush2.bf16.msra.mxu0 %v5022
  %6643 = vmatprep.subr.bf16.mxu0 0
  %6644 = vmatpush2.bf16.msra.mxu0 %v5021
  %6645 = vmatprep.subr.bf16.mxu0 0
  %6646 = vmatpush2.bf16.msra.mxu0 %v5020
  %6647 = vmatprep.subr.bf16.mxu0 0
  %6648 = vmatpush2.bf16.msra.mxu0 %v5019
  %6649 = vmatprep.subr.bf16.mxu0 0
  %6650 = vmatpush2.bf16.msra.mxu0 %v5018
  %6651 = vmatprep.subr.bf16.mxu0 0
  %6652 = vmatpush2.bf16.msra.mxu0 %v5017
  %6653 = vmatprep.subr.bf16.mxu0 0
  %6654 = vmatpush2.bf16.msra.mxu0 %v5016
  %6655 = vmatprep.mubr.bf16.mxu0 %v1851
  %6656 = vmatmul.mubr.bf16.gmra.mxu0 %v1850
  %v6657 = vpop.f32.mrf.mxu0
  %v6658 = vadd.f32 %v6617, %v6657
  %v6659 = vpop.f32.mrf.mxu0
  %v6660 = vpop.f32.mrf.mxu0
  %v6661 = vadd.f32 %v6620, %v6660
  %v6662 = vpop.f32.mrf.mxu0
  %6663 = vdwg.mxu0
  %6664 = vmatprep.subr.bf16.mxu0 0
  %6665 = vmatpush1.bf16.msra.mxu0 %v5031
  %6666 = vmatprep.subr.bf16.mxu0 0
  %6667 = vmatpush1.bf16.msra.mxu0 %v5030
  %6668 = vmatprep.subr.bf16.mxu0 0
  %6669 = vmatpush1.bf16.msra.mxu0 %v5029
  %6670 = vmatprep.subr.bf16.mxu0 0
  %6671 = vmatpush1.bf16.msra.mxu0 %v5028
  %6672 = vmatprep.subr.bf16.mxu0 0
  %6673 = vmatpush1.bf16.msra.mxu0 %v5027
  %6674 = vmatprep.subr.bf16.mxu0 0
  %6675 = vmatpush1.bf16.msra.mxu0 %v5026
  %6676 = vmatprep.subr.bf16.mxu0 0
  %6677 = vmatpush1.bf16.msra.mxu0 %v5025
  %6678 = vmatprep.subr.bf16.mxu0 0
  %6679 = vmatpush1.bf16.msra.mxu0 %v5024
  %6680 = vmatprep.subr.bf16.mxu0 0
  %6681 = vmatpush2.bf16.msra.mxu0 %v5039
  %6682 = vmatprep.subr.bf16.mxu0 0
  %6683 = vmatpush2.bf16.msra.mxu0 %v5038
  %6684 = vmatprep.subr.bf16.mxu0 0
  %6685 = vmatpush2.bf16.msra.mxu0 %v5037
  %6686 = vmatprep.subr.bf16.mxu0 0
  %6687 = vmatpush2.bf16.msra.mxu0 %v5036
  %6688 = vmatprep.subr.bf16.mxu0 0
  %6689 = vmatpush2.bf16.msra.mxu0 %v5035
  %6690 = vmatprep.subr.bf16.mxu0 0
  %6691 = vmatpush2.bf16.msra.mxu0 %v5034
  %6692 = vmatprep.subr.bf16.mxu0 0
  %6693 = vmatpush2.bf16.msra.mxu0 %v5033
  %6694 = vmatprep.subr.bf16.mxu0 0
  %6695 = vmatpush2.bf16.msra.mxu0 %v5032
  %6696 = vmatprep.mubr.bf16.mxu0 %v1853
  %6697 = vmatmul.mubr.bf16.gmra.mxu0 %v1852
  %v6698 = vpop.f32.mrf.mxu0
  %v6699 = vadd.f32 %v6658, %v6698
  %v6700 = vpop.f32.mrf.mxu0
  %v6701 = vpop.f32.mrf.mxu0
  %v6702 = vadd.f32 %v6661, %v6701
  %v6703 = vpop.f32.mrf.mxu0
  %6704 = vdwg.mxu0
  %6705 = vmatprep.subr.bf16.mxu0 0
  %6706 = vmatpush1.bf16.msra.mxu0 %v5047
  %6707 = vmatprep.subr.bf16.mxu0 0
  %6708 = vmatpush1.bf16.msra.mxu0 %v5046
  %6709 = vmatprep.subr.bf16.mxu0 0
  %6710 = vmatpush1.bf16.msra.mxu0 %v5045
  %6711 = vmatprep.subr.bf16.mxu0 0
  %6712 = vmatpush1.bf16.msra.mxu0 %v5044
  %6713 = vmatprep.subr.bf16.mxu0 0
  %6714 = vmatpush1.bf16.msra.mxu0 %v5043
  %6715 = vmatprep.subr.bf16.mxu0 0
  %6716 = vmatpush1.bf16.msra.mxu0 %v5042
  %6717 = vmatprep.subr.bf16.mxu0 0
  %6718 = vmatpush1.bf16.msra.mxu0 %v5041
  %6719 = vmatprep.subr.bf16.mxu0 0
  %6720 = vmatpush1.bf16.msra.mxu0 %v5040
  %6721 = vmatprep.subr.bf16.mxu0 0
  %6722 = vmatpush2.bf16.msra.mxu0 %v5055
  %6723 = vmatprep.subr.bf16.mxu0 0
  %6724 = vmatpush2.bf16.msra.mxu0 %v5054
  %6725 = vmatprep.subr.bf16.mxu0 0
  %6726 = vmatpush2.bf16.msra.mxu0 %v5053
  %6727 = vmatprep.subr.bf16.mxu0 0
  %6728 = vmatpush2.bf16.msra.mxu0 %v5052
  %6729 = vmatprep.subr.bf16.mxu0 0
  %6730 = vmatpush2.bf16.msra.mxu0 %v5051
  %6731 = vmatprep.subr.bf16.mxu0 0
  %6732 = vmatpush2.bf16.msra.mxu0 %v5050
  %6733 = vmatprep.subr.bf16.mxu0 0
  %6734 = vmatpush2.bf16.msra.mxu0 %v5049
  %6735 = vmatprep.subr.bf16.mxu0 0
  %6736 = vmatpush2.bf16.msra.mxu0 %v5048
  %6737 = vmatprep.mubr.bf16.mxu0 %v1855
  %6738 = vmatmul.mubr.bf16.gmra.mxu0 %v1854
  %v6739 = vpop.f32.mrf.mxu0
  %v6740 = vadd.f32 %v6699, %v6739
  %v6741 = vpop.f32.mrf.mxu0
  %v6742 = vpop.f32.mrf.mxu0
  %v6743 = vadd.f32 %v6702, %v6742
  %v6744 = vpop.f32.mrf.mxu0
  %6745 = vdwg.mxu0
  %6746 = vmatprep.subr.bf16.mxu0 0
  %6747 = vmatpush1.bf16.msra.mxu0 %v5063
  %6748 = vmatprep.subr.bf16.mxu0 0
  %6749 = vmatpush1.bf16.msra.mxu0 %v5062
  %6750 = vmatprep.subr.bf16.mxu0 0
  %6751 = vmatpush1.bf16.msra.mxu0 %v5061
  %6752 = vmatprep.subr.bf16.mxu0 0
  %6753 = vmatpush1.bf16.msra.mxu0 %v5060
  %6754 = vmatprep.subr.bf16.mxu0 0
  %6755 = vmatpush1.bf16.msra.mxu0 %v5059
  %6756 = vmatprep.subr.bf16.mxu0 0
  %6757 = vmatpush1.bf16.msra.mxu0 %v5058
  %6758 = vmatprep.subr.bf16.mxu0 0
  %6759 = vmatpush1.bf16.msra.mxu0 %v5057
  %6760 = vmatprep.subr.bf16.mxu0 0
  %6761 = vmatpush1.bf16.msra.mxu0 %v5056
  %6762 = vmatprep.subr.bf16.mxu0 0
  %6763 = vmatpush2.bf16.msra.mxu0 %v5071
  %6764 = vmatprep.subr.bf16.mxu0 0
  %6765 = vmatpush2.bf16.msra.mxu0 %v5070
  %6766 = vmatprep.subr.bf16.mxu0 0
  %6767 = vmatpush2.bf16.msra.mxu0 %v5069
  %6768 = vmatprep.subr.bf16.mxu0 0
  %6769 = vmatpush2.bf16.msra.mxu0 %v5068
  %6770 = vmatprep.subr.bf16.mxu0 0
  %6771 = vmatpush2.bf16.msra.mxu0 %v5067
  %6772 = vmatprep.subr.bf16.mxu0 0
  %6773 = vmatpush2.bf16.msra.mxu0 %v5066
  %6774 = vmatprep.subr.bf16.mxu0 0
  %6775 = vmatpush2.bf16.msra.mxu0 %v5065
  %6776 = vmatprep.subr.bf16.mxu0 0
  %6777 = vmatpush2.bf16.msra.mxu0 %v5064
  %6778 = vmatprep.mubr.bf16.mxu0 %v1857
  %6779 = vmatmul.mubr.bf16.gmra.mxu0 %v1856
  %v6780 = vpop.f32.mrf.mxu0
  %v6781 = vadd.f32 %v6740, %v6780
  %v6782 = vpop.f32.mrf.mxu0
  %v6783 = vpop.f32.mrf.mxu0
  %v6784 = vadd.f32 %v6743, %v6783
  %v6785 = vpop.f32.mrf.mxu0
  %6786 = vdwg.mxu0
  %6787 = vmatprep.subr.bf16.mxu0 0
  %6788 = vmatpush1.bf16.msra.mxu0 %v5079
  %6789 = vmatprep.subr.bf16.mxu0 0
  %6790 = vmatpush1.bf16.msra.mxu0 %v5078
  %6791 = vmatprep.subr.bf16.mxu0 0
  %6792 = vmatpush1.bf16.msra.mxu0 %v5077
  %6793 = vmatprep.subr.bf16.mxu0 0
  %6794 = vmatpush1.bf16.msra.mxu0 %v5076
  %6795 = vmatprep.subr.bf16.mxu0 0
  %6796 = vmatpush1.bf16.msra.mxu0 %v5075
  %6797 = vmatprep.subr.bf16.mxu0 0
  %6798 = vmatpush1.bf16.msra.mxu0 %v5074
  %6799 = vmatprep.subr.bf16.mxu0 0
  %6800 = vmatpush1.bf16.msra.mxu0 %v5073
  %6801 = vmatprep.subr.bf16.mxu0 0
  %6802 = vmatpush1.bf16.msra.mxu0 %v5072
  %6803 = vmatprep.subr.bf16.mxu0 0
  %6804 = vmatpush2.bf16.msra.mxu0 %v5087
  %6805 = vmatprep.subr.bf16.mxu0 0
  %6806 = vmatpush2.bf16.msra.mxu0 %v5086
  %6807 = vmatprep.subr.bf16.mxu0 0
  %6808 = vmatpush2.bf16.msra.mxu0 %v5085
  %6809 = vmatprep.subr.bf16.mxu0 0
  %6810 = vmatpush2.bf16.msra.mxu0 %v5084
  %6811 = vmatprep.subr.bf16.mxu0 0
  %6812 = vmatpush2.bf16.msra.mxu0 %v5083
  %6813 = vmatprep.subr.bf16.mxu0 0
  %6814 = vmatpush2.bf16.msra.mxu0 %v5082
  %6815 = vmatprep.subr.bf16.mxu0 0
  %6816 = vmatpush2.bf16.msra.mxu0 %v5081
  %6817 = vmatprep.subr.bf16.mxu0 0
  %6818 = vmatpush2.bf16.msra.mxu0 %v5080
  %6819 = vmatprep.mubr.bf16.mxu0 %v1859
  %6820 = vmatmul.mubr.bf16.gmra.mxu0 %v1858
  %v6821 = vpop.f32.mrf.mxu0
  %v6822 = vadd.f32 %v6781, %v6821
  %v6823 = vpop.f32.mrf.mxu0
  %v6824 = vpop.f32.mrf.mxu0
  %v6825 = vadd.f32 %v6784, %v6824
  %v6826 = vpop.f32.mrf.mxu0
  %6827 = vdwg.mxu0
  %6828 = vmatprep.subr.bf16.mxu0 0
  %6829 = vmatpush1.bf16.msra.mxu0 %v5095
  %6830 = vmatprep.subr.bf16.mxu0 0
  %6831 = vmatpush1.bf16.msra.mxu0 %v5094
  %6832 = vmatprep.subr.bf16.mxu0 0
  %6833 = vmatpush1.bf16.msra.mxu0 %v5093
  %6834 = vmatprep.subr.bf16.mxu0 0
  %6835 = vmatpush1.bf16.msra.mxu0 %v5092
  %6836 = vmatprep.subr.bf16.mxu0 0
  %6837 = vmatpush1.bf16.msra.mxu0 %v5091
  %6838 = vmatprep.subr.bf16.mxu0 0
  %6839 = vmatpush1.bf16.msra.mxu0 %v5090
  %6840 = vmatprep.subr.bf16.mxu0 0
  %6841 = vmatpush1.bf16.msra.mxu0 %v5089
  %6842 = vmatprep.subr.bf16.mxu0 0
  %6843 = vmatpush1.bf16.msra.mxu0 %v5088
  %6844 = vmatprep.subr.bf16.mxu0 0
  %6845 = vmatpush2.bf16.msra.mxu0 %v5103
  %6846 = vmatprep.subr.bf16.mxu0 0
  %6847 = vmatpush2.bf16.msra.mxu0 %v5102
  %6848 = vmatprep.subr.bf16.mxu0 0
  %6849 = vmatpush2.bf16.msra.mxu0 %v5101
  %6850 = vmatprep.subr.bf16.mxu0 0
  %6851 = vmatpush2.bf16.msra.mxu0 %v5100
  %6852 = vmatprep.subr.bf16.mxu0 0
  %6853 = vmatpush2.bf16.msra.mxu0 %v5099
  %6854 = vmatprep.subr.bf16.mxu0 0
  %6855 = vmatpush2.bf16.msra.mxu0 %v5098
  %6856 = vmatprep.subr.bf16.mxu0 0
  %6857 = vmatpush2.bf16.msra.mxu0 %v5097
  %6858 = vmatprep.subr.bf16.mxu0 0
  %6859 = vmatpush2.bf16.msra.mxu0 %v5096
  %6860 = vmatprep.mubr.bf16.mxu0 %v1861
  %6861 = vmatmul.mubr.bf16.gmra.mxu0 %v1860
  %v6862 = vpop.f32.mrf.mxu0
  %v6863 = vadd.f32 %v6822, %v6862
  %v6864 = vpop.f32.mrf.mxu0
  %v6865 = vpop.f32.mrf.mxu0
  %v6866 = vadd.f32 %v6825, %v6865
  %v6867 = vpop.f32.mrf.mxu0
  %6868 = vdwg.mxu0
  %6869 = vmatprep.subr.bf16.mxu0 0
  %6870 = vmatpush1.bf16.msra.mxu0 %v5111
  %6871 = vmatprep.subr.bf16.mxu0 0
  %6872 = vmatpush1.bf16.msra.mxu0 %v5110
  %6873 = vmatprep.subr.bf16.mxu0 0
  %6874 = vmatpush1.bf16.msra.mxu0 %v5109
  %6875 = vmatprep.subr.bf16.mxu0 0
  %6876 = vmatpush1.bf16.msra.mxu0 %v5108
  %6877 = vmatprep.subr.bf16.mxu0 0
  %6878 = vmatpush1.bf16.msra.mxu0 %v5107
  %6879 = vmatprep.subr.bf16.mxu0 0
  %6880 = vmatpush1.bf16.msra.mxu0 %v5106
  %6881 = vmatprep.subr.bf16.mxu0 0
  %6882 = vmatpush1.bf16.msra.mxu0 %v5105
  %6883 = vmatprep.subr.bf16.mxu0 0
  %6884 = vmatpush1.bf16.msra.mxu0 %v5104
  %6885 = vmatprep.subr.bf16.mxu0 0
  %6886 = vmatpush2.bf16.msra.mxu0 %v5119
  %6887 = vmatprep.subr.bf16.mxu0 0
  %6888 = vmatpush2.bf16.msra.mxu0 %v5118
  %6889 = vmatprep.subr.bf16.mxu0 0
  %6890 = vmatpush2.bf16.msra.mxu0 %v5117
  %6891 = vmatprep.subr.bf16.mxu0 0
  %6892 = vmatpush2.bf16.msra.mxu0 %v5116
  %6893 = vmatprep.subr.bf16.mxu0 0
  %6894 = vmatpush2.bf16.msra.mxu0 %v5115
  %6895 = vmatprep.subr.bf16.mxu0 0
  %6896 = vmatpush2.bf16.msra.mxu0 %v5114
  %6897 = vmatprep.subr.bf16.mxu0 0
  %6898 = vmatpush2.bf16.msra.mxu0 %v5113
  %6899 = vmatprep.subr.bf16.mxu0 0
  %6900 = vmatpush2.bf16.msra.mxu0 %v5112
  %6901 = vmatprep.mubr.bf16.mxu0 %v1863
  %6902 = vmatmul.mubr.bf16.gmra.mxu0 %v1862
  %v6903 = vpop.f32.mrf.mxu0
  %v6904 = vadd.f32 %v6863, %v6903
  %v6905 = vpop.f32.mrf.mxu0
  %v6906 = vpop.f32.mrf.mxu0
  %v6907 = vadd.f32 %v6866, %v6906
  %v6908 = vpop.f32.mrf.mxu0
  %6909 = vdwg.mxu0
  %6910 = vmatprep.subr.bf16.mxu0 0
  %6911 = vmatpush1.bf16.msra.mxu0 %v5127
  %6912 = vmatprep.subr.bf16.mxu0 0
  %6913 = vmatpush1.bf16.msra.mxu0 %v5126
  %6914 = vmatprep.subr.bf16.mxu0 0
  %6915 = vmatpush1.bf16.msra.mxu0 %v5125
  %6916 = vmatprep.subr.bf16.mxu0 0
  %6917 = vmatpush1.bf16.msra.mxu0 %v5124
  %6918 = vmatprep.subr.bf16.mxu0 0
  %6919 = vmatpush1.bf16.msra.mxu0 %v5123
  %6920 = vmatprep.subr.bf16.mxu0 0
  %6921 = vmatpush1.bf16.msra.mxu0 %v5122
  %6922 = vmatprep.subr.bf16.mxu0 0
  %6923 = vmatpush1.bf16.msra.mxu0 %v5121
  %6924 = vmatprep.subr.bf16.mxu0 0
  %6925 = vmatpush1.bf16.msra.mxu0 %v5120
  %6926 = vmatprep.subr.bf16.mxu0 0
  %6927 = vmatpush2.bf16.msra.mxu0 %v5135
  %6928 = vmatprep.subr.bf16.mxu0 0
  %6929 = vmatpush2.bf16.msra.mxu0 %v5134
  %6930 = vmatprep.subr.bf16.mxu0 0
  %6931 = vmatpush2.bf16.msra.mxu0 %v5133
  %6932 = vmatprep.subr.bf16.mxu0 0
  %6933 = vmatpush2.bf16.msra.mxu0 %v5132
  %6934 = vmatprep.subr.bf16.mxu0 0
  %6935 = vmatpush2.bf16.msra.mxu0 %v5131
  %6936 = vmatprep.subr.bf16.mxu0 0
  %6937 = vmatpush2.bf16.msra.mxu0 %v5130
  %6938 = vmatprep.subr.bf16.mxu0 0
  %6939 = vmatpush2.bf16.msra.mxu0 %v5129
  %6940 = vmatprep.subr.bf16.mxu0 0
  %6941 = vmatpush2.bf16.msra.mxu0 %v5128
  %6942 = vmatprep.mubr.bf16.mxu0 %v1865
  %6943 = vmatmul.mubr.bf16.gmra.mxu0 %v1864
  %v6944 = vpop.f32.mrf.mxu0
  %v6945 = vadd.f32 %v6904, %v6944
  %v6946 = vpop.f32.mrf.mxu0
  %v6947 = vpop.f32.mrf.mxu0
  %v6948 = vadd.f32 %v6907, %v6947
  %v6949 = vpop.f32.mrf.mxu0
  %6950 = vdwg.mxu0
  %6951 = vmatprep.subr.bf16.mxu0 0
  %6952 = vmatpush1.bf16.msra.mxu0 %v5143
  %6953 = vmatprep.subr.bf16.mxu0 0
  %6954 = vmatpush1.bf16.msra.mxu0 %v5142
  %6955 = vmatprep.subr.bf16.mxu0 0
  %6956 = vmatpush1.bf16.msra.mxu0 %v5141
  %6957 = vmatprep.subr.bf16.mxu0 0
  %6958 = vmatpush1.bf16.msra.mxu0 %v5140
  %6959 = vmatprep.subr.bf16.mxu0 0
  %6960 = vmatpush1.bf16.msra.mxu0 %v5139
  %6961 = vmatprep.subr.bf16.mxu0 0
  %6962 = vmatpush1.bf16.msra.mxu0 %v5138
  %6963 = vmatprep.subr.bf16.mxu0 0
  %6964 = vmatpush1.bf16.msra.mxu0 %v5137
  %6965 = vmatprep.subr.bf16.mxu0 0
  %6966 = vmatpush1.bf16.msra.mxu0 %v5136
  %6967 = vmatprep.subr.bf16.mxu0 0
  %6968 = vmatpush2.bf16.msra.mxu0 %v5151
  %6969 = vmatprep.subr.bf16.mxu0 0
  %6970 = vmatpush2.bf16.msra.mxu0 %v5150
  %6971 = vmatprep.subr.bf16.mxu0 0
  %6972 = vmatpush2.bf16.msra.mxu0 %v5149
  %6973 = vmatprep.subr.bf16.mxu0 0
  %6974 = vmatpush2.bf16.msra.mxu0 %v5148
  %6975 = vmatprep.subr.bf16.mxu0 0
  %6976 = vmatpush2.bf16.msra.mxu0 %v5147
  %6977 = vmatprep.subr.bf16.mxu0 0
  %6978 = vmatpush2.bf16.msra.mxu0 %v5146
  %6979 = vmatprep.subr.bf16.mxu0 0
  %6980 = vmatpush2.bf16.msra.mxu0 %v5145
  %6981 = vmatprep.subr.bf16.mxu0 0
  %6982 = vmatpush2.bf16.msra.mxu0 %v5144
  %6983 = vmatprep.mubr.bf16.mxu0 %v1867
  %6984 = vmatmul.mubr.bf16.gmra.mxu0 %v1866
  %v6985 = vpop.f32.mrf.mxu0
  %v6986 = vadd.f32 %v6945, %v6985
  %v6987 = vpop.f32.mrf.mxu0
  %v6988 = vpop.f32.mrf.mxu0
  %v6989 = vadd.f32 %v6948, %v6988
  %v6990 = vpop.f32.mrf.mxu0
  %6991 = vdwg.mxu0
  %6992 = vmatprep.subr.bf16.mxu0 0
  %6993 = vmatpush1.bf16.msra.mxu0 %v5159
  %6994 = vmatprep.subr.bf16.mxu0 0
  %6995 = vmatpush1.bf16.msra.mxu0 %v5158
  %6996 = vmatprep.subr.bf16.mxu0 0
  %6997 = vmatpush1.bf16.msra.mxu0 %v5157
  %6998 = vmatprep.subr.bf16.mxu0 0
  %6999 = vmatpush1.bf16.msra.mxu0 %v5156
  %7000 = vmatprep.subr.bf16.mxu0 0
  %7001 = vmatpush1.bf16.msra.mxu0 %v5155
  %7002 = vmatprep.subr.bf16.mxu0 0
  %7003 = vmatpush1.bf16.msra.mxu0 %v5154
  %7004 = vmatprep.subr.bf16.mxu0 0
  %7005 = vmatpush1.bf16.msra.mxu0 %v5153
  %7006 = vmatprep.subr.bf16.mxu0 0
  %7007 = vmatpush1.bf16.msra.mxu0 %v5152
  %7008 = vmatprep.subr.bf16.mxu0 0
  %7009 = vmatpush2.bf16.msra.mxu0 %v5167
  %7010 = vmatprep.subr.bf16.mxu0 0
  %7011 = vmatpush2.bf16.msra.mxu0 %v5166
  %7012 = vmatprep.subr.bf16.mxu0 0
  %7013 = vmatpush2.bf16.msra.mxu0 %v5165
  %7014 = vmatprep.subr.bf16.mxu0 0
  %7015 = vmatpush2.bf16.msra.mxu0 %v5164
  %7016 = vmatprep.subr.bf16.mxu0 0
  %7017 = vmatpush2.bf16.msra.mxu0 %v5163
  %7018 = vmatprep.subr.bf16.mxu0 0
  %7019 = vmatpush2.bf16.msra.mxu0 %v5162
  %7020 = vmatprep.subr.bf16.mxu0 0
  %7021 = vmatpush2.bf16.msra.mxu0 %v5161
  %7022 = vmatprep.subr.bf16.mxu0 0
  %7023 = vmatpush2.bf16.msra.mxu0 %v5160
  %7024 = vmatprep.mubr.bf16.mxu0 %v1869
  %7025 = vmatmul.mubr.bf16.gmra.mxu0 %v1868
  %v7026 = vpop.f32.mrf.mxu0
  %v7027 = vadd.f32 %v6986, %v7026
  %v7028 = vpop.f32.mrf.mxu0
  %v7029 = vpop.f32.mrf.mxu0
  %v7030 = vadd.f32 %v6989, %v7029
  %v7031 = vpop.f32.mrf.mxu0
  %7032 = vdwg.mxu0
  %7033 = vmatprep.subr.bf16.mxu0 0
  %7034 = vmatpush1.bf16.msra.mxu0 %v5175
  %7035 = vmatprep.subr.bf16.mxu0 0
  %7036 = vmatpush1.bf16.msra.mxu0 %v5174
  %7037 = vmatprep.subr.bf16.mxu0 0
  %7038 = vmatpush1.bf16.msra.mxu0 %v5173
  %7039 = vmatprep.subr.bf16.mxu0 0
  %7040 = vmatpush1.bf16.msra.mxu0 %v5172
  %7041 = vmatprep.subr.bf16.mxu0 0
  %7042 = vmatpush1.bf16.msra.mxu0 %v5171
  %7043 = vmatprep.subr.bf16.mxu0 0
  %7044 = vmatpush1.bf16.msra.mxu0 %v5170
  %7045 = vmatprep.subr.bf16.mxu0 0
  %7046 = vmatpush1.bf16.msra.mxu0 %v5169
  %7047 = vmatprep.subr.bf16.mxu0 0
  %7048 = vmatpush1.bf16.msra.mxu0 %v5168
  %7049 = vmatprep.subr.bf16.mxu0 0
  %7050 = vmatpush2.bf16.msra.mxu0 %v5183
  %7051 = vmatprep.subr.bf16.mxu0 0
  %7052 = vmatpush2.bf16.msra.mxu0 %v5182
  %7053 = vmatprep.subr.bf16.mxu0 0
  %7054 = vmatpush2.bf16.msra.mxu0 %v5181
  %7055 = vmatprep.subr.bf16.mxu0 0
  %7056 = vmatpush2.bf16.msra.mxu0 %v5180
  %7057 = vmatprep.subr.bf16.mxu0 0
  %7058 = vmatpush2.bf16.msra.mxu0 %v5179
  %7059 = vmatprep.subr.bf16.mxu0 0
  %7060 = vmatpush2.bf16.msra.mxu0 %v5178
  %7061 = vmatprep.subr.bf16.mxu0 0
  %7062 = vmatpush2.bf16.msra.mxu0 %v5177
  %7063 = vmatprep.subr.bf16.mxu0 0
  %7064 = vmatpush2.bf16.msra.mxu0 %v5176
  %7065 = vmatprep.mubr.bf16.mxu0 %v1871
  %7066 = vmatmul.mubr.bf16.gmra.mxu0 %v1870
  %v7067 = vpop.f32.mrf.mxu0
  %v7068 = vadd.f32 %v7027, %v7067
  %v7069 = vpop.f32.mrf.mxu0
  %v7070 = vpop.f32.mrf.mxu0
  %v7071 = vadd.f32 %v7030, %v7070
  %v7072 = vpop.f32.mrf.mxu0
  %7073 = vdwg.mxu0
  %7074 = vmatprep.subr.bf16.mxu0 0
  %7075 = vmatpush1.bf16.msra.mxu0 %v5191
  %7076 = vmatprep.subr.bf16.mxu0 0
  %7077 = vmatpush1.bf16.msra.mxu0 %v5190
  %7078 = vmatprep.subr.bf16.mxu0 0
  %7079 = vmatpush1.bf16.msra.mxu0 %v5189
  %7080 = vmatprep.subr.bf16.mxu0 0
  %7081 = vmatpush1.bf16.msra.mxu0 %v5188
  %7082 = vmatprep.subr.bf16.mxu0 0
  %7083 = vmatpush1.bf16.msra.mxu0 %v5187
  %7084 = vmatprep.subr.bf16.mxu0 0
  %7085 = vmatpush1.bf16.msra.mxu0 %v5186
  %7086 = vmatprep.subr.bf16.mxu0 0
  %7087 = vmatpush1.bf16.msra.mxu0 %v5185
  %7088 = vmatprep.subr.bf16.mxu0 0
  %7089 = vmatpush1.bf16.msra.mxu0 %v5184
  %7090 = vmatprep.subr.bf16.mxu0 0
  %7091 = vmatpush2.bf16.msra.mxu0 %v5199
  %7092 = vmatprep.subr.bf16.mxu0 0
  %7093 = vmatpush2.bf16.msra.mxu0 %v5198
  %7094 = vmatprep.subr.bf16.mxu0 0
  %7095 = vmatpush2.bf16.msra.mxu0 %v5197
  %7096 = vmatprep.subr.bf16.mxu0 0
  %7097 = vmatpush2.bf16.msra.mxu0 %v5196
  %7098 = vmatprep.subr.bf16.mxu0 0
  %7099 = vmatpush2.bf16.msra.mxu0 %v5195
  %7100 = vmatprep.subr.bf16.mxu0 0
  %7101 = vmatpush2.bf16.msra.mxu0 %v5194
  %7102 = vmatprep.subr.bf16.mxu0 0
  %7103 = vmatpush2.bf16.msra.mxu0 %v5193
  %7104 = vmatprep.subr.bf16.mxu0 0
  %7105 = vmatpush2.bf16.msra.mxu0 %v5192
  %7106 = vmatprep.mubr.bf16.mxu0 %v1873
  %7107 = vmatmul.mubr.bf16.gmra.mxu0 %v1872
  %v7108 = vpop.f32.mrf.mxu0
  %v7109 = vadd.f32 %v7068, %v7108
  %v7110 = vpop.f32.mrf.mxu0
  %v7111 = vpop.f32.mrf.mxu0
  %v7112 = vadd.f32 %v7071, %v7111
  %v7113 = vpop.f32.mrf.mxu0
  %7114 = vdwg.mxu0
  %7115 = vmatprep.subr.bf16.mxu0 0
  %7116 = vmatpush1.bf16.msra.mxu0 %v5207
  %7117 = vmatprep.subr.bf16.mxu0 0
  %7118 = vmatpush1.bf16.msra.mxu0 %v5206
  %7119 = vmatprep.subr.bf16.mxu0 0
  %7120 = vmatpush1.bf16.msra.mxu0 %v5205
  %7121 = vmatprep.subr.bf16.mxu0 0
  %7122 = vmatpush1.bf16.msra.mxu0 %v5204
  %7123 = vmatprep.subr.bf16.mxu0 0
  %7124 = vmatpush1.bf16.msra.mxu0 %v5203
  %7125 = vmatprep.subr.bf16.mxu0 0
  %7126 = vmatpush1.bf16.msra.mxu0 %v5202
  %7127 = vmatprep.subr.bf16.mxu0 0
  %7128 = vmatpush1.bf16.msra.mxu0 %v5201
  %7129 = vmatprep.subr.bf16.mxu0 0
  %7130 = vmatpush1.bf16.msra.mxu0 %v5200
  %7131 = vmatprep.subr.bf16.mxu0 0
  %7132 = vmatpush2.bf16.msra.mxu0 %v5215
  %7133 = vmatprep.subr.bf16.mxu0 0
  %7134 = vmatpush2.bf16.msra.mxu0 %v5214
  %7135 = vmatprep.subr.bf16.mxu0 0
  %7136 = vmatpush2.bf16.msra.mxu0 %v5213
  %7137 = vmatprep.subr.bf16.mxu0 0
  %7138 = vmatpush2.bf16.msra.mxu0 %v5212
  %7139 = vmatprep.subr.bf16.mxu0 0
  %7140 = vmatpush2.bf16.msra.mxu0 %v5211
  %7141 = vmatprep.subr.bf16.mxu0 0
  %7142 = vmatpush2.bf16.msra.mxu0 %v5210
  %7143 = vmatprep.subr.bf16.mxu0 0
  %7144 = vmatpush2.bf16.msra.mxu0 %v5209
  %7145 = vmatprep.subr.bf16.mxu0 0
  %7146 = vmatpush2.bf16.msra.mxu0 %v5208
  %7147 = vmatprep.mubr.bf16.mxu0 %v1875
  %7148 = vmatmul.mubr.bf16.gmra.mxu0 %v1874
  %v7149 = vpop.f32.mrf.mxu0
  %v7150 = vadd.f32 %v7109, %v7149
  %v7151 = vpop.f32.mrf.mxu0
  %v7152 = vpop.f32.mrf.mxu0
  %v7153 = vadd.f32 %v7112, %v7152
  %v7154 = vpop.f32.mrf.mxu0
  %7155 = vdwg.mxu0
  %7156 = vmatprep.subr.bf16.mxu0 0
  %7157 = vmatpush1.bf16.msra.mxu0 %v5223
  %7158 = vmatprep.subr.bf16.mxu0 0
  %7159 = vmatpush1.bf16.msra.mxu0 %v5222
  %7160 = vmatprep.subr.bf16.mxu0 0
  %7161 = vmatpush1.bf16.msra.mxu0 %v5221
  %7162 = vmatprep.subr.bf16.mxu0 0
  %7163 = vmatpush1.bf16.msra.mxu0 %v5220
  %7164 = vmatprep.subr.bf16.mxu0 0
  %7165 = vmatpush1.bf16.msra.mxu0 %v5219
  %7166 = vmatprep.subr.bf16.mxu0 0
  %7167 = vmatpush1.bf16.msra.mxu0 %v5218
  %7168 = vmatprep.subr.bf16.mxu0 0
  %7169 = vmatpush1.bf16.msra.mxu0 %v5217
  %7170 = vmatprep.subr.bf16.mxu0 0
  %7171 = vmatpush1.bf16.msra.mxu0 %v5216
  %7172 = vmatprep.subr.bf16.mxu0 0
  %7173 = vmatpush2.bf16.msra.mxu0 %v5231
  %7174 = vmatprep.subr.bf16.mxu0 0
  %7175 = vmatpush2.bf16.msra.mxu0 %v5230
  %7176 = vmatprep.subr.bf16.mxu0 0
  %7177 = vmatpush2.bf16.msra.mxu0 %v5229
  %7178 = vmatprep.subr.bf16.mxu0 0
  %7179 = vmatpush2.bf16.msra.mxu0 %v5228
  %7180 = vmatprep.subr.bf16.mxu0 0
  %7181 = vmatpush2.bf16.msra.mxu0 %v5227
  %7182 = vmatprep.subr.bf16.mxu0 0
  %7183 = vmatpush2.bf16.msra.mxu0 %v5226
  %7184 = vmatprep.subr.bf16.mxu0 0
  %7185 = vmatpush2.bf16.msra.mxu0 %v5225
  %7186 = vmatprep.subr.bf16.mxu0 0
  %7187 = vmatpush2.bf16.msra.mxu0 %v5224
  %7188 = vmatprep.mubr.bf16.mxu0 %v1877
  %7189 = vmatmul.mubr.bf16.gmra.mxu0 %v1876
  %v7190 = vpop.f32.mrf.mxu0
  %v7191 = vadd.f32 %v7150, %v7190
  %v7192 = vpop.f32.mrf.mxu0
  %v7193 = vpop.f32.mrf.mxu0
  %v7194 = vadd.f32 %v7153, %v7193
  %v7195 = vpop.f32.mrf.mxu0
  %7196 = vdwg.mxu0
  %7197 = vmatprep.subr.bf16.mxu0 0
  %7198 = vmatpush1.bf16.msra.mxu0 %v5239
  %7199 = vmatprep.subr.bf16.mxu0 0
  %7200 = vmatpush1.bf16.msra.mxu0 %v5238
  %7201 = vmatprep.subr.bf16.mxu0 0
  %7202 = vmatpush1.bf16.msra.mxu0 %v5237
  %7203 = vmatprep.subr.bf16.mxu0 0
  %7204 = vmatpush1.bf16.msra.mxu0 %v5236
  %7205 = vmatprep.subr.bf16.mxu0 0
  %7206 = vmatpush1.bf16.msra.mxu0 %v5235
  %7207 = vmatprep.subr.bf16.mxu0 0
  %7208 = vmatpush1.bf16.msra.mxu0 %v5234
  %7209 = vmatprep.subr.bf16.mxu0 0
  %7210 = vmatpush1.bf16.msra.mxu0 %v5233
  %7211 = vmatprep.subr.bf16.mxu0 0
  %7212 = vmatpush1.bf16.msra.mxu0 %v5232
  %7213 = vmatprep.subr.bf16.mxu0 0
  %7214 = vmatpush2.bf16.msra.mxu0 %v5247
  %7215 = vmatprep.subr.bf16.mxu0 0
  %7216 = vmatpush2.bf16.msra.mxu0 %v5246
  %7217 = vmatprep.subr.bf16.mxu0 0
  %7218 = vmatpush2.bf16.msra.mxu0 %v5245
  %7219 = vmatprep.subr.bf16.mxu0 0
  %7220 = vmatpush2.bf16.msra.mxu0 %v5244
  %7221 = vmatprep.subr.bf16.mxu0 0
  %7222 = vmatpush2.bf16.msra.mxu0 %v5243
  %7223 = vmatprep.subr.bf16.mxu0 0
  %7224 = vmatpush2.bf16.msra.mxu0 %v5242
  %7225 = vmatprep.subr.bf16.mxu0 0
  %7226 = vmatpush2.bf16.msra.mxu0 %v5241
  %7227 = vmatprep.subr.bf16.mxu0 0
  %7228 = vmatpush2.bf16.msra.mxu0 %v5240
  %7229 = vmatprep.mubr.bf16.mxu0 %v1879
  %7230 = vmatmul.mubr.bf16.gmra.mxu0 %v1878
  %v7231 = vpop.f32.mrf.mxu0
  %v7232 = vadd.f32 %v7191, %v7231
  %v7233 = vpop.f32.mrf.mxu0
  %v7234 = vpop.f32.mrf.mxu0
  %v7235 = vadd.f32 %v7194, %v7234
  %v7236 = vpop.f32.mrf.mxu0
  %7237 = vdwg.mxu0
  %7238 = vmatprep.subr.bf16.mxu0 0
  %7239 = vmatpush1.bf16.msra.mxu0 %v5255
  %7240 = vmatprep.subr.bf16.mxu0 0
  %7241 = vmatpush1.bf16.msra.mxu0 %v5254
  %7242 = vmatprep.subr.bf16.mxu0 0
  %7243 = vmatpush1.bf16.msra.mxu0 %v5253
  %7244 = vmatprep.subr.bf16.mxu0 0
  %7245 = vmatpush1.bf16.msra.mxu0 %v5252
  %7246 = vmatprep.subr.bf16.mxu0 0
  %7247 = vmatpush1.bf16.msra.mxu0 %v5251
  %7248 = vmatprep.subr.bf16.mxu0 0
  %7249 = vmatpush1.bf16.msra.mxu0 %v5250
  %7250 = vmatprep.subr.bf16.mxu0 0
  %7251 = vmatpush1.bf16.msra.mxu0 %v5249
  %7252 = vmatprep.subr.bf16.mxu0 0
  %7253 = vmatpush1.bf16.msra.mxu0 %v5248
  %7254 = vmatprep.subr.bf16.mxu0 0
  %7255 = vmatpush2.bf16.msra.mxu0 %v5263
  %7256 = vmatprep.subr.bf16.mxu0 0
  %7257 = vmatpush2.bf16.msra.mxu0 %v5262
  %7258 = vmatprep.subr.bf16.mxu0 0
  %7259 = vmatpush2.bf16.msra.mxu0 %v5261
  %7260 = vmatprep.subr.bf16.mxu0 0
  %7261 = vmatpush2.bf16.msra.mxu0 %v5260
  %7262 = vmatprep.subr.bf16.mxu0 0
  %7263 = vmatpush2.bf16.msra.mxu0 %v5259
  %7264 = vmatprep.subr.bf16.mxu0 0
  %7265 = vmatpush2.bf16.msra.mxu0 %v5258
  %7266 = vmatprep.subr.bf16.mxu0 0
  %7267 = vmatpush2.bf16.msra.mxu0 %v5257
  %7268 = vmatprep.subr.bf16.mxu0 0
  %7269 = vmatpush2.bf16.msra.mxu0 %v5256
  %7270 = vmatprep.mubr.bf16.mxu0 %v1881
  %7271 = vmatmul.mubr.bf16.gmra.mxu0 %v1880
  %v7272 = vpop.f32.mrf.mxu0
  %v7273 = vadd.f32 %v7232, %v7272
  %v7274 = vpop.f32.mrf.mxu0
  %v7275 = vpop.f32.mrf.mxu0
  %v7276 = vadd.f32 %v7235, %v7275
  %v7277 = vpop.f32.mrf.mxu0
  %7278 = vdwg.mxu0
  %7279 = vmatprep.subr.bf16.mxu0 0
  %7280 = vmatpush1.bf16.msra.mxu0 %v5271
  %7281 = vmatprep.subr.bf16.mxu0 0
  %7282 = vmatpush1.bf16.msra.mxu0 %v5270
  %7283 = vmatprep.subr.bf16.mxu0 0
  %7284 = vmatpush1.bf16.msra.mxu0 %v5269
  %7285 = vmatprep.subr.bf16.mxu0 0
  %7286 = vmatpush1.bf16.msra.mxu0 %v5268
  %7287 = vmatprep.subr.bf16.mxu0 0
  %7288 = vmatpush1.bf16.msra.mxu0 %v5267
  %7289 = vmatprep.subr.bf16.mxu0 0
  %7290 = vmatpush1.bf16.msra.mxu0 %v5266
  %7291 = vmatprep.subr.bf16.mxu0 0
  %7292 = vmatpush1.bf16.msra.mxu0 %v5265
  %7293 = vmatprep.subr.bf16.mxu0 0
  %7294 = vmatpush1.bf16.msra.mxu0 %v5264
  %7295 = vmatprep.subr.bf16.mxu0 0
  %7296 = vmatpush2.bf16.msra.mxu0 %v5279
  %7297 = vmatprep.subr.bf16.mxu0 0
  %7298 = vmatpush2.bf16.msra.mxu0 %v5278
  %7299 = vmatprep.subr.bf16.mxu0 0
  %7300 = vmatpush2.bf16.msra.mxu0 %v5277
  %7301 = vmatprep.subr.bf16.mxu0 0
  %7302 = vmatpush2.bf16.msra.mxu0 %v5276
  %7303 = vmatprep.subr.bf16.mxu0 0
  %7304 = vmatpush2.bf16.msra.mxu0 %v5275
  %7305 = vmatprep.subr.bf16.mxu0 0
  %7306 = vmatpush2.bf16.msra.mxu0 %v5274
  %7307 = vmatprep.subr.bf16.mxu0 0
  %7308 = vmatpush2.bf16.msra.mxu0 %v5273
  %7309 = vmatprep.subr.bf16.mxu0 0
  %7310 = vmatpush2.bf16.msra.mxu0 %v5272
  %7311 = vmatprep.mubr.bf16.mxu0 %v1883
  %7312 = vmatmul.mubr.bf16.gmra.mxu0 %v1882
  %v7313 = vpop.f32.mrf.mxu0
  %v7314 = vadd.f32 %v7273, %v7313
  %v7315 = vpop.f32.mrf.mxu0
  %v7316 = vpop.f32.mrf.mxu0
  %v7317 = vadd.f32 %v7276, %v7316
  %v7318 = vpop.f32.mrf.mxu0
  %7319 = vdwg.mxu0
  %7320 = vmatprep.subr.bf16.mxu0 0
  %7321 = vmatpush1.bf16.msra.mxu0 %v5287
  %7322 = vmatprep.subr.bf16.mxu0 0
  %7323 = vmatpush1.bf16.msra.mxu0 %v5286
  %7324 = vmatprep.subr.bf16.mxu0 0
  %7325 = vmatpush1.bf16.msra.mxu0 %v5285
  %7326 = vmatprep.subr.bf16.mxu0 0
  %7327 = vmatpush1.bf16.msra.mxu0 %v5284
  %7328 = vmatprep.subr.bf16.mxu0 0
  %7329 = vmatpush1.bf16.msra.mxu0 %v5283
  %7330 = vmatprep.subr.bf16.mxu0 0
  %7331 = vmatpush1.bf16.msra.mxu0 %v5282
  %7332 = vmatprep.subr.bf16.mxu0 0
  %7333 = vmatpush1.bf16.msra.mxu0 %v5281
  %7334 = vmatprep.subr.bf16.mxu0 0
  %7335 = vmatpush1.bf16.msra.mxu0 %v5280
  %7336 = vmatprep.subr.bf16.mxu0 0
  %7337 = vmatpush2.bf16.msra.mxu0 %v5295
  %7338 = vmatprep.subr.bf16.mxu0 0
  %7339 = vmatpush2.bf16.msra.mxu0 %v5294
  %7340 = vmatprep.subr.bf16.mxu0 0
  %7341 = vmatpush2.bf16.msra.mxu0 %v5293
  %7342 = vmatprep.subr.bf16.mxu0 0
  %7343 = vmatpush2.bf16.msra.mxu0 %v5292
  %7344 = vmatprep.subr.bf16.mxu0 0
  %7345 = vmatpush2.bf16.msra.mxu0 %v5291
  %7346 = vmatprep.subr.bf16.mxu0 0
  %7347 = vmatpush2.bf16.msra.mxu0 %v5290
  %7348 = vmatprep.subr.bf16.mxu0 0
  %7349 = vmatpush2.bf16.msra.mxu0 %v5289
  %7350 = vmatprep.subr.bf16.mxu0 0
  %7351 = vmatpush2.bf16.msra.mxu0 %v5288
  %7352 = vmatprep.mubr.bf16.mxu0 %v1885
  %7353 = vmatmul.mubr.bf16.gmra.mxu0 %v1884
  %v7354 = vpop.f32.mrf.mxu0
  %v7355 = vadd.f32 %v7314, %v7354
  %v7356 = vpop.f32.mrf.mxu0
  %v7357 = vpop.f32.mrf.mxu0
  %v7358 = vadd.f32 %v7317, %v7357
  %v7359 = vpop.f32.mrf.mxu0
  %7360 = vdwg.mxu0
  %7361 = vmatprep.subr.bf16.mxu0 0
  %7362 = vmatpush1.bf16.msra.mxu0 %v5303
  %7363 = vmatprep.subr.bf16.mxu0 0
  %7364 = vmatpush1.bf16.msra.mxu0 %v5302
  %7365 = vmatprep.subr.bf16.mxu0 0
  %7366 = vmatpush1.bf16.msra.mxu0 %v5301
  %7367 = vmatprep.subr.bf16.mxu0 0
  %7368 = vmatpush1.bf16.msra.mxu0 %v5300
  %7369 = vmatprep.subr.bf16.mxu0 0
  %7370 = vmatpush1.bf16.msra.mxu0 %v5299
  %7371 = vmatprep.subr.bf16.mxu0 0
  %7372 = vmatpush1.bf16.msra.mxu0 %v5298
  %7373 = vmatprep.subr.bf16.mxu0 0
  %7374 = vmatpush1.bf16.msra.mxu0 %v5297
  %7375 = vmatprep.subr.bf16.mxu0 0
  %7376 = vmatpush1.bf16.msra.mxu0 %v5296
  %7377 = vmatprep.subr.bf16.mxu0 0
  %7378 = vmatpush2.bf16.msra.mxu0 %v5311
  %7379 = vmatprep.subr.bf16.mxu0 0
  %7380 = vmatpush2.bf16.msra.mxu0 %v5310
  %7381 = vmatprep.subr.bf16.mxu0 0
  %7382 = vmatpush2.bf16.msra.mxu0 %v5309
  %7383 = vmatprep.subr.bf16.mxu0 0
  %7384 = vmatpush2.bf16.msra.mxu0 %v5308
  %7385 = vmatprep.subr.bf16.mxu0 0
  %7386 = vmatpush2.bf16.msra.mxu0 %v5307
  %7387 = vmatprep.subr.bf16.mxu0 0
  %7388 = vmatpush2.bf16.msra.mxu0 %v5306
  %7389 = vmatprep.subr.bf16.mxu0 0
  %7390 = vmatpush2.bf16.msra.mxu0 %v5305
  %7391 = vmatprep.subr.bf16.mxu0 0
  %7392 = vmatpush2.bf16.msra.mxu0 %v5304
  %7393 = vmatprep.mubr.bf16.mxu0 %v1887
  %7394 = vmatmul.mubr.bf16.gmra.mxu0 %v1886
  %v7395 = vpop.f32.mrf.mxu0
  %v7396 = vadd.f32 %v7355, %v7395
  %v7397 = vpop.f32.mrf.mxu0
  %v7398 = vpop.f32.mrf.mxu0
  %v7399 = vadd.f32 %v7358, %v7398
  %v7400 = vpop.f32.mrf.mxu0
  %7401 = vdwg.mxu0
  %7402 = vmatprep.subr.bf16.mxu0 0
  %7403 = vmatpush1.bf16.msra.mxu0 %v5319
  %7404 = vmatprep.subr.bf16.mxu0 0
  %7405 = vmatpush1.bf16.msra.mxu0 %v5318
  %7406 = vmatprep.subr.bf16.mxu0 0
  %7407 = vmatpush1.bf16.msra.mxu0 %v5317
  %7408 = vmatprep.subr.bf16.mxu0 0
  %7409 = vmatpush1.bf16.msra.mxu0 %v5316
  %7410 = vmatprep.subr.bf16.mxu0 0
  %7411 = vmatpush1.bf16.msra.mxu0 %v5315
  %7412 = vmatprep.subr.bf16.mxu0 0
  %7413 = vmatpush1.bf16.msra.mxu0 %v5314
  %7414 = vmatprep.subr.bf16.mxu0 0
  %7415 = vmatpush1.bf16.msra.mxu0 %v5313
  %7416 = vmatprep.subr.bf16.mxu0 0
  %7417 = vmatpush1.bf16.msra.mxu0 %v5312
  %7418 = vmatprep.subr.bf16.mxu0 0
  %7419 = vmatpush2.bf16.msra.mxu0 %v5327
  %7420 = vmatprep.subr.bf16.mxu0 0
  %7421 = vmatpush2.bf16.msra.mxu0 %v5326
  %7422 = vmatprep.subr.bf16.mxu0 0
  %7423 = vmatpush2.bf16.msra.mxu0 %v5325
  %7424 = vmatprep.subr.bf16.mxu0 0
  %7425 = vmatpush2.bf16.msra.mxu0 %v5324
  %7426 = vmatprep.subr.bf16.mxu0 0
  %7427 = vmatpush2.bf16.msra.mxu0 %v5323
  %7428 = vmatprep.subr.bf16.mxu0 0
  %7429 = vmatpush2.bf16.msra.mxu0 %v5322
  %7430 = vmatprep.subr.bf16.mxu0 0
  %7431 = vmatpush2.bf16.msra.mxu0 %v5321
  %7432 = vmatprep.subr.bf16.mxu0 0
  %7433 = vmatpush2.bf16.msra.mxu0 %v5320
  %7434 = vmatprep.mubr.bf16.mxu0 %v1889
  %7435 = vmatmul.mubr.bf16.gmra.mxu0 %v1888
  %v7436 = vpop.f32.mrf.mxu0
  %v7437 = vadd.f32 %v7396, %v7436
  %v7438 = vpop.f32.mrf.mxu0
  %v7439 = vpop.f32.mrf.mxu0
  %v7440 = vadd.f32 %v7399, %v7439
  %v7441 = vpop.f32.mrf.mxu0
  %7442 = vdwg.mxu0
  %7443 = vmatprep.subr.bf16.mxu0 0
  %7444 = vmatpush1.bf16.msra.mxu0 %v5335
  %7445 = vmatprep.subr.bf16.mxu0 0
  %7446 = vmatpush1.bf16.msra.mxu0 %v5334
  %7447 = vmatprep.subr.bf16.mxu0 0
  %7448 = vmatpush1.bf16.msra.mxu0 %v5333
  %7449 = vmatprep.subr.bf16.mxu0 0
  %7450 = vmatpush1.bf16.msra.mxu0 %v5332
  %7451 = vmatprep.subr.bf16.mxu0 0
  %7452 = vmatpush1.bf16.msra.mxu0 %v5331
  %7453 = vmatprep.subr.bf16.mxu0 0
  %7454 = vmatpush1.bf16.msra.mxu0 %v5330
  %7455 = vmatprep.subr.bf16.mxu0 0
  %7456 = vmatpush1.bf16.msra.mxu0 %v5329
  %7457 = vmatprep.subr.bf16.mxu0 0
  %7458 = vmatpush1.bf16.msra.mxu0 %v5328
  %7459 = vmatprep.subr.bf16.mxu0 0
  %7460 = vmatpush2.bf16.msra.mxu0 %v5343
  %7461 = vmatprep.subr.bf16.mxu0 0
  %7462 = vmatpush2.bf16.msra.mxu0 %v5342
  %7463 = vmatprep.subr.bf16.mxu0 0
  %7464 = vmatpush2.bf16.msra.mxu0 %v5341
  %7465 = vmatprep.subr.bf16.mxu0 0
  %7466 = vmatpush2.bf16.msra.mxu0 %v5340
  %7467 = vmatprep.subr.bf16.mxu0 0
  %7468 = vmatpush2.bf16.msra.mxu0 %v5339
  %7469 = vmatprep.subr.bf16.mxu0 0
  %7470 = vmatpush2.bf16.msra.mxu0 %v5338
  %7471 = vmatprep.subr.bf16.mxu0 0
  %7472 = vmatpush2.bf16.msra.mxu0 %v5337
  %7473 = vmatprep.subr.bf16.mxu0 0
  %7474 = vmatpush2.bf16.msra.mxu0 %v5336
  %7475 = vmatprep.mubr.bf16.mxu0 %v1891
  %7476 = vmatmul.mubr.bf16.gmra.mxu0 %v1890
  %v7477 = vpop.f32.mrf.mxu0
  %v7478 = vadd.f32 %v7437, %v7477
  %v7479 = vpop.f32.mrf.mxu0
  %v7480 = vpop.f32.mrf.mxu0
  %v7481 = vadd.f32 %v7440, %v7480
  %v7482 = vpop.f32.mrf.mxu0
  %7483 = vdwg.mxu0
  %7484 = vmatprep.subr.bf16.mxu0 0
  %7485 = vmatpush1.bf16.msra.mxu0 %v5351
  %7486 = vmatprep.subr.bf16.mxu0 0
  %7487 = vmatpush1.bf16.msra.mxu0 %v5350
  %7488 = vmatprep.subr.bf16.mxu0 0
  %7489 = vmatpush1.bf16.msra.mxu0 %v5349
  %7490 = vmatprep.subr.bf16.mxu0 0
  %7491 = vmatpush1.bf16.msra.mxu0 %v5348
  %7492 = vmatprep.subr.bf16.mxu0 0
  %7493 = vmatpush1.bf16.msra.mxu0 %v5347
  %7494 = vmatprep.subr.bf16.mxu0 0
  %7495 = vmatpush1.bf16.msra.mxu0 %v5346
  %7496 = vmatprep.subr.bf16.mxu0 0
  %7497 = vmatpush1.bf16.msra.mxu0 %v5345
  %7498 = vmatprep.subr.bf16.mxu0 0
  %7499 = vmatpush1.bf16.msra.mxu0 %v5344
  %7500 = vmatprep.subr.bf16.mxu0 0
  %7501 = vmatpush2.bf16.msra.mxu0 %v5359
  %7502 = vmatprep.subr.bf16.mxu0 0
  %7503 = vmatpush2.bf16.msra.mxu0 %v5358
  %7504 = vmatprep.subr.bf16.mxu0 0
  %7505 = vmatpush2.bf16.msra.mxu0 %v5357
  %7506 = vmatprep.subr.bf16.mxu0 0
  %7507 = vmatpush2.bf16.msra.mxu0 %v5356
  %7508 = vmatprep.subr.bf16.mxu0 0
  %7509 = vmatpush2.bf16.msra.mxu0 %v5355
  %7510 = vmatprep.subr.bf16.mxu0 0
  %7511 = vmatpush2.bf16.msra.mxu0 %v5354
  %7512 = vmatprep.subr.bf16.mxu0 0
  %7513 = vmatpush2.bf16.msra.mxu0 %v5353
  %7514 = vmatprep.subr.bf16.mxu0 0
  %7515 = vmatpush2.bf16.msra.mxu0 %v5352
  %7516 = vmatprep.mubr.bf16.mxu0 %v1893
  %7517 = vmatmul.mubr.bf16.gmra.mxu0 %v1892
  %v7518 = vpop.f32.mrf.mxu0
  %v7519 = vadd.f32 %v7478, %v7518
  %v7520 = vpop.f32.mrf.mxu0
  %v7521 = vpop.f32.mrf.mxu0
  %v7522 = vadd.f32 %v7481, %v7521
  %v7523 = vpop.f32.mrf.mxu0
  %7524 = vdwg.mxu0
  %7525 = vmatprep.subr.bf16.mxu0 0
  %7526 = vmatpush1.bf16.msra.mxu0 %v5367
  %7527 = vmatprep.subr.bf16.mxu0 0
  %7528 = vmatpush1.bf16.msra.mxu0 %v5366
  %7529 = vmatprep.subr.bf16.mxu0 0
  %7530 = vmatpush1.bf16.msra.mxu0 %v5365
  %7531 = vmatprep.subr.bf16.mxu0 0
  %7532 = vmatpush1.bf16.msra.mxu0 %v5364
  %7533 = vmatprep.subr.bf16.mxu0 0
  %7534 = vmatpush1.bf16.msra.mxu0 %v5363
  %7535 = vmatprep.subr.bf16.mxu0 0
  %7536 = vmatpush1.bf16.msra.mxu0 %v5362
  %7537 = vmatprep.subr.bf16.mxu0 0
  %7538 = vmatpush1.bf16.msra.mxu0 %v5361
  %7539 = vmatprep.subr.bf16.mxu0 0
  %7540 = vmatpush1.bf16.msra.mxu0 %v5360
  %7541 = vmatprep.subr.bf16.mxu0 0
  %7542 = vmatpush2.bf16.msra.mxu0 %v5375
  %7543 = vmatprep.subr.bf16.mxu0 0
  %7544 = vmatpush2.bf16.msra.mxu0 %v5374
  %7545 = vmatprep.subr.bf16.mxu0 0
  %7546 = vmatpush2.bf16.msra.mxu0 %v5373
  %7547 = vmatprep.subr.bf16.mxu0 0
  %7548 = vmatpush2.bf16.msra.mxu0 %v5372
  %7549 = vmatprep.subr.bf16.mxu0 0
  %7550 = vmatpush2.bf16.msra.mxu0 %v5371
  %7551 = vmatprep.subr.bf16.mxu0 0
  %7552 = vmatpush2.bf16.msra.mxu0 %v5370
  %7553 = vmatprep.subr.bf16.mxu0 0
  %7554 = vmatpush2.bf16.msra.mxu0 %v5369
  %7555 = vmatprep.subr.bf16.mxu0 0
  %7556 = vmatpush2.bf16.msra.mxu0 %v5368
  %7557 = vmatprep.mubr.bf16.mxu0 %v1895
  %7558 = vmatmul.mubr.bf16.gmra.mxu0 %v1894
  %v7559 = vpop.f32.mrf.mxu0
  %v7560 = vadd.f32 %v7519, %v7559
  %v7561 = vpop.f32.mrf.mxu0
  %v7562 = vpop.f32.mrf.mxu0
  %v7563 = vadd.f32 %v7522, %v7562
  %v7564 = vpop.f32.mrf.mxu0
  %7565 = vdwg.mxu0
  %7566 = vmatprep.subr.bf16.mxu0 0
  %7567 = vmatpush1.bf16.msra.mxu0 %v5383
  %7568 = vmatprep.subr.bf16.mxu0 0
  %7569 = vmatpush1.bf16.msra.mxu0 %v5382
  %7570 = vmatprep.subr.bf16.mxu0 0
  %7571 = vmatpush1.bf16.msra.mxu0 %v5381
  %7572 = vmatprep.subr.bf16.mxu0 0
  %7573 = vmatpush1.bf16.msra.mxu0 %v5380
  %7574 = vmatprep.subr.bf16.mxu0 0
  %7575 = vmatpush1.bf16.msra.mxu0 %v5379
  %7576 = vmatprep.subr.bf16.mxu0 0
  %7577 = vmatpush1.bf16.msra.mxu0 %v5378
  %7578 = vmatprep.subr.bf16.mxu0 0
  %7579 = vmatpush1.bf16.msra.mxu0 %v5377
  %7580 = vmatprep.subr.bf16.mxu0 0
  %7581 = vmatpush1.bf16.msra.mxu0 %v5376
  %7582 = vmatprep.subr.bf16.mxu0 0
  %7583 = vmatpush2.bf16.msra.mxu0 %v5391
  %7584 = vmatprep.subr.bf16.mxu0 0
  %7585 = vmatpush2.bf16.msra.mxu0 %v5390
  %7586 = vmatprep.subr.bf16.mxu0 0
  %7587 = vmatpush2.bf16.msra.mxu0 %v5389
  %7588 = vmatprep.subr.bf16.mxu0 0
  %7589 = vmatpush2.bf16.msra.mxu0 %v5388
  %7590 = vmatprep.subr.bf16.mxu0 0
  %7591 = vmatpush2.bf16.msra.mxu0 %v5387
  %7592 = vmatprep.subr.bf16.mxu0 0
  %7593 = vmatpush2.bf16.msra.mxu0 %v5386
  %7594 = vmatprep.subr.bf16.mxu0 0
  %7595 = vmatpush2.bf16.msra.mxu0 %v5385
  %7596 = vmatprep.subr.bf16.mxu0 0
  %7597 = vmatpush2.bf16.msra.mxu0 %v5384
  %7598 = vmatprep.mubr.bf16.mxu0 %v1897
  %7599 = vmatmul.mubr.bf16.gmra.mxu0 %v1896
  %v7600 = vpop.f32.mrf.mxu0
  %v7601 = vadd.f32 %v7560, %v7600
  %v7602 = vpop.f32.mrf.mxu0
  %v7603 = vpop.f32.mrf.mxu0
  %v7604 = vadd.f32 %v7563, %v7603
  %v7605 = vpop.f32.mrf.mxu0
  %7606 = vdwg.mxu0
  %7607 = vmatprep.subr.bf16.mxu0 0
  %7608 = vmatpush1.bf16.msra.mxu0 %v5399
  %7609 = vmatprep.subr.bf16.mxu0 0
  %7610 = vmatpush1.bf16.msra.mxu0 %v5398
  %7611 = vmatprep.subr.bf16.mxu0 0
  %7612 = vmatpush1.bf16.msra.mxu0 %v5397
  %7613 = vmatprep.subr.bf16.mxu0 0
  %7614 = vmatpush1.bf16.msra.mxu0 %v5396
  %7615 = vmatprep.subr.bf16.mxu0 0
  %7616 = vmatpush1.bf16.msra.mxu0 %v5395
  %7617 = vmatprep.subr.bf16.mxu0 0
  %7618 = vmatpush1.bf16.msra.mxu0 %v5394
  %7619 = vmatprep.subr.bf16.mxu0 0
  %7620 = vmatpush1.bf16.msra.mxu0 %v5393
  %7621 = vmatprep.subr.bf16.mxu0 0
  %7622 = vmatpush1.bf16.msra.mxu0 %v5392
  %7623 = vmatprep.subr.bf16.mxu0 0
  %7624 = vmatpush2.bf16.msra.mxu0 %v5407
  %7625 = vmatprep.subr.bf16.mxu0 0
  %7626 = vmatpush2.bf16.msra.mxu0 %v5406
  %7627 = vmatprep.subr.bf16.mxu0 0
  %7628 = vmatpush2.bf16.msra.mxu0 %v5405
  %7629 = vmatprep.subr.bf16.mxu0 0
  %7630 = vmatpush2.bf16.msra.mxu0 %v5404
  %7631 = vmatprep.subr.bf16.mxu0 0
  %7632 = vmatpush2.bf16.msra.mxu0 %v5403
  %7633 = vmatprep.subr.bf16.mxu0 0
  %7634 = vmatpush2.bf16.msra.mxu0 %v5402
  %7635 = vmatprep.subr.bf16.mxu0 0
  %7636 = vmatpush2.bf16.msra.mxu0 %v5401
  %7637 = vmatprep.subr.bf16.mxu0 0
  %7638 = vmatpush2.bf16.msra.mxu0 %v5400
  %7639 = vmatprep.mubr.bf16.mxu0 %v1899
  %7640 = vmatmul.mubr.bf16.gmra.mxu0 %v1898
  %v7641 = vpop.f32.mrf.mxu0
  %v7642 = vadd.f32 %v7601, %v7641
  %v7643 = vpop.f32.mrf.mxu0
  %v7644 = vpop.f32.mrf.mxu0
  %v7645 = vadd.f32 %v7604, %v7644
  %v7646 = vpop.f32.mrf.mxu0
  %7647 = vdwg.mxu0
  %7648 = vmatprep.subr.bf16.mxu0 0
  %7649 = vmatpush1.bf16.msra.mxu0 %v5415
  %7650 = vmatprep.subr.bf16.mxu0 0
  %7651 = vmatpush1.bf16.msra.mxu0 %v5414
  %7652 = vmatprep.subr.bf16.mxu0 0
  %7653 = vmatpush1.bf16.msra.mxu0 %v5413
  %7654 = vmatprep.subr.bf16.mxu0 0
  %7655 = vmatpush1.bf16.msra.mxu0 %v5412
  %7656 = vmatprep.subr.bf16.mxu0 0
  %7657 = vmatpush1.bf16.msra.mxu0 %v5411
  %7658 = vmatprep.subr.bf16.mxu0 0
  %7659 = vmatpush1.bf16.msra.mxu0 %v5410
  %7660 = vmatprep.subr.bf16.mxu0 0
  %7661 = vmatpush1.bf16.msra.mxu0 %v5409
  %7662 = vmatprep.subr.bf16.mxu0 0
  %7663 = vmatpush1.bf16.msra.mxu0 %v5408
  %7664 = vmatprep.subr.bf16.mxu0 0
  %7665 = vmatpush2.bf16.msra.mxu0 %v5423
  %7666 = vmatprep.subr.bf16.mxu0 0
  %7667 = vmatpush2.bf16.msra.mxu0 %v5422
  %7668 = vmatprep.subr.bf16.mxu0 0
  %7669 = vmatpush2.bf16.msra.mxu0 %v5421
  %7670 = vmatprep.subr.bf16.mxu0 0
  %7671 = vmatpush2.bf16.msra.mxu0 %v5420
  %7672 = vmatprep.subr.bf16.mxu0 0
  %7673 = vmatpush2.bf16.msra.mxu0 %v5419
  %7674 = vmatprep.subr.bf16.mxu0 0
  %7675 = vmatpush2.bf16.msra.mxu0 %v5418
  %7676 = vmatprep.subr.bf16.mxu0 0
  %7677 = vmatpush2.bf16.msra.mxu0 %v5417
  %7678 = vmatprep.subr.bf16.mxu0 0
  %7679 = vmatpush2.bf16.msra.mxu0 %v5416
  %7680 = vmatprep.mubr.bf16.mxu0 %v1901
  %7681 = vmatmul.mubr.bf16.gmra.mxu0 %v1900
  %v7682 = vpop.f32.mrf.mxu0
  %v7683 = vadd.f32 %v7642, %v7682
  %v7684 = vpop.f32.mrf.mxu0
  %v7685 = vpop.f32.mrf.mxu0
  %v7686 = vadd.f32 %v7645, %v7685
  %v7687 = vpop.f32.mrf.mxu0
  %7688 = vdwg.mxu0
  %7689 = vmatprep.subr.bf16.mxu0 0
  %7690 = vmatpush1.bf16.msra.mxu0 %v5431
  %7691 = vmatprep.subr.bf16.mxu0 0
  %7692 = vmatpush1.bf16.msra.mxu0 %v5430
  %7693 = vmatprep.subr.bf16.mxu0 0
  %7694 = vmatpush1.bf16.msra.mxu0 %v5429
  %7695 = vmatprep.subr.bf16.mxu0 0
  %7696 = vmatpush1.bf16.msra.mxu0 %v5428
  %7697 = vmatprep.subr.bf16.mxu0 0
  %7698 = vmatpush1.bf16.msra.mxu0 %v5427
  %7699 = vmatprep.subr.bf16.mxu0 0
  %7700 = vmatpush1.bf16.msra.mxu0 %v5426
  %7701 = vmatprep.subr.bf16.mxu0 0
  %7702 = vmatpush1.bf16.msra.mxu0 %v5425
  %7703 = vmatprep.subr.bf16.mxu0 0
  %7704 = vmatpush1.bf16.msra.mxu0 %v5424
  %7705 = vmatprep.subr.bf16.mxu0 0
  %7706 = vmatpush2.bf16.msra.mxu0 %v5439
  %7707 = vmatprep.subr.bf16.mxu0 0
  %7708 = vmatpush2.bf16.msra.mxu0 %v5438
  %7709 = vmatprep.subr.bf16.mxu0 0
  %7710 = vmatpush2.bf16.msra.mxu0 %v5437
  %7711 = vmatprep.subr.bf16.mxu0 0
  %7712 = vmatpush2.bf16.msra.mxu0 %v5436
  %7713 = vmatprep.subr.bf16.mxu0 0
  %7714 = vmatpush2.bf16.msra.mxu0 %v5435
  %7715 = vmatprep.subr.bf16.mxu0 0
  %7716 = vmatpush2.bf16.msra.mxu0 %v5434
  %7717 = vmatprep.subr.bf16.mxu0 0
  %7718 = vmatpush2.bf16.msra.mxu0 %v5433
  %7719 = vmatprep.subr.bf16.mxu0 0
  %7720 = vmatpush2.bf16.msra.mxu0 %v5432
  %7721 = vmatprep.mubr.bf16.mxu0 %v1903
  %7722 = vmatmul.mubr.bf16.gmra.mxu0 %v1902
  %v7723 = vpop.f32.mrf.mxu0
  %v7724 = vadd.f32 %v7683, %v7723
  %v7725 = vpop.f32.mrf.mxu0
  %v7726 = vpop.f32.mrf.mxu0
  %v7727 = vadd.f32 %v7686, %v7726
  %v7728 = vpop.f32.mrf.mxu0
  %7729 = vdwg.mxu0
  %7730 = vmatprep.subr.bf16.mxu0 0
  %7731 = vmatpush1.bf16.msra.mxu0 %v5447
  %7732 = vmatprep.subr.bf16.mxu0 0
  %7733 = vmatpush1.bf16.msra.mxu0 %v5446
  %7734 = vmatprep.subr.bf16.mxu0 0
  %7735 = vmatpush1.bf16.msra.mxu0 %v5445
  %7736 = vmatprep.subr.bf16.mxu0 0
  %7737 = vmatpush1.bf16.msra.mxu0 %v5444
  %7738 = vmatprep.subr.bf16.mxu0 0
  %7739 = vmatpush1.bf16.msra.mxu0 %v5443
  %7740 = vmatprep.subr.bf16.mxu0 0
  %7741 = vmatpush1.bf16.msra.mxu0 %v5442
  %7742 = vmatprep.subr.bf16.mxu0 0
  %7743 = vmatpush1.bf16.msra.mxu0 %v5441
  %7744 = vmatprep.subr.bf16.mxu0 0
  %7745 = vmatpush1.bf16.msra.mxu0 %v5440
  %7746 = vmatprep.subr.bf16.mxu0 0
  %7747 = vmatpush2.bf16.msra.mxu0 %v5455
  %7748 = vmatprep.subr.bf16.mxu0 0
  %7749 = vmatpush2.bf16.msra.mxu0 %v5454
  %7750 = vmatprep.subr.bf16.mxu0 0
  %7751 = vmatpush2.bf16.msra.mxu0 %v5453
  %7752 = vmatprep.subr.bf16.mxu0 0
  %7753 = vmatpush2.bf16.msra.mxu0 %v5452
  %7754 = vmatprep.subr.bf16.mxu0 0
  %7755 = vmatpush2.bf16.msra.mxu0 %v5451
  %7756 = vmatprep.subr.bf16.mxu0 0
  %7757 = vmatpush2.bf16.msra.mxu0 %v5450
  %7758 = vmatprep.subr.bf16.mxu0 0
  %7759 = vmatpush2.bf16.msra.mxu0 %v5449
  %7760 = vmatprep.subr.bf16.mxu0 0
  %7761 = vmatpush2.bf16.msra.mxu0 %v5448
  %7762 = vmatprep.mubr.bf16.mxu0 %v1905
  %7763 = vmatmul.mubr.bf16.gmra.mxu0 %v1904
  %v7764 = vpop.f32.mrf.mxu0
  %v7765 = vadd.f32 %v7724, %v7764
  %v7766 = vpop.f32.mrf.mxu0
  %v7767 = vpop.f32.mrf.mxu0
  %v7768 = vadd.f32 %v7727, %v7767
  %v7769 = vpop.f32.mrf.mxu0
  %7770 = vdwg.mxu0
  %7771 = vmatprep.subr.bf16.mxu0 0
  %7772 = vmatpush1.bf16.msra.mxu0 %v5463
  %7773 = vmatprep.subr.bf16.mxu0 0
  %7774 = vmatpush1.bf16.msra.mxu0 %v5462
  %7775 = vmatprep.subr.bf16.mxu0 0
  %7776 = vmatpush1.bf16.msra.mxu0 %v5461
  %7777 = vmatprep.subr.bf16.mxu0 0
  %7778 = vmatpush1.bf16.msra.mxu0 %v5460
  %7779 = vmatprep.subr.bf16.mxu0 0
  %7780 = vmatpush1.bf16.msra.mxu0 %v5459
  %7781 = vmatprep.subr.bf16.mxu0 0
  %7782 = vmatpush1.bf16.msra.mxu0 %v5458
  %7783 = vmatprep.subr.bf16.mxu0 0
  %7784 = vmatpush1.bf16.msra.mxu0 %v5457
  %7785 = vmatprep.subr.bf16.mxu0 0
  %7786 = vmatpush1.bf16.msra.mxu0 %v5456
  %7787 = vmatprep.subr.bf16.mxu0 0
  %7788 = vmatpush2.bf16.msra.mxu0 %v5471
  %7789 = vmatprep.subr.bf16.mxu0 0
  %7790 = vmatpush2.bf16.msra.mxu0 %v5470
  %7791 = vmatprep.subr.bf16.mxu0 0
  %7792 = vmatpush2.bf16.msra.mxu0 %v5469
  %7793 = vmatprep.subr.bf16.mxu0 0
  %7794 = vmatpush2.bf16.msra.mxu0 %v5468
  %7795 = vmatprep.subr.bf16.mxu0 0
  %7796 = vmatpush2.bf16.msra.mxu0 %v5467
  %7797 = vmatprep.subr.bf16.mxu0 0
  %7798 = vmatpush2.bf16.msra.mxu0 %v5466
  %7799 = vmatprep.subr.bf16.mxu0 0
  %7800 = vmatpush2.bf16.msra.mxu0 %v5465
  %7801 = vmatprep.subr.bf16.mxu0 0
  %7802 = vmatpush2.bf16.msra.mxu0 %v5464
  %7803 = vmatprep.mubr.bf16.mxu0 %v1907
  %7804 = vmatmul.mubr.bf16.gmra.mxu0 %v1906
  %v7805 = vpop.f32.mrf.mxu0
  %v7806 = vadd.f32 %v7765, %v7805
  %v7807 = vpop.f32.mrf.mxu0
  %v7808 = vpop.f32.mrf.mxu0
  %v7809 = vadd.f32 %v7768, %v7808
  %v7810 = vpop.f32.mrf.mxu0
  %7811 = vdwg.mxu0
  %7812 = vmatprep.subr.bf16.mxu0 0
  %7813 = vmatpush1.bf16.msra.mxu0 %v5479
  %7814 = vmatprep.subr.bf16.mxu0 0
  %7815 = vmatpush1.bf16.msra.mxu0 %v5478
  %7816 = vmatprep.subr.bf16.mxu0 0
  %7817 = vmatpush1.bf16.msra.mxu0 %v5477
  %7818 = vmatprep.subr.bf16.mxu0 0
  %7819 = vmatpush1.bf16.msra.mxu0 %v5476
  %7820 = vmatprep.subr.bf16.mxu0 0
  %7821 = vmatpush1.bf16.msra.mxu0 %v5475
  %7822 = vmatprep.subr.bf16.mxu0 0
  %7823 = vmatpush1.bf16.msra.mxu0 %v5474
  %7824 = vmatprep.subr.bf16.mxu0 0
  %7825 = vmatpush1.bf16.msra.mxu0 %v5473
  %7826 = vmatprep.subr.bf16.mxu0 0
  %7827 = vmatpush1.bf16.msra.mxu0 %v5472
  %7828 = vmatprep.subr.bf16.mxu0 0
  %7829 = vmatpush2.bf16.msra.mxu0 %v5487
  %7830 = vmatprep.subr.bf16.mxu0 0
  %7831 = vmatpush2.bf16.msra.mxu0 %v5486
  %7832 = vmatprep.subr.bf16.mxu0 0
  %7833 = vmatpush2.bf16.msra.mxu0 %v5485
  %7834 = vmatprep.subr.bf16.mxu0 0
  %7835 = vmatpush2.bf16.msra.mxu0 %v5484
  %7836 = vmatprep.subr.bf16.mxu0 0
  %7837 = vmatpush2.bf16.msra.mxu0 %v5483
  %7838 = vmatprep.subr.bf16.mxu0 0
  %7839 = vmatpush2.bf16.msra.mxu0 %v5482
  %7840 = vmatprep.subr.bf16.mxu0 0
  %7841 = vmatpush2.bf16.msra.mxu0 %v5481
  %7842 = vmatprep.subr.bf16.mxu0 0
  %7843 = vmatpush2.bf16.msra.mxu0 %v5480
  %7844 = vmatprep.mubr.bf16.mxu0 %v1909
  %7845 = vmatmul.mubr.bf16.gmra.mxu0 %v1908
  %v7846 = vpop.f32.mrf.mxu0
  %v7847 = vadd.f32 %v7806, %v7846
  %v7848 = vpop.f32.mrf.mxu0
  %v7849 = vpop.f32.mrf.mxu0
  %v7850 = vadd.f32 %v7809, %v7849
  %v7851 = vpop.f32.mrf.mxu0
  %7852 = vdwg.mxu0
  %7853 = vmatprep.subr.bf16.mxu0 0
  %7854 = vmatpush1.bf16.msra.mxu0 %v5495
  %7855 = vmatprep.subr.bf16.mxu0 0
  %7856 = vmatpush1.bf16.msra.mxu0 %v5494
  %7857 = vmatprep.subr.bf16.mxu0 0
  %7858 = vmatpush1.bf16.msra.mxu0 %v5493
  %7859 = vmatprep.subr.bf16.mxu0 0
  %7860 = vmatpush1.bf16.msra.mxu0 %v5492
  %7861 = vmatprep.subr.bf16.mxu0 0
  %7862 = vmatpush1.bf16.msra.mxu0 %v5491
  %7863 = vmatprep.subr.bf16.mxu0 0
  %7864 = vmatpush1.bf16.msra.mxu0 %v5490
  %7865 = vmatprep.subr.bf16.mxu0 0
  %7866 = vmatpush1.bf16.msra.mxu0 %v5489
  %7867 = vmatprep.subr.bf16.mxu0 0
  %7868 = vmatpush1.bf16.msra.mxu0 %v5488
  %7869 = vmatprep.subr.bf16.mxu0 0
  %7870 = vmatpush2.bf16.msra.mxu0 %v5503
  %7871 = vmatprep.subr.bf16.mxu0 0
  %7872 = vmatpush2.bf16.msra.mxu0 %v5502
  %7873 = vmatprep.subr.bf16.mxu0 0
  %7874 = vmatpush2.bf16.msra.mxu0 %v5501
  %7875 = vmatprep.subr.bf16.mxu0 0
  %7876 = vmatpush2.bf16.msra.mxu0 %v5500
  %7877 = vmatprep.subr.bf16.mxu0 0
  %7878 = vmatpush2.bf16.msra.mxu0 %v5499
  %7879 = vmatprep.subr.bf16.mxu0 0
  %7880 = vmatpush2.bf16.msra.mxu0 %v5498
  %7881 = vmatprep.subr.bf16.mxu0 0
  %7882 = vmatpush2.bf16.msra.mxu0 %v5497
  %7883 = vmatprep.subr.bf16.mxu0 0
  %7884 = vmatpush2.bf16.msra.mxu0 %v5496
  %7885 = vmatprep.mubr.bf16.mxu0 %v1911
  %7886 = vmatmul.mubr.bf16.gmra.mxu0 %v1910
  %v7887 = vpop.f32.mrf.mxu0
  %v7888 = vadd.f32 %v7847, %v7887
  %v7889 = vpop.f32.mrf.mxu0
  %v7890 = vpop.f32.mrf.mxu0
  %v7891 = vadd.f32 %v7850, %v7890
  %v7892 = vpop.f32.mrf.mxu0
  %7893 = vdwg.mxu0
  %7894 = vmatprep.subr.bf16.mxu0 0
  %7895 = vmatpush1.bf16.msra.mxu0 %v5511
  %7896 = vmatprep.subr.bf16.mxu0 0
  %7897 = vmatpush1.bf16.msra.mxu0 %v5510
  %7898 = vmatprep.subr.bf16.mxu0 0
  %7899 = vmatpush1.bf16.msra.mxu0 %v5509
  %7900 = vmatprep.subr.bf16.mxu0 0
  %7901 = vmatpush1.bf16.msra.mxu0 %v5508
  %7902 = vmatprep.subr.bf16.mxu0 0
  %7903 = vmatpush1.bf16.msra.mxu0 %v5507
  %7904 = vmatprep.subr.bf16.mxu0 0
  %7905 = vmatpush1.bf16.msra.mxu0 %v5506
  %7906 = vmatprep.subr.bf16.mxu0 0
  %7907 = vmatpush1.bf16.msra.mxu0 %v5505
  %7908 = vmatprep.subr.bf16.mxu0 0
  %7909 = vmatpush1.bf16.msra.mxu0 %v5504
  %7910 = vmatprep.subr.bf16.mxu0 0
  %7911 = vmatpush2.bf16.msra.mxu0 %v5519
  %7912 = vmatprep.subr.bf16.mxu0 0
  %7913 = vmatpush2.bf16.msra.mxu0 %v5518
  %7914 = vmatprep.subr.bf16.mxu0 0
  %7915 = vmatpush2.bf16.msra.mxu0 %v5517
  %7916 = vmatprep.subr.bf16.mxu0 0
  %7917 = vmatpush2.bf16.msra.mxu0 %v5516
  %7918 = vmatprep.subr.bf16.mxu0 0
  %7919 = vmatpush2.bf16.msra.mxu0 %v5515
  %7920 = vmatprep.subr.bf16.mxu0 0
  %7921 = vmatpush2.bf16.msra.mxu0 %v5514
  %7922 = vmatprep.subr.bf16.mxu0 0
  %7923 = vmatpush2.bf16.msra.mxu0 %v5513
  %7924 = vmatprep.subr.bf16.mxu0 0
  %7925 = vmatpush2.bf16.msra.mxu0 %v5512
  %7926 = vmatprep.mubr.bf16.mxu0 %v1913
  %7927 = vmatmul.mubr.bf16.gmra.mxu0 %v1912
  %v7928 = vpop.f32.mrf.mxu0
  %v7929 = vadd.f32 %v7888, %v7928
  %v7930 = vpop.f32.mrf.mxu0
  %v7931 = vpop.f32.mrf.mxu0
  %v7932 = vadd.f32 %v7891, %v7931
  %v7933 = vpop.f32.mrf.mxu0
  %7934 = vdwg.mxu0
  %7935 = vmatprep.subr.bf16.mxu0 0
  %7936 = vmatpush1.bf16.msra.mxu0 %v5527
  %7937 = vmatprep.subr.bf16.mxu0 0
  %7938 = vmatpush1.bf16.msra.mxu0 %v5526
  %7939 = vmatprep.subr.bf16.mxu0 0
  %7940 = vmatpush1.bf16.msra.mxu0 %v5525
  %7941 = vmatprep.subr.bf16.mxu0 0
  %7942 = vmatpush1.bf16.msra.mxu0 %v5524
  %7943 = vmatprep.subr.bf16.mxu0 0
  %7944 = vmatpush1.bf16.msra.mxu0 %v5523
  %7945 = vmatprep.subr.bf16.mxu0 0
  %7946 = vmatpush1.bf16.msra.mxu0 %v5522
  %7947 = vmatprep.subr.bf16.mxu0 0
  %7948 = vmatpush1.bf16.msra.mxu0 %v5521
  %7949 = vmatprep.subr.bf16.mxu0 0
  %7950 = vmatpush1.bf16.msra.mxu0 %v5520
  %7951 = vmatprep.subr.bf16.mxu0 0
  %7952 = vmatpush2.bf16.msra.mxu0 %v5535
  %7953 = vmatprep.subr.bf16.mxu0 0
  %7954 = vmatpush2.bf16.msra.mxu0 %v5534
  %7955 = vmatprep.subr.bf16.mxu0 0
  %7956 = vmatpush2.bf16.msra.mxu0 %v5533
  %7957 = vmatprep.subr.bf16.mxu0 0
  %7958 = vmatpush2.bf16.msra.mxu0 %v5532
  %7959 = vmatprep.subr.bf16.mxu0 0
  %7960 = vmatpush2.bf16.msra.mxu0 %v5531
  %7961 = vmatprep.subr.bf16.mxu0 0
  %7962 = vmatpush2.bf16.msra.mxu0 %v5530
  %7963 = vmatprep.subr.bf16.mxu0 0
  %7964 = vmatpush2.bf16.msra.mxu0 %v5529
  %7965 = vmatprep.subr.bf16.mxu0 0
  %7966 = vmatpush2.bf16.msra.mxu0 %v5528
  %7967 = vmatprep.mubr.bf16.mxu0 %v1915
  %7968 = vmatmul.mubr.bf16.gmra.mxu0 %v1914
  %v7969 = vpop.f32.mrf.mxu0
  %v7970 = vadd.f32 %v7929, %v7969
  %v7971 = vpop.f32.mrf.mxu0
  %v7972 = vpop.f32.mrf.mxu0
  %v7973 = vadd.f32 %v7932, %v7972
  %v7974 = vpop.f32.mrf.mxu0
  %7975 = vdwg.mxu0
  %7976 = vmatprep.subr.bf16.mxu0 0
  %7977 = vmatpush1.bf16.msra.mxu0 %v5543
  %7978 = vmatprep.subr.bf16.mxu0 0
  %7979 = vmatpush1.bf16.msra.mxu0 %v5542
  %7980 = vmatprep.subr.bf16.mxu0 0
  %7981 = vmatpush1.bf16.msra.mxu0 %v5541
  %7982 = vmatprep.subr.bf16.mxu0 0
  %7983 = vmatpush1.bf16.msra.mxu0 %v5540
  %7984 = vmatprep.subr.bf16.mxu0 0
  %7985 = vmatpush1.bf16.msra.mxu0 %v5539
  %7986 = vmatprep.subr.bf16.mxu0 0
  %7987 = vmatpush1.bf16.msra.mxu0 %v5538
  %7988 = vmatprep.subr.bf16.mxu0 0
  %7989 = vmatpush1.bf16.msra.mxu0 %v5537
  %7990 = vmatprep.subr.bf16.mxu0 0
  %7991 = vmatpush1.bf16.msra.mxu0 %v5536
  %7992 = vmatprep.subr.bf16.mxu0 0
  %7993 = vmatpush2.bf16.msra.mxu0 %v5551
  %7994 = vmatprep.subr.bf16.mxu0 0
  %7995 = vmatpush2.bf16.msra.mxu0 %v5550
  %7996 = vmatprep.subr.bf16.mxu0 0
  %7997 = vmatpush2.bf16.msra.mxu0 %v5549
  %7998 = vmatprep.subr.bf16.mxu0 0
  %7999 = vmatpush2.bf16.msra.mxu0 %v5548
  %8000 = vmatprep.subr.bf16.mxu0 0
  %8001 = vmatpush2.bf16.msra.mxu0 %v5547
  %8002 = vmatprep.subr.bf16.mxu0 0
  %8003 = vmatpush2.bf16.msra.mxu0 %v5546
  %8004 = vmatprep.subr.bf16.mxu0 0
  %8005 = vmatpush2.bf16.msra.mxu0 %v5545
  %8006 = vmatprep.subr.bf16.mxu0 0
  %8007 = vmatpush2.bf16.msra.mxu0 %v5544
  %8008 = vmatprep.mubr.bf16.mxu0 %v1917
  %8009 = vmatmul.mubr.bf16.gmra.mxu0 %v1916
  %v8010 = vpop.f32.mrf.mxu0
  %v8011 = vadd.f32 %v7970, %v8010
  %v8012 = vpop.f32.mrf.mxu0
  %v8013 = vpop.f32.mrf.mxu0
  %v8014 = vadd.f32 %v7973, %v8013
  %v8015 = vpop.f32.mrf.mxu0
  %8016 = vdwg.mxu0
  %8017 = vmatprep.subr.bf16.mxu0 0
  %8018 = vmatpush1.bf16.msra.mxu0 %v5559
  %8019 = vmatprep.subr.bf16.mxu0 0
  %8020 = vmatpush1.bf16.msra.mxu0 %v5558
  %8021 = vmatprep.subr.bf16.mxu0 0
  %8022 = vmatpush1.bf16.msra.mxu0 %v5557
  %8023 = vmatprep.subr.bf16.mxu0 0
  %8024 = vmatpush1.bf16.msra.mxu0 %v5556
  %8025 = vmatprep.subr.bf16.mxu0 0
  %8026 = vmatpush1.bf16.msra.mxu0 %v5555
  %8027 = vmatprep.subr.bf16.mxu0 0
  %8028 = vmatpush1.bf16.msra.mxu0 %v5554
  %8029 = vmatprep.subr.bf16.mxu0 0
  %8030 = vmatpush1.bf16.msra.mxu0 %v5553
  %8031 = vmatprep.subr.bf16.mxu0 0
  %8032 = vmatpush1.bf16.msra.mxu0 %v5552
  %8033 = vmatprep.subr.bf16.mxu0 0
  %8034 = vmatpush2.bf16.msra.mxu0 %v5567
  %8035 = vmatprep.subr.bf16.mxu0 0
  %8036 = vmatpush2.bf16.msra.mxu0 %v5566
  %8037 = vmatprep.subr.bf16.mxu0 0
  %8038 = vmatpush2.bf16.msra.mxu0 %v5565
  %8039 = vmatprep.subr.bf16.mxu0 0
  %8040 = vmatpush2.bf16.msra.mxu0 %v5564
  %8041 = vmatprep.subr.bf16.mxu0 0
  %8042 = vmatpush2.bf16.msra.mxu0 %v5563
  %8043 = vmatprep.subr.bf16.mxu0 0
  %8044 = vmatpush2.bf16.msra.mxu0 %v5562
  %8045 = vmatprep.subr.bf16.mxu0 0
  %8046 = vmatpush2.bf16.msra.mxu0 %v5561
  %8047 = vmatprep.subr.bf16.mxu0 0
  %8048 = vmatpush2.bf16.msra.mxu0 %v5560
  %8049 = vmatprep.mubr.bf16.mxu0 %v1919
  %8050 = vmatmul.mubr.bf16.gmra.mxu0 %v1918
  %v8051 = vpop.f32.mrf.mxu0
  %v8052 = vadd.f32 %v8011, %v8051
  %v8053 = vpop.f32.mrf.mxu0
  %v8054 = vpop.f32.mrf.mxu0
  %v8055 = vadd.f32 %v8014, %v8054
  %v8056 = vpop.f32.mrf.mxu0
  %8057 = vdwg.mxu0
  %8058 = vmatprep.subr.bf16.mxu0 0
  %8059 = vmatpush1.bf16.msra.mxu0 %v5575
  %8060 = vmatprep.subr.bf16.mxu0 0
  %8061 = vmatpush1.bf16.msra.mxu0 %v5574
  %8062 = vmatprep.subr.bf16.mxu0 0
  %8063 = vmatpush1.bf16.msra.mxu0 %v5573
  %8064 = vmatprep.subr.bf16.mxu0 0
  %8065 = vmatpush1.bf16.msra.mxu0 %v5572
  %8066 = vmatprep.subr.bf16.mxu0 0
  %8067 = vmatpush1.bf16.msra.mxu0 %v5571
  %8068 = vmatprep.subr.bf16.mxu0 0
  %8069 = vmatpush1.bf16.msra.mxu0 %v5570
  %8070 = vmatprep.subr.bf16.mxu0 0
  %8071 = vmatpush1.bf16.msra.mxu0 %v5569
  %8072 = vmatprep.subr.bf16.mxu0 0
  %8073 = vmatpush1.bf16.msra.mxu0 %v5568
  %8074 = vmatprep.subr.bf16.mxu0 0
  %8075 = vmatpush2.bf16.msra.mxu0 %v5583
  %8076 = vmatprep.subr.bf16.mxu0 0
  %8077 = vmatpush2.bf16.msra.mxu0 %v5582
  %8078 = vmatprep.subr.bf16.mxu0 0
  %8079 = vmatpush2.bf16.msra.mxu0 %v5581
  %8080 = vmatprep.subr.bf16.mxu0 0
  %8081 = vmatpush2.bf16.msra.mxu0 %v5580
  %8082 = vmatprep.subr.bf16.mxu0 0
  %8083 = vmatpush2.bf16.msra.mxu0 %v5579
  %8084 = vmatprep.subr.bf16.mxu0 0
  %8085 = vmatpush2.bf16.msra.mxu0 %v5578
  %8086 = vmatprep.subr.bf16.mxu0 0
  %8087 = vmatpush2.bf16.msra.mxu0 %v5577
  %8088 = vmatprep.subr.bf16.mxu0 0
  %8089 = vmatpush2.bf16.msra.mxu0 %v5576
  %8090 = vmatprep.mubr.bf16.mxu0 %v1921
  %8091 = vmatmul.mubr.bf16.gmra.mxu0 %v1920
  %v8092 = vpop.f32.mrf.mxu0
  %v8093 = vadd.f32 %v8052, %v8092
  %v8094 = vpop.f32.mrf.mxu0
  %v8095 = vpop.f32.mrf.mxu0
  %v8096 = vadd.f32 %v8055, %v8095
  %v8097 = vpop.f32.mrf.mxu0
  %8098 = vdwg.mxu0
  %8099 = vmatprep.subr.bf16.mxu0 0
  %8100 = vmatpush1.bf16.msra.mxu0 %v5591
  %8101 = vmatprep.subr.bf16.mxu0 0
  %8102 = vmatpush1.bf16.msra.mxu0 %v5590
  %8103 = vmatprep.subr.bf16.mxu0 0
  %8104 = vmatpush1.bf16.msra.mxu0 %v5589
  %8105 = vmatprep.subr.bf16.mxu0 0
  %8106 = vmatpush1.bf16.msra.mxu0 %v5588
  %8107 = vmatprep.subr.bf16.mxu0 0
  %8108 = vmatpush1.bf16.msra.mxu0 %v5587
  %8109 = vmatprep.subr.bf16.mxu0 0
  %8110 = vmatpush1.bf16.msra.mxu0 %v5586
  %8111 = vmatprep.subr.bf16.mxu0 0
  %8112 = vmatpush1.bf16.msra.mxu0 %v5585
  %8113 = vmatprep.subr.bf16.mxu0 0
  %8114 = vmatpush1.bf16.msra.mxu0 %v5584
  %8115 = vmatprep.subr.bf16.mxu0 0
  %8116 = vmatpush2.bf16.msra.mxu0 %v5599
  %8117 = vmatprep.subr.bf16.mxu0 0
  %8118 = vmatpush2.bf16.msra.mxu0 %v5598
  %8119 = vmatprep.subr.bf16.mxu0 0
  %8120 = vmatpush2.bf16.msra.mxu0 %v5597
  %8121 = vmatprep.subr.bf16.mxu0 0
  %8122 = vmatpush2.bf16.msra.mxu0 %v5596
  %8123 = vmatprep.subr.bf16.mxu0 0
  %8124 = vmatpush2.bf16.msra.mxu0 %v5595
  %8125 = vmatprep.subr.bf16.mxu0 0
  %8126 = vmatpush2.bf16.msra.mxu0 %v5594
  %8127 = vmatprep.subr.bf16.mxu0 0
  %8128 = vmatpush2.bf16.msra.mxu0 %v5593
  %8129 = vmatprep.subr.bf16.mxu0 0
  %8130 = vmatpush2.bf16.msra.mxu0 %v5592
  %8131 = vmatprep.mubr.bf16.mxu0 %v1923
  %8132 = vmatmul.mubr.bf16.gmra.mxu0 %v1922
  %v8133 = vpop.f32.mrf.mxu0
  %v8134 = vadd.f32 %v8093, %v8133
  %v8135 = vpop.f32.mrf.mxu0
  %v8136 = vpop.f32.mrf.mxu0
  %v8137 = vadd.f32 %v8096, %v8136
  %v8138 = vpop.f32.mrf.mxu0
  %8139 = vdwg.mxu0
  %8140 = vmatprep.subr.bf16.mxu0 0
  %8141 = vmatpush1.bf16.msra.mxu0 %v5607
  %8142 = vmatprep.subr.bf16.mxu0 0
  %8143 = vmatpush1.bf16.msra.mxu0 %v5606
  %8144 = vmatprep.subr.bf16.mxu0 0
  %8145 = vmatpush1.bf16.msra.mxu0 %v5605
  %8146 = vmatprep.subr.bf16.mxu0 0
  %8147 = vmatpush1.bf16.msra.mxu0 %v5604
  %8148 = vmatprep.subr.bf16.mxu0 0
  %8149 = vmatpush1.bf16.msra.mxu0 %v5603
  %8150 = vmatprep.subr.bf16.mxu0 0
  %8151 = vmatpush1.bf16.msra.mxu0 %v5602
  %8152 = vmatprep.subr.bf16.mxu0 0
  %8153 = vmatpush1.bf16.msra.mxu0 %v5601
  %8154 = vmatprep.subr.bf16.mxu0 0
  %8155 = vmatpush1.bf16.msra.mxu0 %v5600
  %8156 = vmatprep.subr.bf16.mxu0 0
  %8157 = vmatpush2.bf16.msra.mxu0 %v5615
  %8158 = vmatprep.subr.bf16.mxu0 0
  %8159 = vmatpush2.bf16.msra.mxu0 %v5614
  %8160 = vmatprep.subr.bf16.mxu0 0
  %8161 = vmatpush2.bf16.msra.mxu0 %v5613
  %8162 = vmatprep.subr.bf16.mxu0 0
  %8163 = vmatpush2.bf16.msra.mxu0 %v5612
  %8164 = vmatprep.subr.bf16.mxu0 0
  %8165 = vmatpush2.bf16.msra.mxu0 %v5611
  %8166 = vmatprep.subr.bf16.mxu0 0
  %8167 = vmatpush2.bf16.msra.mxu0 %v5610
  %8168 = vmatprep.subr.bf16.mxu0 0
  %8169 = vmatpush2.bf16.msra.mxu0 %v5609
  %8170 = vmatprep.subr.bf16.mxu0 0
  %8171 = vmatpush2.bf16.msra.mxu0 %v5608
  %8172 = vmatprep.mubr.bf16.mxu0 %v1925
  %8173 = vmatmul.mubr.bf16.gmra.mxu0 %v1924
  %v8174 = vpop.f32.mrf.mxu0
  %v8175 = vadd.f32 %v8134, %v8174
  %v8176 = vpop.f32.mrf.mxu0
  %v8177 = vpop.f32.mrf.mxu0
  %v8178 = vadd.f32 %v8137, %v8177
  %v8179 = vpop.f32.mrf.mxu0
  %8180 = vdwg.mxu0
  %v8181 = vmax.f32 %v8175, 0.0
  %v8182 = vmax.f32 %v8178, 0.0
  %v8183 = vpack.c.bf16 %v8182, %v8181
  %v8184 = vld [vmem:[%s3] sm:$0xf]
  %v8185 = vld [vmem:[%s3 + $0x4] sm:$0xf]
  %v8186 = vld [vmem:[%s3 + $0x8] sm:$0xf]
  %v8187 = vld [vmem:[%s3 + $0xc] sm:$0xf]
  %v8188 = vld [vmem:[%s3 + $0x10] sm:$0xf]
  %v8189 = vld [vmem:[%s3 + $0x14] sm:$0xf]
  %v8190 = vld [vmem:[%s3 + $0x18] sm:$0xf]
  %v8191 = vld [vmem:[%s3 + $0x1c] sm:$0xf]
  %v8192 = vld [vmem:[%s3 + $0x20] sm:$0xf]
  %v8193 = vld [vmem:[%s3 + $0x24] sm:$0xf]
  %v8194 = vld [vmem:[%s3 + $0x28] sm:$0xf]
  %v8195 = vld [vmem:[%s3 + $0x2c] sm:$0xf]
  %v8196 = vld [vmem:[%s3 + $0x30] sm:$0xf]
  %v8197 = vld [vmem:[%s3 + $0x34] sm:$0xf]
  %v8198 = vld [vmem:[%s3 + $0x38] sm:$0xf]
  %v8199 = vld [vmem:[%s3 + $0x3c] sm:$0xf]
  %v8200 = vld [vmem:[%s4] sm:$0x1]
  %v8202 = vlaneseq
  %v8203 = vshrl.u32 %v8202, 7
  %v8204 = vsub.s32 0, %v8203
  %v8205 = vrot.slane %v8200, %v8204
  %v8223 = vunpack.c.l.b16 %v8184
  %v8224 = vunpack.c.l.b16 %v8185
  %v8225 = vunpack.c.l.b16 %v8186
  %v8226 = vunpack.c.l.b16 %v8187
  %v8227 = vunpack.c.l.b16 %v8188
  %v8228 = vunpack.c.l.b16 %v8189
  %v8229 = vunpack.c.l.b16 %v8190
  %v8230 = vunpack.c.l.b16 %v8191
  %v8231 = vunpack.c.l.b16 %v8192
  %v8232 = vunpack.c.l.b16 %v8193
  %v8233 = vunpack.c.l.b16 %v8194
  %v8234 = vunpack.c.l.b16 %v8195
  %v8235 = vunpack.c.l.b16 %v8196
  %v8236 = vunpack.c.l.b16 %v8197
  %v8237 = vunpack.c.l.b16 %v8198
  %v8238 = vunpack.c.l.b16 %v8199
  %v8239 = vpack.c.b16 %v8224, %v8223
  %v8240 = vpack.c.b16 %v8226, %v8225
  %v8241 = vpack.c.b16 %v8228, %v8227
  %v8242 = vpack.c.b16 %v8230, %v8229
  %v8243 = vpack.c.b16 %v8232, %v8231
  %v8244 = vpack.c.b16 %v8234, %v8233
  %v8245 = vpack.c.b16 %v8236, %v8235
  %v8246 = vpack.c.b16 %v8238, %v8237
  %8255 = vmatprep.subr.bf16.mxu0 0
  %8256 = vmatpush1.bf16.msra.mxu0 %v8246
  %8257 = vmatprep.subr.bf16.mxu0 0
  %8258 = vmatpush1.bf16.msra.mxu0 %v8245
  %8259 = vmatprep.subr.bf16.mxu0 0
  %8260 = vmatpush1.bf16.msra.mxu0 %v8244
  %8261 = vmatprep.subr.bf16.mxu0 0
  %8262 = vmatpush1.bf16.msra.mxu0 %v8243
  %8263 = vmatprep.subr.bf16.mxu0 0
  %8264 = vmatpush1.bf16.msra.mxu0 %v8242
  %8265 = vmatprep.subr.bf16.mxu0 0
  %8266 = vmatpush1.bf16.msra.mxu0 %v8241
  %8267 = vmatprep.subr.bf16.mxu0 0
  %8268 = vmatpush1.bf16.msra.mxu0 %v8240
  %8269 = vmatprep.subr.bf16.mxu0 0
  %8270 = vmatpush1.bf16.msra.mxu0 %v8239
  %8271 = vmatprep.subr.bf16.mxu0 0
  %8272 = vmatpush2.bf16.msra.mxu0 0
  %8273 = vmatprep.subr.bf16.mxu0 0
  %8274 = vmatpush2.bf16.msra.mxu0 0
  %8275 = vmatprep.subr.bf16.mxu0 0
  %8276 = vmatpush2.bf16.msra.mxu0 0
  %8277 = vmatprep.subr.bf16.mxu0 0
  %8278 = vmatpush2.bf16.msra.mxu0 0
  %8279 = vmatprep.subr.bf16.mxu0 0
  %8280 = vmatpush2.bf16.msra.mxu0 0
  %8281 = vmatprep.subr.bf16.mxu0 0
  %8282 = vmatpush2.bf16.msra.mxu0 0
  %8283 = vmatprep.subr.bf16.mxu0 0
  %8284 = vmatpush2.bf16.msra.mxu0 0
  %8285 = vmatprep.subr.bf16.mxu0 0
  %8286 = vmatpush2.bf16.msra.mxu0 0
  %8287 = vmatprep.mubr.bf16.mxu0 0
  %8288 = vmatmul.mubr.bf16.gmra.mxu0 %v8183
  %v8289 = vpop.f32.mrf.mxu0
  %v8290 = vadd.f32 %v8205, %v8289
  %v8291 = vpop.f32.mrf.mxu0
  %v8292 = vpop.f32.mrf.mxu0
  %v8293 = vadd.f32 %v8205, %v8292
  %v8294 = vpop.f32.mrf.mxu0
  %8295 = vdwg.mxu0
  %v8296 = vmax.f32 %v8290, 0.0
  %v8297 = vmax.f32 %v8293, 0.0
  %v8298 = vpack.c.bf16 %v8297, %v8296
  %v8299 = vld [vmem:[%s5] sm:$0xf]
  %v8300 = vld [vmem:[%s5 + $0x4] sm:$0xf]
  %v8301 = vld [vmem:[%s5 + $0x8] sm:$0xf]
  %v8302 = vld [vmem:[%s5 + $0xc] sm:$0xf]
  %v8303 = vld [vmem:[%s5 + $0x10] sm:$0xf]
  %v8304 = vld [vmem:[%s5 + $0x14] sm:$0xf]
  %v8305 = vld [vmem:[%s5 + $0x18] sm:$0xf]
  %v8306 = vld [vmem:[%s5 + $0x1c] sm:$0xf]
  %v8307 = vld [vmem:[%s5 + $0x20] sm:$0xf]
  %v8308 = vld [vmem:[%s5 + $0x24] sm:$0xf]
  %v8309 = vld [vmem:[%s5 + $0x28] sm:$0xf]
  %v8310 = vld [vmem:[%s5 + $0x2c] sm:$0xf]
  %v8311 = vld [vmem:[%s5 + $0x30] sm:$0xf]
  %v8312 = vld [vmem:[%s5 + $0x34] sm:$0xf]
  %v8313 = vld [vmem:[%s5 + $0x38] sm:$0xf]
  %v8314 = vld [vmem:[%s5 + $0x3c] sm:$0xf]
  %v8315 = vld [vmem:[#allocation2] sm:$0x1]
  %v8317 = vlaneseq
  %v8318 = vshrl.u32 %v8317, 7
  %v8319 = vsub.s32 0, %v8318
  %v8320 = vrot.slane %v8315, %v8319
  %v8338 = vunpack.c.l.b16 %v8299
  %v8339 = vunpack.c.l.b16 %v8300
  %v8340 = vunpack.c.l.b16 %v8301
  %v8341 = vunpack.c.l.b16 %v8302
  %v8342 = vunpack.c.l.b16 %v8303
  %v8343 = vunpack.c.l.b16 %v8304
  %v8344 = vunpack.c.l.b16 %v8305
  %v8345 = vunpack.c.l.b16 %v8306
  %v8346 = vunpack.c.l.b16 %v8307
  %v8347 = vunpack.c.l.b16 %v8308
  %v8348 = vunpack.c.l.b16 %v8309
  %v8349 = vunpack.c.l.b16 %v8310
  %v8350 = vunpack.c.l.b16 %v8311
  %v8351 = vunpack.c.l.b16 %v8312
  %v8352 = vunpack.c.l.b16 %v8313
  %v8353 = vunpack.c.l.b16 %v8314
  %v8354 = vpack.c.b16 %v8339, %v8338
  %v8355 = vpack.c.b16 %v8341, %v8340
  %v8356 = vpack.c.b16 %v8343, %v8342
  %v8357 = vpack.c.b16 %v8345, %v8344
  %v8358 = vpack.c.b16 %v8347, %v8346
  %v8359 = vpack.c.b16 %v8349, %v8348
  %v8360 = vpack.c.b16 %v8351, %v8350
  %v8361 = vpack.c.b16 %v8353, %v8352
  %8370 = vmatprep.subr.bf16.mxu0 0
  %8371 = vmatpush1.bf16.msra.mxu0 %v8361
  %8372 = vmatprep.subr.bf16.mxu0 0
  %8373 = vmatpush1.bf16.msra.mxu0 %v8360
  %8374 = vmatprep.subr.bf16.mxu0 0
  %8375 = vmatpush1.bf16.msra.mxu0 %v8359
  %8376 = vmatprep.subr.bf16.mxu0 0
  %8377 = vmatpush1.bf16.msra.mxu0 %v8358
  %8378 = vmatprep.subr.bf16.mxu0 0
  %8379 = vmatpush1.bf16.msra.mxu0 %v8357
  %8380 = vmatprep.subr.bf16.mxu0 0
  %8381 = vmatpush1.bf16.msra.mxu0 %v8356
  %8382 = vmatprep.subr.bf16.mxu0 0
  %8383 = vmatpush1.bf16.msra.mxu0 %v8355
  %8384 = vmatprep.subr.bf16.mxu0 0
  %8385 = vmatpush1.bf16.msra.mxu0 %v8354
  %8386 = vmatprep.subr.bf16.mxu0 0
  %8387 = vmatpush2.bf16.msra.mxu0 0
  %8388 = vmatprep.subr.bf16.mxu0 0
  %8389 = vmatpush2.bf16.msra.mxu0 0
  %8390 = vmatprep.subr.bf16.mxu0 0
  %8391 = vmatpush2.bf16.msra.mxu0 0
  %8392 = vmatprep.subr.bf16.mxu0 0
  %8393 = vmatpush2.bf16.msra.mxu0 0
  %8394 = vmatprep.subr.bf16.mxu0 0
  %8395 = vmatpush2.bf16.msra.mxu0 0
  %8396 = vmatprep.subr.bf16.mxu0 0
  %8397 = vmatpush2.bf16.msra.mxu0 0
  %8398 = vmatprep.subr.bf16.mxu0 0
  %8399 = vmatpush2.bf16.msra.mxu0 0
  %8400 = vmatprep.subr.bf16.mxu0 0
  %8401 = vmatpush2.bf16.msra.mxu0 0
  %8402 = vmatprep.mubr.bf16.mxu0 0
  %8403 = vmatmul.mubr.bf16.gmra.mxu0 %v8298
  %v8404 = vpop.f32.mrf.mxu0
  %v8405 = vadd.f32 %v8320, %v8404
  %v8406 = vpop.f32.mrf.mxu0
  %v8407 = vpop.f32.mrf.mxu0
  %v8408 = vadd.f32 %v8320, %v8407
  %v8409 = vpop.f32.mrf.mxu0
  %8410 = vdwg.mxu0
  %vm8411 = vcmask 7168
  %8412 = vst.msk [vmem:[%s7] sm:$0xff] %vm8411, %v8405
  %8413 = vst.msk [vmem:[%s7 + $0x8] sm:$0xff] %vm8411, %v8408
  // Predicated region
  $region30: #{cnn_forward.5} parent=0 // pred_check
    _
  $region31: #{cnn_forward.5} parent=0 // pred_check_branch
    %8415 = sbr.rel (0) target = $region33
  $region32: #{cnn_forward.5} parent=0 // pred_region
    _
  $region33: #{cnn_forward.5} parent=0 // pred_fallthru
    _
  // Predicated region
  $region34: #{cnn_forward.5} parent=0 // pred_check
    _
  $region35: #{cnn_forward.5} parent=0 // pred_check_branch
    %8417 = sbr.rel (0) target = $region37
  $region36: #{cnn_forward.5} parent=0 // pred_region
    _
  $region37: #{cnn_forward.5} parent=0 // pred_fallthru
    _

</llo_original>
